<compile_context>
chip_gen: v7x
topology: tpu7x:2x2x1
jax: 0.10.0
libtpu: 0.0.40
codegen_flags: <defaults>
</compile_context>

<pallas_src>
import functools

import jax
import jax.numpy as jnp
import numpy as np
from jax import lax
from jax.experimental import pallas as pl
from jax.experimental.pallas import tpu as pltpu


# ---------------------------------------------------------------------------
# Kernel helpers
# ---------------------------------------------------------------------------
def _zero_halo(pad_ref):
    """Zero only the 1-px border of a (BN, H+2, W+2, C) padded scratch."""
    BN, Hp, Wp, C = pad_ref.shape
    zrow = jnp.zeros((BN, 1, Wp, C), pad_ref.dtype)
    zcol = jnp.zeros((BN, Hp, 1, C), pad_ref.dtype)
    pad_ref[:, 0:1, :, :] = zrow
    pad_ref[:, Hp - 1:Hp, :, :] = zrow
    pad_ref[:, :, 0:1, :] = zcol
    pad_ref[:, :, Wp - 1:Wp, :] = zcol


def _conv3x3_mxu(pad_ref, stack_ref, w_ref, b_ref):
    """3x3 'SAME' conv + bias + ReLU as ONE wide-K bf16 MXU matmul.

    The im2col stack is built with 9 direct stores into `stack_ref`
    (no lane-axis concatenate, no per-tap concat temporaries).
    """
    BN, Hp, Wp, C = pad_ref.shape
    H, W = Hp - 2, Wp - 2
    Cout = w_ref.shape[-1]
    M = BN * H * W
    for kh in range(3):
        for kw in range(3):
            t = kh * 3 + kw
            sl = pad_ref[:, kh:kh + H, kw:kw + W, :]                 # (BN, H, W, C)
            stack_ref[:, t * C:(t + 1) * C] = sl.reshape(M, C).astype(stack_ref.dtype)
    # TODO(synk): if this kernel is reused at U-Net scale and becomes MXU-bound,
    # compute the transposed product (w.T @ stack.T) so the 256-wide MXU output
    # dim is the spatial M instead of Cout=32 (8x better MXU column use).
    acc = jnp.dot(stack_ref[:, 0:9 * C],
                  w_ref[...].astype(jnp.bfloat16),
                  preferred_element_type=jnp.float32)                # (M, Cout) f32
    y = jnp.maximum(acc + b_ref[...], 0.0)
    return y.reshape(BN, H, W, Cout)


def _conv1_vpu_rows(xpad_ref, w1_ref, b1_ref, y1pad_ref):
    """Cin==1 conv1 on the VPU, one output row at a time (low vreg pressure).

    xpad_ref holds the padded input replicated across Cout channel lanes, so
    every tap is a lane-dense elementwise MAC (no per-tap lane broadcast).
    Each finished row is written straight into y1pad's interior.
    """
    BN, Hp, Wp, Cout = xpad_ref.shape
    H, W = Hp - 2, Wp - 2
    w1 = w1_ref[...]                                                 # (9, Cout) f32
    # Hoist the per-tap weight rows and bias out of the row loop.
    wtaps = [w1[t:t + 1, :].reshape(1, 1, Cout) for t in range(9)]
    b1 = b1_ref[...].reshape(1, 1, Cout)

    def row(h, carry):
        rows = xpad_ref[:, pl.ds(h, 3), :, :]                        # (BN, 3, W+2, Cout)
        acc = jnp.zeros((BN, W, Cout), jnp.float32)
        for kh in range(3):
            for kw in range(3):
                acc = acc + rows[:, kh, kw:kw + W, :] * wtaps[kh * 3 + kw]
        y = jnp.maximum(acc + b1, 0.0)                               # (BN, W, Cout)
        y1pad_ref[:, pl.ds(h + 1, 1), 1:W + 1, :] = (
            y.reshape(BN, 1, W, Cout).astype(y1pad_ref.dtype))
        return carry

    lax.fori_loop(0, H, row, 0)


# ---------------------------------------------------------------------------
# Kernel body
# ---------------------------------------------------------------------------
def downconv_kernel(x_ref, w1_ref, b1_ref, w2_ref, b2_ref, out_ref,
                    xpad_ref, y1pad_ref, stack_ref):
    """One batch-tile per grid step.

    x_ref    : (BN, H, W, Cin)            unpadded NHWC input tile (f32)
    w1_ref   : (9, Cout) f32  if Cin==1   / (9*Cin, Cout) bf16 otherwise
    b1_ref   : (1, Cout) f32
    w2_ref   : (9*Cout, Cout) bf16
    b2_ref   : (1, Cout) f32
    out_ref  : (BN, H//2, (W//2)*Cout)    lane-dense pooled output tile (f32)
    xpad_ref : padded input scratch: (BN,H+2,W+2,Cout) f32 (channel-replicated)
               when Cin==1, else (BN,H+2,W+2,Cin) bf16
    y1pad_ref: (BN, H+2, W+2, Cout) bf16  padded conv1 output
    stack_ref: (BN*H*W, 9*max(Cin,Cout)) bf16  im2col stack
    """
    BN, H, W, Cin = x_ref.shape
    Cout = w2_ref.shape[1]
    Ho, Wo = H // 2, W // 2

    # Halo of both padded scratches is re-zeroed every grid step so the kernel
    # stays correct under megacore "parallel" splitting (each core has its own
    # scratch instance).  Interior writes below never touch the halo.
    _zero_halo(xpad_ref)
    _zero_halo(y1pad_ref)

    # ---- conv1 + ReLU ----
    if Cin == 1:
        # Store the single input channel replicated across Cout lanes: tap MACs
        # become lane-dense elementwise ops, no broadcast inside the row loop.
        Crep = xpad_ref.shape[-1]
        xpad_ref[:, 1:H + 1, 1:W + 1, :] = jnp.broadcast_to(
            x_ref[...].astype(xpad_ref.dtype), (BN, H, W, Crep))
        _conv1_vpu_rows(xpad_ref, w1_ref, b1_ref, y1pad_ref)
    else:
        xpad_ref[:, 1:H + 1, 1:W + 1, :] = x_ref[...].astype(xpad_ref.dtype)
        y1 = _conv3x3_mxu(xpad_ref, stack_ref, w1_ref, b1_ref)       # (BN,H,W,Cout) f32
        y1pad_ref[:, 1:H + 1, 1:W + 1, :] = y1.astype(y1pad_ref.dtype)

    # ---- conv2 + ReLU (single K = 9*Cout bf16 matmul, f32 accumulation) ----
    y2 = _conv3x3_mxu(y1pad_ref, stack_ref, w2_ref, b2_ref)          # (BN,H,W,Cout) f32

    # ---- MaxPool2d(kernel_size=2, stride=2) ----
    t = jnp.max(y2.reshape(BN, Ho, 2, W, Cout), axis=2)              # H-pool (outer dim)
    pooled = jnp.max(t.reshape(BN, Ho, Wo, 2, Cout), axis=3)         # W-pool

    # lane-dense store: last dim = Wo*Cout (multiple of 128 for Cout=32, W=16)
    out_ref[...] = pooled.reshape(BN, Ho, Wo * Cout)


# ---------------------------------------------------------------------------
# Generation-aware tiling / VMEM heuristics
# ---------------------------------------------------------------------------
def _device_kind():
    try:
        return (jax.devices()[0].device_kind or "").lower()
    except Exception:
        return ""


def _cores_per_chip(kind):
    """TensorCores a 'parallel' grid axis can be split across on one device."""
    if any(t in kind for t in ("v7", "7x")):
        return 2
    if any(t in kind for t in ("v3", "v4", "v5p")):   # megacore chips
        return 2
    return 1                                          # v5e / v6e / unknown


def _vmem_budgets(kind):
    """(picker budget for scratch+blocks, explicit compiler vmem limit)."""
    if any(t in kind for t in ("v7", "7x")):
        return 24 * 1024 * 1024, 40 * 1024 * 1024     # 64 MiB physical VMEM
    return 48 * 1024 * 1024, 64 * 1024 * 1024         # v5e/v6e: 128 MiB physical


def _pick_batch_tile(N, H, W, Cin, Cout, n_cores, budget_bytes):
    """Largest batch tile dividing N that fits the VMEM budget.

    On single-TensorCore chips this yields BN=N (one grid step, no per-step
    overhead).  On multi-core chips it prefers a step count that is a multiple
    of the core count so both cores finish together.
    """
    Cs = max(Cin, Cout)
    per_img = (
        (H + 2) * (W + 2) * (Cout * 4 if Cin == 1 else Cin * 2)   # xpad scratch
        + (H + 2) * (W + 2) * Cout * 2                            # y1pad scratch (bf16)
        + H * W * 9 * Cs * 2                                      # im2col stack (bf16)
        + 2 * H * W * Cin * 4                                     # input block (double-buffered)
        + 2 * (H // 2) * (W // 2) * Cout * 4                      # output block (double-buffered)
        + 3 * H * W * Cout * 4                                    # y2 / pooling temporaries (f32)
    )
    cap = max(1, budget_bytes // max(per_img, 1))
    divs = [d for d in range(1, N + 1) if N % d == 0 and d <= cap]
    if not divs:
        divs = [1]
    if n_cores > 1 and N >= n_cores:
        balanced = [d for d in divs if (N // d) % n_cores == 0]
        if balanced:
            return max(balanced)
    return max(divs)


# ---------------------------------------------------------------------------
# Wrapper
# ---------------------------------------------------------------------------
@functools.partial(jax.jit, static_argnames=("batch_tile",))
def down_conv(x_nchw, w1_hwio, b1, w2_hwio, b2, *, batch_tile=None):
    """Pallas DownConv forward. x_nchw: (N, Cin, H, W) -> (N, Cout, H//2, W//2)."""
    N, Cin, H, W = x_nchw.shape
    Cout = w1_hwio.shape[-1]
    assert H % 2 == 0 and W % 2 == 0, "MaxPool2d(2,2) path assumes even H, W"

    kind = _device_kind()
    n_cores = _cores_per_chip(kind)
    budget, vmem_limit = _vmem_budgets(kind)

    # NHWC, unpadded (1-px halo is built inside the kernel -> no extra HBM copy)
    x = jnp.transpose(x_nchw, (0, 2, 3, 1)).astype(jnp.float32)

    if Cin == 1:
        w1m = w1_hwio.astype(jnp.float32).reshape(9, Cout)           # f32 VPU weights
    else:
        w1m = w1_hwio.astype(jnp.bfloat16).reshape(9 * Cin, Cout)    # bf16 MXU weights
    b1m = b1.astype(jnp.float32).reshape(1, Cout)
    w2m = w2_hwio.astype(jnp.bfloat16).reshape(9 * Cout, Cout)       # bf16 MXU weights
    b2m = b2.astype(jnp.float32).reshape(1, Cout)

    BN = batch_tile if batch_tile is not None else _pick_batch_tile(
        N, H, W, Cin, Cout, n_cores, budget)
    grid = (pl.cdiv(N, BN),)
    Ho, Wo = H // 2, W // 2
    Cs = max(Cin, Cout)

    xpad_shape = (BN, H + 2, W + 2, Cout if Cin == 1 else Cin)
    xpad_dtype = jnp.float32 if Cin == 1 else jnp.bfloat16

    # TODO(synk): for very large H*W (U-Net scale), add an H-tile grid axis with
    # a 1-row halo so the im2col stack fits v7x's 64 MiB VMEM; also consider
    # bf16 input/output blocks and skipping the NCHW transpose for HBM traffic.
    out3d = pl.pallas_call(
        downconv_kernel,
        out_shape=jax.ShapeDtypeStruct((N, Ho, Wo * Cout), jnp.float32),
        grid=grid,
        in_specs=[
            pl.BlockSpec((BN, H, W, Cin), lambda n: (n, 0, 0, 0)),
            pl.BlockSpec(w1m.shape, lambda n: (0, 0)),
            pl.BlockSpec((1, Cout), lambda n: (0, 0)),
            pl.BlockSpec((9 * Cout, Cout), lambda n: (0, 0)),
            pl.BlockSpec((1, Cout), lambda n: (0, 0)),
        ],
        out_specs=pl.BlockSpec((BN, Ho, Wo * Cout), lambda n: (n, 0, 0)),
        scratch_shapes=[
            pltpu.VMEM(xpad_shape, xpad_dtype),
            pltpu.VMEM((BN, H + 2, W + 2, Cout), jnp.bfloat16),
            pltpu.VMEM((BN * H * W, 9 * Cs), jnp.bfloat16),
        ],
        compiler_params=pltpu.CompilerParams(
            dimension_semantics=("parallel",),
            vmem_limit_bytes=vmem_limit,
        ),
    )(x, w1m, b1m, w2m, b2m)

    out_nhwc = out3d.reshape(N, Ho, Wo, Cout)
    return jnp.transpose(out_nhwc, (0, 3, 1, 2))                     # back to NCHW


# ---------------------------------------------------------------------------
# Pure-JAX reference (mirrors the PyTorch module, f32 end-to-end)
# ---------------------------------------------------------------------------
def reference_forward(x_nchw, w1_hwio, b1, w2_hwio, b2):
    dn = ("NHWC", "HWIO", "NHWC")
    x = jnp.transpose(x_nchw, (0, 2, 3, 1)).astype(jnp.float32)
    y = jax.lax.conv_general_dilated(x, w1_hwio, (1, 1), "SAME", dimension_numbers=dn)
    y = jax.nn.relu(y + b1)
    y = jax.lax.conv_general_dilated(y, w2_hwio, (1, 1), "SAME", dimension_numbers=dn)
    y = jax.nn.relu(y + b2)
    y = jax.lax.reduce_window(y, -jnp.inf, jax.lax.max,
                              (1, 2, 2, 1), (1, 2, 2, 1), "VALID")
    return jnp.transpose(y, (0, 3, 1, 2))


if __name__ == "__main__":
    # Module defaults: in_channels=1, out_channels=32, kernel_size=3,
    # n_filters_per_depth=2 (conv3 not built).
    N, Cin, H, W = 2, 1, 16, 16
    Cout = 32

    key = jax.random.PRNGKey(0)
    kx, k1, k2, k3, k4 = jax.random.split(key, 5)

    x = jax.random.normal(kx, (N, Cin, H, W), dtype=jnp.float32)
    w1 = 0.2 * jax.random.normal(k1, (3, 3, Cin, Cout), dtype=jnp.float32)
    b1 = 0.1 * jax.random.normal(k2, (Cout,), dtype=jnp.float32)
    w2 = 0.2 * jax.random.normal(k3, (3, 3, Cout, Cout), dtype=jnp.float32)
    b2 = 0.1 * jax.random.normal(k4, (Cout,), dtype=jnp.float32)

    out = jax.block_until_ready(down_conv(x, w1, b1, w2, b2))
    ref = jax.block_until_ready(reference_forward(x, w1, b1, w2, b2))

    assert out.shape == (N, Cout, H // 2, W // 2), out.shape
    # Tolerance accounts for bf16 MXU inputs on conv2 (f32 accumulation).
    np.testing.assert_allclose(np.asarray(out), np.asarray(ref), rtol=3e-2, atol=3e-2)

    print("KERNEL_OK")
</pallas_src>

<mosaic_0001>
module attributes {stable_mosaic.version = 11 : i64} {
  func.func @downconv_kernel(%arg0: i32, %arg1: memref<2x16x16x1xf32, #tpu.memory_space<vmem>>, %arg2: memref<9x32xf32, #tpu.memory_space<vmem>>, %arg3: memref<1x32xf32, #tpu.memory_space<vmem>>, %arg4: memref<288x32xbf16, #tpu.memory_space<vmem>>, %arg5: memref<1x32xf32, #tpu.memory_space<vmem>>, %arg6: memref<2x8x256xf32, #tpu.memory_space<vmem>>, %arg7: memref<2x18x18x32xf32, #tpu.memory_space<vmem>>, %arg8: memref<2x18x18x32xbf16, #tpu.memory_space<vmem>>, %arg9: memref<512x288xbf16, #tpu.memory_space<vmem>>) attributes {dimension_semantics = [#tpu.dimension_semantics<parallel>], iteration_bounds = array<i64: 1>, scalar_prefetch = 0 : i64, scratch_operands = 3 : i64, tpu.core_type = #tpu.core_type<tc>, window_params = [{transform_indices = @transform_0, window_bounds = array<i64: 2, 16, 16, 1>}, {pipeline_mode = #tpu.pipeline_mode<synchronous>, transform_indices = @transform_1, window_bounds = array<i64: 9, 32>}, {pipeline_mode = #tpu.pipeline_mode<synchronous>, transform_indices = @transform_2, window_bounds = array<i64: 1, 32>}, {pipeline_mode = #tpu.pipeline_mode<synchronous>, transform_indices = @transform_3, window_bounds = array<i64: 288, 32>}, {pipeline_mode = #tpu.pipeline_mode<synchronous>, transform_indices = @transform_4, window_bounds = array<i64: 1, 32>}, {transform_indices = @transform_5, window_bounds = array<i64: 2, 8, 256>}]} {
    %cst = arith.constant 0.000000e+00 : f32
    %0 = vector.broadcast %cst : f32 to vector<2x1x18x32xf32>
    %cst_0 = arith.constant 0.000000e+00 : f32
    %1 = vector.broadcast %cst_0 : f32 to vector<2x18x1x32xf32>
    %c0 = arith.constant 0 : index
    %c0_1 = arith.constant 0 : index
    %c0_2 = arith.constant 0 : index
    %c0_3 = arith.constant 0 : index
    %2 = vector.load %arg7[%c0, %c0_1, %c0_2, %c0_3] : memref<2x18x18x32xf32, #tpu.memory_space<vmem>>, vector<2x1x18x32xf32>
    tpu.vector_store %arg7[%c0, %c0_1, %c0_2, %c0_3], %0 {strides = array<i32>} : memref<2x18x18x32xf32, #tpu.memory_space<vmem>>, vector<2x1x18x32xf32>,
    %c0_4 = arith.constant 0 : index
    %c17 = arith.constant 17 : index
    %c0_5 = arith.constant 0 : index
    %c0_6 = arith.constant 0 : index
    %3 = vector.load %arg7[%c0_4, %c17, %c0_5, %c0_6] : memref<2x18x18x32xf32, #tpu.memory_space<vmem>>, vector<2x1x18x32xf32>
    tpu.vector_store %arg7[%c0_4, %c17, %c0_5, %c0_6], %0 {strides = array<i32>} : memref<2x18x18x32xf32, #tpu.memory_space<vmem>>, vector<2x1x18x32xf32>,
    %c0_7 = arith.constant 0 : index
    %c0_8 = arith.constant 0 : index
    %c0_9 = arith.constant 0 : index
    %c0_10 = arith.constant 0 : index
    %4 = vector.load %arg7[%c0_7, %c0_8, %c0_9, %c0_10] : memref<2x18x18x32xf32, #tpu.memory_space<vmem>>, vector<2x18x1x32xf32>
    tpu.vector_store %arg7[%c0_7, %c0_8, %c0_9, %c0_10], %1 {strides = array<i32>} : memref<2x18x18x32xf32, #tpu.memory_space<vmem>>, vector<2x18x1x32xf32>,
    %c0_11 = arith.constant 0 : index
    %c0_12 = arith.constant 0 : index
    %c17_13 = arith.constant 17 : index
    %c0_14 = arith.constant 0 : index
    %5 = vector.load %arg7[%c0_11, %c0_12, %c17_13, %c0_14] : memref<2x18x18x32xf32, #tpu.memory_space<vmem>>, vector<2x18x1x32xf32>
    tpu.vector_store %arg7[%c0_11, %c0_12, %c17_13, %c0_14], %1 {strides = array<i32>} : memref<2x18x18x32xf32, #tpu.memory_space<vmem>>, vector<2x18x1x32xf32>,
    %cst_15 = arith.constant 0.000000e+00 : bf16
    %6 = vector.broadcast %cst_15 : bf16 to vector<2x1x18x32xbf16>
    %cst_16 = arith.constant 0.000000e+00 : bf16
    %7 = vector.broadcast %cst_16 : bf16 to vector<2x18x1x32xbf16>
    %c0_17 = arith.constant 0 : index
    %c0_18 = arith.constant 0 : index
    %c0_19 = arith.constant 0 : index
    %c0_20 = arith.constant 0 : index
    %8 = vector.load %arg8[%c0_17, %c0_18, %c0_19, %c0_20] : memref<2x18x18x32xbf16, #tpu.memory_space<vmem>>, vector<2x1x18x32xbf16>
    tpu.vector_store %arg8[%c0_17, %c0_18, %c0_19, %c0_20], %6 {strides = array<i32>} : memref<2x18x18x32xbf16, #tpu.memory_space<vmem>>, vector<2x1x18x32xbf16>,
    %c0_21 = arith.constant 0 : index
    %c17_22 = arith.constant 17 : index
    %c0_23 = arith.constant 0 : index
    %c0_24 = arith.constant 0 : index
    %9 = vector.load %arg8[%c0_21, %c17_22, %c0_23, %c0_24] : memref<2x18x18x32xbf16, #tpu.memory_space<vmem>>, vector<2x1x18x32xbf16>
    tpu.vector_store %arg8[%c0_21, %c17_22, %c0_23, %c0_24], %6 {strides = array<i32>} : memref<2x18x18x32xbf16, #tpu.memory_space<vmem>>, vector<2x1x18x32xbf16>,
    %c0_25 = arith.constant 0 : index
    %c0_26 = arith.constant 0 : index
    %c0_27 = arith.constant 0 : index
    %c0_28 = arith.constant 0 : index
    %10 = vector.load %arg8[%c0_25, %c0_26, %c0_27, %c0_28] : memref<2x18x18x32xbf16, #tpu.memory_space<vmem>>, vector<2x18x1x32xbf16>
    tpu.vector_store %arg8[%c0_25, %c0_26, %c0_27, %c0_28], %7 {strides = array<i32>} : memref<2x18x18x32xbf16, #tpu.memory_space<vmem>>, vector<2x18x1x32xbf16>,
    %c0_29 = arith.constant 0 : index
    %c0_30 = arith.constant 0 : index
    %c17_31 = arith.constant 17 : index
    %c0_32 = arith.constant 0 : index
    %11 = vector.load %arg8[%c0_29, %c0_30, %c17_31, %c0_32] : memref<2x18x18x32xbf16, #tpu.memory_space<vmem>>, vector<2x18x1x32xbf16>
    tpu.vector_store %arg8[%c0_29, %c0_30, %c17_31, %c0_32], %7 {strides = array<i32>} : memref<2x18x18x32xbf16, #tpu.memory_space<vmem>>, vector<2x18x1x32xbf16>,
    %c0_33 = arith.constant 0 : index
    %c0_34 = arith.constant 0 : index
    %c0_35 = arith.constant 0 : index
    %c0_36 = arith.constant 0 : index
    %12 = vector.load %arg1[%c0_33, %c0_34, %c0_35, %c0_36] : memref<2x16x16x1xf32, #tpu.memory_space<vmem>>, vector<2x16x16x1xf32>
    %13 = vector.shape_cast %12 : vector<2x16x16x1xf32> to vector<2x16x16x1xf32>
    %14 = vector.broadcast %13 : vector<2x16x16x1xf32> to vector<2x16x16x32xf32>
    %c0_37 = arith.constant 0 : index
    %c1 = arith.constant 1 : index
    %c1_38 = arith.constant 1 : index
    %c0_39 = arith.constant 0 : index
    %15 = vector.load %arg7[%c0_37, %c1, %c1_38, %c0_39] : memref<2x18x18x32xf32, #tpu.memory_space<vmem>>, vector<2x16x16x32xf32>
    tpu.vector_store %arg7[%c0_37, %c1, %c1_38, %c0_39], %14 {strides = array<i32>} : memref<2x18x18x32xf32, #tpu.memory_space<vmem>>, vector<2x16x16x32xf32>,
    %c0_40 = arith.constant 0 : index
    %c0_41 = arith.constant 0 : index
    %16 = vector.load %arg2[%c0_40, %c0_41] : memref<9x32xf32, #tpu.memory_space<vmem>>, vector<9x32xf32>
    %17 = vector.extract_strided_slice %16 {offsets = [0, 0], sizes = [1, 32], strides = [1, 1]} : vector<9x32xf32> to vector<1x32xf32>
    %18 = vector.shape_cast %17 : vector<1x32xf32> to vector<1x1x32xf32>
    %19 = vector.extract_strided_slice %16 {offsets = [1, 0], sizes = [1, 32], strides = [1, 1]} : vector<9x32xf32> to vector<1x32xf32>
    %20 = vector.shape_cast %19 : vector<1x32xf32> to vector<1x1x32xf32>
    %21 = vector.extract_strided_slice %16 {offsets = [2, 0], sizes = [1, 32], strides = [1, 1]} : vector<9x32xf32> to vector<1x32xf32>
    %22 = vector.shape_cast %21 : vector<1x32xf32> to vector<1x1x32xf32>
    %23 = vector.extract_strided_slice %16 {offsets = [3, 0], sizes = [1, 32], strides = [1, 1]} : vector<9x32xf32> to vector<1x32xf32>
    %24 = vector.shape_cast %23 : vector<1x32xf32> to vector<1x1x32xf32>
    %25 = vector.extract_strided_slice %16 {offsets = [4, 0], sizes = [1, 32], strides = [1, 1]} : vector<9x32xf32> to vector<1x32xf32>
    %26 = vector.shape_cast %25 : vector<1x32xf32> to vector<1x1x32xf32>
    %27 = vector.extract_strided_slice %16 {offsets = [5, 0], sizes = [1, 32], strides = [1, 1]} : vector<9x32xf32> to vector<1x32xf32>
    %28 = vector.shape_cast %27 : vector<1x32xf32> to vector<1x1x32xf32>
    %29 = vector.extract_strided_slice %16 {offsets = [6, 0], sizes = [1, 32], strides = [1, 1]} : vector<9x32xf32> to vector<1x32xf32>
    %30 = vector.shape_cast %29 : vector<1x32xf32> to vector<1x1x32xf32>
    %31 = vector.extract_strided_slice %16 {offsets = [7, 0], sizes = [1, 32], strides = [1, 1]} : vector<9x32xf32> to vector<1x32xf32>
    %32 = vector.shape_cast %31 : vector<1x32xf32> to vector<1x1x32xf32>
    %33 = vector.extract_strided_slice %16 {offsets = [8, 0], sizes = [1, 32], strides = [1, 1]} : vector<9x32xf32> to vector<1x32xf32>
    %34 = vector.shape_cast %33 : vector<1x32xf32> to vector<1x1x32xf32>
    %c0_42 = arith.constant 0 : index
    %c0_43 = arith.constant 0 : index
    %35 = vector.load %arg3[%c0_42, %c0_43] : memref<1x32xf32, #tpu.memory_space<vmem>>, vector<1x32xf32>
    %36 = vector.shape_cast %35 : vector<1x32xf32> to vector<1x1x32xf32>
    %c0_i32 = arith.constant 0 : i32
    %c16_i32 = arith.constant 16 : i32
    %37 = arith.addi %c0_i32, %c16_i32 : i32
    %c1_i32 = arith.constant 1 : i32
    scf.for %arg10 = %c0_i32 to %37 step %c1_i32  : i32 {
      %c0_103 = arith.constant 0 : index
      %80 = arith.index_cast %arg10 : i32 to index
      %c0_104 = arith.constant 0 : index
      %c0_105 = arith.constant 0 : index
      %81 = vector.load %arg7[%c0_103, %80, %c0_104, %c0_105] : memref<2x18x18x32xf32, #tpu.memory_space<vmem>>, vector<2x3x18x32xf32>
      %cst_106 = arith.constant 0.000000e+00 : f32
      %82 = vector.broadcast %cst_106 : f32 to vector<2x16x32xf32>
      %83 = vector.extract_strided_slice %81 {offsets = [0, 0, 0, 0], sizes = [2, 1, 16, 32], strides = [1, 1, 1, 1]} : vector<2x3x18x32xf32> to vector<2x1x16x32xf32>
      %84 = vector.shape_cast %83 : vector<2x1x16x32xf32> to vector<2x16x32xf32>
      %85 = vector.broadcast %18 : vector<1x1x32xf32> to vector<2x16x32xf32>
      %86 = arith.mulf %84, %85 : vector<2x16x32xf32>
      %87 = arith.addf %82, %86 : vector<2x16x32xf32>
      %88 = vector.extract_strided_slice %81 {offsets = [0, 0, 1, 0], sizes = [2, 1, 16, 32], strides = [1, 1, 1, 1]} : vector<2x3x18x32xf32> to vector<2x1x16x32xf32>
      %89 = vector.shape_cast %88 : vector<2x1x16x32xf32> to vector<2x16x32xf32>
      %90 = vector.broadcast %20 : vector<1x1x32xf32> to vector<2x16x32xf32>
      %91 = arith.mulf %89, %90 : vector<2x16x32xf32>
      %92 = arith.addf %87, %91 : vector<2x16x32xf32>
      %93 = vector.extract_strided_slice %81 {offsets = [0, 0, 2, 0], sizes = [2, 1, 16, 32], strides = [1, 1, 1, 1]} : vector<2x3x18x32xf32> to vector<2x1x16x32xf32>
      %94 = vector.shape_cast %93 : vector<2x1x16x32xf32> to vector<2x16x32xf32>
      %95 = vector.broadcast %22 : vector<1x1x32xf32> to vector<2x16x32xf32>
      %96 = arith.mulf %94, %95 : vector<2x16x32xf32>
      %97 = arith.addf %92, %96 : vector<2x16x32xf32>
      %98 = vector.extract_strided_slice %81 {offsets = [0, 1, 0, 0], sizes = [2, 1, 16, 32], strides = [1, 1, 1, 1]} : vector<2x3x18x32xf32> to vector<2x1x16x32xf32>
      %99 = vector.shape_cast %98 : vector<2x1x16x32xf32> to vector<2x16x32xf32>
      %100 = vector.broadcast %24 : vector<1x1x32xf32> to vector<2x16x32xf32>
      %101 = arith.mulf %99, %100 : vector<2x16x32xf32>
      %102 = arith.addf %97, %101 : vector<2x16x32xf32>
      %103 = vector.extract_strided_slice %81 {offsets = [0, 1, 1, 0], sizes = [2, 1, 16, 32], strides = [1, 1, 1, 1]} : vector<2x3x18x32xf32> to vector<2x1x16x32xf32>
      %104 = vector.shape_cast %103 : vector<2x1x16x32xf32> to vector<2x16x32xf32>
      %105 = vector.broadcast %26 : vector<1x1x32xf32> to vector<2x16x32xf32>
      %106 = arith.mulf %104, %105 : vector<2x16x32xf32>
      %107 = arith.addf %102, %106 : vector<2x16x32xf32>
      %108 = vector.extract_strided_slice %81 {offsets = [0, 1, 2, 0], sizes = [2, 1, 16, 32], strides = [1, 1, 1, 1]} : vector<2x3x18x32xf32> to vector<2x1x16x32xf32>
      %109 = vector.shape_cast %108 : vector<2x1x16x32xf32> to vector<2x16x32xf32>
      %110 = vector.broadcast %28 : vector<1x1x32xf32> to vector<2x16x32xf32>
      %111 = arith.mulf %109, %110 : vector<2x16x32xf32>
      %112 = arith.addf %107, %111 : vector<2x16x32xf32>
      %113 = vector.extract_strided_slice %81 {offsets = [0, 2, 0, 0], sizes = [2, 1, 16, 32], strides = [1, 1, 1, 1]} : vector<2x3x18x32xf32> to vector<2x1x16x32xf32>
      %114 = vector.shape_cast %113 : vector<2x1x16x32xf32> to vector<2x16x32xf32>
      %115 = vector.broadcast %30 : vector<1x1x32xf32> to vector<2x16x32xf32>
      %116 = arith.mulf %114, %115 : vector<2x16x32xf32>
      %117 = arith.addf %112, %116 : vector<2x16x32xf32>
      %118 = vector.extract_strided_slice %81 {offsets = [0, 2, 1, 0], sizes = [2, 1, 16, 32], strides = [1, 1, 1, 1]} : vector<2x3x18x32xf32> to vector<2x1x16x32xf32>
      %119 = vector.shape_cast %118 : vector<2x1x16x32xf32> to vector<2x16x32xf32>
      %120 = vector.broadcast %32 : vector<1x1x32xf32> to vector<2x16x32xf32>
      %121 = arith.mulf %119, %120 : vector<2x16x32xf32>
      %122 = arith.addf %117, %121 : vector<2x16x32xf32>
      %123 = vector.extract_strided_slice %81 {offsets = [0, 2, 2, 0], sizes = [2, 1, 16, 32], strides = [1, 1, 1, 1]} : vector<2x3x18x32xf32> to vector<2x1x16x32xf32>
      %124 = vector.shape_cast %123 : vector<2x1x16x32xf32> to vector<2x16x32xf32>
      %125 = vector.broadcast %34 : vector<1x1x32xf32> to vector<2x16x32xf32>
      %126 = arith.mulf %124, %125 : vector<2x16x32xf32>
      %127 = arith.addf %122, %126 : vector<2x16x32xf32>
      %128 = vector.broadcast %36 : vector<1x1x32xf32> to vector<2x16x32xf32>
      %129 = arith.addf %127, %128 : vector<2x16x32xf32>
      %cst_107 = arith.constant 0.000000e+00 : f32
      %130 = vector.broadcast %cst_107 : f32 to vector<2x16x32xf32>
      %131 = arith.maximumf %129, %130 : vector<2x16x32xf32>
      %132 = vector.shape_cast %131 : vector<2x16x32xf32> to vector<2x1x16x32xf32>
      %133 = arith.truncf %132 : vector<2x1x16x32xf32> to vector<2x1x16x32xbf16>
      %c1_i32_108 = arith.constant 1 : i32
      %134 = arith.addi %arg10, %c1_i32_108 : i32
      %c0_109 = arith.constant 0 : index
      %135 = arith.index_cast %134 : i32 to index
      %c1_110 = arith.constant 1 : index
      %c0_111 = arith.constant 0 : index
      %136 = vector.load %arg8[%c0_109, %135, %c1_110, %c0_111] : memref<2x18x18x32xbf16, #tpu.memory_space<vmem>>, vector<2x1x16x32xbf16>
      tpu.vector_store %arg8[%c0_109, %135, %c1_110, %c0_111], %133 {strides = array<i32>} : memref<2x18x18x32xbf16, #tpu.memory_space<vmem>>, vector<2x1x16x32xbf16>,
    }
    %c16_i32_44 = arith.constant 16 : i32
    %c0_45 = arith.constant 0 : index
    %c0_46 = arith.constant 0 : index
    %c0_47 = arith.constant 0 : index
    %c0_48 = arith.constant 0 : index
    %38 = vector.load %arg8[%c0_45, %c0_46, %c0_47, %c0_48] : memref<2x18x18x32xbf16, #tpu.memory_space<vmem>>, vector<2x16x16x32xbf16>
    %39 = vector.shape_cast %38 : vector<2x16x16x32xbf16> to vector<512x32xbf16>
    %c0_49 = arith.constant 0 : index
    %c0_50 = arith.constant 0 : index
    %40 = vector.load %arg9[%c0_49, %c0_50] : memref<512x288xbf16, #tpu.memory_space<vmem>>, vector<512x32xbf16>
    tpu.vector_store %arg9[%c0_49, %c0_50], %39 {strides = array<i32>} : memref<512x288xbf16, #tpu.memory_space<vmem>>, vector<512x32xbf16>,
    %c0_51 = arith.constant 0 : index
    %c0_52 = arith.constant 0 : index
    %c1_53 = arith.constant 1 : index
    %c0_54 = arith.constant 0 : index
    %41 = vector.load %arg8[%c0_51, %c0_52, %c1_53, %c0_54] : memref<2x18x18x32xbf16, #tpu.memory_space<vmem>>, vector<2x16x16x32xbf16>
    %42 = vector.shape_cast %41 : vector<2x16x16x32xbf16> to vector<512x32xbf16>
    %c0_55 = arith.constant 0 : index
    %c32 = arith.constant 32 : index
    %43 = vector.load %arg9[%c0_55, %c32] : memref<512x288xbf16, #tpu.memory_space<vmem>>, vector<512x32xbf16>
    tpu.vector_store %arg9[%c0_55, %c32], %42 {strides = array<i32>} : memref<512x288xbf16, #tpu.memory_space<vmem>>, vector<512x32xbf16>,
    %c0_56 = arith.constant 0 : index
    %c0_57 = arith.constant 0 : index
    %c2 = arith.constant 2 : index
    %c0_58 = arith.constant 0 : index
    %44 = vector.load %arg8[%c0_56, %c0_57, %c2, %c0_58] : memref<2x18x18x32xbf16, #tpu.memory_space<vmem>>, vector<2x16x16x32xbf16>
    %45 = vector.shape_cast %44 : vector<2x16x16x32xbf16> to vector<512x32xbf16>
    %c0_59 = arith.constant 0 : index
    %c64 = arith.constant 64 : index
    %46 = vector.load %arg9[%c0_59, %c64] : memref<512x288xbf16, #tpu.memory_space<vmem>>, vector<512x32xbf16>
    tpu.vector_store %arg9[%c0_59, %c64], %45 {strides = array<i32>} : memref<512x288xbf16, #tpu.memory_space<vmem>>, vector<512x32xbf16>,
    %c0_60 = arith.constant 0 : index
    %c1_61 = arith.constant 1 : index
    %c0_62 = arith.constant 0 : index
    %c0_63 = arith.constant 0 : index
    %47 = vector.load %arg8[%c0_60, %c1_61, %c0_62, %c0_63] : memref<2x18x18x32xbf16, #tpu.memory_space<vmem>>, vector<2x16x16x32xbf16>
    %48 = vector.shape_cast %47 : vector<2x16x16x32xbf16> to vector<512x32xbf16>
    %c0_64 = arith.constant 0 : index
    %c96 = arith.constant 96 : index
    %49 = vector.load %arg9[%c0_64, %c96] : memref<512x288xbf16, #tpu.memory_space<vmem>>, vector<512x32xbf16>
    tpu.vector_store %arg9[%c0_64, %c96], %48 {strides = array<i32>} : memref<512x288xbf16, #tpu.memory_space<vmem>>, vector<512x32xbf16>,
    %c0_65 = arith.constant 0 : index
    %c1_66 = arith.constant 1 : index
    %c1_67 = arith.constant 1 : index
    %c0_68 = arith.constant 0 : index
    %50 = vector.load %arg8[%c0_65, %c1_66, %c1_67, %c0_68] : memref<2x18x18x32xbf16, #tpu.memory_space<vmem>>, vector<2x16x16x32xbf16>
    %51 = vector.shape_cast %50 : vector<2x16x16x32xbf16> to vector<512x32xbf16>
    %c0_69 = arith.constant 0 : index
    %c128 = arith.constant 128 : index
    %52 = vector.load %arg9[%c0_69, %c128] : memref<512x288xbf16, #tpu.memory_space<vmem>>, vector<512x32xbf16>
    tpu.vector_store %arg9[%c0_69, %c128], %51 {strides = array<i32>} : memref<512x288xbf16, #tpu.memory_space<vmem>>, vector<512x32xbf16>,
    %c0_70 = arith.constant 0 : index
    %c1_71 = arith.constant 1 : index
    %c2_72 = arith.constant 2 : index
    %c0_73 = arith.constant 0 : index
    %53 = vector.load %arg8[%c0_70, %c1_71, %c2_72, %c0_73] : memref<2x18x18x32xbf16, #tpu.memory_space<vmem>>, vector<2x16x16x32xbf16>
    %54 = vector.shape_cast %53 : vector<2x16x16x32xbf16> to vector<512x32xbf16>
    %c0_74 = arith.constant 0 : index
    %c160 = arith.constant 160 : index
    %55 = vector.load %arg9[%c0_74, %c160] : memref<512x288xbf16, #tpu.memory_space<vmem>>, vector<512x32xbf16>
    tpu.vector_store %arg9[%c0_74, %c160], %54 {strides = array<i32>} : memref<512x288xbf16, #tpu.memory_space<vmem>>, vector<512x32xbf16>,
    %c0_75 = arith.constant 0 : index
    %c2_76 = arith.constant 2 : index
    %c0_77 = arith.constant 0 : index
    %c0_78 = arith.constant 0 : index
    %56 = vector.load %arg8[%c0_75, %c2_76, %c0_77, %c0_78] : memref<2x18x18x32xbf16, #tpu.memory_space<vmem>>, vector<2x16x16x32xbf16>
    %57 = vector.shape_cast %56 : vector<2x16x16x32xbf16> to vector<512x32xbf16>
    %c0_79 = arith.constant 0 : index
    %c192 = arith.constant 192 : index
    %58 = vector.load %arg9[%c0_79, %c192] : memref<512x288xbf16, #tpu.memory_space<vmem>>, vector<512x32xbf16>
    tpu.vector_store %arg9[%c0_79, %c192], %57 {strides = array<i32>} : memref<512x288xbf16, #tpu.memory_space<vmem>>, vector<512x32xbf16>,
    %c0_80 = arith.constant 0 : index
    %c2_81 = arith.constant 2 : index
    %c1_82 = arith.constant 1 : index
    %c0_83 = arith.constant 0 : index
    %59 = vector.load %arg8[%c0_80, %c2_81, %c1_82, %c0_83] : memref<2x18x18x32xbf16, #tpu.memory_space<vmem>>, vector<2x16x16x32xbf16>
    %60 = vector.shape_cast %59 : vector<2x16x16x32xbf16> to vector<512x32xbf16>
    %c0_84 = arith.constant 0 : index
    %c224 = arith.constant 224 : index
    %61 = vector.load %arg9[%c0_84, %c224] : memref<512x288xbf16, #tpu.memory_space<vmem>>, vector<512x32xbf16>
    tpu.vector_store %arg9[%c0_84, %c224], %60 {strides = array<i32>} : memref<512x288xbf16, #tpu.memory_space<vmem>>, vector<512x32xbf16>,
    %c0_85 = arith.constant 0 : index
    %c2_86 = arith.constant 2 : index
    %c2_87 = arith.constant 2 : index
    %c0_88 = arith.constant 0 : index
    %62 = vector.load %arg8[%c0_85, %c2_86, %c2_87, %c0_88] : memref<2x18x18x32xbf16, #tpu.memory_space<vmem>>, vector<2x16x16x32xbf16>
    %63 = vector.shape_cast %62 : vector<2x16x16x32xbf16> to vector<512x32xbf16>
    %c0_89 = arith.constant 0 : index
    %c256 = arith.constant 256 : index
    %64 = vector.load %arg9[%c0_89, %c256] : memref<512x288xbf16, #tpu.memory_space<vmem>>, vector<512x32xbf16>
    tpu.vector_store %arg9[%c0_89, %c256], %63 {strides = array<i32>} : memref<512x288xbf16, #tpu.memory_space<vmem>>, vector<512x32xbf16>,
    %c0_90 = arith.constant 0 : index
    %c0_91 = arith.constant 0 : index
    %65 = vector.load %arg9[%c0_90, %c0_91] : memref<512x288xbf16, #tpu.memory_space<vmem>>, vector<512x288xbf16>
    %c0_92 = arith.constant 0 : index
    %c0_93 = arith.constant 0 : index
    %66 = vector.load %arg4[%c0_92, %c0_93] : memref<288x32xbf16, #tpu.memory_space<vmem>>, vector<288x32xbf16>
    %cst_94 = arith.constant dense<0.000000e+00> : vector<512x32xf32>
    %67 = tpu.matmul %65, %66, %cst_94 {dimension_numbers = #tpu.dot_dimension_numbers<[1], [0], [0], [1], [0, 0, 1, 1], [], []>} : vector<512x288xbf16>, vector<288x32xbf16>, vector<512x32xf32> -> vector<512x32xf32>
    %c0_95 = arith.constant 0 : index
    %c0_96 = arith.constant 0 : index
    %68 = vector.load %arg5[%c0_95, %c0_96] : memref<1x32xf32, #tpu.memory_space<vmem>>, vector<1x32xf32>
    %69 = vector.broadcast %68 : vector<1x32xf32> to vector<512x32xf32>
    %70 = arith.addf %67, %69 : vector<512x32xf32>
    %cst_97 = arith.constant 0.000000e+00 : f32
    %71 = vector.broadcast %cst_97 : f32 to vector<512x32xf32>
    %72 = arith.maximumf %70, %71 : vector<512x32xf32>
    %73 = vector.shape_cast %72 : vector<512x32xf32> to vector<2x16x16x32xf32>
    %74 = vector.shape_cast %73 : vector<2x16x16x32xf32> to vector<2x8x2x16x32xf32>
    %cst_98 = arith.constant dense<0xFF800000> : vector<2x8x16x32xf32>
    %75 = vector.multi_reduction <maximumf>, %74, %cst_98 [2] : vector<2x8x2x16x32xf32> to vector<2x8x16x32xf32>
    %76 = vector.shape_cast %75 : vector<2x8x16x32xf32> to vector<2x8x8x2x32xf32>
    %cst_99 = arith.constant dense<0xFF800000> : vector<2x8x8x32xf32>
    %77 = vector.multi_reduction <maximumf>, %76, %cst_99 [3] : vector<2x8x8x2x32xf32> to vector<2x8x8x32xf32>
    %78 = vector.shape_cast %77 : vector<2x8x8x32xf32> to vector<2x8x256xf32>
    %c0_100 = arith.constant 0 : index
    %c0_101 = arith.constant 0 : index
    %c0_102 = arith.constant 0 : index
    %79 = vector.load %arg6[%c0_100, %c0_101, %c0_102] : memref<2x8x256xf32, #tpu.memory_space<vmem>>, vector<2x8x256xf32>
    tpu.vector_store %arg6[%c0_100, %c0_101, %c0_102], %78 {strides = array<i32>} : memref<2x8x256xf32, #tpu.memory_space<vmem>>, vector<2x8x256xf32>,
    return
  }
  func.func @transform_0(%arg0: i32) -> (i32, i32, i32, i32) {
    %c0_i32 = arith.constant 0 : i32
    %c0_i32_0 = arith.constant 0 : i32
    %c0_i32_1 = arith.constant 0 : i32
    %c0_i32_2 = arith.constant 0 : i32
    return %arg0, %c0_i32, %c0_i32_0, %c0_i32_1 : i32, i32, i32, i32
  }
  func.func @transform_1(%arg0: i32) -> (i32, i32) {
    %c0_i32 = arith.constant 0 : i32
    %c0_i32_0 = arith.constant 0 : i32
    %c0_i32_1 = arith.constant 0 : i32
    return %c0_i32, %c0_i32_0 : i32, i32
  }
  func.func @transform_2(%arg0: i32) -> (i32, i32) {
    %c0_i32 = arith.constant 0 : i32
    %c0_i32_0 = arith.constant 0 : i32
    %c0_i32_1 = arith.constant 0 : i32
    return %c0_i32, %c0_i32_0 : i32, i32
  }
  func.func @transform_3(%arg0: i32) -> (i32, i32) {
    %c0_i32 = arith.constant 0 : i32
    %c0_i32_0 = arith.constant 0 : i32
    %c0_i32_1 = arith.constant 0 : i32
    return %c0_i32, %c0_i32_0 : i32, i32
  }
  func.func @transform_4(%arg0: i32) -> (i32, i32) {
    %c0_i32 = arith.constant 0 : i32
    %c0_i32_0 = arith.constant 0 : i32
    %c0_i32_1 = arith.constant 0 : i32
    return %c0_i32, %c0_i32_0 : i32, i32
  }
  func.func @transform_5(%arg0: i32) -> (i32, i32, i32) {
    %c0_i32 = arith.constant 0 : i32
    %c0_i32_0 = arith.constant 0 : i32
    %c0_i32_1 = arith.constant 0 : i32
    return %arg0, %c0_i32, %c0_i32_0 : i32, i32, i32
  }
}

</mosaic_0001>

<llo_original>
// kernel: down_conv.1
$region0: #{down_conv.1}
  #allocation0 [shape = 'u32[]', space=smem, size = 0x4, offset = 0x4, fixed_abs, tag = 'smem constant byte address 0x4 - core index']
  #allocation1 [shape = 'u32[144,128]{1,0:T(1,128)}', space=vmem, size = 0x12000, scoped, tag = 'internal scratch']
  #allocation2 [shape = 'f32[2,18,18,32]{3,2,1,0:T(8,128)}', space=vmem, size = 0x6c000, scoped, tag = 'scratch operand']
  #allocation3 [shape = 'bf16[2,18,18,32]{3,2,1,0:T(8,128)(2,1)}', space=vmem, size = 0x36000, scoped, tag = 'scratch operand']
  #allocation4 [shape = 'bf16[512,288]{1,0:T(16,128)(2,1)}', space=vmem, size = 0x60000, scoped, tag = 'scratch operand']
  %s0 = inlined_call_operand.hbm [shape: f32[2,16,16,1], index: 0, kind: input, shape index: {}]
  %s1 = inlined_call_operand.hbm [shape: f32[9,32], index: 1, kind: input, shape index: {}]
  %s2 = inlined_call_operand.hbm [shape: f32[1,32], index: 2, kind: input, shape index: {}]
  %s3 = inlined_call_operand.hbm [shape: bf16[288,32], index: 3, kind: input, shape index: {}]
  %s4 = inlined_call_operand.hbm [shape: f32[1,32], index: 4, kind: input, shape index: {}]
  %s5 = inlined_call_operand.hbm [shape: f32[2,8,256], index: 5, kind: output, shape index: {}]
  %s6 = sld [smem:[#allocation0]]
  $region57: #{down_conv.1} parent=0
    _
  %s8 = ssub.s32 1, %s6
  %s9 = scalar_select 0, %s8, %s6
  $region1: #{down_conv.1} parent=0
    #allocation5 [shape = 'u8[262144]{0}', space=vmem, size = 0x40000, scoped, tag = 'input window, operand 0, single buffered']
    #allocation6 [shape = 's32[1]{0}', space=sflag, size = 0x4, scoped, tag = 'scoped memory for down_conv.1']
    #allocation7 [shape = 's32[1]{0}', space=sflag, size = 0x4, scoped, tag = 'scoped memory for down_conv.1']
    #allocation8 [shape = 'u8[8192]{0}', space=vmem, size = 0x2000, scoped, tag = 'input window, operand 1, single buffered']
    #allocation9 [shape = 's32[1]{0}', space=sflag, size = 0x4, scoped, tag = 'scoped memory for down_conv.1']
    #allocation10 [shape = 'u8[512]{0}', space=vmem, size = 0x400, scoped, tag = 'input window, operand 2, single buffered']
    #allocation11 [shape = 'u8[73728]{0}', space=vmem, size = 0x12000, scoped, tag = 'input window, operand 3, single buffered']
    #allocation12 [shape = 's32[1]{0}', space=sflag, size = 0x4, scoped, tag = 'scoped memory for down_conv.1']
    #allocation13 [shape = 'u8[512]{0}', space=vmem, size = 0x400, scoped, tag = 'input window, operand 4, single buffered']
    #allocation14 [shape = 'u8[16384]{0}', space=vmem, size = 0x4000, scoped, tag = 'output window, operand 0, single buffered']
    %10 = vsyncpa [#allocation6], 0
    %11 = vsyncpa [#allocation9], 0
    %12 = vsyncpa [#allocation12], 0
    %13 = vsyncpa [#allocation7], 0
    // Predicated region
    $region2: #{down_conv.1} parent=1 // pred_check
      _
    $region3: #{down_conv.1} parent=1 // pred_check_branch
      %15 = sbr.rel (0) target = $region5
    $region4: #{down_conv.1} parent=1 // pred_region
      %s17 = ssub.s32 8192, 8192
      %18 = vsyncadd [#allocation6], %s17
      %s19 = sshll.u32 [#allocation5], 4
      %s20 = int_to_ptr.vmem [resolvable:$true] %s19
      %25 = dma.hbm_to_vmem [thread:$0]  %s0, 8192, %s20, [#allocation6], 128, 128, 8
    $region5: #{down_conv.1} parent=1 // pred_fallthru
      _
    // Predicated region
    $region6: #{down_conv.1} parent=1 // pred_check
      _
    $region7: #{down_conv.1} parent=1 // pred_check_branch
      %27 = sbr.rel (0) target = $region9
    $region8: #{down_conv.1} parent=1 // pred_region
      %s29 = ssub.s32 256, 256
      %30 = vsyncadd [#allocation9], %s29
      %s31 = sshll.u32 [#allocation8], 4
      %s32 = int_to_ptr.vmem [resolvable:$true] %s31
      %37 = dma.hbm_to_vmem [thread:$0]  %s1, 256, %s32, [#allocation9], 128, 128, 8
    $region9: #{down_conv.1} parent=1 // pred_fallthru
      _
    // Predicated region
    $region10: #{down_conv.1} parent=1 // pred_check
      _
    $region11: #{down_conv.1} parent=1 // pred_check_branch
      %39 = sbr.rel (0) target = $region13
    $region12: #{down_conv.1} parent=1 // pred_region
      %s41 = ssub.s32 16, 16
      %42 = vsyncadd [#allocation9], %s41
      %s44 = sshll.u32 [#allocation10], 4
      %s45 = int_to_ptr.vmem [resolvable:$true] %s44
      %47 = dma.hbm_to_vmem [thread:$0]  %s2, 16, %s45, [#allocation9]
    $region13: #{down_conv.1} parent=1 // pred_fallthru
      _
    // Predicated region
    $region14: #{down_conv.1} parent=1 // pred_check
      _
    $region15: #{down_conv.1} parent=1 // pred_check_branch
      %49 = sbr.rel (0) target = $region17
    $region16: #{down_conv.1} parent=1 // pred_region
      %s51 = ssub.s32 2304, 2304
      %52 = vsyncadd [#allocation12], %s51
      %s53 = sshll.u32 [#allocation11], 4
      %s54 = int_to_ptr.vmem [resolvable:$true] %s53
      %59 = dma.hbm_to_vmem [thread:$0]  %s3, 2304, %s54, [#allocation12], 64, 64, 4
    $region17: #{down_conv.1} parent=1 // pred_fallthru
      _
    // Predicated region
    $region18: #{down_conv.1} parent=1 // pred_check
      _
    $region19: #{down_conv.1} parent=1 // pred_check_branch
      %61 = sbr.rel (0) target = $region21
    $region20: #{down_conv.1} parent=1 // pred_region
      %s63 = ssub.s32 16, 16
      %64 = vsyncadd [#allocation12], %s63
      %s66 = sshll.u32 [#allocation13], 4
      %s67 = int_to_ptr.vmem [resolvable:$true] %s66
      %69 = dma.hbm_to_vmem [thread:$0]  %s4, 16, %s67, [#allocation12]
    $region21: #{down_conv.1} parent=1 // pred_fallthru
      _
    // Predicated region
    $region22: #{down_conv.1} parent=1 // pred_check
      _
    $region23: #{down_conv.1} parent=1 // pred_check_branch
      %71 = sbr.rel (0) target = $region25
    $region24: #{down_conv.1} parent=1 // pred_region
      %72 = dma.done [#allocation6], 8192
    $region25: #{down_conv.1} parent=1 // pred_fallthru
      _
    // Predicated region
    $region26: #{down_conv.1} parent=1 // pred_check
      _
    $region27: #{down_conv.1} parent=1 // pred_check_branch
      %74 = sbr.rel (0) target = $region29
    $region28: #{down_conv.1} parent=1 // pred_region
      %75 = dma.done [#allocation9], 256
    $region29: #{down_conv.1} parent=1 // pred_fallthru
      _
    // Predicated region
    $region30: #{down_conv.1} parent=1 // pred_check
      _
    $region31: #{down_conv.1} parent=1 // pred_check_branch
      %77 = sbr.rel (0) target = $region33
    $region32: #{down_conv.1} parent=1 // pred_region
      %78 = dma.done [#allocation9], 16
    $region33: #{down_conv.1} parent=1 // pred_fallthru
      _
    // Predicated region
    $region34: #{down_conv.1} parent=1 // pred_check
      _
    $region35: #{down_conv.1} parent=1 // pred_check_branch
      %80 = sbr.rel (0) target = $region37
    $region36: #{down_conv.1} parent=1 // pred_region
      %81 = dma.done [#allocation12], 2304
    $region37: #{down_conv.1} parent=1 // pred_fallthru
      _
    // Predicated region
    $region38: #{down_conv.1} parent=1 // pred_check
      _
    $region39: #{down_conv.1} parent=1 // pred_check_branch
      %83 = sbr.rel (0) target = $region41
    $region40: #{down_conv.1} parent=1 // pred_region
      %84 = dma.done [#allocation12], 16
    $region41: #{down_conv.1} parent=1 // pred_fallthru
      _
    %vm86 = vcmask 261120
    %87 = vst.msk [vmem:[#allocation2] sm:$0xff] %vm86, 0.0
    %88 = vst.msk [vmem:[#allocation2 + $0x8] sm:$0xff] %vm86, 0.0
    %vm89 = vcmask 254976
    %90 = vst.msk [vmem:[#allocation2 + $0x10] sm:$0x3] %vm89, 0.0
    %91 = vst.msk [vmem:[#allocation2 + $0x1b0] sm:$0xff] %vm86, 0.0
    %92 = vst.msk [vmem:[#allocation2 + $0x1b8] sm:$0xff] %vm86, 0.0
    %93 = vst.msk [vmem:[#allocation2 + $0x1c0] sm:$0x3] %vm89, 0.0
    %s94 = scalar_lea.vmem [#allocation2], 408
    %95 = vst.msk [vmem:[%s94] sm:$0xff] %vm86, 0.0
    %96 = vst.msk [vmem:[%s94 + $0x8] sm:$0xff] %vm86, 0.0
    %97 = vst.msk [vmem:[%s94 + $0x10] sm:$0x3] %vm89, 0.0
    %98 = vst.msk [vmem:[%s94 + $0x1b0] sm:$0xff] %vm86, 0.0
    %99 = vst.msk [vmem:[%s94 + $0x1b8] sm:$0xff] %vm86, 0.0
    %100 = vst.msk [vmem:[%s94 + $0x1c0] sm:$0x3] %vm89, 0.0
    %vm101 = vcmask 253952
    %102 = vst.msk [vmem:[#allocation2] sm:$0x1] %vm101, 0.0
    %103 = vst.msk [vmem:[#allocation2 + $0x18] sm:$0x1] %vm101, 0.0
    %104 = vst.msk [vmem:[#allocation2 + $0x30] sm:$0x1] %vm101, 0.0
    %105 = vst.msk [vmem:[#allocation2 + $0x48] sm:$0x1] %vm101, 0.0
    %106 = vst.msk [vmem:[#allocation2 + $0x60] sm:$0x1] %vm101, 0.0
    %107 = vst.msk [vmem:[#allocation2 + $0x78] sm:$0x1] %vm101, 0.0
    %108 = vst.msk [vmem:[#allocation2 + $0x90] sm:$0x1] %vm101, 0.0
    %109 = vst.msk [vmem:[#allocation2 + $0xa8] sm:$0x1] %vm101, 0.0
    %110 = vst.msk [vmem:[#allocation2 + $0xc0] sm:$0x1] %vm101, 0.0
    %111 = vst.msk [vmem:[#allocation2 + $0xd8] sm:$0x1] %vm101, 0.0
    %112 = vst.msk [vmem:[#allocation2 + $0xf0] sm:$0x1] %vm101, 0.0
    %113 = vst.msk [vmem:[#allocation2 + $0x108] sm:$0x1] %vm101, 0.0
    %114 = vst.msk [vmem:[#allocation2 + $0x120] sm:$0x1] %vm101, 0.0
    %115 = vst.msk [vmem:[#allocation2 + $0x138] sm:$0x1] %vm101, 0.0
    %116 = vst.msk [vmem:[#allocation2 + $0x150] sm:$0x1] %vm101, 0.0
    %117 = vst.msk [vmem:[#allocation2 + $0x168] sm:$0x1] %vm101, 0.0
    %118 = vst.msk [vmem:[#allocation2 + $0x180] sm:$0x1] %vm101, 0.0
    %119 = vst.msk [vmem:[#allocation2 + $0x198] sm:$0x1] %vm101, 0.0
    %120 = vst.msk [vmem:[#allocation2 + $0x1b0] sm:$0x1] %vm101, 0.0
    %121 = vst.msk [vmem:[#allocation2 + $0x1c8] sm:$0x1] %vm101, 0.0
    %122 = vst.msk [vmem:[#allocation2 + $0x1e0] sm:$0x1] %vm101, 0.0
    %123 = vst.msk [vmem:[#allocation2 + $0x1f8] sm:$0x1] %vm101, 0.0
    %124 = vst.msk [vmem:[#allocation2 + $0x210] sm:$0x1] %vm101, 0.0
    %125 = vst.msk [vmem:[#allocation2 + $0x228] sm:$0x1] %vm101, 0.0
    %126 = vst.msk [vmem:[#allocation2 + $0x240] sm:$0x1] %vm101, 0.0
    %127 = vst.msk [vmem:[#allocation2 + $0x258] sm:$0x1] %vm101, 0.0
    %128 = vst.msk [vmem:[#allocation2 + $0x270] sm:$0x1] %vm101, 0.0
    %129 = vst.msk [vmem:[#allocation2 + $0x288] sm:$0x1] %vm101, 0.0
    %130 = vst.msk [vmem:[#allocation2 + $0x2a0] sm:$0x1] %vm101, 0.0
    %131 = vst.msk [vmem:[#allocation2 + $0x2b8] sm:$0x1] %vm101, 0.0
    %132 = vst.msk [vmem:[#allocation2 + $0x2d0] sm:$0x1] %vm101, 0.0
    %133 = vst.msk [vmem:[#allocation2 + $0x2e8] sm:$0x1] %vm101, 0.0
    %134 = vst.msk [vmem:[#allocation2 + $0x300] sm:$0x1] %vm101, 0.0
    %135 = vst.msk [vmem:[#allocation2 + $0x318] sm:$0x1] %vm101, 0.0
    %136 = vst.msk [vmem:[#allocation2 + $0x330] sm:$0x1] %vm101, 0.0
    %137 = vst.msk [vmem:[#allocation2 + $0x348] sm:$0x1] %vm101, 0.0
    %138 = vst.msk [vmem:[#allocation2 + $0x11] sm:$0x1] %vm101, 0.0
    %139 = vst.msk [vmem:[#allocation2 + $0x29] sm:$0x1] %vm101, 0.0
    %140 = vst.msk [vmem:[#allocation2 + $0x41] sm:$0x1] %vm101, 0.0
    %141 = vst.msk [vmem:[#allocation2 + $0x59] sm:$0x1] %vm101, 0.0
    %142 = vst.msk [vmem:[#allocation2 + $0x71] sm:$0x1] %vm101, 0.0
    %143 = vst.msk [vmem:[#allocation2 + $0x89] sm:$0x1] %vm101, 0.0
    %144 = vst.msk [vmem:[#allocation2 + $0xa1] sm:$0x1] %vm101, 0.0
    %145 = vst.msk [vmem:[#allocation2 + $0xb9] sm:$0x1] %vm101, 0.0
    %146 = vst.msk [vmem:[#allocation2 + $0xd1] sm:$0x1] %vm101, 0.0
    %147 = vst.msk [vmem:[#allocation2 + $0xe9] sm:$0x1] %vm101, 0.0
    %148 = vst.msk [vmem:[#allocation2 + $0x101] sm:$0x1] %vm101, 0.0
    %149 = vst.msk [vmem:[#allocation2 + $0x119] sm:$0x1] %vm101, 0.0
    %150 = vst.msk [vmem:[#allocation2 + $0x131] sm:$0x1] %vm101, 0.0
    %151 = vst.msk [vmem:[#allocation2 + $0x149] sm:$0x1] %vm101, 0.0
    %152 = vst.msk [vmem:[#allocation2 + $0x161] sm:$0x1] %vm101, 0.0
    %153 = vst.msk [vmem:[#allocation2 + $0x179] sm:$0x1] %vm101, 0.0
    %154 = vst.msk [vmem:[#allocation2 + $0x191] sm:$0x1] %vm101, 0.0
    %155 = vst.msk [vmem:[#allocation2 + $0x1a9] sm:$0x1] %vm101, 0.0
    %156 = vst.msk [vmem:[#allocation2 + $0x1c1] sm:$0x1] %vm101, 0.0
    %157 = vst.msk [vmem:[#allocation2 + $0x1d9] sm:$0x1] %vm101, 0.0
    %158 = vst.msk [vmem:[#allocation2 + $0x1f1] sm:$0x1] %vm101, 0.0
    %159 = vst.msk [vmem:[#allocation2 + $0x209] sm:$0x1] %vm101, 0.0
    %160 = vst.msk [vmem:[#allocation2 + $0x221] sm:$0x1] %vm101, 0.0
    %161 = vst.msk [vmem:[#allocation2 + $0x239] sm:$0x1] %vm101, 0.0
    %162 = vst.msk [vmem:[#allocation2 + $0x251] sm:$0x1] %vm101, 0.0
    %163 = vst.msk [vmem:[#allocation2 + $0x269] sm:$0x1] %vm101, 0.0
    %164 = vst.msk [vmem:[#allocation2 + $0x281] sm:$0x1] %vm101, 0.0
    %165 = vst.msk [vmem:[#allocation2 + $0x299] sm:$0x1] %vm101, 0.0
    %166 = vst.msk [vmem:[#allocation2 + $0x2b1] sm:$0x1] %vm101, 0.0
    %167 = vst.msk [vmem:[#allocation2 + $0x2c9] sm:$0x1] %vm101, 0.0
    %168 = vst.msk [vmem:[#allocation2 + $0x2e1] sm:$0x1] %vm101, 0.0
    %169 = vst.msk [vmem:[#allocation2 + $0x2f9] sm:$0x1] %vm101, 0.0
    %170 = vst.msk [vmem:[#allocation2 + $0x311] sm:$0x1] %vm101, 0.0
    %171 = vst.msk [vmem:[#allocation2 + $0x329] sm:$0x1] %vm101, 0.0
    %172 = vst.msk [vmem:[#allocation2 + $0x341] sm:$0x1] %vm101, 0.0
    %173 = vst.msk [vmem:[#allocation2 + $0x359] sm:$0x1] %vm101, 0.0
    %vm174 = vcmask 257024
    %175 = vst.msk [vmem:[#allocation3] sm:$0xf] %vm174, 0
    %176 = vst.msk [vmem:[#allocation3 + $0x4] sm:$0xf] %vm174, 0
    %177 = vst.msk [vmem:[#allocation3 + $0x8] sm:$0x1] %vm101, 0
    %178 = vst.msk [vmem:[#allocation3 + $0xd8] sm:$0xf] %vm174, 0
    %179 = vst.msk [vmem:[#allocation3 + $0xdc] sm:$0xf] %vm174, 0
    %180 = vst.msk [vmem:[#allocation3 + $0xe0] sm:$0x1] %vm101, 0
    %s181 = scalar_lea.vmem [#allocation3], 204
    %182 = vst.msk [vmem:[%s181] sm:$0xf] %vm174, 0
    %183 = vst.msk [vmem:[%s181 + $0x4] sm:$0xf] %vm174, 0
    %184 = vst.msk [vmem:[%s181 + $0x8] sm:$0x1] %vm101, 0
    %185 = vst.msk [vmem:[%s181 + $0xd8] sm:$0xf] %vm174, 0
    %186 = vst.msk [vmem:[%s181 + $0xdc] sm:$0xf] %vm174, 0
    %187 = vst.msk [vmem:[%s181 + $0xe0] sm:$0x1] %vm101, 0
    %vm188 = vcmask 253952
    %vm189 = vsmask.f32 256
    %vm190 = vmand %vm188, %vm189
    %v191 = vld [vmem:[#allocation3] sm:$0x1]
    %v192 = vsel %vm190, 0, %v191
    %193 = vst [vmem:[#allocation3] sm:$0x1] %v192
    %v194 = vld [vmem:[#allocation3 + $0xc] sm:$0x1]
    %v195 = vsel %vm190, 0, %v194
    %196 = vst [vmem:[#allocation3 + $0xc] sm:$0x1] %v195
    %v197 = vld [vmem:[#allocation3 + $0x18] sm:$0x1]
    %v198 = vsel %vm190, 0, %v197
    %199 = vst [vmem:[#allocation3 + $0x18] sm:$0x1] %v198
    %v200 = vld [vmem:[#allocation3 + $0x24] sm:$0x1]
    %v201 = vsel %vm190, 0, %v200
    %202 = vst [vmem:[#allocation3 + $0x24] sm:$0x1] %v201
    %v203 = vld [vmem:[#allocation3 + $0x30] sm:$0x1]
    %v204 = vsel %vm190, 0, %v203
    %205 = vst [vmem:[#allocation3 + $0x30] sm:$0x1] %v204
    %v206 = vld [vmem:[#allocation3 + $0x3c] sm:$0x1]
    %v207 = vsel %vm190, 0, %v206
    %208 = vst [vmem:[#allocation3 + $0x3c] sm:$0x1] %v207
    %v209 = vld [vmem:[#allocation3 + $0x48] sm:$0x1]
    %v210 = vsel %vm190, 0, %v209
    %211 = vst [vmem:[#allocation3 + $0x48] sm:$0x1] %v210
    %v212 = vld [vmem:[#allocation3 + $0x54] sm:$0x1]
    %v213 = vsel %vm190, 0, %v212
    %214 = vst [vmem:[#allocation3 + $0x54] sm:$0x1] %v213
    %v215 = vld [vmem:[#allocation3 + $0x60] sm:$0x1]
    %v216 = vsel %vm190, 0, %v215
    %217 = vst [vmem:[#allocation3 + $0x60] sm:$0x1] %v216
    %v218 = vld [vmem:[#allocation3 + $0x6c] sm:$0x1]
    %v219 = vsel %vm190, 0, %v218
    %220 = vst [vmem:[#allocation3 + $0x6c] sm:$0x1] %v219
    %v221 = vld [vmem:[#allocation3 + $0x78] sm:$0x1]
    %v222 = vsel %vm190, 0, %v221
    %223 = vst [vmem:[#allocation3 + $0x78] sm:$0x1] %v222
    %v224 = vld [vmem:[#allocation3 + $0x84] sm:$0x1]
    %v225 = vsel %vm190, 0, %v224
    %226 = vst [vmem:[#allocation3 + $0x84] sm:$0x1] %v225
    %v227 = vld [vmem:[#allocation3 + $0x90] sm:$0x1]
    %v228 = vsel %vm190, 0, %v227
    %229 = vst [vmem:[#allocation3 + $0x90] sm:$0x1] %v228
    %v230 = vld [vmem:[#allocation3 + $0x9c] sm:$0x1]
    %v231 = vsel %vm190, 0, %v230
    %232 = vst [vmem:[#allocation3 + $0x9c] sm:$0x1] %v231
    %v233 = vld [vmem:[#allocation3 + $0xa8] sm:$0x1]
    %v234 = vsel %vm190, 0, %v233
    %235 = vst [vmem:[#allocation3 + $0xa8] sm:$0x1] %v234
    %v236 = vld [vmem:[#allocation3 + $0xb4] sm:$0x1]
    %v237 = vsel %vm190, 0, %v236
    %238 = vst [vmem:[#allocation3 + $0xb4] sm:$0x1] %v237
    %v239 = vld [vmem:[#allocation3 + $0xc0] sm:$0x1]
    %v240 = vsel %vm190, 0, %v239
    %241 = vst [vmem:[#allocation3 + $0xc0] sm:$0x1] %v240
    %v242 = vld [vmem:[#allocation3 + $0xcc] sm:$0x1]
    %v243 = vsel %vm190, 0, %v242
    %244 = vst [vmem:[#allocation3 + $0xcc] sm:$0x1] %v243
    %v245 = vld [vmem:[#allocation3 + $0xd8] sm:$0x1]
    %v246 = vsel %vm190, 0, %v245
    %247 = vst [vmem:[#allocation3 + $0xd8] sm:$0x1] %v246
    %v248 = vld [vmem:[#allocation3 + $0xe4] sm:$0x1]
    %v249 = vsel %vm190, 0, %v248
    %250 = vst [vmem:[#allocation3 + $0xe4] sm:$0x1] %v249
    %v251 = vld [vmem:[#allocation3 + $0xf0] sm:$0x1]
    %v252 = vsel %vm190, 0, %v251
    %253 = vst [vmem:[#allocation3 + $0xf0] sm:$0x1] %v252
    %v254 = vld [vmem:[#allocation3 + $0xfc] sm:$0x1]
    %v255 = vsel %vm190, 0, %v254
    %256 = vst [vmem:[#allocation3 + $0xfc] sm:$0x1] %v255
    %v257 = vld [vmem:[#allocation3 + $0x108] sm:$0x1]
    %v258 = vsel %vm190, 0, %v257
    %259 = vst [vmem:[#allocation3 + $0x108] sm:$0x1] %v258
    %v260 = vld [vmem:[#allocation3 + $0x114] sm:$0x1]
    %v261 = vsel %vm190, 0, %v260
    %262 = vst [vmem:[#allocation3 + $0x114] sm:$0x1] %v261
    %v263 = vld [vmem:[#allocation3 + $0x120] sm:$0x1]
    %v264 = vsel %vm190, 0, %v263
    %265 = vst [vmem:[#allocation3 + $0x120] sm:$0x1] %v264
    %v266 = vld [vmem:[#allocation3 + $0x12c] sm:$0x1]
    %v267 = vsel %vm190, 0, %v266
    %268 = vst [vmem:[#allocation3 + $0x12c] sm:$0x1] %v267
    %v269 = vld [vmem:[#allocation3 + $0x138] sm:$0x1]
    %v270 = vsel %vm190, 0, %v269
    %271 = vst [vmem:[#allocation3 + $0x138] sm:$0x1] %v270
    %v272 = vld [vmem:[#allocation3 + $0x144] sm:$0x1]
    %v273 = vsel %vm190, 0, %v272
    %274 = vst [vmem:[#allocation3 + $0x144] sm:$0x1] %v273
    %v275 = vld [vmem:[#allocation3 + $0x150] sm:$0x1]
    %v276 = vsel %vm190, 0, %v275
    %277 = vst [vmem:[#allocation3 + $0x150] sm:$0x1] %v276
    %v278 = vld [vmem:[#allocation3 + $0x15c] sm:$0x1]
    %v279 = vsel %vm190, 0, %v278
    %280 = vst [vmem:[#allocation3 + $0x15c] sm:$0x1] %v279
    %v281 = vld [vmem:[#allocation3 + $0x168] sm:$0x1]
    %v282 = vsel %vm190, 0, %v281
    %283 = vst [vmem:[#allocation3 + $0x168] sm:$0x1] %v282
    %v284 = vld [vmem:[#allocation3 + $0x174] sm:$0x1]
    %v285 = vsel %vm190, 0, %v284
    %286 = vst [vmem:[#allocation3 + $0x174] sm:$0x1] %v285
    %v287 = vld [vmem:[#allocation3 + $0x180] sm:$0x1]
    %v288 = vsel %vm190, 0, %v287
    %289 = vst [vmem:[#allocation3 + $0x180] sm:$0x1] %v288
    %v290 = vld [vmem:[#allocation3 + $0x18c] sm:$0x1]
    %v291 = vsel %vm190, 0, %v290
    %292 = vst [vmem:[#allocation3 + $0x18c] sm:$0x1] %v291
    %v293 = vld [vmem:[#allocation3 + $0x198] sm:$0x1]
    %v294 = vsel %vm190, 0, %v293
    %295 = vst [vmem:[#allocation3 + $0x198] sm:$0x1] %v294
    %v296 = vld [vmem:[#allocation3 + $0x1a4] sm:$0x1]
    %v297 = vsel %vm190, 0, %v296
    %298 = vst [vmem:[#allocation3 + $0x1a4] sm:$0x1] %v297
    %vm299 = vsmask.f32 7938
    %vm300 = vmand %vm188, %vm299
    %v301 = vld [vmem:[#allocation3 + $0x8] sm:$0x1]
    %v302 = vsel %vm300, 0, %v301
    %303 = vst [vmem:[#allocation3 + $0x8] sm:$0x1] %v302
    %v304 = vld [vmem:[#allocation3 + $0x14] sm:$0x1]
    %v305 = vsel %vm300, 0, %v304
    %306 = vst [vmem:[#allocation3 + $0x14] sm:$0x1] %v305
    %v307 = vld [vmem:[#allocation3 + $0x20] sm:$0x1]
    %v308 = vsel %vm300, 0, %v307
    %309 = vst [vmem:[#allocation3 + $0x20] sm:$0x1] %v308
    %v310 = vld [vmem:[#allocation3 + $0x2c] sm:$0x1]
    %v311 = vsel %vm300, 0, %v310
    %312 = vst [vmem:[#allocation3 + $0x2c] sm:$0x1] %v311
    %v313 = vld [vmem:[#allocation3 + $0x38] sm:$0x1]
    %v314 = vsel %vm300, 0, %v313
    %315 = vst [vmem:[#allocation3 + $0x38] sm:$0x1] %v314
    %v316 = vld [vmem:[#allocation3 + $0x44] sm:$0x1]
    %v317 = vsel %vm300, 0, %v316
    %318 = vst [vmem:[#allocation3 + $0x44] sm:$0x1] %v317
    %v319 = vld [vmem:[#allocation3 + $0x50] sm:$0x1]
    %v320 = vsel %vm300, 0, %v319
    %321 = vst [vmem:[#allocation3 + $0x50] sm:$0x1] %v320
    %v322 = vld [vmem:[#allocation3 + $0x5c] sm:$0x1]
    %v323 = vsel %vm300, 0, %v322
    %324 = vst [vmem:[#allocation3 + $0x5c] sm:$0x1] %v323
    %v325 = vld [vmem:[#allocation3 + $0x68] sm:$0x1]
    %v326 = vsel %vm300, 0, %v325
    %327 = vst [vmem:[#allocation3 + $0x68] sm:$0x1] %v326
    %v328 = vld [vmem:[#allocation3 + $0x74] sm:$0x1]
    %v329 = vsel %vm300, 0, %v328
    %330 = vst [vmem:[#allocation3 + $0x74] sm:$0x1] %v329
    %v331 = vld [vmem:[#allocation3 + $0x80] sm:$0x1]
    %v332 = vsel %vm300, 0, %v331
    %333 = vst [vmem:[#allocation3 + $0x80] sm:$0x1] %v332
    %v334 = vld [vmem:[#allocation3 + $0x8c] sm:$0x1]
    %v335 = vsel %vm300, 0, %v334
    %336 = vst [vmem:[#allocation3 + $0x8c] sm:$0x1] %v335
    %v337 = vld [vmem:[#allocation3 + $0x98] sm:$0x1]
    %v338 = vsel %vm300, 0, %v337
    %339 = vst [vmem:[#allocation3 + $0x98] sm:$0x1] %v338
    %v340 = vld [vmem:[#allocation3 + $0xa4] sm:$0x1]
    %v341 = vsel %vm300, 0, %v340
    %342 = vst [vmem:[#allocation3 + $0xa4] sm:$0x1] %v341
    %v343 = vld [vmem:[#allocation3 + $0xb0] sm:$0x1]
    %v344 = vsel %vm300, 0, %v343
    %345 = vst [vmem:[#allocation3 + $0xb0] sm:$0x1] %v344
    %v346 = vld [vmem:[#allocation3 + $0xbc] sm:$0x1]
    %v347 = vsel %vm300, 0, %v346
    %348 = vst [vmem:[#allocation3 + $0xbc] sm:$0x1] %v347
    %v349 = vld [vmem:[#allocation3 + $0xc8] sm:$0x1]
    %v350 = vsel %vm300, 0, %v349
    %351 = vst [vmem:[#allocation3 + $0xc8] sm:$0x1] %v350
    %v352 = vld [vmem:[#allocation3 + $0xd4] sm:$0x1]
    %v353 = vsel %vm300, 0, %v352
    %354 = vst [vmem:[#allocation3 + $0xd4] sm:$0x1] %v353
    %v355 = vld [vmem:[#allocation3 + $0xe0] sm:$0x1]
    %v356 = vsel %vm300, 0, %v355
    %357 = vst [vmem:[#allocation3 + $0xe0] sm:$0x1] %v356
    %v358 = vld [vmem:[#allocation3 + $0xec] sm:$0x1]
    %v359 = vsel %vm300, 0, %v358
    %360 = vst [vmem:[#allocation3 + $0xec] sm:$0x1] %v359
    %v361 = vld [vmem:[#allocation3 + $0xf8] sm:$0x1]
    %v362 = vsel %vm300, 0, %v361
    %363 = vst [vmem:[#allocation3 + $0xf8] sm:$0x1] %v362
    %v364 = vld [vmem:[#allocation3 + $0x104] sm:$0x1]
    %v365 = vsel %vm300, 0, %v364
    %366 = vst [vmem:[#allocation3 + $0x104] sm:$0x1] %v365
    %v367 = vld [vmem:[#allocation3 + $0x110] sm:$0x1]
    %v368 = vsel %vm300, 0, %v367
    %369 = vst [vmem:[#allocation3 + $0x110] sm:$0x1] %v368
    %v370 = vld [vmem:[#allocation3 + $0x11c] sm:$0x1]
    %v371 = vsel %vm300, 0, %v370
    %372 = vst [vmem:[#allocation3 + $0x11c] sm:$0x1] %v371
    %v373 = vld [vmem:[#allocation3 + $0x128] sm:$0x1]
    %v374 = vsel %vm300, 0, %v373
    %375 = vst [vmem:[#allocation3 + $0x128] sm:$0x1] %v374
    %v376 = vld [vmem:[#allocation3 + $0x134] sm:$0x1]
    %v377 = vsel %vm300, 0, %v376
    %378 = vst [vmem:[#allocation3 + $0x134] sm:$0x1] %v377
    %v379 = vld [vmem:[#allocation3 + $0x140] sm:$0x1]
    %v380 = vsel %vm300, 0, %v379
    %381 = vst [vmem:[#allocation3 + $0x140] sm:$0x1] %v380
    %v382 = vld [vmem:[#allocation3 + $0x14c] sm:$0x1]
    %v383 = vsel %vm300, 0, %v382
    %384 = vst [vmem:[#allocation3 + $0x14c] sm:$0x1] %v383
    %v385 = vld [vmem:[#allocation3 + $0x158] sm:$0x1]
    %v386 = vsel %vm300, 0, %v385
    %387 = vst [vmem:[#allocation3 + $0x158] sm:$0x1] %v386
    %v388 = vld [vmem:[#allocation3 + $0x164] sm:$0x1]
    %v389 = vsel %vm300, 0, %v388
    %390 = vst [vmem:[#allocation3 + $0x164] sm:$0x1] %v389
    %v391 = vld [vmem:[#allocation3 + $0x170] sm:$0x1]
    %v392 = vsel %vm300, 0, %v391
    %393 = vst [vmem:[#allocation3 + $0x170] sm:$0x1] %v392
    %v394 = vld [vmem:[#allocation3 + $0x17c] sm:$0x1]
    %v395 = vsel %vm300, 0, %v394
    %396 = vst [vmem:[#allocation3 + $0x17c] sm:$0x1] %v395
    %v397 = vld [vmem:[#allocation3 + $0x188] sm:$0x1]
    %v398 = vsel %vm300, 0, %v397
    %399 = vst [vmem:[#allocation3 + $0x188] sm:$0x1] %v398
    %v400 = vld [vmem:[#allocation3 + $0x194] sm:$0x1]
    %v401 = vsel %vm300, 0, %v400
    %402 = vst [vmem:[#allocation3 + $0x194] sm:$0x1] %v401
    %v403 = vld [vmem:[#allocation3 + $0x1a0] sm:$0x1]
    %v404 = vsel %vm300, 0, %v403
    %405 = vst [vmem:[#allocation3 + $0x1a0] sm:$0x1] %v404
    %v406 = vld [vmem:[#allocation3 + $0x1ac] sm:$0x1]
    %v407 = vsel %vm300, 0, %v406
    %408 = vst [vmem:[#allocation3 + $0x1ac] sm:$0x1] %v407
    %v409 = vld [vmem:[#allocation5] sm:$0xff]
    %v410 = vld [vmem:[#allocation5 + $0x8] sm:$0xff]
    %v411 = vld [vmem:[#allocation5 + $0x10] sm:$0xff]
    %v412 = vld [vmem:[#allocation5 + $0x18] sm:$0xff]
    %v413 = vld [vmem:[#allocation5 + $0x20] sm:$0xff]
    %v414 = vld [vmem:[#allocation5 + $0x28] sm:$0xff]
    %v415 = vld [vmem:[#allocation5 + $0x30] sm:$0xff]
    %v416 = vld [vmem:[#allocation5 + $0x38] sm:$0xff]
    %v417 = vld [vmem:[#allocation5 + $0x40] sm:$0xff]
    %v418 = vld [vmem:[#allocation5 + $0x48] sm:$0xff]
    %v419 = vld [vmem:[#allocation5 + $0x50] sm:$0xff]
    %v420 = vld [vmem:[#allocation5 + $0x58] sm:$0xff]
    %v421 = vld [vmem:[#allocation5 + $0x60] sm:$0xff]
    %v422 = vld [vmem:[#allocation5 + $0x68] sm:$0xff]
    %v423 = vld [vmem:[#allocation5 + $0x70] sm:$0xff]
    %v424 = vld [vmem:[#allocation5 + $0x78] sm:$0xff]
    %v425 = vld [vmem:[#allocation5 + $0x80] sm:$0xff]
    %v426 = vld [vmem:[#allocation5 + $0x88] sm:$0xff]
    %v427 = vld [vmem:[#allocation5 + $0x90] sm:$0xff]
    %v428 = vld [vmem:[#allocation5 + $0x98] sm:$0xff]
    %v429 = vld [vmem:[#allocation5 + $0xa0] sm:$0xff]
    %v430 = vld [vmem:[#allocation5 + $0xa8] sm:$0xff]
    %v431 = vld [vmem:[#allocation5 + $0xb0] sm:$0xff]
    %v432 = vld [vmem:[#allocation5 + $0xb8] sm:$0xff]
    %v433 = vld [vmem:[#allocation5 + $0xc0] sm:$0xff]
    %v434 = vld [vmem:[#allocation5 + $0xc8] sm:$0xff]
    %v435 = vld [vmem:[#allocation5 + $0xd0] sm:$0xff]
    %v436 = vld [vmem:[#allocation5 + $0xd8] sm:$0xff]
    %v437 = vld [vmem:[#allocation5 + $0xe0] sm:$0xff]
    %v438 = vld [vmem:[#allocation5 + $0xe8] sm:$0xff]
    %v439 = vld [vmem:[#allocation5 + $0xf0] sm:$0xff]
    %v440 = vld [vmem:[#allocation5 + $0xf8] sm:$0xff]
    %v441 = vld [vmem:[#allocation5 + $0x100] sm:$0xff]
    %v442 = vld [vmem:[#allocation5 + $0x108] sm:$0xff]
    %v443 = vld [vmem:[#allocation5 + $0x110] sm:$0xff]
    %v444 = vld [vmem:[#allocation5 + $0x118] sm:$0xff]
    %v445 = vld [vmem:[#allocation5 + $0x120] sm:$0xff]
    %v446 = vld [vmem:[#allocation5 + $0x128] sm:$0xff]
    %v447 = vld [vmem:[#allocation5 + $0x130] sm:$0xff]
    %v448 = vld [vmem:[#allocation5 + $0x138] sm:$0xff]
    %v449 = vld [vmem:[#allocation5 + $0x140] sm:$0xff]
    %v450 = vld [vmem:[#allocation5 + $0x148] sm:$0xff]
    %v451 = vld [vmem:[#allocation5 + $0x150] sm:$0xff]
    %v452 = vld [vmem:[#allocation5 + $0x158] sm:$0xff]
    %v453 = vld [vmem:[#allocation5 + $0x160] sm:$0xff]
    %v454 = vld [vmem:[#allocation5 + $0x168] sm:$0xff]
    %v455 = vld [vmem:[#allocation5 + $0x170] sm:$0xff]
    %v456 = vld [vmem:[#allocation5 + $0x178] sm:$0xff]
    %v457 = vld [vmem:[#allocation5 + $0x180] sm:$0xff]
    %v458 = vld [vmem:[#allocation5 + $0x188] sm:$0xff]
    %v459 = vld [vmem:[#allocation5 + $0x190] sm:$0xff]
    %v460 = vld [vmem:[#allocation5 + $0x198] sm:$0xff]
    %v461 = vld [vmem:[#allocation5 + $0x1a0] sm:$0xff]
    %v462 = vld [vmem:[#allocation5 + $0x1a8] sm:$0xff]
    %v463 = vld [vmem:[#allocation5 + $0x1b0] sm:$0xff]
    %v464 = vld [vmem:[#allocation5 + $0x1b8] sm:$0xff]
    %v465 = vld [vmem:[#allocation5 + $0x1c0] sm:$0xff]
    %v466 = vld [vmem:[#allocation5 + $0x1c8] sm:$0xff]
    %v467 = vld [vmem:[#allocation5 + $0x1d0] sm:$0xff]
    %v468 = vld [vmem:[#allocation5 + $0x1d8] sm:$0xff]
    %v469 = vld [vmem:[#allocation5 + $0x1e0] sm:$0xff]
    %v470 = vld [vmem:[#allocation5 + $0x1e8] sm:$0xff]
    %v471 = vld [vmem:[#allocation5 + $0x1f0] sm:$0xff]
    %v472 = vld [vmem:[#allocation5 + $0x1f8] sm:$0xff]
    %474 = vset.pattern.permute.xlu0 0
    %475 = vperm.xlu0 %474, %v409
    %v476 = vpop.permute.xlu0 %475
    %479 = vset.pattern.permute.xlu0 0
    %480 = vperm.xlu0 %479, %v410
    %v481 = vpop.permute.xlu0 %480
    %484 = vset.pattern.permute.xlu0 0
    %485 = vperm.xlu0 %484, %v411
    %v486 = vpop.permute.xlu0 %485
    %489 = vset.pattern.permute.xlu0 0
    %490 = vperm.xlu0 %489, %v412
    %v491 = vpop.permute.xlu0 %490
    %494 = vset.pattern.permute.xlu0 0
    %495 = vperm.xlu0 %494, %v413
    %v496 = vpop.permute.xlu0 %495
    %499 = vset.pattern.permute.xlu0 0
    %500 = vperm.xlu0 %499, %v414
    %v501 = vpop.permute.xlu0 %500
    %504 = vset.pattern.permute.xlu0 0
    %505 = vperm.xlu0 %504, %v415
    %v506 = vpop.permute.xlu0 %505
    %509 = vset.pattern.permute.xlu0 0
    %510 = vperm.xlu0 %509, %v416
    %v511 = vpop.permute.xlu0 %510
    %514 = vset.pattern.permute.xlu0 0
    %515 = vperm.xlu0 %514, %v417
    %v516 = vpop.permute.xlu0 %515
    %519 = vset.pattern.permute.xlu0 0
    %520 = vperm.xlu0 %519, %v418
    %v521 = vpop.permute.xlu0 %520
    %524 = vset.pattern.permute.xlu0 0
    %525 = vperm.xlu0 %524, %v419
    %v526 = vpop.permute.xlu0 %525
    %529 = vset.pattern.permute.xlu0 0
    %530 = vperm.xlu0 %529, %v420
    %v531 = vpop.permute.xlu0 %530
    %534 = vset.pattern.permute.xlu0 0
    %535 = vperm.xlu0 %534, %v421
    %v536 = vpop.permute.xlu0 %535
    %539 = vset.pattern.permute.xlu0 0
    %540 = vperm.xlu0 %539, %v422
    %v541 = vpop.permute.xlu0 %540
    %544 = vset.pattern.permute.xlu0 0
    %545 = vperm.xlu0 %544, %v423
    %v546 = vpop.permute.xlu0 %545
    %549 = vset.pattern.permute.xlu0 0
    %550 = vperm.xlu0 %549, %v424
    %v551 = vpop.permute.xlu0 %550
    %554 = vset.pattern.permute.xlu0 0
    %555 = vperm.xlu0 %554, %v425
    %v556 = vpop.permute.xlu0 %555
    %559 = vset.pattern.permute.xlu0 0
    %560 = vperm.xlu0 %559, %v426
    %v561 = vpop.permute.xlu0 %560
    %564 = vset.pattern.permute.xlu0 0
    %565 = vperm.xlu0 %564, %v427
    %v566 = vpop.permute.xlu0 %565
    %569 = vset.pattern.permute.xlu0 0
    %570 = vperm.xlu0 %569, %v428
    %v571 = vpop.permute.xlu0 %570
    %574 = vset.pattern.permute.xlu0 0
    %575 = vperm.xlu0 %574, %v429
    %v576 = vpop.permute.xlu0 %575
    %579 = vset.pattern.permute.xlu0 0
    %580 = vperm.xlu0 %579, %v430
    %v581 = vpop.permute.xlu0 %580
    %584 = vset.pattern.permute.xlu0 0
    %585 = vperm.xlu0 %584, %v431
    %v586 = vpop.permute.xlu0 %585
    %589 = vset.pattern.permute.xlu0 0
    %590 = vperm.xlu0 %589, %v432
    %v591 = vpop.permute.xlu0 %590
    %594 = vset.pattern.permute.xlu0 0
    %595 = vperm.xlu0 %594, %v433
    %v596 = vpop.permute.xlu0 %595
    %599 = vset.pattern.permute.xlu0 0
    %600 = vperm.xlu0 %599, %v434
    %v601 = vpop.permute.xlu0 %600
    %604 = vset.pattern.permute.xlu0 0
    %605 = vperm.xlu0 %604, %v435
    %v606 = vpop.permute.xlu0 %605
    %609 = vset.pattern.permute.xlu0 0
    %610 = vperm.xlu0 %609, %v436
    %v611 = vpop.permute.xlu0 %610
    %614 = vset.pattern.permute.xlu0 0
    %615 = vperm.xlu0 %614, %v437
    %v616 = vpop.permute.xlu0 %615
    %619 = vset.pattern.permute.xlu0 0
    %620 = vperm.xlu0 %619, %v438
    %v621 = vpop.permute.xlu0 %620
    %624 = vset.pattern.permute.xlu0 0
    %625 = vperm.xlu0 %624, %v439
    %v626 = vpop.permute.xlu0 %625
    %629 = vset.pattern.permute.xlu0 0
    %630 = vperm.xlu0 %629, %v440
    %v631 = vpop.permute.xlu0 %630
    %634 = vset.pattern.permute.xlu0 0
    %635 = vperm.xlu0 %634, %v441
    %v636 = vpop.permute.xlu0 %635
    %639 = vset.pattern.permute.xlu0 0
    %640 = vperm.xlu0 %639, %v442
    %v641 = vpop.permute.xlu0 %640
    %644 = vset.pattern.permute.xlu0 0
    %645 = vperm.xlu0 %644, %v443
    %v646 = vpop.permute.xlu0 %645
    %649 = vset.pattern.permute.xlu0 0
    %650 = vperm.xlu0 %649, %v444
    %v651 = vpop.permute.xlu0 %650
    %654 = vset.pattern.permute.xlu0 0
    %655 = vperm.xlu0 %654, %v445
    %v656 = vpop.permute.xlu0 %655
    %659 = vset.pattern.permute.xlu0 0
    %660 = vperm.xlu0 %659, %v446
    %v661 = vpop.permute.xlu0 %660
    %664 = vset.pattern.permute.xlu0 0
    %665 = vperm.xlu0 %664, %v447
    %v666 = vpop.permute.xlu0 %665
    %669 = vset.pattern.permute.xlu0 0
    %670 = vperm.xlu0 %669, %v448
    %v671 = vpop.permute.xlu0 %670
    %674 = vset.pattern.permute.xlu0 0
    %675 = vperm.xlu0 %674, %v449
    %v676 = vpop.permute.xlu0 %675
    %679 = vset.pattern.permute.xlu0 0
    %680 = vperm.xlu0 %679, %v450
    %v681 = vpop.permute.xlu0 %680
    %684 = vset.pattern.permute.xlu0 0
    %685 = vperm.xlu0 %684, %v451
    %v686 = vpop.permute.xlu0 %685
    %689 = vset.pattern.permute.xlu0 0
    %690 = vperm.xlu0 %689, %v452
    %v691 = vpop.permute.xlu0 %690
    %694 = vset.pattern.permute.xlu0 0
    %695 = vperm.xlu0 %694, %v453
    %v696 = vpop.permute.xlu0 %695
    %699 = vset.pattern.permute.xlu0 0
    %700 = vperm.xlu0 %699, %v454
    %v701 = vpop.permute.xlu0 %700
    %704 = vset.pattern.permute.xlu0 0
    %705 = vperm.xlu0 %704, %v455
    %v706 = vpop.permute.xlu0 %705
    %709 = vset.pattern.permute.xlu0 0
    %710 = vperm.xlu0 %709, %v456
    %v711 = vpop.permute.xlu0 %710
    %714 = vset.pattern.permute.xlu0 0
    %715 = vperm.xlu0 %714, %v457
    %v716 = vpop.permute.xlu0 %715
    %719 = vset.pattern.permute.xlu0 0
    %720 = vperm.xlu0 %719, %v458
    %v721 = vpop.permute.xlu0 %720
    %724 = vset.pattern.permute.xlu0 0
    %725 = vperm.xlu0 %724, %v459
    %v726 = vpop.permute.xlu0 %725
    %729 = vset.pattern.permute.xlu0 0
    %730 = vperm.xlu0 %729, %v460
    %v731 = vpop.permute.xlu0 %730
    %734 = vset.pattern.permute.xlu0 0
    %735 = vperm.xlu0 %734, %v461
    %v736 = vpop.permute.xlu0 %735
    %739 = vset.pattern.permute.xlu0 0
    %740 = vperm.xlu0 %739, %v462
    %v741 = vpop.permute.xlu0 %740
    %744 = vset.pattern.permute.xlu0 0
    %745 = vperm.xlu0 %744, %v463
    %v746 = vpop.permute.xlu0 %745
    %749 = vset.pattern.permute.xlu0 0
    %750 = vperm.xlu0 %749, %v464
    %v751 = vpop.permute.xlu0 %750
    %754 = vset.pattern.permute.xlu0 0
    %755 = vperm.xlu0 %754, %v465
    %v756 = vpop.permute.xlu0 %755
    %759 = vset.pattern.permute.xlu0 0
    %760 = vperm.xlu0 %759, %v466
    %v761 = vpop.permute.xlu0 %760
    %764 = vset.pattern.permute.xlu0 0
    %765 = vperm.xlu0 %764, %v467
    %v766 = vpop.permute.xlu0 %765
    %769 = vset.pattern.permute.xlu0 0
    %770 = vperm.xlu0 %769, %v468
    %v771 = vpop.permute.xlu0 %770
    %774 = vset.pattern.permute.xlu0 0
    %775 = vperm.xlu0 %774, %v469
    %v776 = vpop.permute.xlu0 %775
    %779 = vset.pattern.permute.xlu0 0
    %780 = vperm.xlu0 %779, %v470
    %v781 = vpop.permute.xlu0 %780
    %784 = vset.pattern.permute.xlu0 0
    %785 = vperm.xlu0 %784, %v471
    %v786 = vpop.permute.xlu0 %785
    %789 = vset.pattern.permute.xlu0 0
    %790 = vperm.xlu0 %789, %v472
    %v791 = vpop.permute.xlu0 %790
    %s793 = scalar_lea.vmem [#allocation2], 24
    %794 = vst.msk [vmem:[%s793 + $0x1] sm:$0xff] %vm86, %v476
    %795 = vst.msk [vmem:[%s793 + $0x9] sm:$0xff] %vm86, %v481
    %796 = vst.msk [vmem:[%s793 + $0x19] sm:$0xff] %vm86, %v486
    %797 = vst.msk [vmem:[%s793 + $0x21] sm:$0xff] %vm86, %v491
    %798 = vst.msk [vmem:[%s793 + $0x31] sm:$0xff] %vm86, %v496
    %799 = vst.msk [vmem:[%s793 + $0x39] sm:$0xff] %vm86, %v501
    %800 = vst.msk [vmem:[%s793 + $0x49] sm:$0xff] %vm86, %v506
    %801 = vst.msk [vmem:[%s793 + $0x51] sm:$0xff] %vm86, %v511
    %802 = vst.msk [vmem:[%s793 + $0x61] sm:$0xff] %vm86, %v516
    %803 = vst.msk [vmem:[%s793 + $0x69] sm:$0xff] %vm86, %v521
    %804 = vst.msk [vmem:[%s793 + $0x79] sm:$0xff] %vm86, %v526
    %805 = vst.msk [vmem:[%s793 + $0x81] sm:$0xff] %vm86, %v531
    %806 = vst.msk [vmem:[%s793 + $0x91] sm:$0xff] %vm86, %v536
    %807 = vst.msk [vmem:[%s793 + $0x99] sm:$0xff] %vm86, %v541
    %808 = vst.msk [vmem:[%s793 + $0xa9] sm:$0xff] %vm86, %v546
    %809 = vst.msk [vmem:[%s793 + $0xb1] sm:$0xff] %vm86, %v551
    %810 = vst.msk [vmem:[%s793 + $0xc1] sm:$0xff] %vm86, %v556
    %811 = vst.msk [vmem:[%s793 + $0xc9] sm:$0xff] %vm86, %v561
    %812 = vst.msk [vmem:[%s793 + $0xd9] sm:$0xff] %vm86, %v566
    %813 = vst.msk [vmem:[%s793 + $0xe1] sm:$0xff] %vm86, %v571
    %814 = vst.msk [vmem:[%s793 + $0xf1] sm:$0xff] %vm86, %v576
    %815 = vst.msk [vmem:[%s793 + $0xf9] sm:$0xff] %vm86, %v581
    %816 = vst.msk [vmem:[%s793 + $0x109] sm:$0xff] %vm86, %v586
    %817 = vst.msk [vmem:[%s793 + $0x111] sm:$0xff] %vm86, %v591
    %818 = vst.msk [vmem:[%s793 + $0x121] sm:$0xff] %vm86, %v596
    %819 = vst.msk [vmem:[%s793 + $0x129] sm:$0xff] %vm86, %v601
    %820 = vst.msk [vmem:[%s793 + $0x139] sm:$0xff] %vm86, %v606
    %821 = vst.msk [vmem:[%s793 + $0x141] sm:$0xff] %vm86, %v611
    %822 = vst.msk [vmem:[%s793 + $0x151] sm:$0xff] %vm86, %v616
    %823 = vst.msk [vmem:[%s793 + $0x159] sm:$0xff] %vm86, %v621
    %824 = vst.msk [vmem:[%s793 + $0x169] sm:$0xff] %vm86, %v626
    %825 = vst.msk [vmem:[%s793 + $0x171] sm:$0xff] %vm86, %v631
    %826 = vst.msk [vmem:[%s793 + $0x1b1] sm:$0xff] %vm86, %v636
    %827 = vst.msk [vmem:[%s793 + $0x1b9] sm:$0xff] %vm86, %v641
    %828 = vst.msk [vmem:[%s793 + $0x1c9] sm:$0xff] %vm86, %v646
    %829 = vst.msk [vmem:[%s793 + $0x1d1] sm:$0xff] %vm86, %v651
    %830 = vst.msk [vmem:[%s793 + $0x1e1] sm:$0xff] %vm86, %v656
    %831 = vst.msk [vmem:[%s793 + $0x1e9] sm:$0xff] %vm86, %v661
    %832 = vst.msk [vmem:[%s793 + $0x1f9] sm:$0xff] %vm86, %v666
    %833 = vst.msk [vmem:[%s793 + $0x201] sm:$0xff] %vm86, %v671
    %834 = vst.msk [vmem:[%s793 + $0x211] sm:$0xff] %vm86, %v676
    %835 = vst.msk [vmem:[%s793 + $0x219] sm:$0xff] %vm86, %v681
    %836 = vst.msk [vmem:[%s793 + $0x229] sm:$0xff] %vm86, %v686
    %837 = vst.msk [vmem:[%s793 + $0x231] sm:$0xff] %vm86, %v691
    %838 = vst.msk [vmem:[%s793 + $0x241] sm:$0xff] %vm86, %v696
    %839 = vst.msk [vmem:[%s793 + $0x249] sm:$0xff] %vm86, %v701
    %840 = vst.msk [vmem:[%s793 + $0x259] sm:$0xff] %vm86, %v706
    %841 = vst.msk [vmem:[%s793 + $0x261] sm:$0xff] %vm86, %v711
    %842 = vst.msk [vmem:[%s793 + $0x271] sm:$0xff] %vm86, %v716
    %843 = vst.msk [vmem:[%s793 + $0x279] sm:$0xff] %vm86, %v721
    %844 = vst.msk [vmem:[%s793 + $0x289] sm:$0xff] %vm86, %v726
    %845 = vst.msk [vmem:[%s793 + $0x291] sm:$0xff] %vm86, %v731
    %846 = vst.msk [vmem:[%s793 + $0x2a1] sm:$0xff] %vm86, %v736
    %847 = vst.msk [vmem:[%s793 + $0x2a9] sm:$0xff] %vm86, %v741
    %848 = vst.msk [vmem:[%s793 + $0x2b9] sm:$0xff] %vm86, %v746
    %849 = vst.msk [vmem:[%s793 + $0x2c1] sm:$0xff] %vm86, %v751
    %850 = vst.msk [vmem:[%s793 + $0x2d1] sm:$0xff] %vm86, %v756
    %851 = vst.msk [vmem:[%s793 + $0x2d9] sm:$0xff] %vm86, %v761
    %852 = vst.msk [vmem:[%s793 + $0x2e9] sm:$0xff] %vm86, %v766
    %853 = vst.msk [vmem:[%s793 + $0x2f1] sm:$0xff] %vm86, %v771
    %854 = vst.msk [vmem:[%s793 + $0x301] sm:$0xff] %vm86, %v776
    %855 = vst.msk [vmem:[%s793 + $0x309] sm:$0xff] %vm86, %v781
    %856 = vst.msk [vmem:[%s793 + $0x319] sm:$0xff] %vm86, %v786
    %857 = vst.msk [vmem:[%s793 + $0x321] sm:$0xff] %vm86, %v791
    %v858 = vld [vmem:[#allocation8] sm:$0xff]
    %v859 = vld [vmem:[#allocation8 + $0x8] sm:$0x1]
    %v860 = vld [vmem:[#allocation10] sm:$0x1]
    loop: start=0, step=1, limit=16
    $region42: #{down_conv.1} parent=1 // loop_pre_header
      _
    $region43: #{down_conv.1} parent=1 // loop_header
      %s862 = sphi 0, %s866
      %p863 = scmp.ge.s32.totalorder %s862, 16
    $region44: #{down_conv.1} parent=1 // loop_header_branch
      %865 = sbr.rel (%p863) target = $region48
    $region45: #{down_conv.1} parent=1 // loop_body
      %s867 = smul.u32 %s862, 24
      %s868 = scalar_lea.vmem [#allocation2], %s867
      %v869 = vld [vmem:[%s868] sm:$0xff]
      %v870 = vld [vmem:[%s868 + $0x8] sm:$0xff]
      %v871 = vld [vmem:[%s868 + $0x10] sm:$0x3]
      %v872 = vld [vmem:[%s868 + $0x18] sm:$0xff]
      %v873 = vld [vmem:[%s868 + $0x20] sm:$0xff]
      %v874 = vld [vmem:[%s868 + $0x28] sm:$0x3]
      %v875 = vld [vmem:[%s868 + $0x30] sm:$0xff]
      %v876 = vld [vmem:[%s868 + $0x38] sm:$0xff]
      %v877 = vld [vmem:[%s868 + $0x40] sm:$0x3]
      %v878 = vld [vmem:[%s868 + $0x1b0] sm:$0xff]
      %v879 = vld [vmem:[%s868 + $0x1b8] sm:$0xff]
      %v880 = vld [vmem:[%s868 + $0x1c0] sm:$0x3]
      %v881 = vld [vmem:[%s868 + $0x1c8] sm:$0xff]
      %v882 = vld [vmem:[%s868 + $0x1d0] sm:$0xff]
      %v883 = vld [vmem:[%s868 + $0x1d8] sm:$0x3]
      %v884 = vld [vmem:[%s868 + $0x1e0] sm:$0xff]
      %v885 = vld [vmem:[%s868 + $0x1e8] sm:$0xff]
      %v886 = vld [vmem:[%s868 + $0x1f0] sm:$0x3]
      %v887 = vlaneseq
      %v888 = vshrl.u32 %v887, 7
      %v889 = vsub.s32 0, %v888
      %v890 = vrot.slane %v858, %v889
      %v891 = vmul.f32 %v869, %v890
      %v892 = vmul.f32 %v870, %v890
      %v893 = vmul.f32 %v878, %v890
      %v894 = vmul.f32 %v879, %v890
      %v895 = vadd.f32 %v891, 0.0
      %v896 = vadd.f32 %v892, 0.0
      %v897 = vadd.f32 %v893, 0.0
      %v898 = vadd.f32 %v894, 0.0
      %v899 = vlaneseq
      %v900 = vshrl.u32 %v899, 7
      %v901 = vsub.s32 1, %v900
      %v902 = vrot.slane %v858, %v901
      %v903 = vmul.f32 %v869, %v902
      %v904 = vmul.f32 %v870, %v902
      %v905 = vmul.f32 %v871, %v902
      %v906 = vmul.f32 %v878, %v902
      %v907 = vmul.f32 %v879, %v902
      %v908 = vmul.f32 %v880, %v902
      %vm915 = vcmask 1046528
      %v916 = vrot.slane %v903, 1
      %v917 = vrot.slane %v904, 1
      %v918 = vsel %vm915, %v916, %v917
      %v919 = vrot.slane %v905, 1
      %v920 = vsel %vm915, %v917, %v919
      %v921 = vrot.slane %v906, 1
      %v922 = vrot.slane %v907, 1
      %v923 = vsel %vm915, %v921, %v922
      %v924 = vrot.slane %v908, 1
      %v925 = vsel %vm915, %v922, %v924
      %v930 = vadd.f32 %v895, %v918
      %v931 = vadd.f32 %v896, %v920
      %v932 = vadd.f32 %v897, %v923
      %v933 = vadd.f32 %v898, %v925
      %v934 = vlaneseq
      %v935 = vshrl.u32 %v934, 7
      %v936 = vsub.s32 2, %v935
      %v937 = vrot.slane %v858, %v936
      %v938 = vmul.f32 %v869, %v937
      %v939 = vmul.f32 %v870, %v937
      %v940 = vmul.f32 %v871, %v937
      %v941 = vmul.f32 %v878, %v937
      %v942 = vmul.f32 %v879, %v937
      %v943 = vmul.f32 %v880, %v937
      %vm950 = vcmask 1045504
      %v951 = vrot.slane %v938, 2
      %v952 = vrot.slane %v939, 2
      %v953 = vsel %vm950, %v951, %v952
      %v954 = vrot.slane %v940, 2
      %v955 = vsel %vm950, %v952, %v954
      %v956 = vrot.slane %v941, 2
      %v957 = vrot.slane %v942, 2
      %v958 = vsel %vm950, %v956, %v957
      %v959 = vrot.slane %v943, 2
      %v960 = vsel %vm950, %v957, %v959
      %v965 = vadd.f32 %v930, %v953
      %v966 = vadd.f32 %v931, %v955
      %v967 = vadd.f32 %v932, %v958
      %v968 = vadd.f32 %v933, %v960
      %v969 = vlaneseq
      %v970 = vshrl.u32 %v969, 7
      %v971 = vsub.s32 3, %v970
      %v972 = vrot.slane %v858, %v971
      %v973 = vmul.f32 %v872, %v972
      %v974 = vmul.f32 %v873, %v972
      %v975 = vmul.f32 %v881, %v972
      %v976 = vmul.f32 %v882, %v972
      %v977 = vadd.f32 %v965, %v973
      %v978 = vadd.f32 %v966, %v974
      %v979 = vadd.f32 %v967, %v975
      %v980 = vadd.f32 %v968, %v976
      %v981 = vlaneseq
      %v982 = vshrl.u32 %v981, 7
      %v983 = vsub.s32 4, %v982
      %v984 = vrot.slane %v858, %v983
      %v985 = vmul.f32 %v872, %v984
      %v986 = vmul.f32 %v873, %v984
      %v987 = vmul.f32 %v874, %v984
      %v988 = vmul.f32 %v881, %v984
      %v989 = vmul.f32 %v882, %v984
      %v990 = vmul.f32 %v883, %v984
      %v997 = vrot.slane %v985, 1
      %v998 = vrot.slane %v986, 1
      %v999 = vsel %vm915, %v997, %v998
      %v1000 = vrot.slane %v987, 1
      %v1001 = vsel %vm915, %v998, %v1000
      %v1002 = vrot.slane %v988, 1
      %v1003 = vrot.slane %v989, 1
      %v1004 = vsel %vm915, %v1002, %v1003
      %v1005 = vrot.slane %v990, 1
      %v1006 = vsel %vm915, %v1003, %v1005
      %v1011 = vadd.f32 %v977, %v999
      %v1012 = vadd.f32 %v978, %v1001
      %v1013 = vadd.f32 %v979, %v1004
      %v1014 = vadd.f32 %v980, %v1006
      %v1015 = vlaneseq
      %v1016 = vshrl.u32 %v1015, 7
      %v1017 = vsub.s32 5, %v1016
      %v1018 = vrot.slane %v858, %v1017
      %v1019 = vmul.f32 %v872, %v1018
      %v1020 = vmul.f32 %v873, %v1018
      %v1021 = vmul.f32 %v874, %v1018
      %v1022 = vmul.f32 %v881, %v1018
      %v1023 = vmul.f32 %v882, %v1018
      %v1024 = vmul.f32 %v883, %v1018
      %v1031 = vrot.slane %v1019, 2
      %v1032 = vrot.slane %v1020, 2
      %v1033 = vsel %vm950, %v1031, %v1032
      %v1034 = vrot.slane %v1021, 2
      %v1035 = vsel %vm950, %v1032, %v1034
      %v1036 = vrot.slane %v1022, 2
      %v1037 = vrot.slane %v1023, 2
      %v1038 = vsel %vm950, %v1036, %v1037
      %v1039 = vrot.slane %v1024, 2
      %v1040 = vsel %vm950, %v1037, %v1039
      %v1045 = vadd.f32 %v1011, %v1033
      %v1046 = vadd.f32 %v1012, %v1035
      %v1047 = vadd.f32 %v1013, %v1038
      %v1048 = vadd.f32 %v1014, %v1040
      %v1049 = vlaneseq
      %v1050 = vshrl.u32 %v1049, 7
      %v1051 = vsub.s32 6, %v1050
      %v1052 = vrot.slane %v858, %v1051
      %v1053 = vmul.f32 %v875, %v1052
      %v1054 = vmul.f32 %v876, %v1052
      %v1055 = vmul.f32 %v884, %v1052
      %v1056 = vmul.f32 %v885, %v1052
      %v1057 = vadd.f32 %v1045, %v1053
      %v1058 = vadd.f32 %v1046, %v1054
      %v1059 = vadd.f32 %v1047, %v1055
      %v1060 = vadd.f32 %v1048, %v1056
      %v1061 = vlaneseq
      %v1062 = vshrl.u32 %v1061, 7
      %v1063 = vsub.s32 7, %v1062
      %v1064 = vrot.slane %v858, %v1063
      %v1065 = vmul.f32 %v875, %v1064
      %v1066 = vmul.f32 %v876, %v1064
      %v1067 = vmul.f32 %v877, %v1064
      %v1068 = vmul.f32 %v884, %v1064
      %v1069 = vmul.f32 %v885, %v1064
      %v1070 = vmul.f32 %v886, %v1064
      %v1077 = vrot.slane %v1065, 1
      %v1078 = vrot.slane %v1066, 1
      %v1079 = vsel %vm915, %v1077, %v1078
      %v1080 = vrot.slane %v1067, 1
      %v1081 = vsel %vm915, %v1078, %v1080
      %v1082 = vrot.slane %v1068, 1
      %v1083 = vrot.slane %v1069, 1
      %v1084 = vsel %vm915, %v1082, %v1083
      %v1085 = vrot.slane %v1070, 1
      %v1086 = vsel %vm915, %v1083, %v1085
      %v1091 = vadd.f32 %v1057, %v1079
      %v1092 = vadd.f32 %v1058, %v1081
      %v1093 = vadd.f32 %v1059, %v1084
      %v1094 = vadd.f32 %v1060, %v1086
      %v1095 = vlaneseq
      %v1096 = vshrl.u32 %v1095, 7
      %v1097 = vsub.s32 0, %v1096
      %v1098 = vrot.slane %v859, %v1097
      %v1099 = vmul.f32 %v875, %v1098
      %v1100 = vmul.f32 %v876, %v1098
      %v1101 = vmul.f32 %v877, %v1098
      %v1102 = vmul.f32 %v884, %v1098
      %v1103 = vmul.f32 %v885, %v1098
      %v1104 = vmul.f32 %v886, %v1098
      %v1111 = vrot.slane %v1099, 2
      %v1112 = vrot.slane %v1100, 2
      %v1113 = vsel %vm950, %v1111, %v1112
      %v1114 = vrot.slane %v1101, 2
      %v1115 = vsel %vm950, %v1112, %v1114
      %v1116 = vrot.slane %v1102, 2
      %v1117 = vrot.slane %v1103, 2
      %v1118 = vsel %vm950, %v1116, %v1117
      %v1119 = vrot.slane %v1104, 2
      %v1120 = vsel %vm950, %v1117, %v1119
      %v1125 = vadd.f32 %v1091, %v1113
      %v1126 = vadd.f32 %v1092, %v1115
      %v1127 = vadd.f32 %v1093, %v1118
      %v1128 = vadd.f32 %v1094, %v1120
      %v1130 = vlaneseq
      %v1131 = vshrl.u32 %v1130, 7
      %v1132 = vsub.s32 0, %v1131
      %v1133 = vrot.slane %v860, %v1132
      %v1135 = vadd.f32 %v1125, %v1133
      %v1136 = vadd.f32 %v1126, %v1133
      %v1137 = vadd.f32 %v1127, %v1133
      %v1138 = vadd.f32 %v1128, %v1133
      %v1139 = vmax.f32 %v1135, 0.0
      %v1140 = vmax.f32 %v1136, 0.0
      %v1141 = vmax.f32 %v1137, 0.0
      %v1142 = vmax.f32 %v1138, 0.0
      %v1143 = vpack.c.bf16 %v1140, %v1139
      %v1144 = vpack.c.bf16 %v1142, %v1141
      %s1145 = sadd.s32 %s862, 1
      %v1148 = vunpack.c.l.b16 %v1143
      %v1149 = vunpack.c.h.b16 %v1143
      %v1150 = vunpack.c.l.b16 %v1144
      %v1151 = vunpack.c.h.b16 %v1144
      %v1152 = vpack.c.b16 %v1148, %v1148
      %v1153 = vpack.c.b16 %v1149, %v1149
      %v1154 = vpack.c.b16 %v1150, %v1150
      %v1155 = vpack.c.b16 %v1151, %v1151
      %vm1156 = vsmask.f32 4368
      %vm1157 = vmor %vm189, %vm1156
      %v1159 = vshrl.u32 %v1152, 16
      %v1161 = vrot.slane %v1159, 7
      %v1162 = vshll.u32 %v1152, 16
      %v1164 = vor.u32 %v1161, %v1162
      %v1165 = vrot.slane %v1161, 4
      %v1167 = vshrl.u32 %v1153, 16
      %v1169 = vrot.slane %v1167, 7
      %v1170 = vshll.u32 %v1153, 16
      %v1172 = vor.u32 %v1169, %v1170
      %v1173 = vsel %vm1157, %v1165, %v1172
      %v1174 = vrot.slane %v1169, 4
      %v1176 = vshrl.u32 %v1154, 16
      %v1178 = vrot.slane %v1176, 7
      %v1179 = vshll.u32 %v1154, 16
      %v1181 = vor.u32 %v1178, %v1179
      %v1182 = vrot.slane %v1178, 4
      %v1184 = vshrl.u32 %v1155, 16
      %v1186 = vrot.slane %v1184, 7
      %v1187 = vshll.u32 %v1155, 16
      %v1189 = vor.u32 %v1186, %v1187
      %v1190 = vsel %vm1157, %v1182, %v1189
      %v1191 = vrot.slane %v1186, 4
      %s1198 = smul.u32 %s1145, 3
      %s1199 = smul.addr %s1198, 4
      %s1200 = scalar_lea.vmem [#allocation3], %s1199
      %vm1201 = vcmask 257024
      %vm1202 = vmand %vm1201, %vm299
      %v1203 = vld [vmem:[%s1200] sm:$0xf]
      %v1204 = vsel %vm1202, %v1164, %v1203
      %1205 = vst [vmem:[%s1200] sm:$0xf] %v1204
      %1206 = vst.msk [vmem:[%s1200 + $0x4] sm:$0xf] %vm174, %v1173
      %v1207 = vld [vmem:[%s1200 + $0x8] sm:$0x1]
      %v1208 = vsel %vm190, %v1174, %v1207
      %1209 = vst [vmem:[%s1200 + $0x8] sm:$0x1] %v1208
      %v1210 = vld [vmem:[%s1200 + $0xd8] sm:$0xf]
      %v1211 = vsel %vm1202, %v1181, %v1210
      %1212 = vst [vmem:[%s1200 + $0xd8] sm:$0xf] %v1211
      %1213 = vst.msk [vmem:[%s1200 + $0xdc] sm:$0xf] %vm174, %v1190
      %v1214 = vld [vmem:[%s1200 + $0xe0] sm:$0x1]
      %v1215 = vsel %vm190, %v1191, %v1214
      %1216 = vst [vmem:[%s1200 + $0xe0] sm:$0x1] %v1215
    $region46: #{down_conv.1} parent=1 // loop_footer
      %s866 = sadd.s32 1, %s862
    $region47: #{down_conv.1} parent=1 // loop_footer_branch
      %861 = sbr.rel target = $region43
    $region48: #{down_conv.1} parent=1 // loop_exit
      _
    %v1217 = vld [vmem:[#allocation3] sm:$0xf]
    %v1218 = vld [vmem:[#allocation3 + $0x4] sm:$0xf]
    %v1219 = vld [vmem:[#allocation3 + $0xc] sm:$0xf]
    %v1220 = vld [vmem:[#allocation3 + $0x10] sm:$0xf]
    %v1221 = vld [vmem:[#allocation3 + $0x18] sm:$0xf]
    %v1222 = vld [vmem:[#allocation3 + $0x1c] sm:$0xf]
    %v1223 = vld [vmem:[#allocation3 + $0x24] sm:$0xf]
    %v1224 = vld [vmem:[#allocation3 + $0x28] sm:$0xf]
    %v1225 = vld [vmem:[#allocation3 + $0x30] sm:$0xf]
    %v1226 = vld [vmem:[#allocation3 + $0x34] sm:$0xf]
    %v1227 = vld [vmem:[#allocation3 + $0x3c] sm:$0xf]
    %v1228 = vld [vmem:[#allocation3 + $0x40] sm:$0xf]
    %v1229 = vld [vmem:[#allocation3 + $0x48] sm:$0xf]
    %v1230 = vld [vmem:[#allocation3 + $0x4c] sm:$0xf]
    %v1231 = vld [vmem:[#allocation3 + $0x54] sm:$0xf]
    %v1232 = vld [vmem:[#allocation3 + $0x58] sm:$0xf]
    %v1233 = vld [vmem:[#allocation3 + $0x60] sm:$0xf]
    %v1234 = vld [vmem:[#allocation3 + $0x64] sm:$0xf]
    %v1235 = vld [vmem:[#allocation3 + $0x6c] sm:$0xf]
    %v1236 = vld [vmem:[#allocation3 + $0x70] sm:$0xf]
    %v1237 = vld [vmem:[#allocation3 + $0x78] sm:$0xf]
    %v1238 = vld [vmem:[#allocation3 + $0x7c] sm:$0xf]
    %v1239 = vld [vmem:[#allocation3 + $0x84] sm:$0xf]
    %v1240 = vld [vmem:[#allocation3 + $0x88] sm:$0xf]
    %v1241 = vld [vmem:[#allocation3 + $0x90] sm:$0xf]
    %v1242 = vld [vmem:[#allocation3 + $0x94] sm:$0xf]
    %v1243 = vld [vmem:[#allocation3 + $0x9c] sm:$0xf]
    %v1244 = vld [vmem:[#allocation3 + $0xa0] sm:$0xf]
    %v1245 = vld [vmem:[#allocation3 + $0xa8] sm:$0xf]
    %v1246 = vld [vmem:[#allocation3 + $0xac] sm:$0xf]
    %v1247 = vld [vmem:[#allocation3 + $0xb4] sm:$0xf]
    %v1248 = vld [vmem:[#allocation3 + $0xb8] sm:$0xf]
    %v1249 = vld [vmem:[#allocation3 + $0xd8] sm:$0xf]
    %v1250 = vld [vmem:[#allocation3 + $0xdc] sm:$0xf]
    %v1251 = vld [vmem:[#allocation3 + $0xe4] sm:$0xf]
    %v1252 = vld [vmem:[#allocation3 + $0xe8] sm:$0xf]
    %v1253 = vld [vmem:[#allocation3 + $0xf0] sm:$0xf]
    %v1254 = vld [vmem:[#allocation3 + $0xf4] sm:$0xf]
    %v1255 = vld [vmem:[#allocation3 + $0xfc] sm:$0xf]
    %v1256 = vld [vmem:[#allocation3 + $0x100] sm:$0xf]
    %v1257 = vld [vmem:[#allocation3 + $0x108] sm:$0xf]
    %v1258 = vld [vmem:[#allocation3 + $0x10c] sm:$0xf]
    %v1259 = vld [vmem:[#allocation3 + $0x114] sm:$0xf]
    %v1260 = vld [vmem:[#allocation3 + $0x118] sm:$0xf]
    %v1261 = vld [vmem:[#allocation3 + $0x120] sm:$0xf]
    %v1262 = vld [vmem:[#allocation3 + $0x124] sm:$0xf]
    %v1263 = vld [vmem:[#allocation3 + $0x12c] sm:$0xf]
    %v1264 = vld [vmem:[#allocation3 + $0x130] sm:$0xf]
    %v1265 = vld [vmem:[#allocation3 + $0x138] sm:$0xf]
    %v1266 = vld [vmem:[#allocation3 + $0x13c] sm:$0xf]
    %v1267 = vld [vmem:[#allocation3 + $0x144] sm:$0xf]
    %v1268 = vld [vmem:[#allocation3 + $0x148] sm:$0xf]
    %v1269 = vld [vmem:[#allocation3 + $0x150] sm:$0xf]
    %v1270 = vld [vmem:[#allocation3 + $0x154] sm:$0xf]
    %v1271 = vld [vmem:[#allocation3 + $0x15c] sm:$0xf]
    %v1272 = vld [vmem:[#allocation3 + $0x160] sm:$0xf]
    %v1273 = vld [vmem:[#allocation3 + $0x168] sm:$0xf]
    %v1274 = vld [vmem:[#allocation3 + $0x16c] sm:$0xf]
    %v1275 = vld [vmem:[#allocation3 + $0x174] sm:$0xf]
    %v1276 = vld [vmem:[#allocation3 + $0x178] sm:$0xf]
    %v1277 = vld [vmem:[#allocation3 + $0x180] sm:$0xf]
    %v1278 = vld [vmem:[#allocation3 + $0x184] sm:$0xf]
    %v1279 = vld [vmem:[#allocation3 + $0x18c] sm:$0xf]
    %v1280 = vld [vmem:[#allocation3 + $0x190] sm:$0xf]
    %v1345 = vunpack.c.l.b16 %v1217
    %v1346 = vunpack.c.l.b16 %v1218
    %v1347 = vunpack.c.l.b16 %v1219
    %v1348 = vunpack.c.l.b16 %v1220
    %v1349 = vunpack.c.l.b16 %v1221
    %v1350 = vunpack.c.l.b16 %v1222
    %v1351 = vunpack.c.l.b16 %v1223
    %v1352 = vunpack.c.l.b16 %v1224
    %v1353 = vunpack.c.l.b16 %v1225
    %v1354 = vunpack.c.l.b16 %v1226
    %v1355 = vunpack.c.l.b16 %v1227
    %v1356 = vunpack.c.l.b16 %v1228
    %v1357 = vunpack.c.l.b16 %v1229
    %v1358 = vunpack.c.l.b16 %v1230
    %v1359 = vunpack.c.l.b16 %v1231
    %v1360 = vunpack.c.l.b16 %v1232
    %v1361 = vunpack.c.l.b16 %v1233
    %v1362 = vunpack.c.l.b16 %v1234
    %v1363 = vunpack.c.l.b16 %v1235
    %v1364 = vunpack.c.l.b16 %v1236
    %v1365 = vunpack.c.l.b16 %v1237
    %v1366 = vunpack.c.l.b16 %v1238
    %v1367 = vunpack.c.l.b16 %v1239
    %v1368 = vunpack.c.l.b16 %v1240
    %v1369 = vunpack.c.l.b16 %v1241
    %v1370 = vunpack.c.l.b16 %v1242
    %v1371 = vunpack.c.l.b16 %v1243
    %v1372 = vunpack.c.l.b16 %v1244
    %v1373 = vunpack.c.l.b16 %v1245
    %v1374 = vunpack.c.l.b16 %v1246
    %v1375 = vunpack.c.l.b16 %v1247
    %v1376 = vunpack.c.l.b16 %v1248
    %v1377 = vunpack.c.l.b16 %v1249
    %v1378 = vunpack.c.l.b16 %v1250
    %v1379 = vunpack.c.l.b16 %v1251
    %v1380 = vunpack.c.l.b16 %v1252
    %v1381 = vunpack.c.l.b16 %v1253
    %v1382 = vunpack.c.l.b16 %v1254
    %v1383 = vunpack.c.l.b16 %v1255
    %v1384 = vunpack.c.l.b16 %v1256
    %v1385 = vunpack.c.l.b16 %v1257
    %v1386 = vunpack.c.l.b16 %v1258
    %v1387 = vunpack.c.l.b16 %v1259
    %v1388 = vunpack.c.l.b16 %v1260
    %v1389 = vunpack.c.l.b16 %v1261
    %v1390 = vunpack.c.l.b16 %v1262
    %v1391 = vunpack.c.l.b16 %v1263
    %v1392 = vunpack.c.l.b16 %v1264
    %v1393 = vunpack.c.l.b16 %v1265
    %v1394 = vunpack.c.l.b16 %v1266
    %v1395 = vunpack.c.l.b16 %v1267
    %v1396 = vunpack.c.l.b16 %v1268
    %v1397 = vunpack.c.l.b16 %v1269
    %v1398 = vunpack.c.l.b16 %v1270
    %v1399 = vunpack.c.l.b16 %v1271
    %v1400 = vunpack.c.l.b16 %v1272
    %v1401 = vunpack.c.l.b16 %v1273
    %v1402 = vunpack.c.l.b16 %v1274
    %v1403 = vunpack.c.l.b16 %v1275
    %v1404 = vunpack.c.l.b16 %v1276
    %v1405 = vunpack.c.l.b16 %v1277
    %v1406 = vunpack.c.l.b16 %v1278
    %v1407 = vunpack.c.l.b16 %v1279
    %v1408 = vunpack.c.l.b16 %v1280
    %v1409 = vpack.c.b16 %v1346, %v1345
    %v1410 = vpack.c.b16 %v1348, %v1347
    %v1411 = vpack.c.b16 %v1350, %v1349
    %v1412 = vpack.c.b16 %v1352, %v1351
    %v1413 = vpack.c.b16 %v1354, %v1353
    %v1414 = vpack.c.b16 %v1356, %v1355
    %v1415 = vpack.c.b16 %v1358, %v1357
    %v1416 = vpack.c.b16 %v1360, %v1359
    %v1417 = vpack.c.b16 %v1362, %v1361
    %v1418 = vpack.c.b16 %v1364, %v1363
    %v1419 = vpack.c.b16 %v1366, %v1365
    %v1420 = vpack.c.b16 %v1368, %v1367
    %v1421 = vpack.c.b16 %v1370, %v1369
    %v1422 = vpack.c.b16 %v1372, %v1371
    %v1423 = vpack.c.b16 %v1374, %v1373
    %v1424 = vpack.c.b16 %v1376, %v1375
    %v1425 = vpack.c.b16 %v1378, %v1377
    %v1426 = vpack.c.b16 %v1380, %v1379
    %v1427 = vpack.c.b16 %v1382, %v1381
    %v1428 = vpack.c.b16 %v1384, %v1383
    %v1429 = vpack.c.b16 %v1386, %v1385
    %v1430 = vpack.c.b16 %v1388, %v1387
    %v1431 = vpack.c.b16 %v1390, %v1389
    %v1432 = vpack.c.b16 %v1392, %v1391
    %v1433 = vpack.c.b16 %v1394, %v1393
    %v1434 = vpack.c.b16 %v1396, %v1395
    %v1435 = vpack.c.b16 %v1398, %v1397
    %v1436 = vpack.c.b16 %v1400, %v1399
    %v1437 = vpack.c.b16 %v1402, %v1401
    %v1438 = vpack.c.b16 %v1404, %v1403
    %v1439 = vpack.c.b16 %v1406, %v1405
    %v1440 = vpack.c.b16 %v1408, %v1407
    %1473 = vst.msk [vmem:[#allocation4] sm:$0xff] %vm86, %v1409
    %1474 = vst.msk [vmem:[#allocation4 + $0x18] sm:$0xff] %vm86, %v1410
    %1475 = vst.msk [vmem:[#allocation4 + $0x30] sm:$0xff] %vm86, %v1411
    %1476 = vst.msk [vmem:[#allocation4 + $0x48] sm:$0xff] %vm86, %v1412
    %1477 = vst.msk [vmem:[#allocation4 + $0x60] sm:$0xff] %vm86, %v1413
    %1478 = vst.msk [vmem:[#allocation4 + $0x78] sm:$0xff] %vm86, %v1414
    %1479 = vst.msk [vmem:[#allocation4 + $0x90] sm:$0xff] %vm86, %v1415
    %1480 = vst.msk [vmem:[#allocation4 + $0xa8] sm:$0xff] %vm86, %v1416
    %1481 = vst.msk [vmem:[#allocation4 + $0xc0] sm:$0xff] %vm86, %v1417
    %1482 = vst.msk [vmem:[#allocation4 + $0xd8] sm:$0xff] %vm86, %v1418
    %1483 = vst.msk [vmem:[#allocation4 + $0xf0] sm:$0xff] %vm86, %v1419
    %1484 = vst.msk [vmem:[#allocation4 + $0x108] sm:$0xff] %vm86, %v1420
    %1485 = vst.msk [vmem:[#allocation4 + $0x120] sm:$0xff] %vm86, %v1421
    %1486 = vst.msk [vmem:[#allocation4 + $0x138] sm:$0xff] %vm86, %v1422
    %1487 = vst.msk [vmem:[#allocation4 + $0x150] sm:$0xff] %vm86, %v1423
    %1488 = vst.msk [vmem:[#allocation4 + $0x168] sm:$0xff] %vm86, %v1424
    %1489 = vst.msk [vmem:[#allocation4 + $0x180] sm:$0xff] %vm86, %v1425
    %1490 = vst.msk [vmem:[#allocation4 + $0x198] sm:$0xff] %vm86, %v1426
    %1491 = vst.msk [vmem:[#allocation4 + $0x1b0] sm:$0xff] %vm86, %v1427
    %1492 = vst.msk [vmem:[#allocation4 + $0x1c8] sm:$0xff] %vm86, %v1428
    %1493 = vst.msk [vmem:[#allocation4 + $0x1e0] sm:$0xff] %vm86, %v1429
    %1494 = vst.msk [vmem:[#allocation4 + $0x1f8] sm:$0xff] %vm86, %v1430
    %1495 = vst.msk [vmem:[#allocation4 + $0x210] sm:$0xff] %vm86, %v1431
    %1496 = vst.msk [vmem:[#allocation4 + $0x228] sm:$0xff] %vm86, %v1432
    %1497 = vst.msk [vmem:[#allocation4 + $0x240] sm:$0xff] %vm86, %v1433
    %1498 = vst.msk [vmem:[#allocation4 + $0x258] sm:$0xff] %vm86, %v1434
    %1499 = vst.msk [vmem:[#allocation4 + $0x270] sm:$0xff] %vm86, %v1435
    %1500 = vst.msk [vmem:[#allocation4 + $0x288] sm:$0xff] %vm86, %v1436
    %1501 = vst.msk [vmem:[#allocation4 + $0x2a0] sm:$0xff] %vm86, %v1437
    %1502 = vst.msk [vmem:[#allocation4 + $0x2b8] sm:$0xff] %vm86, %v1438
    %1503 = vst.msk [vmem:[#allocation4 + $0x2d0] sm:$0xff] %vm86, %v1439
    %1504 = vst.msk [vmem:[#allocation4 + $0x2e8] sm:$0xff] %vm86, %v1440
    %v1505 = vld [vmem:[#allocation3] sm:$0xf]
    %v1506 = vld [vmem:[#allocation3 + $0x4] sm:$0xf]
    %v1507 = vld [vmem:[#allocation3 + $0x8] sm:$0x1]
    %v1508 = vld [vmem:[#allocation3 + $0xc] sm:$0xf]
    %v1509 = vld [vmem:[#allocation3 + $0x10] sm:$0xf]
    %v1510 = vld [vmem:[#allocation3 + $0x14] sm:$0x1]
    %v1511 = vld [vmem:[#allocation3 + $0x18] sm:$0xf]
    %v1512 = vld [vmem:[#allocation3 + $0x1c] sm:$0xf]
    %v1513 = vld [vmem:[#allocation3 + $0x20] sm:$0x1]
    %v1514 = vld [vmem:[#allocation3 + $0x24] sm:$0xf]
    %v1515 = vld [vmem:[#allocation3 + $0x28] sm:$0xf]
    %v1516 = vld [vmem:[#allocation3 + $0x2c] sm:$0x1]
    %v1517 = vld [vmem:[#allocation3 + $0x30] sm:$0xf]
    %v1518 = vld [vmem:[#allocation3 + $0x34] sm:$0xf]
    %v1519 = vld [vmem:[#allocation3 + $0x38] sm:$0x1]
    %v1520 = vld [vmem:[#allocation3 + $0x3c] sm:$0xf]
    %v1521 = vld [vmem:[#allocation3 + $0x40] sm:$0xf]
    %v1522 = vld [vmem:[#allocation3 + $0x44] sm:$0x1]
    %v1523 = vld [vmem:[#allocation3 + $0x48] sm:$0xf]
    %v1524 = vld [vmem:[#allocation3 + $0x4c] sm:$0xf]
    %v1525 = vld [vmem:[#allocation3 + $0x50] sm:$0x1]
    %v1526 = vld [vmem:[#allocation3 + $0x54] sm:$0xf]
    %v1527 = vld [vmem:[#allocation3 + $0x58] sm:$0xf]
    %v1528 = vld [vmem:[#allocation3 + $0x5c] sm:$0x1]
    %v1529 = vld [vmem:[#allocation3 + $0x60] sm:$0xf]
    %v1530 = vld [vmem:[#allocation3 + $0x64] sm:$0xf]
    %v1531 = vld [vmem:[#allocation3 + $0x68] sm:$0x1]
    %v1532 = vld [vmem:[#allocation3 + $0x6c] sm:$0xf]
    %v1533 = vld [vmem:[#allocation3 + $0x70] sm:$0xf]
    %v1534 = vld [vmem:[#allocation3 + $0x74] sm:$0x1]
    %v1535 = vld [vmem:[#allocation3 + $0x78] sm:$0xf]
    %v1536 = vld [vmem:[#allocation3 + $0x7c] sm:$0xf]
    %v1537 = vld [vmem:[#allocation3 + $0x80] sm:$0x1]
    %v1538 = vld [vmem:[#allocation3 + $0x84] sm:$0xf]
    %v1539 = vld [vmem:[#allocation3 + $0x88] sm:$0xf]
    %v1540 = vld [vmem:[#allocation3 + $0x8c] sm:$0x1]
    %v1541 = vld [vmem:[#allocation3 + $0x90] sm:$0xf]
    %v1542 = vld [vmem:[#allocation3 + $0x94] sm:$0xf]
    %v1543 = vld [vmem:[#allocation3 + $0x98] sm:$0x1]
    %v1544 = vld [vmem:[#allocation3 + $0x9c] sm:$0xf]
    %v1545 = vld [vmem:[#allocation3 + $0xa0] sm:$0xf]
    %v1546 = vld [vmem:[#allocation3 + $0xa4] sm:$0x1]
    %v1547 = vld [vmem:[#allocation3 + $0xa8] sm:$0xf]
    %v1548 = vld [vmem:[#allocation3 + $0xac] sm:$0xf]
    %v1549 = vld [vmem:[#allocation3 + $0xb0] sm:$0x1]
    %v1550 = vld [vmem:[#allocation3 + $0xb4] sm:$0xf]
    %v1551 = vld [vmem:[#allocation3 + $0xb8] sm:$0xf]
    %v1552 = vld [vmem:[#allocation3 + $0xbc] sm:$0x1]
    %v1553 = vld [vmem:[#allocation3 + $0xd8] sm:$0xf]
    %v1554 = vld [vmem:[#allocation3 + $0xdc] sm:$0xf]
    %v1555 = vld [vmem:[#allocation3 + $0xe0] sm:$0x1]
    %v1556 = vld [vmem:[#allocation3 + $0xe4] sm:$0xf]
    %v1557 = vld [vmem:[#allocation3 + $0xe8] sm:$0xf]
    %v1558 = vld [vmem:[#allocation3 + $0xec] sm:$0x1]
    %v1559 = vld [vmem:[#allocation3 + $0xf0] sm:$0xf]
    %v1560 = vld [vmem:[#allocation3 + $0xf4] sm:$0xf]
    %v1561 = vld [vmem:[#allocation3 + $0xf8] sm:$0x1]
    %v1562 = vld [vmem:[#allocation3 + $0xfc] sm:$0xf]
    %v1563 = vld [vmem:[#allocation3 + $0x100] sm:$0xf]
    %v1564 = vld [vmem:[#allocation3 + $0x104] sm:$0x1]
    %v1565 = vld [vmem:[#allocation3 + $0x108] sm:$0xf]
    %v1566 = vld [vmem:[#allocation3 + $0x10c] sm:$0xf]
    %v1567 = vld [vmem:[#allocation3 + $0x110] sm:$0x1]
    %v1568 = vld [vmem:[#allocation3 + $0x114] sm:$0xf]
    %v1569 = vld [vmem:[#allocation3 + $0x118] sm:$0xf]
    %v1570 = vld [vmem:[#allocation3 + $0x11c] sm:$0x1]
    %v1571 = vld [vmem:[#allocation3 + $0x120] sm:$0xf]
    %v1572 = vld [vmem:[#allocation3 + $0x124] sm:$0xf]
    %v1573 = vld [vmem:[#allocation3 + $0x128] sm:$0x1]
    %v1574 = vld [vmem:[#allocation3 + $0x12c] sm:$0xf]
    %v1575 = vld [vmem:[#allocation3 + $0x130] sm:$0xf]
    %v1576 = vld [vmem:[#allocation3 + $0x134] sm:$0x1]
    %v1577 = vld [vmem:[#allocation3 + $0x138] sm:$0xf]
    %v1578 = vld [vmem:[#allocation3 + $0x13c] sm:$0xf]
    %v1579 = vld [vmem:[#allocation3 + $0x140] sm:$0x1]
    %v1580 = vld [vmem:[#allocation3 + $0x144] sm:$0xf]
    %v1581 = vld [vmem:[#allocation3 + $0x148] sm:$0xf]
    %v1582 = vld [vmem:[#allocation3 + $0x14c] sm:$0x1]
    %v1583 = vld [vmem:[#allocation3 + $0x150] sm:$0xf]
    %v1584 = vld [vmem:[#allocation3 + $0x154] sm:$0xf]
    %v1585 = vld [vmem:[#allocation3 + $0x158] sm:$0x1]
    %v1586 = vld [vmem:[#allocation3 + $0x15c] sm:$0xf]
    %v1587 = vld [vmem:[#allocation3 + $0x160] sm:$0xf]
    %v1588 = vld [vmem:[#allocation3 + $0x164] sm:$0x1]
    %v1589 = vld [vmem:[#allocation3 + $0x168] sm:$0xf]
    %v1590 = vld [vmem:[#allocation3 + $0x16c] sm:$0xf]
    %v1591 = vld [vmem:[#allocation3 + $0x170] sm:$0x1]
    %v1592 = vld [vmem:[#allocation3 + $0x174] sm:$0xf]
    %v1593 = vld [vmem:[#allocation3 + $0x178] sm:$0xf]
    %v1594 = vld [vmem:[#allocation3 + $0x17c] sm:$0x1]
    %v1595 = vld [vmem:[#allocation3 + $0x180] sm:$0xf]
    %v1596 = vld [vmem:[#allocation3 + $0x184] sm:$0xf]
    %v1597 = vld [vmem:[#allocation3 + $0x188] sm:$0x1]
    %v1598 = vld [vmem:[#allocation3 + $0x18c] sm:$0xf]
    %v1599 = vld [vmem:[#allocation3 + $0x190] sm:$0xf]
    %v1600 = vld [vmem:[#allocation3 + $0x194] sm:$0x1]
    %vm1601 = vsmask.f32 3328
    %vm1602 = vsmask.f32 7440
    %vm1603 = vmor %vm1601, %vm1602
    %v1605 = vshrl.u32 %v1505, 16
    %v1607 = vrot.slane %v1605, 4
    %v1608 = vshll.u32 %v1505, 16
    %v1610 = vrot.slane %v1608, 5
    %v1611 = vor.u32 %v1607, %v1610
    %v1612 = vrot.slane %v1611, 4
    %v1614 = vshll.u32 %v1506, 16
    %v1616 = vrot.slane %v1614, 5
    %v1617 = vsel %vm1603, %v1612, %v1616
    %v1618 = vshrl.u32 %v1506, 16
    %v1620 = vrot.slane %v1618, 4
    %v1621 = vor.u32 %v1620, %v1616
    %v1622 = vrot.slane %v1621, 4
    %v1624 = vshll.u32 %v1507, 16
    %v1626 = vrot.slane %v1624, 5
    %v1627 = vsel %vm1603, %v1622, %v1626
    %v1629 = vshrl.u32 %v1508, 16
    %v1631 = vrot.slane %v1629, 4
    %v1632 = vshll.u32 %v1508, 16
    %v1634 = vrot.slane %v1632, 5
    %v1635 = vor.u32 %v1631, %v1634
    %v1636 = vrot.slane %v1635, 4
    %v1638 = vshll.u32 %v1509, 16
    %v1640 = vrot.slane %v1638, 5
    %v1641 = vsel %vm1603, %v1636, %v1640
    %v1642 = vshrl.u32 %v1509, 16
    %v1644 = vrot.slane %v1642, 4
    %v1645 = vor.u32 %v1644, %v1640
    %v1646 = vrot.slane %v1645, 4
    %v1648 = vshll.u32 %v1510, 16
    %v1650 = vrot.slane %v1648, 5
    %v1651 = vsel %vm1603, %v1646, %v1650
    %v1653 = vshrl.u32 %v1511, 16
    %v1655 = vrot.slane %v1653, 4
    %v1656 = vshll.u32 %v1511, 16
    %v1658 = vrot.slane %v1656, 5
    %v1659 = vor.u32 %v1655, %v1658
    %v1660 = vrot.slane %v1659, 4
    %v1662 = vshll.u32 %v1512, 16
    %v1664 = vrot.slane %v1662, 5
    %v1665 = vsel %vm1603, %v1660, %v1664
    %v1666 = vshrl.u32 %v1512, 16
    %v1668 = vrot.slane %v1666, 4
    %v1669 = vor.u32 %v1668, %v1664
    %v1670 = vrot.slane %v1669, 4
    %v1672 = vshll.u32 %v1513, 16
    %v1674 = vrot.slane %v1672, 5
    %v1675 = vsel %vm1603, %v1670, %v1674
    %v1677 = vshrl.u32 %v1514, 16
    %v1679 = vrot.slane %v1677, 4
    %v1680 = vshll.u32 %v1514, 16
    %v1682 = vrot.slane %v1680, 5
    %v1683 = vor.u32 %v1679, %v1682
    %v1684 = vrot.slane %v1683, 4
    %v1686 = vshll.u32 %v1515, 16
    %v1688 = vrot.slane %v1686, 5
    %v1689 = vsel %vm1603, %v1684, %v1688
    %v1690 = vshrl.u32 %v1515, 16
    %v1692 = vrot.slane %v1690, 4
    %v1693 = vor.u32 %v1692, %v1688
    %v1694 = vrot.slane %v1693, 4
    %v1696 = vshll.u32 %v1516, 16
    %v1698 = vrot.slane %v1696, 5
    %v1699 = vsel %vm1603, %v1694, %v1698
    %v1701 = vshrl.u32 %v1517, 16
    %v1703 = vrot.slane %v1701, 4
    %v1704 = vshll.u32 %v1517, 16
    %v1706 = vrot.slane %v1704, 5
    %v1707 = vor.u32 %v1703, %v1706
    %v1708 = vrot.slane %v1707, 4
    %v1710 = vshll.u32 %v1518, 16
    %v1712 = vrot.slane %v1710, 5
    %v1713 = vsel %vm1603, %v1708, %v1712
    %v1714 = vshrl.u32 %v1518, 16
    %v1716 = vrot.slane %v1714, 4
    %v1717 = vor.u32 %v1716, %v1712
    %v1718 = vrot.slane %v1717, 4
    %v1720 = vshll.u32 %v1519, 16
    %v1722 = vrot.slane %v1720, 5
    %v1723 = vsel %vm1603, %v1718, %v1722
    %v1725 = vshrl.u32 %v1520, 16
    %v1727 = vrot.slane %v1725, 4
    %v1728 = vshll.u32 %v1520, 16
    %v1730 = vrot.slane %v1728, 5
    %v1731 = vor.u32 %v1727, %v1730
    %v1732 = vrot.slane %v1731, 4
    %v1734 = vshll.u32 %v1521, 16
    %v1736 = vrot.slane %v1734, 5
    %v1737 = vsel %vm1603, %v1732, %v1736
    %v1738 = vshrl.u32 %v1521, 16
    %v1740 = vrot.slane %v1738, 4
    %v1741 = vor.u32 %v1740, %v1736
    %v1742 = vrot.slane %v1741, 4
    %v1744 = vshll.u32 %v1522, 16
    %v1746 = vrot.slane %v1744, 5
    %v1747 = vsel %vm1603, %v1742, %v1746
    %v1749 = vshrl.u32 %v1523, 16
    %v1751 = vrot.slane %v1749, 4
    %v1752 = vshll.u32 %v1523, 16
    %v1754 = vrot.slane %v1752, 5
    %v1755 = vor.u32 %v1751, %v1754
    %v1756 = vrot.slane %v1755, 4
    %v1758 = vshll.u32 %v1524, 16
    %v1760 = vrot.slane %v1758, 5
    %v1761 = vsel %vm1603, %v1756, %v1760
    %v1762 = vshrl.u32 %v1524, 16
    %v1764 = vrot.slane %v1762, 4
    %v1765 = vor.u32 %v1764, %v1760
    %v1766 = vrot.slane %v1765, 4
    %v1768 = vshll.u32 %v1525, 16
    %v1770 = vrot.slane %v1768, 5
    %v1771 = vsel %vm1603, %v1766, %v1770
    %v1773 = vshrl.u32 %v1526, 16
    %v1775 = vrot.slane %v1773, 4
    %v1776 = vshll.u32 %v1526, 16
    %v1778 = vrot.slane %v1776, 5
    %v1779 = vor.u32 %v1775, %v1778
    %v1780 = vrot.slane %v1779, 4
    %v1782 = vshll.u32 %v1527, 16
    %v1784 = vrot.slane %v1782, 5
    %v1785 = vsel %vm1603, %v1780, %v1784
    %v1786 = vshrl.u32 %v1527, 16
    %v1788 = vrot.slane %v1786, 4
    %v1789 = vor.u32 %v1788, %v1784
    %v1790 = vrot.slane %v1789, 4
    %v1792 = vshll.u32 %v1528, 16
    %v1794 = vrot.slane %v1792, 5
    %v1795 = vsel %vm1603, %v1790, %v1794
    %v1797 = vshrl.u32 %v1529, 16
    %v1799 = vrot.slane %v1797, 4
    %v1800 = vshll.u32 %v1529, 16
    %v1802 = vrot.slane %v1800, 5
    %v1803 = vor.u32 %v1799, %v1802
    %v1804 = vrot.slane %v1803, 4
    %v1806 = vshll.u32 %v1530, 16
    %v1808 = vrot.slane %v1806, 5
    %v1809 = vsel %vm1603, %v1804, %v1808
    %v1810 = vshrl.u32 %v1530, 16
    %v1812 = vrot.slane %v1810, 4
    %v1813 = vor.u32 %v1812, %v1808
    %v1814 = vrot.slane %v1813, 4
    %v1816 = vshll.u32 %v1531, 16
    %v1818 = vrot.slane %v1816, 5
    %v1819 = vsel %vm1603, %v1814, %v1818
    %v1821 = vshrl.u32 %v1532, 16
    %v1823 = vrot.slane %v1821, 4
    %v1824 = vshll.u32 %v1532, 16
    %v1826 = vrot.slane %v1824, 5
    %v1827 = vor.u32 %v1823, %v1826
    %v1828 = vrot.slane %v1827, 4
    %v1830 = vshll.u32 %v1533, 16
    %v1832 = vrot.slane %v1830, 5
    %v1833 = vsel %vm1603, %v1828, %v1832
    %v1834 = vshrl.u32 %v1533, 16
    %v1836 = vrot.slane %v1834, 4
    %v1837 = vor.u32 %v1836, %v1832
    %v1838 = vrot.slane %v1837, 4
    %v1840 = vshll.u32 %v1534, 16
    %v1842 = vrot.slane %v1840, 5
    %v1843 = vsel %vm1603, %v1838, %v1842
    %v1845 = vshrl.u32 %v1535, 16
    %v1847 = vrot.slane %v1845, 4
    %v1848 = vshll.u32 %v1535, 16
    %v1850 = vrot.slane %v1848, 5
    %v1851 = vor.u32 %v1847, %v1850
    %v1852 = vrot.slane %v1851, 4
    %v1854 = vshll.u32 %v1536, 16
    %v1856 = vrot.slane %v1854, 5
    %v1857 = vsel %vm1603, %v1852, %v1856
    %v1858 = vshrl.u32 %v1536, 16
    %v1860 = vrot.slane %v1858, 4
    %v1861 = vor.u32 %v1860, %v1856
    %v1862 = vrot.slane %v1861, 4
    %v1864 = vshll.u32 %v1537, 16
    %v1866 = vrot.slane %v1864, 5
    %v1867 = vsel %vm1603, %v1862, %v1866
    %v1869 = vshrl.u32 %v1538, 16
    %v1871 = vrot.slane %v1869, 4
    %v1872 = vshll.u32 %v1538, 16
    %v1874 = vrot.slane %v1872, 5
    %v1875 = vor.u32 %v1871, %v1874
    %v1876 = vrot.slane %v1875, 4
    %v1878 = vshll.u32 %v1539, 16
    %v1880 = vrot.slane %v1878, 5
    %v1881 = vsel %vm1603, %v1876, %v1880
    %v1882 = vshrl.u32 %v1539, 16
    %v1884 = vrot.slane %v1882, 4
    %v1885 = vor.u32 %v1884, %v1880
    %v1886 = vrot.slane %v1885, 4
    %v1888 = vshll.u32 %v1540, 16
    %v1890 = vrot.slane %v1888, 5
    %v1891 = vsel %vm1603, %v1886, %v1890
    %v1893 = vshrl.u32 %v1541, 16
    %v1895 = vrot.slane %v1893, 4
    %v1896 = vshll.u32 %v1541, 16
    %v1898 = vrot.slane %v1896, 5
    %v1899 = vor.u32 %v1895, %v1898
    %v1900 = vrot.slane %v1899, 4
    %v1902 = vshll.u32 %v1542, 16
    %v1904 = vrot.slane %v1902, 5
    %v1905 = vsel %vm1603, %v1900, %v1904
    %v1906 = vshrl.u32 %v1542, 16
    %v1908 = vrot.slane %v1906, 4
    %v1909 = vor.u32 %v1908, %v1904
    %v1910 = vrot.slane %v1909, 4
    %v1912 = vshll.u32 %v1543, 16
    %v1914 = vrot.slane %v1912, 5
    %v1915 = vsel %vm1603, %v1910, %v1914
    %v1917 = vshrl.u32 %v1544, 16
    %v1919 = vrot.slane %v1917, 4
    %v1920 = vshll.u32 %v1544, 16
    %v1922 = vrot.slane %v1920, 5
    %v1923 = vor.u32 %v1919, %v1922
    %v1924 = vrot.slane %v1923, 4
    %v1926 = vshll.u32 %v1545, 16
    %v1928 = vrot.slane %v1926, 5
    %v1929 = vsel %vm1603, %v1924, %v1928
    %v1930 = vshrl.u32 %v1545, 16
    %v1932 = vrot.slane %v1930, 4
    %v1933 = vor.u32 %v1932, %v1928
    %v1934 = vrot.slane %v1933, 4
    %v1936 = vshll.u32 %v1546, 16
    %v1938 = vrot.slane %v1936, 5
    %v1939 = vsel %vm1603, %v1934, %v1938
    %v1941 = vshrl.u32 %v1547, 16
    %v1943 = vrot.slane %v1941, 4
    %v1944 = vshll.u32 %v1547, 16
    %v1946 = vrot.slane %v1944, 5
    %v1947 = vor.u32 %v1943, %v1946
    %v1948 = vrot.slane %v1947, 4
    %v1950 = vshll.u32 %v1548, 16
    %v1952 = vrot.slane %v1950, 5
    %v1953 = vsel %vm1603, %v1948, %v1952
    %v1954 = vshrl.u32 %v1548, 16
    %v1956 = vrot.slane %v1954, 4
    %v1957 = vor.u32 %v1956, %v1952
    %v1958 = vrot.slane %v1957, 4
    %v1960 = vshll.u32 %v1549, 16
    %v1962 = vrot.slane %v1960, 5
    %v1963 = vsel %vm1603, %v1958, %v1962
    %v1965 = vshrl.u32 %v1550, 16
    %v1967 = vrot.slane %v1965, 4
    %v1968 = vshll.u32 %v1550, 16
    %v1970 = vrot.slane %v1968, 5
    %v1971 = vor.u32 %v1967, %v1970
    %v1972 = vrot.slane %v1971, 4
    %v1974 = vshll.u32 %v1551, 16
    %v1976 = vrot.slane %v1974, 5
    %v1977 = vsel %vm1603, %v1972, %v1976
    %v1978 = vshrl.u32 %v1551, 16
    %v1980 = vrot.slane %v1978, 4
    %v1981 = vor.u32 %v1980, %v1976
    %v1982 = vrot.slane %v1981, 4
    %v1984 = vshll.u32 %v1552, 16
    %v1986 = vrot.slane %v1984, 5
    %v1987 = vsel %vm1603, %v1982, %v1986
    %v1989 = vshrl.u32 %v1553, 16
    %v1991 = vrot.slane %v1989, 4
    %v1992 = vshll.u32 %v1553, 16
    %v1994 = vrot.slane %v1992, 5
    %v1995 = vor.u32 %v1991, %v1994
    %v1996 = vrot.slane %v1995, 4
    %v1998 = vshll.u32 %v1554, 16
    %v2000 = vrot.slane %v1998, 5
    %v2001 = vsel %vm1603, %v1996, %v2000
    %v2002 = vshrl.u32 %v1554, 16
    %v2004 = vrot.slane %v2002, 4
    %v2005 = vor.u32 %v2004, %v2000
    %v2006 = vrot.slane %v2005, 4
    %v2008 = vshll.u32 %v1555, 16
    %v2010 = vrot.slane %v2008, 5
    %v2011 = vsel %vm1603, %v2006, %v2010
    %v2013 = vshrl.u32 %v1556, 16
    %v2015 = vrot.slane %v2013, 4
    %v2016 = vshll.u32 %v1556, 16
    %v2018 = vrot.slane %v2016, 5
    %v2019 = vor.u32 %v2015, %v2018
    %v2020 = vrot.slane %v2019, 4
    %v2022 = vshll.u32 %v1557, 16
    %v2024 = vrot.slane %v2022, 5
    %v2025 = vsel %vm1603, %v2020, %v2024
    %v2026 = vshrl.u32 %v1557, 16
    %v2028 = vrot.slane %v2026, 4
    %v2029 = vor.u32 %v2028, %v2024
    %v2030 = vrot.slane %v2029, 4
    %v2032 = vshll.u32 %v1558, 16
    %v2034 = vrot.slane %v2032, 5
    %v2035 = vsel %vm1603, %v2030, %v2034
    %v2037 = vshrl.u32 %v1559, 16
    %v2039 = vrot.slane %v2037, 4
    %v2040 = vshll.u32 %v1559, 16
    %v2042 = vrot.slane %v2040, 5
    %v2043 = vor.u32 %v2039, %v2042
    %v2044 = vrot.slane %v2043, 4
    %v2046 = vshll.u32 %v1560, 16
    %v2048 = vrot.slane %v2046, 5
    %v2049 = vsel %vm1603, %v2044, %v2048
    %v2050 = vshrl.u32 %v1560, 16
    %v2052 = vrot.slane %v2050, 4
    %v2053 = vor.u32 %v2052, %v2048
    %v2054 = vrot.slane %v2053, 4
    %v2056 = vshll.u32 %v1561, 16
    %v2058 = vrot.slane %v2056, 5
    %v2059 = vsel %vm1603, %v2054, %v2058
    %v2061 = vshrl.u32 %v1562, 16
    %v2063 = vrot.slane %v2061, 4
    %v2064 = vshll.u32 %v1562, 16
    %v2066 = vrot.slane %v2064, 5
    %v2067 = vor.u32 %v2063, %v2066
    %v2068 = vrot.slane %v2067, 4
    %v2070 = vshll.u32 %v1563, 16
    %v2072 = vrot.slane %v2070, 5
    %v2073 = vsel %vm1603, %v2068, %v2072
    %v2074 = vshrl.u32 %v1563, 16
    %v2076 = vrot.slane %v2074, 4
    %v2077 = vor.u32 %v2076, %v2072
    %v2078 = vrot.slane %v2077, 4
    %v2080 = vshll.u32 %v1564, 16
    %v2082 = vrot.slane %v2080, 5
    %v2083 = vsel %vm1603, %v2078, %v2082
    %v2085 = vshrl.u32 %v1565, 16
    %v2087 = vrot.slane %v2085, 4
    %v2088 = vshll.u32 %v1565, 16
    %v2090 = vrot.slane %v2088, 5
    %v2091 = vor.u32 %v2087, %v2090
    %v2092 = vrot.slane %v2091, 4
    %v2094 = vshll.u32 %v1566, 16
    %v2096 = vrot.slane %v2094, 5
    %v2097 = vsel %vm1603, %v2092, %v2096
    %v2098 = vshrl.u32 %v1566, 16
    %v2100 = vrot.slane %v2098, 4
    %v2101 = vor.u32 %v2100, %v2096
    %v2102 = vrot.slane %v2101, 4
    %v2104 = vshll.u32 %v1567, 16
    %v2106 = vrot.slane %v2104, 5
    %v2107 = vsel %vm1603, %v2102, %v2106
    %v2109 = vshrl.u32 %v1568, 16
    %v2111 = vrot.slane %v2109, 4
    %v2112 = vshll.u32 %v1568, 16
    %v2114 = vrot.slane %v2112, 5
    %v2115 = vor.u32 %v2111, %v2114
    %v2116 = vrot.slane %v2115, 4
    %v2118 = vshll.u32 %v1569, 16
    %v2120 = vrot.slane %v2118, 5
    %v2121 = vsel %vm1603, %v2116, %v2120
    %v2122 = vshrl.u32 %v1569, 16
    %v2124 = vrot.slane %v2122, 4
    %v2125 = vor.u32 %v2124, %v2120
    %v2126 = vrot.slane %v2125, 4
    %v2128 = vshll.u32 %v1570, 16
    %v2130 = vrot.slane %v2128, 5
    %v2131 = vsel %vm1603, %v2126, %v2130
    %v2133 = vshrl.u32 %v1571, 16
    %v2135 = vrot.slane %v2133, 4
    %v2136 = vshll.u32 %v1571, 16
    %v2138 = vrot.slane %v2136, 5
    %v2139 = vor.u32 %v2135, %v2138
    %v2140 = vrot.slane %v2139, 4
    %v2142 = vshll.u32 %v1572, 16
    %v2144 = vrot.slane %v2142, 5
    %v2145 = vsel %vm1603, %v2140, %v2144
    %v2146 = vshrl.u32 %v1572, 16
    %v2148 = vrot.slane %v2146, 4
    %v2149 = vor.u32 %v2148, %v2144
    %v2150 = vrot.slane %v2149, 4
    %v2152 = vshll.u32 %v1573, 16
    %v2154 = vrot.slane %v2152, 5
    %v2155 = vsel %vm1603, %v2150, %v2154
    %v2157 = vshrl.u32 %v1574, 16
    %v2159 = vrot.slane %v2157, 4
    %v2160 = vshll.u32 %v1574, 16
    %v2162 = vrot.slane %v2160, 5
    %v2163 = vor.u32 %v2159, %v2162
    %v2164 = vrot.slane %v2163, 4
    %v2166 = vshll.u32 %v1575, 16
    %v2168 = vrot.slane %v2166, 5
    %v2169 = vsel %vm1603, %v2164, %v2168
    %v2170 = vshrl.u32 %v1575, 16
    %v2172 = vrot.slane %v2170, 4
    %v2173 = vor.u32 %v2172, %v2168
    %v2174 = vrot.slane %v2173, 4
    %v2176 = vshll.u32 %v1576, 16
    %v2178 = vrot.slane %v2176, 5
    %v2179 = vsel %vm1603, %v2174, %v2178
    %v2181 = vshrl.u32 %v1577, 16
    %v2183 = vrot.slane %v2181, 4
    %v2184 = vshll.u32 %v1577, 16
    %v2186 = vrot.slane %v2184, 5
    %v2187 = vor.u32 %v2183, %v2186
    %v2188 = vrot.slane %v2187, 4
    %v2190 = vshll.u32 %v1578, 16
    %v2192 = vrot.slane %v2190, 5
    %v2193 = vsel %vm1603, %v2188, %v2192
    %v2194 = vshrl.u32 %v1578, 16
    %v2196 = vrot.slane %v2194, 4
    %v2197 = vor.u32 %v2196, %v2192
    %v2198 = vrot.slane %v2197, 4
    %v2200 = vshll.u32 %v1579, 16
    %v2202 = vrot.slane %v2200, 5
    %v2203 = vsel %vm1603, %v2198, %v2202
    %v2205 = vshrl.u32 %v1580, 16
    %v2207 = vrot.slane %v2205, 4
    %v2208 = vshll.u32 %v1580, 16
    %v2210 = vrot.slane %v2208, 5
    %v2211 = vor.u32 %v2207, %v2210
    %v2212 = vrot.slane %v2211, 4
    %v2214 = vshll.u32 %v1581, 16
    %v2216 = vrot.slane %v2214, 5
    %v2217 = vsel %vm1603, %v2212, %v2216
    %v2218 = vshrl.u32 %v1581, 16
    %v2220 = vrot.slane %v2218, 4
    %v2221 = vor.u32 %v2220, %v2216
    %v2222 = vrot.slane %v2221, 4
    %v2224 = vshll.u32 %v1582, 16
    %v2226 = vrot.slane %v2224, 5
    %v2227 = vsel %vm1603, %v2222, %v2226
    %v2229 = vshrl.u32 %v1583, 16
    %v2231 = vrot.slane %v2229, 4
    %v2232 = vshll.u32 %v1583, 16
    %v2234 = vrot.slane %v2232, 5
    %v2235 = vor.u32 %v2231, %v2234
    %v2236 = vrot.slane %v2235, 4
    %v2238 = vshll.u32 %v1584, 16
    %v2240 = vrot.slane %v2238, 5
    %v2241 = vsel %vm1603, %v2236, %v2240
    %v2242 = vshrl.u32 %v1584, 16
    %v2244 = vrot.slane %v2242, 4
    %v2245 = vor.u32 %v2244, %v2240
    %v2246 = vrot.slane %v2245, 4
    %v2248 = vshll.u32 %v1585, 16
    %v2250 = vrot.slane %v2248, 5
    %v2251 = vsel %vm1603, %v2246, %v2250
    %v2253 = vshrl.u32 %v1586, 16
    %v2255 = vrot.slane %v2253, 4
    %v2256 = vshll.u32 %v1586, 16
    %v2258 = vrot.slane %v2256, 5
    %v2259 = vor.u32 %v2255, %v2258
    %v2260 = vrot.slane %v2259, 4
    %v2262 = vshll.u32 %v1587, 16
    %v2264 = vrot.slane %v2262, 5
    %v2265 = vsel %vm1603, %v2260, %v2264
    %v2266 = vshrl.u32 %v1587, 16
    %v2268 = vrot.slane %v2266, 4
    %v2269 = vor.u32 %v2268, %v2264
    %v2270 = vrot.slane %v2269, 4
    %v2272 = vshll.u32 %v1588, 16
    %v2274 = vrot.slane %v2272, 5
    %v2275 = vsel %vm1603, %v2270, %v2274
    %v2277 = vshrl.u32 %v1589, 16
    %v2279 = vrot.slane %v2277, 4
    %v2280 = vshll.u32 %v1589, 16
    %v2282 = vrot.slane %v2280, 5
    %v2283 = vor.u32 %v2279, %v2282
    %v2284 = vrot.slane %v2283, 4
    %v2286 = vshll.u32 %v1590, 16
    %v2288 = vrot.slane %v2286, 5
    %v2289 = vsel %vm1603, %v2284, %v2288
    %v2290 = vshrl.u32 %v1590, 16
    %v2292 = vrot.slane %v2290, 4
    %v2293 = vor.u32 %v2292, %v2288
    %v2294 = vrot.slane %v2293, 4
    %v2296 = vshll.u32 %v1591, 16
    %v2298 = vrot.slane %v2296, 5
    %v2299 = vsel %vm1603, %v2294, %v2298
    %v2301 = vshrl.u32 %v1592, 16
    %v2303 = vrot.slane %v2301, 4
    %v2304 = vshll.u32 %v1592, 16
    %v2306 = vrot.slane %v2304, 5
    %v2307 = vor.u32 %v2303, %v2306
    %v2308 = vrot.slane %v2307, 4
    %v2310 = vshll.u32 %v1593, 16
    %v2312 = vrot.slane %v2310, 5
    %v2313 = vsel %vm1603, %v2308, %v2312
    %v2314 = vshrl.u32 %v1593, 16
    %v2316 = vrot.slane %v2314, 4
    %v2317 = vor.u32 %v2316, %v2312
    %v2318 = vrot.slane %v2317, 4
    %v2320 = vshll.u32 %v1594, 16
    %v2322 = vrot.slane %v2320, 5
    %v2323 = vsel %vm1603, %v2318, %v2322
    %v2325 = vshrl.u32 %v1595, 16
    %v2327 = vrot.slane %v2325, 4
    %v2328 = vshll.u32 %v1595, 16
    %v2330 = vrot.slane %v2328, 5
    %v2331 = vor.u32 %v2327, %v2330
    %v2332 = vrot.slane %v2331, 4
    %v2334 = vshll.u32 %v1596, 16
    %v2336 = vrot.slane %v2334, 5
    %v2337 = vsel %vm1603, %v2332, %v2336
    %v2338 = vshrl.u32 %v1596, 16
    %v2340 = vrot.slane %v2338, 4
    %v2341 = vor.u32 %v2340, %v2336
    %v2342 = vrot.slane %v2341, 4
    %v2344 = vshll.u32 %v1597, 16
    %v2346 = vrot.slane %v2344, 5
    %v2347 = vsel %vm1603, %v2342, %v2346
    %v2349 = vshrl.u32 %v1598, 16
    %v2351 = vrot.slane %v2349, 4
    %v2352 = vshll.u32 %v1598, 16
    %v2354 = vrot.slane %v2352, 5
    %v2355 = vor.u32 %v2351, %v2354
    %v2356 = vrot.slane %v2355, 4
    %v2358 = vshll.u32 %v1599, 16
    %v2360 = vrot.slane %v2358, 5
    %v2361 = vsel %vm1603, %v2356, %v2360
    %v2362 = vshrl.u32 %v1599, 16
    %v2364 = vrot.slane %v2362, 4
    %v2365 = vor.u32 %v2364, %v2360
    %v2366 = vrot.slane %v2365, 4
    %v2368 = vshll.u32 %v1600, 16
    %v2370 = vrot.slane %v2368, 5
    %v2371 = vsel %vm1603, %v2366, %v2370
    %v2372 = vunpack.c.l.b16 %v1617
    %v2373 = vunpack.c.l.b16 %v1627
    %v2374 = vunpack.c.l.b16 %v1641
    %v2375 = vunpack.c.l.b16 %v1651
    %v2376 = vunpack.c.l.b16 %v1665
    %v2377 = vunpack.c.l.b16 %v1675
    %v2378 = vunpack.c.l.b16 %v1689
    %v2379 = vunpack.c.l.b16 %v1699
    %v2380 = vunpack.c.l.b16 %v1713
    %v2381 = vunpack.c.l.b16 %v1723
    %v2382 = vunpack.c.l.b16 %v1737
    %v2383 = vunpack.c.l.b16 %v1747
    %v2384 = vunpack.c.l.b16 %v1761
    %v2385 = vunpack.c.l.b16 %v1771
    %v2386 = vunpack.c.l.b16 %v1785
    %v2387 = vunpack.c.l.b16 %v1795
    %v2388 = vunpack.c.l.b16 %v1809
    %v2389 = vunpack.c.l.b16 %v1819
    %v2390 = vunpack.c.l.b16 %v1833
    %v2391 = vunpack.c.l.b16 %v1843
    %v2392 = vunpack.c.l.b16 %v1857
    %v2393 = vunpack.c.l.b16 %v1867
    %v2394 = vunpack.c.l.b16 %v1881
    %v2395 = vunpack.c.l.b16 %v1891
    %v2396 = vunpack.c.l.b16 %v1905
    %v2397 = vunpack.c.l.b16 %v1915
    %v2398 = vunpack.c.l.b16 %v1929
    %v2399 = vunpack.c.l.b16 %v1939
    %v2400 = vunpack.c.l.b16 %v1953
    %v2401 = vunpack.c.l.b16 %v1963
    %v2402 = vunpack.c.l.b16 %v1977
    %v2403 = vunpack.c.l.b16 %v1987
    %v2404 = vunpack.c.l.b16 %v2001
    %v2405 = vunpack.c.l.b16 %v2011
    %v2406 = vunpack.c.l.b16 %v2025
    %v2407 = vunpack.c.l.b16 %v2035
    %v2408 = vunpack.c.l.b16 %v2049
    %v2409 = vunpack.c.l.b16 %v2059
    %v2410 = vunpack.c.l.b16 %v2073
    %v2411 = vunpack.c.l.b16 %v2083
    %v2412 = vunpack.c.l.b16 %v2097
    %v2413 = vunpack.c.l.b16 %v2107
    %v2414 = vunpack.c.l.b16 %v2121
    %v2415 = vunpack.c.l.b16 %v2131
    %v2416 = vunpack.c.l.b16 %v2145
    %v2417 = vunpack.c.l.b16 %v2155
    %v2418 = vunpack.c.l.b16 %v2169
    %v2419 = vunpack.c.l.b16 %v2179
    %v2420 = vunpack.c.l.b16 %v2193
    %v2421 = vunpack.c.l.b16 %v2203
    %v2422 = vunpack.c.l.b16 %v2217
    %v2423 = vunpack.c.l.b16 %v2227
    %v2424 = vunpack.c.l.b16 %v2241
    %v2425 = vunpack.c.l.b16 %v2251
    %v2426 = vunpack.c.l.b16 %v2265
    %v2427 = vunpack.c.l.b16 %v2275
    %v2428 = vunpack.c.l.b16 %v2289
    %v2429 = vunpack.c.l.b16 %v2299
    %v2430 = vunpack.c.l.b16 %v2313
    %v2431 = vunpack.c.l.b16 %v2323
    %v2432 = vunpack.c.l.b16 %v2337
    %v2433 = vunpack.c.l.b16 %v2347
    %v2434 = vunpack.c.l.b16 %v2361
    %v2435 = vunpack.c.l.b16 %v2371
    %v2436 = vpack.c.b16 %v2373, %v2372
    %v2437 = vpack.c.b16 %v2375, %v2374
    %v2438 = vpack.c.b16 %v2377, %v2376
    %v2439 = vpack.c.b16 %v2379, %v2378
    %v2440 = vpack.c.b16 %v2381, %v2380
    %v2441 = vpack.c.b16 %v2383, %v2382
    %v2442 = vpack.c.b16 %v2385, %v2384
    %v2443 = vpack.c.b16 %v2387, %v2386
    %v2444 = vpack.c.b16 %v2389, %v2388
    %v2445 = vpack.c.b16 %v2391, %v2390
    %v2446 = vpack.c.b16 %v2393, %v2392
    %v2447 = vpack.c.b16 %v2395, %v2394
    %v2448 = vpack.c.b16 %v2397, %v2396
    %v2449 = vpack.c.b16 %v2399, %v2398
    %v2450 = vpack.c.b16 %v2401, %v2400
    %v2451 = vpack.c.b16 %v2403, %v2402
    %v2452 = vpack.c.b16 %v2405, %v2404
    %v2453 = vpack.c.b16 %v2407, %v2406
    %v2454 = vpack.c.b16 %v2409, %v2408
    %v2455 = vpack.c.b16 %v2411, %v2410
    %v2456 = vpack.c.b16 %v2413, %v2412
    %v2457 = vpack.c.b16 %v2415, %v2414
    %v2458 = vpack.c.b16 %v2417, %v2416
    %v2459 = vpack.c.b16 %v2419, %v2418
    %v2460 = vpack.c.b16 %v2421, %v2420
    %v2461 = vpack.c.b16 %v2423, %v2422
    %v2462 = vpack.c.b16 %v2425, %v2424
    %v2463 = vpack.c.b16 %v2427, %v2426
    %v2464 = vpack.c.b16 %v2429, %v2428
    %v2465 = vpack.c.b16 %v2431, %v2430
    %v2466 = vpack.c.b16 %v2433, %v2432
    %v2467 = vpack.c.b16 %v2435, %v2434
    %2468 = vrot.lane.b32.xlu0 %v2436, 32
    %v2469 = vpop.permute.xlu0 %2468
    %2470 = vrot.lane.b32.xlu0 %v2437, 32
    %v2471 = vpop.permute.xlu0 %2470
    %2472 = vrot.lane.b32.xlu0 %v2438, 32
    %v2473 = vpop.permute.xlu0 %2472
    %2474 = vrot.lane.b32.xlu0 %v2439, 32
    %v2475 = vpop.permute.xlu0 %2474
    %2476 = vrot.lane.b32.xlu0 %v2440, 32
    %v2477 = vpop.permute.xlu0 %2476
    %2478 = vrot.lane.b32.xlu0 %v2441, 32
    %v2479 = vpop.permute.xlu0 %2478
    %2480 = vrot.lane.b32.xlu0 %v2442, 32
    %v2481 = vpop.permute.xlu0 %2480
    %2482 = vrot.lane.b32.xlu0 %v2443, 32
    %v2483 = vpop.permute.xlu0 %2482
    %2484 = vrot.lane.b32.xlu0 %v2444, 32
    %v2485 = vpop.permute.xlu0 %2484
    %2486 = vrot.lane.b32.xlu0 %v2445, 32
    %v2487 = vpop.permute.xlu0 %2486
    %2488 = vrot.lane.b32.xlu0 %v2446, 32
    %v2489 = vpop.permute.xlu0 %2488
    %2490 = vrot.lane.b32.xlu0 %v2447, 32
    %v2491 = vpop.permute.xlu0 %2490
    %2492 = vrot.lane.b32.xlu0 %v2448, 32
    %v2493 = vpop.permute.xlu0 %2492
    %2494 = vrot.lane.b32.xlu0 %v2449, 32
    %v2495 = vpop.permute.xlu0 %2494
    %2496 = vrot.lane.b32.xlu0 %v2450, 32
    %v2497 = vpop.permute.xlu0 %2496
    %2498 = vrot.lane.b32.xlu0 %v2451, 32
    %v2499 = vpop.permute.xlu0 %2498
    %2500 = vrot.lane.b32.xlu0 %v2452, 32
    %v2501 = vpop.permute.xlu0 %2500
    %2502 = vrot.lane.b32.xlu0 %v2453, 32
    %v2503 = vpop.permute.xlu0 %2502
    %2504 = vrot.lane.b32.xlu0 %v2454, 32
    %v2505 = vpop.permute.xlu0 %2504
    %2506 = vrot.lane.b32.xlu0 %v2455, 32
    %v2507 = vpop.permute.xlu0 %2506
    %2508 = vrot.lane.b32.xlu0 %v2456, 32
    %v2509 = vpop.permute.xlu0 %2508
    %2510 = vrot.lane.b32.xlu0 %v2457, 32
    %v2511 = vpop.permute.xlu0 %2510
    %2512 = vrot.lane.b32.xlu0 %v2458, 32
    %v2513 = vpop.permute.xlu0 %2512
    %2514 = vrot.lane.b32.xlu0 %v2459, 32
    %v2515 = vpop.permute.xlu0 %2514
    %2516 = vrot.lane.b32.xlu0 %v2460, 32
    %v2517 = vpop.permute.xlu0 %2516
    %2518 = vrot.lane.b32.xlu0 %v2461, 32
    %v2519 = vpop.permute.xlu0 %2518
    %2520 = vrot.lane.b32.xlu0 %v2462, 32
    %v2521 = vpop.permute.xlu0 %2520
    %2522 = vrot.lane.b32.xlu0 %v2463, 32
    %v2523 = vpop.permute.xlu0 %2522
    %2524 = vrot.lane.b32.xlu0 %v2464, 32
    %v2525 = vpop.permute.xlu0 %2524
    %2526 = vrot.lane.b32.xlu0 %v2465, 32
    %v2527 = vpop.permute.xlu0 %2526
    %2528 = vrot.lane.b32.xlu0 %v2466, 32
    %v2529 = vpop.permute.xlu0 %2528
    %2530 = vrot.lane.b32.xlu0 %v2467, 32
    %v2531 = vpop.permute.xlu0 %2530
    %vm2564 = vcmask 523520
    %2565 = vst.msk [vmem:[#allocation4] sm:$0xff] %vm2564, %v2469
    %2566 = vst.msk [vmem:[#allocation4 + $0x18] sm:$0xff] %vm2564, %v2471
    %2567 = vst.msk [vmem:[#allocation4 + $0x30] sm:$0xff] %vm2564, %v2473
    %2568 = vst.msk [vmem:[#allocation4 + $0x48] sm:$0xff] %vm2564, %v2475
    %2569 = vst.msk [vmem:[#allocation4 + $0x60] sm:$0xff] %vm2564, %v2477
    %2570 = vst.msk [vmem:[#allocation4 + $0x78] sm:$0xff] %vm2564, %v2479
    %2571 = vst.msk [vmem:[#allocation4 + $0x90] sm:$0xff] %vm2564, %v2481
    %2572 = vst.msk [vmem:[#allocation4 + $0xa8] sm:$0xff] %vm2564, %v2483
    %2573 = vst.msk [vmem:[#allocation4 + $0xc0] sm:$0xff] %vm2564, %v2485
    %2574 = vst.msk [vmem:[#allocation4 + $0xd8] sm:$0xff] %vm2564, %v2487
    %2575 = vst.msk [vmem:[#allocation4 + $0xf0] sm:$0xff] %vm2564, %v2489
    %2576 = vst.msk [vmem:[#allocation4 + $0x108] sm:$0xff] %vm2564, %v2491
    %2577 = vst.msk [vmem:[#allocation4 + $0x120] sm:$0xff] %vm2564, %v2493
    %2578 = vst.msk [vmem:[#allocation4 + $0x138] sm:$0xff] %vm2564, %v2495
    %2579 = vst.msk [vmem:[#allocation4 + $0x150] sm:$0xff] %vm2564, %v2497
    %2580 = vst.msk [vmem:[#allocation4 + $0x168] sm:$0xff] %vm2564, %v2499
    %2581 = vst.msk [vmem:[#allocation4 + $0x180] sm:$0xff] %vm2564, %v2501
    %2582 = vst.msk [vmem:[#allocation4 + $0x198] sm:$0xff] %vm2564, %v2503
    %2583 = vst.msk [vmem:[#allocation4 + $0x1b0] sm:$0xff] %vm2564, %v2505
    %2584 = vst.msk [vmem:[#allocation4 + $0x1c8] sm:$0xff] %vm2564, %v2507
    %2585 = vst.msk [vmem:[#allocation4 + $0x1e0] sm:$0xff] %vm2564, %v2509
    %2586 = vst.msk [vmem:[#allocation4 + $0x1f8] sm:$0xff] %vm2564, %v2511
    %2587 = vst.msk [vmem:[#allocation4 + $0x210] sm:$0xff] %vm2564, %v2513
    %2588 = vst.msk [vmem:[#allocation4 + $0x228] sm:$0xff] %vm2564, %v2515
    %2589 = vst.msk [vmem:[#allocation4 + $0x240] sm:$0xff] %vm2564, %v2517
    %2590 = vst.msk [vmem:[#allocation4 + $0x258] sm:$0xff] %vm2564, %v2519
    %2591 = vst.msk [vmem:[#allocation4 + $0x270] sm:$0xff] %vm2564, %v2521
    %2592 = vst.msk [vmem:[#allocation4 + $0x288] sm:$0xff] %vm2564, %v2523
    %2593 = vst.msk [vmem:[#allocation4 + $0x2a0] sm:$0xff] %vm2564, %v2525
    %2594 = vst.msk [vmem:[#allocation4 + $0x2b8] sm:$0xff] %vm2564, %v2527
    %2595 = vst.msk [vmem:[#allocation4 + $0x2d0] sm:$0xff] %vm2564, %v2529
    %2596 = vst.msk [vmem:[#allocation4 + $0x2e8] sm:$0xff] %vm2564, %v2531
    %v2597 = vld [vmem:[#allocation3] sm:$0xe]
    %v2598 = vld [vmem:[#allocation3 + $0x4] sm:$0xf]
    %v2599 = vld [vmem:[#allocation3 + $0x8] sm:$0x1]
    %v2600 = vld [vmem:[#allocation3 + $0xc] sm:$0xe]
    %v2601 = vld [vmem:[#allocation3 + $0x10] sm:$0xf]
    %v2602 = vld [vmem:[#allocation3 + $0x14] sm:$0x1]
    %v2603 = vld [vmem:[#allocation3 + $0x18] sm:$0xe]
    %v2604 = vld [vmem:[#allocation3 + $0x1c] sm:$0xf]
    %v2605 = vld [vmem:[#allocation3 + $0x20] sm:$0x1]
    %v2606 = vld [vmem:[#allocation3 + $0x24] sm:$0xe]
    %v2607 = vld [vmem:[#allocation3 + $0x28] sm:$0xf]
    %v2608 = vld [vmem:[#allocation3 + $0x2c] sm:$0x1]
    %v2609 = vld [vmem:[#allocation3 + $0x30] sm:$0xe]
    %v2610 = vld [vmem:[#allocation3 + $0x34] sm:$0xf]
    %v2611 = vld [vmem:[#allocation3 + $0x38] sm:$0x1]
    %v2612 = vld [vmem:[#allocation3 + $0x3c] sm:$0xe]
    %v2613 = vld [vmem:[#allocation3 + $0x40] sm:$0xf]
    %v2614 = vld [vmem:[#allocation3 + $0x44] sm:$0x1]
    %v2615 = vld [vmem:[#allocation3 + $0x48] sm:$0xe]
    %v2616 = vld [vmem:[#allocation3 + $0x4c] sm:$0xf]
    %v2617 = vld [vmem:[#allocation3 + $0x50] sm:$0x1]
    %v2618 = vld [vmem:[#allocation3 + $0x54] sm:$0xe]
    %v2619 = vld [vmem:[#allocation3 + $0x58] sm:$0xf]
    %v2620 = vld [vmem:[#allocation3 + $0x5c] sm:$0x1]
    %v2621 = vld [vmem:[#allocation3 + $0x60] sm:$0xe]
    %v2622 = vld [vmem:[#allocation3 + $0x64] sm:$0xf]
    %v2623 = vld [vmem:[#allocation3 + $0x68] sm:$0x1]
    %v2624 = vld [vmem:[#allocation3 + $0x6c] sm:$0xe]
    %v2625 = vld [vmem:[#allocation3 + $0x70] sm:$0xf]
    %v2626 = vld [vmem:[#allocation3 + $0x74] sm:$0x1]
    %v2627 = vld [vmem:[#allocation3 + $0x78] sm:$0xe]
    %v2628 = vld [vmem:[#allocation3 + $0x7c] sm:$0xf]
    %v2629 = vld [vmem:[#allocation3 + $0x80] sm:$0x1]
    %v2630 = vld [vmem:[#allocation3 + $0x84] sm:$0xe]
    %v2631 = vld [vmem:[#allocation3 + $0x88] sm:$0xf]
    %v2632 = vld [vmem:[#allocation3 + $0x8c] sm:$0x1]
    %v2633 = vld [vmem:[#allocation3 + $0x90] sm:$0xe]
    %v2634 = vld [vmem:[#allocation3 + $0x94] sm:$0xf]
    %v2635 = vld [vmem:[#allocation3 + $0x98] sm:$0x1]
    %v2636 = vld [vmem:[#allocation3 + $0x9c] sm:$0xe]
    %v2637 = vld [vmem:[#allocation3 + $0xa0] sm:$0xf]
    %v2638 = vld [vmem:[#allocation3 + $0xa4] sm:$0x1]
    %v2639 = vld [vmem:[#allocation3 + $0xa8] sm:$0xe]
    %v2640 = vld [vmem:[#allocation3 + $0xac] sm:$0xf]
    %v2641 = vld [vmem:[#allocation3 + $0xb0] sm:$0x1]
    %v2642 = vld [vmem:[#allocation3 + $0xb4] sm:$0xe]
    %v2643 = vld [vmem:[#allocation3 + $0xb8] sm:$0xf]
    %v2644 = vld [vmem:[#allocation3 + $0xbc] sm:$0x1]
    %v2645 = vld [vmem:[#allocation3 + $0xd8] sm:$0xe]
    %v2646 = vld [vmem:[#allocation3 + $0xdc] sm:$0xf]
    %v2647 = vld [vmem:[#allocation3 + $0xe0] sm:$0x1]
    %v2648 = vld [vmem:[#allocation3 + $0xe4] sm:$0xe]
    %v2649 = vld [vmem:[#allocation3 + $0xe8] sm:$0xf]
    %v2650 = vld [vmem:[#allocation3 + $0xec] sm:$0x1]
    %v2651 = vld [vmem:[#allocation3 + $0xf0] sm:$0xe]
    %v2652 = vld [vmem:[#allocation3 + $0xf4] sm:$0xf]
    %v2653 = vld [vmem:[#allocation3 + $0xf8] sm:$0x1]
    %v2654 = vld [vmem:[#allocation3 + $0xfc] sm:$0xe]
    %v2655 = vld [vmem:[#allocation3 + $0x100] sm:$0xf]
    %v2656 = vld [vmem:[#allocation3 + $0x104] sm:$0x1]
    %v2657 = vld [vmem:[#allocation3 + $0x108] sm:$0xe]
    %v2658 = vld [vmem:[#allocation3 + $0x10c] sm:$0xf]
    %v2659 = vld [vmem:[#allocation3 + $0x110] sm:$0x1]
    %v2660 = vld [vmem:[#allocation3 + $0x114] sm:$0xe]
    %v2661 = vld [vmem:[#allocation3 + $0x118] sm:$0xf]
    %v2662 = vld [vmem:[#allocation3 + $0x11c] sm:$0x1]
    %v2663 = vld [vmem:[#allocation3 + $0x120] sm:$0xe]
    %v2664 = vld [vmem:[#allocation3 + $0x124] sm:$0xf]
    %v2665 = vld [vmem:[#allocation3 + $0x128] sm:$0x1]
    %v2666 = vld [vmem:[#allocation3 + $0x12c] sm:$0xe]
    %v2667 = vld [vmem:[#allocation3 + $0x130] sm:$0xf]
    %v2668 = vld [vmem:[#allocation3 + $0x134] sm:$0x1]
    %v2669 = vld [vmem:[#allocation3 + $0x138] sm:$0xe]
    %v2670 = vld [vmem:[#allocation3 + $0x13c] sm:$0xf]
    %v2671 = vld [vmem:[#allocation3 + $0x140] sm:$0x1]
    %v2672 = vld [vmem:[#allocation3 + $0x144] sm:$0xe]
    %v2673 = vld [vmem:[#allocation3 + $0x148] sm:$0xf]
    %v2674 = vld [vmem:[#allocation3 + $0x14c] sm:$0x1]
    %v2675 = vld [vmem:[#allocation3 + $0x150] sm:$0xe]
    %v2676 = vld [vmem:[#allocation3 + $0x154] sm:$0xf]
    %v2677 = vld [vmem:[#allocation3 + $0x158] sm:$0x1]
    %v2678 = vld [vmem:[#allocation3 + $0x15c] sm:$0xe]
    %v2679 = vld [vmem:[#allocation3 + $0x160] sm:$0xf]
    %v2680 = vld [vmem:[#allocation3 + $0x164] sm:$0x1]
    %v2681 = vld [vmem:[#allocation3 + $0x168] sm:$0xe]
    %v2682 = vld [vmem:[#allocation3 + $0x16c] sm:$0xf]
    %v2683 = vld [vmem:[#allocation3 + $0x170] sm:$0x1]
    %v2684 = vld [vmem:[#allocation3 + $0x174] sm:$0xe]
    %v2685 = vld [vmem:[#allocation3 + $0x178] sm:$0xf]
    %v2686 = vld [vmem:[#allocation3 + $0x17c] sm:$0x1]
    %v2687 = vld [vmem:[#allocation3 + $0x180] sm:$0xe]
    %v2688 = vld [vmem:[#allocation3 + $0x184] sm:$0xf]
    %v2689 = vld [vmem:[#allocation3 + $0x188] sm:$0x1]
    %v2690 = vld [vmem:[#allocation3 + $0x18c] sm:$0xe]
    %v2691 = vld [vmem:[#allocation3 + $0x190] sm:$0xf]
    %v2692 = vld [vmem:[#allocation3 + $0x194] sm:$0x1]
    %vm2789 = vcmask 1042432
    %vm2790 = vcmask 1046532
    %vm2791 = vmor %vm2789, %vm2790
    %v2792 = vrot.slane %v2597, 5
    %v2793 = vrot.slane %v2792, 4
    %v2794 = vrot.slane %v2598, 5
    %v2795 = vsel %vm2791, %v2793, %v2794
    %v2796 = vrot.slane %v2794, 4
    %v2797 = vrot.slane %v2599, 5
    %v2798 = vsel %vm2791, %v2796, %v2797
    %v2799 = vrot.slane %v2600, 5
    %v2800 = vrot.slane %v2799, 4
    %v2801 = vrot.slane %v2601, 5
    %v2802 = vsel %vm2791, %v2800, %v2801
    %v2803 = vrot.slane %v2801, 4
    %v2804 = vrot.slane %v2602, 5
    %v2805 = vsel %vm2791, %v2803, %v2804
    %v2806 = vrot.slane %v2603, 5
    %v2807 = vrot.slane %v2806, 4
    %v2808 = vrot.slane %v2604, 5
    %v2809 = vsel %vm2791, %v2807, %v2808
    %v2810 = vrot.slane %v2808, 4
    %v2811 = vrot.slane %v2605, 5
    %v2812 = vsel %vm2791, %v2810, %v2811
    %v2813 = vrot.slane %v2606, 5
    %v2814 = vrot.slane %v2813, 4
    %v2815 = vrot.slane %v2607, 5
    %v2816 = vsel %vm2791, %v2814, %v2815
    %v2817 = vrot.slane %v2815, 4
    %v2818 = vrot.slane %v2608, 5
    %v2819 = vsel %vm2791, %v2817, %v2818
    %v2820 = vrot.slane %v2609, 5
    %v2821 = vrot.slane %v2820, 4
    %v2822 = vrot.slane %v2610, 5
    %v2823 = vsel %vm2791, %v2821, %v2822
    %v2824 = vrot.slane %v2822, 4
    %v2825 = vrot.slane %v2611, 5
    %v2826 = vsel %vm2791, %v2824, %v2825
    %v2827 = vrot.slane %v2612, 5
    %v2828 = vrot.slane %v2827, 4
    %v2829 = vrot.slane %v2613, 5
    %v2830 = vsel %vm2791, %v2828, %v2829
    %v2831 = vrot.slane %v2829, 4
    %v2832 = vrot.slane %v2614, 5
    %v2833 = vsel %vm2791, %v2831, %v2832
    %v2834 = vrot.slane %v2615, 5
    %v2835 = vrot.slane %v2834, 4
    %v2836 = vrot.slane %v2616, 5
    %v2837 = vsel %vm2791, %v2835, %v2836
    %v2838 = vrot.slane %v2836, 4
    %v2839 = vrot.slane %v2617, 5
    %v2840 = vsel %vm2791, %v2838, %v2839
    %v2841 = vrot.slane %v2618, 5
    %v2842 = vrot.slane %v2841, 4
    %v2843 = vrot.slane %v2619, 5
    %v2844 = vsel %vm2791, %v2842, %v2843
    %v2845 = vrot.slane %v2843, 4
    %v2846 = vrot.slane %v2620, 5
    %v2847 = vsel %vm2791, %v2845, %v2846
    %v2848 = vrot.slane %v2621, 5
    %v2849 = vrot.slane %v2848, 4
    %v2850 = vrot.slane %v2622, 5
    %v2851 = vsel %vm2791, %v2849, %v2850
    %v2852 = vrot.slane %v2850, 4
    %v2853 = vrot.slane %v2623, 5
    %v2854 = vsel %vm2791, %v2852, %v2853
    %v2855 = vrot.slane %v2624, 5
    %v2856 = vrot.slane %v2855, 4
    %v2857 = vrot.slane %v2625, 5
    %v2858 = vsel %vm2791, %v2856, %v2857
    %v2859 = vrot.slane %v2857, 4
    %v2860 = vrot.slane %v2626, 5
    %v2861 = vsel %vm2791, %v2859, %v2860
    %v2862 = vrot.slane %v2627, 5
    %v2863 = vrot.slane %v2862, 4
    %v2864 = vrot.slane %v2628, 5
    %v2865 = vsel %vm2791, %v2863, %v2864
    %v2866 = vrot.slane %v2864, 4
    %v2867 = vrot.slane %v2629, 5
    %v2868 = vsel %vm2791, %v2866, %v2867
    %v2869 = vrot.slane %v2630, 5
    %v2870 = vrot.slane %v2869, 4
    %v2871 = vrot.slane %v2631, 5
    %v2872 = vsel %vm2791, %v2870, %v2871
    %v2873 = vrot.slane %v2871, 4
    %v2874 = vrot.slane %v2632, 5
    %v2875 = vsel %vm2791, %v2873, %v2874
    %v2876 = vrot.slane %v2633, 5
    %v2877 = vrot.slane %v2876, 4
    %v2878 = vrot.slane %v2634, 5
    %v2879 = vsel %vm2791, %v2877, %v2878
    %v2880 = vrot.slane %v2878, 4
    %v2881 = vrot.slane %v2635, 5
    %v2882 = vsel %vm2791, %v2880, %v2881
    %v2883 = vrot.slane %v2636, 5
    %v2884 = vrot.slane %v2883, 4
    %v2885 = vrot.slane %v2637, 5
    %v2886 = vsel %vm2791, %v2884, %v2885
    %v2887 = vrot.slane %v2885, 4
    %v2888 = vrot.slane %v2638, 5
    %v2889 = vsel %vm2791, %v2887, %v2888
    %v2890 = vrot.slane %v2639, 5
    %v2891 = vrot.slane %v2890, 4
    %v2892 = vrot.slane %v2640, 5
    %v2893 = vsel %vm2791, %v2891, %v2892
    %v2894 = vrot.slane %v2892, 4
    %v2895 = vrot.slane %v2641, 5
    %v2896 = vsel %vm2791, %v2894, %v2895
    %v2897 = vrot.slane %v2642, 5
    %v2898 = vrot.slane %v2897, 4
    %v2899 = vrot.slane %v2643, 5
    %v2900 = vsel %vm2791, %v2898, %v2899
    %v2901 = vrot.slane %v2899, 4
    %v2902 = vrot.slane %v2644, 5
    %v2903 = vsel %vm2791, %v2901, %v2902
    %v2904 = vrot.slane %v2645, 5
    %v2905 = vrot.slane %v2904, 4
    %v2906 = vrot.slane %v2646, 5
    %v2907 = vsel %vm2791, %v2905, %v2906
    %v2908 = vrot.slane %v2906, 4
    %v2909 = vrot.slane %v2647, 5
    %v2910 = vsel %vm2791, %v2908, %v2909
    %v2911 = vrot.slane %v2648, 5
    %v2912 = vrot.slane %v2911, 4
    %v2913 = vrot.slane %v2649, 5
    %v2914 = vsel %vm2791, %v2912, %v2913
    %v2915 = vrot.slane %v2913, 4
    %v2916 = vrot.slane %v2650, 5
    %v2917 = vsel %vm2791, %v2915, %v2916
    %v2918 = vrot.slane %v2651, 5
    %v2919 = vrot.slane %v2918, 4
    %v2920 = vrot.slane %v2652, 5
    %v2921 = vsel %vm2791, %v2919, %v2920
    %v2922 = vrot.slane %v2920, 4
    %v2923 = vrot.slane %v2653, 5
    %v2924 = vsel %vm2791, %v2922, %v2923
    %v2925 = vrot.slane %v2654, 5
    %v2926 = vrot.slane %v2925, 4
    %v2927 = vrot.slane %v2655, 5
    %v2928 = vsel %vm2791, %v2926, %v2927
    %v2929 = vrot.slane %v2927, 4
    %v2930 = vrot.slane %v2656, 5
    %v2931 = vsel %vm2791, %v2929, %v2930
    %v2932 = vrot.slane %v2657, 5
    %v2933 = vrot.slane %v2932, 4
    %v2934 = vrot.slane %v2658, 5
    %v2935 = vsel %vm2791, %v2933, %v2934
    %v2936 = vrot.slane %v2934, 4
    %v2937 = vrot.slane %v2659, 5
    %v2938 = vsel %vm2791, %v2936, %v2937
    %v2939 = vrot.slane %v2660, 5
    %v2940 = vrot.slane %v2939, 4
    %v2941 = vrot.slane %v2661, 5
    %v2942 = vsel %vm2791, %v2940, %v2941
    %v2943 = vrot.slane %v2941, 4
    %v2944 = vrot.slane %v2662, 5
    %v2945 = vsel %vm2791, %v2943, %v2944
    %v2946 = vrot.slane %v2663, 5
    %v2947 = vrot.slane %v2946, 4
    %v2948 = vrot.slane %v2664, 5
    %v2949 = vsel %vm2791, %v2947, %v2948
    %v2950 = vrot.slane %v2948, 4
    %v2951 = vrot.slane %v2665, 5
    %v2952 = vsel %vm2791, %v2950, %v2951
    %v2953 = vrot.slane %v2666, 5
    %v2954 = vrot.slane %v2953, 4
    %v2955 = vrot.slane %v2667, 5
    %v2956 = vsel %vm2791, %v2954, %v2955
    %v2957 = vrot.slane %v2955, 4
    %v2958 = vrot.slane %v2668, 5
    %v2959 = vsel %vm2791, %v2957, %v2958
    %v2960 = vrot.slane %v2669, 5
    %v2961 = vrot.slane %v2960, 4
    %v2962 = vrot.slane %v2670, 5
    %v2963 = vsel %vm2791, %v2961, %v2962
    %v2964 = vrot.slane %v2962, 4
    %v2965 = vrot.slane %v2671, 5
    %v2966 = vsel %vm2791, %v2964, %v2965
    %v2967 = vrot.slane %v2672, 5
    %v2968 = vrot.slane %v2967, 4
    %v2969 = vrot.slane %v2673, 5
    %v2970 = vsel %vm2791, %v2968, %v2969
    %v2971 = vrot.slane %v2969, 4
    %v2972 = vrot.slane %v2674, 5
    %v2973 = vsel %vm2791, %v2971, %v2972
    %v2974 = vrot.slane %v2675, 5
    %v2975 = vrot.slane %v2974, 4
    %v2976 = vrot.slane %v2676, 5
    %v2977 = vsel %vm2791, %v2975, %v2976
    %v2978 = vrot.slane %v2976, 4
    %v2979 = vrot.slane %v2677, 5
    %v2980 = vsel %vm2791, %v2978, %v2979
    %v2981 = vrot.slane %v2678, 5
    %v2982 = vrot.slane %v2981, 4
    %v2983 = vrot.slane %v2679, 5
    %v2984 = vsel %vm2791, %v2982, %v2983
    %v2985 = vrot.slane %v2983, 4
    %v2986 = vrot.slane %v2680, 5
    %v2987 = vsel %vm2791, %v2985, %v2986
    %v2988 = vrot.slane %v2681, 5
    %v2989 = vrot.slane %v2988, 4
    %v2990 = vrot.slane %v2682, 5
    %v2991 = vsel %vm2791, %v2989, %v2990
    %v2992 = vrot.slane %v2990, 4
    %v2993 = vrot.slane %v2683, 5
    %v2994 = vsel %vm2791, %v2992, %v2993
    %v2995 = vrot.slane %v2684, 5
    %v2996 = vrot.slane %v2995, 4
    %v2997 = vrot.slane %v2685, 5
    %v2998 = vsel %vm2791, %v2996, %v2997
    %v2999 = vrot.slane %v2997, 4
    %v3000 = vrot.slane %v2686, 5
    %v3001 = vsel %vm2791, %v2999, %v3000
    %v3002 = vrot.slane %v2687, 5
    %v3003 = vrot.slane %v3002, 4
    %v3004 = vrot.slane %v2688, 5
    %v3005 = vsel %vm2791, %v3003, %v3004
    %v3006 = vrot.slane %v3004, 4
    %v3007 = vrot.slane %v2689, 5
    %v3008 = vsel %vm2791, %v3006, %v3007
    %v3009 = vrot.slane %v2690, 5
    %v3010 = vrot.slane %v3009, 4
    %v3011 = vrot.slane %v2691, 5
    %v3012 = vsel %vm2791, %v3010, %v3011
    %v3013 = vrot.slane %v3011, 4
    %v3014 = vrot.slane %v2692, 5
    %v3015 = vsel %vm2791, %v3013, %v3014
    %v3016 = vunpack.c.l.b16 %v2795
    %v3017 = vunpack.c.l.b16 %v2798
    %v3018 = vunpack.c.l.b16 %v2802
    %v3019 = vunpack.c.l.b16 %v2805
    %v3020 = vunpack.c.l.b16 %v2809
    %v3021 = vunpack.c.l.b16 %v2812
    %v3022 = vunpack.c.l.b16 %v2816
    %v3023 = vunpack.c.l.b16 %v2819
    %v3024 = vunpack.c.l.b16 %v2823
    %v3025 = vunpack.c.l.b16 %v2826
    %v3026 = vunpack.c.l.b16 %v2830
    %v3027 = vunpack.c.l.b16 %v2833
    %v3028 = vunpack.c.l.b16 %v2837
    %v3029 = vunpack.c.l.b16 %v2840
    %v3030 = vunpack.c.l.b16 %v2844
    %v3031 = vunpack.c.l.b16 %v2847
    %v3032 = vunpack.c.l.b16 %v2851
    %v3033 = vunpack.c.l.b16 %v2854
    %v3034 = vunpack.c.l.b16 %v2858
    %v3035 = vunpack.c.l.b16 %v2861
    %v3036 = vunpack.c.l.b16 %v2865
    %v3037 = vunpack.c.l.b16 %v2868
    %v3038 = vunpack.c.l.b16 %v2872
    %v3039 = vunpack.c.l.b16 %v2875
    %v3040 = vunpack.c.l.b16 %v2879
    %v3041 = vunpack.c.l.b16 %v2882
    %v3042 = vunpack.c.l.b16 %v2886
    %v3043 = vunpack.c.l.b16 %v2889
    %v3044 = vunpack.c.l.b16 %v2893
    %v3045 = vunpack.c.l.b16 %v2896
    %v3046 = vunpack.c.l.b16 %v2900
    %v3047 = vunpack.c.l.b16 %v2903
    %v3048 = vunpack.c.l.b16 %v2907
    %v3049 = vunpack.c.l.b16 %v2910
    %v3050 = vunpack.c.l.b16 %v2914
    %v3051 = vunpack.c.l.b16 %v2917
    %v3052 = vunpack.c.l.b16 %v2921
    %v3053 = vunpack.c.l.b16 %v2924
    %v3054 = vunpack.c.l.b16 %v2928
    %v3055 = vunpack.c.l.b16 %v2931
    %v3056 = vunpack.c.l.b16 %v2935
    %v3057 = vunpack.c.l.b16 %v2938
    %v3058 = vunpack.c.l.b16 %v2942
    %v3059 = vunpack.c.l.b16 %v2945
    %v3060 = vunpack.c.l.b16 %v2949
    %v3061 = vunpack.c.l.b16 %v2952
    %v3062 = vunpack.c.l.b16 %v2956
    %v3063 = vunpack.c.l.b16 %v2959
    %v3064 = vunpack.c.l.b16 %v2963
    %v3065 = vunpack.c.l.b16 %v2966
    %v3066 = vunpack.c.l.b16 %v2970
    %v3067 = vunpack.c.l.b16 %v2973
    %v3068 = vunpack.c.l.b16 %v2977
    %v3069 = vunpack.c.l.b16 %v2980
    %v3070 = vunpack.c.l.b16 %v2984
    %v3071 = vunpack.c.l.b16 %v2987
    %v3072 = vunpack.c.l.b16 %v2991
    %v3073 = vunpack.c.l.b16 %v2994
    %v3074 = vunpack.c.l.b16 %v2998
    %v3075 = vunpack.c.l.b16 %v3001
    %v3076 = vunpack.c.l.b16 %v3005
    %v3077 = vunpack.c.l.b16 %v3008
    %v3078 = vunpack.c.l.b16 %v3012
    %v3079 = vunpack.c.l.b16 %v3015
    %v3080 = vpack.c.b16 %v3017, %v3016
    %v3081 = vpack.c.b16 %v3019, %v3018
    %v3082 = vpack.c.b16 %v3021, %v3020
    %v3083 = vpack.c.b16 %v3023, %v3022
    %v3084 = vpack.c.b16 %v3025, %v3024
    %v3085 = vpack.c.b16 %v3027, %v3026
    %v3086 = vpack.c.b16 %v3029, %v3028
    %v3087 = vpack.c.b16 %v3031, %v3030
    %v3088 = vpack.c.b16 %v3033, %v3032
    %v3089 = vpack.c.b16 %v3035, %v3034
    %v3090 = vpack.c.b16 %v3037, %v3036
    %v3091 = vpack.c.b16 %v3039, %v3038
    %v3092 = vpack.c.b16 %v3041, %v3040
    %v3093 = vpack.c.b16 %v3043, %v3042
    %v3094 = vpack.c.b16 %v3045, %v3044
    %v3095 = vpack.c.b16 %v3047, %v3046
    %v3096 = vpack.c.b16 %v3049, %v3048
    %v3097 = vpack.c.b16 %v3051, %v3050
    %v3098 = vpack.c.b16 %v3053, %v3052
    %v3099 = vpack.c.b16 %v3055, %v3054
    %v3100 = vpack.c.b16 %v3057, %v3056
    %v3101 = vpack.c.b16 %v3059, %v3058
    %v3102 = vpack.c.b16 %v3061, %v3060
    %v3103 = vpack.c.b16 %v3063, %v3062
    %v3104 = vpack.c.b16 %v3065, %v3064
    %v3105 = vpack.c.b16 %v3067, %v3066
    %v3106 = vpack.c.b16 %v3069, %v3068
    %v3107 = vpack.c.b16 %v3071, %v3070
    %v3108 = vpack.c.b16 %v3073, %v3072
    %v3109 = vpack.c.b16 %v3075, %v3074
    %v3110 = vpack.c.b16 %v3077, %v3076
    %v3111 = vpack.c.b16 %v3079, %v3078
    %3112 = vrot.lane.b32.xlu0 %v3080, 64
    %v3113 = vpop.permute.xlu0 %3112
    %3114 = vrot.lane.b32.xlu0 %v3081, 64
    %v3115 = vpop.permute.xlu0 %3114
    %3116 = vrot.lane.b32.xlu0 %v3082, 64
    %v3117 = vpop.permute.xlu0 %3116
    %3118 = vrot.lane.b32.xlu0 %v3083, 64
    %v3119 = vpop.permute.xlu0 %3118
    %3120 = vrot.lane.b32.xlu0 %v3084, 64
    %v3121 = vpop.permute.xlu0 %3120
    %3122 = vrot.lane.b32.xlu0 %v3085, 64
    %v3123 = vpop.permute.xlu0 %3122
    %3124 = vrot.lane.b32.xlu0 %v3086, 64
    %v3125 = vpop.permute.xlu0 %3124
    %3126 = vrot.lane.b32.xlu0 %v3087, 64
    %v3127 = vpop.permute.xlu0 %3126
    %3128 = vrot.lane.b32.xlu0 %v3088, 64
    %v3129 = vpop.permute.xlu0 %3128
    %3130 = vrot.lane.b32.xlu0 %v3089, 64
    %v3131 = vpop.permute.xlu0 %3130
    %3132 = vrot.lane.b32.xlu0 %v3090, 64
    %v3133 = vpop.permute.xlu0 %3132
    %3134 = vrot.lane.b32.xlu0 %v3091, 64
    %v3135 = vpop.permute.xlu0 %3134
    %3136 = vrot.lane.b32.xlu0 %v3092, 64
    %v3137 = vpop.permute.xlu0 %3136
    %3138 = vrot.lane.b32.xlu0 %v3093, 64
    %v3139 = vpop.permute.xlu0 %3138
    %3140 = vrot.lane.b32.xlu0 %v3094, 64
    %v3141 = vpop.permute.xlu0 %3140
    %3142 = vrot.lane.b32.xlu0 %v3095, 64
    %v3143 = vpop.permute.xlu0 %3142
    %3144 = vrot.lane.b32.xlu0 %v3096, 64
    %v3145 = vpop.permute.xlu0 %3144
    %3146 = vrot.lane.b32.xlu0 %v3097, 64
    %v3147 = vpop.permute.xlu0 %3146
    %3148 = vrot.lane.b32.xlu0 %v3098, 64
    %v3149 = vpop.permute.xlu0 %3148
    %3150 = vrot.lane.b32.xlu0 %v3099, 64
    %v3151 = vpop.permute.xlu0 %3150
    %3152 = vrot.lane.b32.xlu0 %v3100, 64
    %v3153 = vpop.permute.xlu0 %3152
    %3154 = vrot.lane.b32.xlu0 %v3101, 64
    %v3155 = vpop.permute.xlu0 %3154
    %3156 = vrot.lane.b32.xlu0 %v3102, 64
    %v3157 = vpop.permute.xlu0 %3156
    %3158 = vrot.lane.b32.xlu0 %v3103, 64
    %v3159 = vpop.permute.xlu0 %3158
    %3160 = vrot.lane.b32.xlu0 %v3104, 64
    %v3161 = vpop.permute.xlu0 %3160
    %3162 = vrot.lane.b32.xlu0 %v3105, 64
    %v3163 = vpop.permute.xlu0 %3162
    %3164 = vrot.lane.b32.xlu0 %v3106, 64
    %v3165 = vpop.permute.xlu0 %3164
    %3166 = vrot.lane.b32.xlu0 %v3107, 64
    %v3167 = vpop.permute.xlu0 %3166
    %3168 = vrot.lane.b32.xlu0 %v3108, 64
    %v3169 = vpop.permute.xlu0 %3168
    %3170 = vrot.lane.b32.xlu0 %v3109, 64
    %v3171 = vpop.permute.xlu0 %3170
    %3172 = vrot.lane.b32.xlu0 %v3110, 64
    %v3173 = vpop.permute.xlu0 %3172
    %3174 = vrot.lane.b32.xlu0 %v3111, 64
    %v3175 = vpop.permute.xlu0 %3174
    %vm3208 = vcmask 785920
    %3209 = vst.msk [vmem:[#allocation4] sm:$0xff] %vm3208, %v3113
    %3210 = vst.msk [vmem:[#allocation4 + $0x18] sm:$0xff] %vm3208, %v3115
    %3211 = vst.msk [vmem:[#allocation4 + $0x30] sm:$0xff] %vm3208, %v3117
    %3212 = vst.msk [vmem:[#allocation4 + $0x48] sm:$0xff] %vm3208, %v3119
    %3213 = vst.msk [vmem:[#allocation4 + $0x60] sm:$0xff] %vm3208, %v3121
    %3214 = vst.msk [vmem:[#allocation4 + $0x78] sm:$0xff] %vm3208, %v3123
    %3215 = vst.msk [vmem:[#allocation4 + $0x90] sm:$0xff] %vm3208, %v3125
    %3216 = vst.msk [vmem:[#allocation4 + $0xa8] sm:$0xff] %vm3208, %v3127
    %3217 = vst.msk [vmem:[#allocation4 + $0xc0] sm:$0xff] %vm3208, %v3129
    %3218 = vst.msk [vmem:[#allocation4 + $0xd8] sm:$0xff] %vm3208, %v3131
    %3219 = vst.msk [vmem:[#allocation4 + $0xf0] sm:$0xff] %vm3208, %v3133
    %3220 = vst.msk [vmem:[#allocation4 + $0x108] sm:$0xff] %vm3208, %v3135
    %3221 = vst.msk [vmem:[#allocation4 + $0x120] sm:$0xff] %vm3208, %v3137
    %3222 = vst.msk [vmem:[#allocation4 + $0x138] sm:$0xff] %vm3208, %v3139
    %3223 = vst.msk [vmem:[#allocation4 + $0x150] sm:$0xff] %vm3208, %v3141
    %3224 = vst.msk [vmem:[#allocation4 + $0x168] sm:$0xff] %vm3208, %v3143
    %3225 = vst.msk [vmem:[#allocation4 + $0x180] sm:$0xff] %vm3208, %v3145
    %3226 = vst.msk [vmem:[#allocation4 + $0x198] sm:$0xff] %vm3208, %v3147
    %3227 = vst.msk [vmem:[#allocation4 + $0x1b0] sm:$0xff] %vm3208, %v3149
    %3228 = vst.msk [vmem:[#allocation4 + $0x1c8] sm:$0xff] %vm3208, %v3151
    %3229 = vst.msk [vmem:[#allocation4 + $0x1e0] sm:$0xff] %vm3208, %v3153
    %3230 = vst.msk [vmem:[#allocation4 + $0x1f8] sm:$0xff] %vm3208, %v3155
    %3231 = vst.msk [vmem:[#allocation4 + $0x210] sm:$0xff] %vm3208, %v3157
    %3232 = vst.msk [vmem:[#allocation4 + $0x228] sm:$0xff] %vm3208, %v3159
    %3233 = vst.msk [vmem:[#allocation4 + $0x240] sm:$0xff] %vm3208, %v3161
    %3234 = vst.msk [vmem:[#allocation4 + $0x258] sm:$0xff] %vm3208, %v3163
    %3235 = vst.msk [vmem:[#allocation4 + $0x270] sm:$0xff] %vm3208, %v3165
    %3236 = vst.msk [vmem:[#allocation4 + $0x288] sm:$0xff] %vm3208, %v3167
    %3237 = vst.msk [vmem:[#allocation4 + $0x2a0] sm:$0xff] %vm3208, %v3169
    %3238 = vst.msk [vmem:[#allocation4 + $0x2b8] sm:$0xff] %vm3208, %v3171
    %3239 = vst.msk [vmem:[#allocation4 + $0x2d0] sm:$0xff] %vm3208, %v3173
    %3240 = vst.msk [vmem:[#allocation4 + $0x2e8] sm:$0xff] %vm3208, %v3175
    %s3241 = scalar_lea.vmem [#allocation3], 12
    %v3242 = vld [vmem:[%s3241] sm:$0xf]
    %v3243 = vld [vmem:[%s3241 + $0x4] sm:$0xf]
    %v3244 = vld [vmem:[%s3241 + $0xc] sm:$0xf]
    %v3245 = vld [vmem:[%s3241 + $0x10] sm:$0xf]
    %v3246 = vld [vmem:[%s3241 + $0x18] sm:$0xf]
    %v3247 = vld [vmem:[%s3241 + $0x1c] sm:$0xf]
    %v3248 = vld [vmem:[%s3241 + $0x24] sm:$0xf]
    %v3249 = vld [vmem:[%s3241 + $0x28] sm:$0xf]
    %v3250 = vld [vmem:[%s3241 + $0x30] sm:$0xf]
    %v3251 = vld [vmem:[%s3241 + $0x34] sm:$0xf]
    %v3252 = vld [vmem:[%s3241 + $0x3c] sm:$0xf]
    %v3253 = vld [vmem:[%s3241 + $0x40] sm:$0xf]
    %v3254 = vld [vmem:[%s3241 + $0x48] sm:$0xf]
    %v3255 = vld [vmem:[%s3241 + $0x4c] sm:$0xf]
    %v3256 = vld [vmem:[%s3241 + $0x54] sm:$0xf]
    %v3257 = vld [vmem:[%s3241 + $0x58] sm:$0xf]
    %v3258 = vld [vmem:[%s3241 + $0x60] sm:$0xf]
    %v3259 = vld [vmem:[%s3241 + $0x64] sm:$0xf]
    %v3260 = vld [vmem:[%s3241 + $0x6c] sm:$0xf]
    %v3261 = vld [vmem:[%s3241 + $0x70] sm:$0xf]
    %v3262 = vld [vmem:[%s3241 + $0x78] sm:$0xf]
    %v3263 = vld [vmem:[%s3241 + $0x7c] sm:$0xf]
    %v3264 = vld [vmem:[%s3241 + $0x84] sm:$0xf]
    %v3265 = vld [vmem:[%s3241 + $0x88] sm:$0xf]
    %v3266 = vld [vmem:[%s3241 + $0x90] sm:$0xf]
    %v3267 = vld [vmem:[%s3241 + $0x94] sm:$0xf]
    %v3268 = vld [vmem:[%s3241 + $0x9c] sm:$0xf]
    %v3269 = vld [vmem:[%s3241 + $0xa0] sm:$0xf]
    %v3270 = vld [vmem:[%s3241 + $0xa8] sm:$0xf]
    %v3271 = vld [vmem:[%s3241 + $0xac] sm:$0xf]
    %v3272 = vld [vmem:[%s3241 + $0xb4] sm:$0xf]
    %v3273 = vld [vmem:[%s3241 + $0xb8] sm:$0xf]
    %v3274 = vld [vmem:[%s3241 + $0xd8] sm:$0xf]
    %v3275 = vld [vmem:[%s3241 + $0xdc] sm:$0xf]
    %v3276 = vld [vmem:[%s3241 + $0xe4] sm:$0xf]
    %v3277 = vld [vmem:[%s3241 + $0xe8] sm:$0xf]
    %v3278 = vld [vmem:[%s3241 + $0xf0] sm:$0xf]
    %v3279 = vld [vmem:[%s3241 + $0xf4] sm:$0xf]
    %v3280 = vld [vmem:[%s3241 + $0xfc] sm:$0xf]
    %v3281 = vld [vmem:[%s3241 + $0x100] sm:$0xf]
    %v3282 = vld [vmem:[%s3241 + $0x108] sm:$0xf]
    %v3283 = vld [vmem:[%s3241 + $0x10c] sm:$0xf]
    %v3284 = vld [vmem:[%s3241 + $0x114] sm:$0xf]
    %v3285 = vld [vmem:[%s3241 + $0x118] sm:$0xf]
    %v3286 = vld [vmem:[%s3241 + $0x120] sm:$0xf]
    %v3287 = vld [vmem:[%s3241 + $0x124] sm:$0xf]
    %v3288 = vld [vmem:[%s3241 + $0x12c] sm:$0xf]
    %v3289 = vld [vmem:[%s3241 + $0x130] sm:$0xf]
    %v3290 = vld [vmem:[%s3241 + $0x138] sm:$0xf]
    %v3291 = vld [vmem:[%s3241 + $0x13c] sm:$0xf]
    %v3292 = vld [vmem:[%s3241 + $0x144] sm:$0xf]
    %v3293 = vld [vmem:[%s3241 + $0x148] sm:$0xf]
    %v3294 = vld [vmem:[%s3241 + $0x150] sm:$0xf]
    %v3295 = vld [vmem:[%s3241 + $0x154] sm:$0xf]
    %v3296 = vld [vmem:[%s3241 + $0x15c] sm:$0xf]
    %v3297 = vld [vmem:[%s3241 + $0x160] sm:$0xf]
    %v3298 = vld [vmem:[%s3241 + $0x168] sm:$0xf]
    %v3299 = vld [vmem:[%s3241 + $0x16c] sm:$0xf]
    %v3300 = vld [vmem:[%s3241 + $0x174] sm:$0xf]
    %v3301 = vld [vmem:[%s3241 + $0x178] sm:$0xf]
    %v3302 = vld [vmem:[%s3241 + $0x180] sm:$0xf]
    %v3303 = vld [vmem:[%s3241 + $0x184] sm:$0xf]
    %v3304 = vld [vmem:[%s3241 + $0x18c] sm:$0xf]
    %v3305 = vld [vmem:[%s3241 + $0x190] sm:$0xf]
    %v3370 = vunpack.c.l.b16 %v3242
    %v3371 = vunpack.c.l.b16 %v3243
    %v3372 = vunpack.c.l.b16 %v3244
    %v3373 = vunpack.c.l.b16 %v3245
    %v3374 = vunpack.c.l.b16 %v3246
    %v3375 = vunpack.c.l.b16 %v3247
    %v3376 = vunpack.c.l.b16 %v3248
    %v3377 = vunpack.c.l.b16 %v3249
    %v3378 = vunpack.c.l.b16 %v3250
    %v3379 = vunpack.c.l.b16 %v3251
    %v3380 = vunpack.c.l.b16 %v3252
    %v3381 = vunpack.c.l.b16 %v3253
    %v3382 = vunpack.c.l.b16 %v3254
    %v3383 = vunpack.c.l.b16 %v3255
    %v3384 = vunpack.c.l.b16 %v3256
    %v3385 = vunpack.c.l.b16 %v3257
    %v3386 = vunpack.c.l.b16 %v3258
    %v3387 = vunpack.c.l.b16 %v3259
    %v3388 = vunpack.c.l.b16 %v3260
    %v3389 = vunpack.c.l.b16 %v3261
    %v3390 = vunpack.c.l.b16 %v3262
    %v3391 = vunpack.c.l.b16 %v3263
    %v3392 = vunpack.c.l.b16 %v3264
    %v3393 = vunpack.c.l.b16 %v3265
    %v3394 = vunpack.c.l.b16 %v3266
    %v3395 = vunpack.c.l.b16 %v3267
    %v3396 = vunpack.c.l.b16 %v3268
    %v3397 = vunpack.c.l.b16 %v3269
    %v3398 = vunpack.c.l.b16 %v3270
    %v3399 = vunpack.c.l.b16 %v3271
    %v3400 = vunpack.c.l.b16 %v3272
    %v3401 = vunpack.c.l.b16 %v3273
    %v3402 = vunpack.c.l.b16 %v3274
    %v3403 = vunpack.c.l.b16 %v3275
    %v3404 = vunpack.c.l.b16 %v3276
    %v3405 = vunpack.c.l.b16 %v3277
    %v3406 = vunpack.c.l.b16 %v3278
    %v3407 = vunpack.c.l.b16 %v3279
    %v3408 = vunpack.c.l.b16 %v3280
    %v3409 = vunpack.c.l.b16 %v3281
    %v3410 = vunpack.c.l.b16 %v3282
    %v3411 = vunpack.c.l.b16 %v3283
    %v3412 = vunpack.c.l.b16 %v3284
    %v3413 = vunpack.c.l.b16 %v3285
    %v3414 = vunpack.c.l.b16 %v3286
    %v3415 = vunpack.c.l.b16 %v3287
    %v3416 = vunpack.c.l.b16 %v3288
    %v3417 = vunpack.c.l.b16 %v3289
    %v3418 = vunpack.c.l.b16 %v3290
    %v3419 = vunpack.c.l.b16 %v3291
    %v3420 = vunpack.c.l.b16 %v3292
    %v3421 = vunpack.c.l.b16 %v3293
    %v3422 = vunpack.c.l.b16 %v3294
    %v3423 = vunpack.c.l.b16 %v3295
    %v3424 = vunpack.c.l.b16 %v3296
    %v3425 = vunpack.c.l.b16 %v3297
    %v3426 = vunpack.c.l.b16 %v3298
    %v3427 = vunpack.c.l.b16 %v3299
    %v3428 = vunpack.c.l.b16 %v3300
    %v3429 = vunpack.c.l.b16 %v3301
    %v3430 = vunpack.c.l.b16 %v3302
    %v3431 = vunpack.c.l.b16 %v3303
    %v3432 = vunpack.c.l.b16 %v3304
    %v3433 = vunpack.c.l.b16 %v3305
    %v3434 = vpack.c.b16 %v3371, %v3370
    %v3435 = vpack.c.b16 %v3373, %v3372
    %v3436 = vpack.c.b16 %v3375, %v3374
    %v3437 = vpack.c.b16 %v3377, %v3376
    %v3438 = vpack.c.b16 %v3379, %v3378
    %v3439 = vpack.c.b16 %v3381, %v3380
    %v3440 = vpack.c.b16 %v3383, %v3382
    %v3441 = vpack.c.b16 %v3385, %v3384
    %v3442 = vpack.c.b16 %v3387, %v3386
    %v3443 = vpack.c.b16 %v3389, %v3388
    %v3444 = vpack.c.b16 %v3391, %v3390
    %v3445 = vpack.c.b16 %v3393, %v3392
    %v3446 = vpack.c.b16 %v3395, %v3394
    %v3447 = vpack.c.b16 %v3397, %v3396
    %v3448 = vpack.c.b16 %v3399, %v3398
    %v3449 = vpack.c.b16 %v3401, %v3400
    %v3450 = vpack.c.b16 %v3403, %v3402
    %v3451 = vpack.c.b16 %v3405, %v3404
    %v3452 = vpack.c.b16 %v3407, %v3406
    %v3453 = vpack.c.b16 %v3409, %v3408
    %v3454 = vpack.c.b16 %v3411, %v3410
    %v3455 = vpack.c.b16 %v3413, %v3412
    %v3456 = vpack.c.b16 %v3415, %v3414
    %v3457 = vpack.c.b16 %v3417, %v3416
    %v3458 = vpack.c.b16 %v3419, %v3418
    %v3459 = vpack.c.b16 %v3421, %v3420
    %v3460 = vpack.c.b16 %v3423, %v3422
    %v3461 = vpack.c.b16 %v3425, %v3424
    %v3462 = vpack.c.b16 %v3427, %v3426
    %v3463 = vpack.c.b16 %v3429, %v3428
    %v3464 = vpack.c.b16 %v3431, %v3430
    %v3465 = vpack.c.b16 %v3433, %v3432
    %3466 = vrot.lane.b32.xlu0 %v3434, 96
    %v3467 = vpop.permute.xlu0 %3466
    %3468 = vrot.lane.b32.xlu0 %v3435, 96
    %v3469 = vpop.permute.xlu0 %3468
    %3470 = vrot.lane.b32.xlu0 %v3436, 96
    %v3471 = vpop.permute.xlu0 %3470
    %3472 = vrot.lane.b32.xlu0 %v3437, 96
    %v3473 = vpop.permute.xlu0 %3472
    %3474 = vrot.lane.b32.xlu0 %v3438, 96
    %v3475 = vpop.permute.xlu0 %3474
    %3476 = vrot.lane.b32.xlu0 %v3439, 96
    %v3477 = vpop.permute.xlu0 %3476
    %3478 = vrot.lane.b32.xlu0 %v3440, 96
    %v3479 = vpop.permute.xlu0 %3478
    %3480 = vrot.lane.b32.xlu0 %v3441, 96
    %v3481 = vpop.permute.xlu0 %3480
    %3482 = vrot.lane.b32.xlu0 %v3442, 96
    %v3483 = vpop.permute.xlu0 %3482
    %3484 = vrot.lane.b32.xlu0 %v3443, 96
    %v3485 = vpop.permute.xlu0 %3484
    %3486 = vrot.lane.b32.xlu0 %v3444, 96
    %v3487 = vpop.permute.xlu0 %3486
    %3488 = vrot.lane.b32.xlu0 %v3445, 96
    %v3489 = vpop.permute.xlu0 %3488
    %3490 = vrot.lane.b32.xlu0 %v3446, 96
    %v3491 = vpop.permute.xlu0 %3490
    %3492 = vrot.lane.b32.xlu0 %v3447, 96
    %v3493 = vpop.permute.xlu0 %3492
    %3494 = vrot.lane.b32.xlu0 %v3448, 96
    %v3495 = vpop.permute.xlu0 %3494
    %3496 = vrot.lane.b32.xlu0 %v3449, 96
    %v3497 = vpop.permute.xlu0 %3496
    %3498 = vrot.lane.b32.xlu0 %v3450, 96
    %v3499 = vpop.permute.xlu0 %3498
    %3500 = vrot.lane.b32.xlu0 %v3451, 96
    %v3501 = vpop.permute.xlu0 %3500
    %3502 = vrot.lane.b32.xlu0 %v3452, 96
    %v3503 = vpop.permute.xlu0 %3502
    %3504 = vrot.lane.b32.xlu0 %v3453, 96
    %v3505 = vpop.permute.xlu0 %3504
    %3506 = vrot.lane.b32.xlu0 %v3454, 96
    %v3507 = vpop.permute.xlu0 %3506
    %3508 = vrot.lane.b32.xlu0 %v3455, 96
    %v3509 = vpop.permute.xlu0 %3508
    %3510 = vrot.lane.b32.xlu0 %v3456, 96
    %v3511 = vpop.permute.xlu0 %3510
    %3512 = vrot.lane.b32.xlu0 %v3457, 96
    %v3513 = vpop.permute.xlu0 %3512
    %3514 = vrot.lane.b32.xlu0 %v3458, 96
    %v3515 = vpop.permute.xlu0 %3514
    %3516 = vrot.lane.b32.xlu0 %v3459, 96
    %v3517 = vpop.permute.xlu0 %3516
    %3518 = vrot.lane.b32.xlu0 %v3460, 96
    %v3519 = vpop.permute.xlu0 %3518
    %3520 = vrot.lane.b32.xlu0 %v3461, 96
    %v3521 = vpop.permute.xlu0 %3520
    %3522 = vrot.lane.b32.xlu0 %v3462, 96
    %v3523 = vpop.permute.xlu0 %3522
    %3524 = vrot.lane.b32.xlu0 %v3463, 96
    %v3525 = vpop.permute.xlu0 %3524
    %3526 = vrot.lane.b32.xlu0 %v3464, 96
    %v3527 = vpop.permute.xlu0 %3526
    %3528 = vrot.lane.b32.xlu0 %v3465, 96
    %v3529 = vpop.permute.xlu0 %3528
    %vm3562 = vcmask 1048320
    %3563 = vst.msk [vmem:[#allocation4] sm:$0xff] %vm3562, %v3467
    %3564 = vst.msk [vmem:[#allocation4 + $0x18] sm:$0xff] %vm3562, %v3469
    %3565 = vst.msk [vmem:[#allocation4 + $0x30] sm:$0xff] %vm3562, %v3471
    %3566 = vst.msk [vmem:[#allocation4 + $0x48] sm:$0xff] %vm3562, %v3473
    %3567 = vst.msk [vmem:[#allocation4 + $0x60] sm:$0xff] %vm3562, %v3475
    %3568 = vst.msk [vmem:[#allocation4 + $0x78] sm:$0xff] %vm3562, %v3477
    %3569 = vst.msk [vmem:[#allocation4 + $0x90] sm:$0xff] %vm3562, %v3479
    %3570 = vst.msk [vmem:[#allocation4 + $0xa8] sm:$0xff] %vm3562, %v3481
    %3571 = vst.msk [vmem:[#allocation4 + $0xc0] sm:$0xff] %vm3562, %v3483
    %3572 = vst.msk [vmem:[#allocation4 + $0xd8] sm:$0xff] %vm3562, %v3485
    %3573 = vst.msk [vmem:[#allocation4 + $0xf0] sm:$0xff] %vm3562, %v3487
    %3574 = vst.msk [vmem:[#allocation4 + $0x108] sm:$0xff] %vm3562, %v3489
    %3575 = vst.msk [vmem:[#allocation4 + $0x120] sm:$0xff] %vm3562, %v3491
    %3576 = vst.msk [vmem:[#allocation4 + $0x138] sm:$0xff] %vm3562, %v3493
    %3577 = vst.msk [vmem:[#allocation4 + $0x150] sm:$0xff] %vm3562, %v3495
    %3578 = vst.msk [vmem:[#allocation4 + $0x168] sm:$0xff] %vm3562, %v3497
    %3579 = vst.msk [vmem:[#allocation4 + $0x180] sm:$0xff] %vm3562, %v3499
    %3580 = vst.msk [vmem:[#allocation4 + $0x198] sm:$0xff] %vm3562, %v3501
    %3581 = vst.msk [vmem:[#allocation4 + $0x1b0] sm:$0xff] %vm3562, %v3503
    %3582 = vst.msk [vmem:[#allocation4 + $0x1c8] sm:$0xff] %vm3562, %v3505
    %3583 = vst.msk [vmem:[#allocation4 + $0x1e0] sm:$0xff] %vm3562, %v3507
    %3584 = vst.msk [vmem:[#allocation4 + $0x1f8] sm:$0xff] %vm3562, %v3509
    %3585 = vst.msk [vmem:[#allocation4 + $0x210] sm:$0xff] %vm3562, %v3511
    %3586 = vst.msk [vmem:[#allocation4 + $0x228] sm:$0xff] %vm3562, %v3513
    %3587 = vst.msk [vmem:[#allocation4 + $0x240] sm:$0xff] %vm3562, %v3515
    %3588 = vst.msk [vmem:[#allocation4 + $0x258] sm:$0xff] %vm3562, %v3517
    %3589 = vst.msk [vmem:[#allocation4 + $0x270] sm:$0xff] %vm3562, %v3519
    %3590 = vst.msk [vmem:[#allocation4 + $0x288] sm:$0xff] %vm3562, %v3521
    %3591 = vst.msk [vmem:[#allocation4 + $0x2a0] sm:$0xff] %vm3562, %v3523
    %3592 = vst.msk [vmem:[#allocation4 + $0x2b8] sm:$0xff] %vm3562, %v3525
    %3593 = vst.msk [vmem:[#allocation4 + $0x2d0] sm:$0xff] %vm3562, %v3527
    %3594 = vst.msk [vmem:[#allocation4 + $0x2e8] sm:$0xff] %vm3562, %v3529
    %v3595 = vld [vmem:[%s3241] sm:$0xf]
    %v3596 = vld [vmem:[%s3241 + $0x4] sm:$0xf]
    %v3597 = vld [vmem:[%s3241 + $0x8] sm:$0x1]
    %v3598 = vld [vmem:[%s3241 + $0xc] sm:$0xf]
    %v3599 = vld [vmem:[%s3241 + $0x10] sm:$0xf]
    %v3600 = vld [vmem:[%s3241 + $0x14] sm:$0x1]
    %v3601 = vld [vmem:[%s3241 + $0x18] sm:$0xf]
    %v3602 = vld [vmem:[%s3241 + $0x1c] sm:$0xf]
    %v3603 = vld [vmem:[%s3241 + $0x20] sm:$0x1]
    %v3604 = vld [vmem:[%s3241 + $0x24] sm:$0xf]
    %v3605 = vld [vmem:[%s3241 + $0x28] sm:$0xf]
    %v3606 = vld [vmem:[%s3241 + $0x2c] sm:$0x1]
    %v3607 = vld [vmem:[%s3241 + $0x30] sm:$0xf]
    %v3608 = vld [vmem:[%s3241 + $0x34] sm:$0xf]
    %v3609 = vld [vmem:[%s3241 + $0x38] sm:$0x1]
    %v3610 = vld [vmem:[%s3241 + $0x3c] sm:$0xf]
    %v3611 = vld [vmem:[%s3241 + $0x40] sm:$0xf]
    %v3612 = vld [vmem:[%s3241 + $0x44] sm:$0x1]
    %v3613 = vld [vmem:[%s3241 + $0x48] sm:$0xf]
    %v3614 = vld [vmem:[%s3241 + $0x4c] sm:$0xf]
    %v3615 = vld [vmem:[%s3241 + $0x50] sm:$0x1]
    %v3616 = vld [vmem:[%s3241 + $0x54] sm:$0xf]
    %v3617 = vld [vmem:[%s3241 + $0x58] sm:$0xf]
    %v3618 = vld [vmem:[%s3241 + $0x5c] sm:$0x1]
    %v3619 = vld [vmem:[%s3241 + $0x60] sm:$0xf]
    %v3620 = vld [vmem:[%s3241 + $0x64] sm:$0xf]
    %v3621 = vld [vmem:[%s3241 + $0x68] sm:$0x1]
    %v3622 = vld [vmem:[%s3241 + $0x6c] sm:$0xf]
    %v3623 = vld [vmem:[%s3241 + $0x70] sm:$0xf]
    %v3624 = vld [vmem:[%s3241 + $0x74] sm:$0x1]
    %v3625 = vld [vmem:[%s3241 + $0x78] sm:$0xf]
    %v3626 = vld [vmem:[%s3241 + $0x7c] sm:$0xf]
    %v3627 = vld [vmem:[%s3241 + $0x80] sm:$0x1]
    %v3628 = vld [vmem:[%s3241 + $0x84] sm:$0xf]
    %v3629 = vld [vmem:[%s3241 + $0x88] sm:$0xf]
    %v3630 = vld [vmem:[%s3241 + $0x8c] sm:$0x1]
    %v3631 = vld [vmem:[%s3241 + $0x90] sm:$0xf]
    %v3632 = vld [vmem:[%s3241 + $0x94] sm:$0xf]
    %v3633 = vld [vmem:[%s3241 + $0x98] sm:$0x1]
    %v3634 = vld [vmem:[%s3241 + $0x9c] sm:$0xf]
    %v3635 = vld [vmem:[%s3241 + $0xa0] sm:$0xf]
    %v3636 = vld [vmem:[%s3241 + $0xa4] sm:$0x1]
    %v3637 = vld [vmem:[%s3241 + $0xa8] sm:$0xf]
    %v3638 = vld [vmem:[%s3241 + $0xac] sm:$0xf]
    %v3639 = vld [vmem:[%s3241 + $0xb0] sm:$0x1]
    %v3640 = vld [vmem:[%s3241 + $0xb4] sm:$0xf]
    %v3641 = vld [vmem:[%s3241 + $0xb8] sm:$0xf]
    %v3642 = vld [vmem:[%s3241 + $0xbc] sm:$0x1]
    %v3643 = vld [vmem:[%s3241 + $0xd8] sm:$0xf]
    %v3644 = vld [vmem:[%s3241 + $0xdc] sm:$0xf]
    %v3645 = vld [vmem:[%s3241 + $0xe0] sm:$0x1]
    %v3646 = vld [vmem:[%s3241 + $0xe4] sm:$0xf]
    %v3647 = vld [vmem:[%s3241 + $0xe8] sm:$0xf]
    %v3648 = vld [vmem:[%s3241 + $0xec] sm:$0x1]
    %v3649 = vld [vmem:[%s3241 + $0xf0] sm:$0xf]
    %v3650 = vld [vmem:[%s3241 + $0xf4] sm:$0xf]
    %v3651 = vld [vmem:[%s3241 + $0xf8] sm:$0x1]
    %v3652 = vld [vmem:[%s3241 + $0xfc] sm:$0xf]
    %v3653 = vld [vmem:[%s3241 + $0x100] sm:$0xf]
    %v3654 = vld [vmem:[%s3241 + $0x104] sm:$0x1]
    %v3655 = vld [vmem:[%s3241 + $0x108] sm:$0xf]
    %v3656 = vld [vmem:[%s3241 + $0x10c] sm:$0xf]
    %v3657 = vld [vmem:[%s3241 + $0x110] sm:$0x1]
    %v3658 = vld [vmem:[%s3241 + $0x114] sm:$0xf]
    %v3659 = vld [vmem:[%s3241 + $0x118] sm:$0xf]
    %v3660 = vld [vmem:[%s3241 + $0x11c] sm:$0x1]
    %v3661 = vld [vmem:[%s3241 + $0x120] sm:$0xf]
    %v3662 = vld [vmem:[%s3241 + $0x124] sm:$0xf]
    %v3663 = vld [vmem:[%s3241 + $0x128] sm:$0x1]
    %v3664 = vld [vmem:[%s3241 + $0x12c] sm:$0xf]
    %v3665 = vld [vmem:[%s3241 + $0x130] sm:$0xf]
    %v3666 = vld [vmem:[%s3241 + $0x134] sm:$0x1]
    %v3667 = vld [vmem:[%s3241 + $0x138] sm:$0xf]
    %v3668 = vld [vmem:[%s3241 + $0x13c] sm:$0xf]
    %v3669 = vld [vmem:[%s3241 + $0x140] sm:$0x1]
    %v3670 = vld [vmem:[%s3241 + $0x144] sm:$0xf]
    %v3671 = vld [vmem:[%s3241 + $0x148] sm:$0xf]
    %v3672 = vld [vmem:[%s3241 + $0x14c] sm:$0x1]
    %v3673 = vld [vmem:[%s3241 + $0x150] sm:$0xf]
    %v3674 = vld [vmem:[%s3241 + $0x154] sm:$0xf]
    %v3675 = vld [vmem:[%s3241 + $0x158] sm:$0x1]
    %v3676 = vld [vmem:[%s3241 + $0x15c] sm:$0xf]
    %v3677 = vld [vmem:[%s3241 + $0x160] sm:$0xf]
    %v3678 = vld [vmem:[%s3241 + $0x164] sm:$0x1]
    %v3679 = vld [vmem:[%s3241 + $0x168] sm:$0xf]
    %v3680 = vld [vmem:[%s3241 + $0x16c] sm:$0xf]
    %v3681 = vld [vmem:[%s3241 + $0x170] sm:$0x1]
    %v3682 = vld [vmem:[%s3241 + $0x174] sm:$0xf]
    %v3683 = vld [vmem:[%s3241 + $0x178] sm:$0xf]
    %v3684 = vld [vmem:[%s3241 + $0x17c] sm:$0x1]
    %v3685 = vld [vmem:[%s3241 + $0x180] sm:$0xf]
    %v3686 = vld [vmem:[%s3241 + $0x184] sm:$0xf]
    %v3687 = vld [vmem:[%s3241 + $0x188] sm:$0x1]
    %v3688 = vld [vmem:[%s3241 + $0x18c] sm:$0xf]
    %v3689 = vld [vmem:[%s3241 + $0x190] sm:$0xf]
    %v3690 = vld [vmem:[%s3241 + $0x194] sm:$0x1]
    %v3692 = vshrl.u32 %v3595, 16
    %v3694 = vrot.slane %v3692, 4
    %v3695 = vshll.u32 %v3595, 16
    %v3697 = vrot.slane %v3695, 5
    %v3698 = vor.u32 %v3694, %v3697
    %v3699 = vrot.slane %v3698, 4
    %v3701 = vshll.u32 %v3596, 16
    %v3703 = vrot.slane %v3701, 5
    %v3704 = vsel %vm1603, %v3699, %v3703
    %v3705 = vshrl.u32 %v3596, 16
    %v3707 = vrot.slane %v3705, 4
    %v3708 = vor.u32 %v3707, %v3703
    %v3709 = vrot.slane %v3708, 4
    %v3711 = vshll.u32 %v3597, 16
    %v3713 = vrot.slane %v3711, 5
    %v3714 = vsel %vm1603, %v3709, %v3713
    %v3716 = vshrl.u32 %v3598, 16
    %v3718 = vrot.slane %v3716, 4
    %v3719 = vshll.u32 %v3598, 16
    %v3721 = vrot.slane %v3719, 5
    %v3722 = vor.u32 %v3718, %v3721
    %v3723 = vrot.slane %v3722, 4
    %v3725 = vshll.u32 %v3599, 16
    %v3727 = vrot.slane %v3725, 5
    %v3728 = vsel %vm1603, %v3723, %v3727
    %v3729 = vshrl.u32 %v3599, 16
    %v3731 = vrot.slane %v3729, 4
    %v3732 = vor.u32 %v3731, %v3727
    %v3733 = vrot.slane %v3732, 4
    %v3735 = vshll.u32 %v3600, 16
    %v3737 = vrot.slane %v3735, 5
    %v3738 = vsel %vm1603, %v3733, %v3737
    %v3740 = vshrl.u32 %v3601, 16
    %v3742 = vrot.slane %v3740, 4
    %v3743 = vshll.u32 %v3601, 16
    %v3745 = vrot.slane %v3743, 5
    %v3746 = vor.u32 %v3742, %v3745
    %v3747 = vrot.slane %v3746, 4
    %v3749 = vshll.u32 %v3602, 16
    %v3751 = vrot.slane %v3749, 5
    %v3752 = vsel %vm1603, %v3747, %v3751
    %v3753 = vshrl.u32 %v3602, 16
    %v3755 = vrot.slane %v3753, 4
    %v3756 = vor.u32 %v3755, %v3751
    %v3757 = vrot.slane %v3756, 4
    %v3759 = vshll.u32 %v3603, 16
    %v3761 = vrot.slane %v3759, 5
    %v3762 = vsel %vm1603, %v3757, %v3761
    %v3764 = vshrl.u32 %v3604, 16
    %v3766 = vrot.slane %v3764, 4
    %v3767 = vshll.u32 %v3604, 16
    %v3769 = vrot.slane %v3767, 5
    %v3770 = vor.u32 %v3766, %v3769
    %v3771 = vrot.slane %v3770, 4
    %v3773 = vshll.u32 %v3605, 16
    %v3775 = vrot.slane %v3773, 5
    %v3776 = vsel %vm1603, %v3771, %v3775
    %v3777 = vshrl.u32 %v3605, 16
    %v3779 = vrot.slane %v3777, 4
    %v3780 = vor.u32 %v3779, %v3775
    %v3781 = vrot.slane %v3780, 4
    %v3783 = vshll.u32 %v3606, 16
    %v3785 = vrot.slane %v3783, 5
    %v3786 = vsel %vm1603, %v3781, %v3785
    %v3788 = vshrl.u32 %v3607, 16
    %v3790 = vrot.slane %v3788, 4
    %v3791 = vshll.u32 %v3607, 16
    %v3793 = vrot.slane %v3791, 5
    %v3794 = vor.u32 %v3790, %v3793
    %v3795 = vrot.slane %v3794, 4
    %v3797 = vshll.u32 %v3608, 16
    %v3799 = vrot.slane %v3797, 5
    %v3800 = vsel %vm1603, %v3795, %v3799
    %v3801 = vshrl.u32 %v3608, 16
    %v3803 = vrot.slane %v3801, 4
    %v3804 = vor.u32 %v3803, %v3799
    %v3805 = vrot.slane %v3804, 4
    %v3807 = vshll.u32 %v3609, 16
    %v3809 = vrot.slane %v3807, 5
    %v3810 = vsel %vm1603, %v3805, %v3809
    %v3812 = vshrl.u32 %v3610, 16
    %v3814 = vrot.slane %v3812, 4
    %v3815 = vshll.u32 %v3610, 16
    %v3817 = vrot.slane %v3815, 5
    %v3818 = vor.u32 %v3814, %v3817
    %v3819 = vrot.slane %v3818, 4
    %v3821 = vshll.u32 %v3611, 16
    %v3823 = vrot.slane %v3821, 5
    %v3824 = vsel %vm1603, %v3819, %v3823
    %v3825 = vshrl.u32 %v3611, 16
    %v3827 = vrot.slane %v3825, 4
    %v3828 = vor.u32 %v3827, %v3823
    %v3829 = vrot.slane %v3828, 4
    %v3831 = vshll.u32 %v3612, 16
    %v3833 = vrot.slane %v3831, 5
    %v3834 = vsel %vm1603, %v3829, %v3833
    %v3836 = vshrl.u32 %v3613, 16
    %v3838 = vrot.slane %v3836, 4
    %v3839 = vshll.u32 %v3613, 16
    %v3841 = vrot.slane %v3839, 5
    %v3842 = vor.u32 %v3838, %v3841
    %v3843 = vrot.slane %v3842, 4
    %v3845 = vshll.u32 %v3614, 16
    %v3847 = vrot.slane %v3845, 5
    %v3848 = vsel %vm1603, %v3843, %v3847
    %v3849 = vshrl.u32 %v3614, 16
    %v3851 = vrot.slane %v3849, 4
    %v3852 = vor.u32 %v3851, %v3847
    %v3853 = vrot.slane %v3852, 4
    %v3855 = vshll.u32 %v3615, 16
    %v3857 = vrot.slane %v3855, 5
    %v3858 = vsel %vm1603, %v3853, %v3857
    %v3860 = vshrl.u32 %v3616, 16
    %v3862 = vrot.slane %v3860, 4
    %v3863 = vshll.u32 %v3616, 16
    %v3865 = vrot.slane %v3863, 5
    %v3866 = vor.u32 %v3862, %v3865
    %v3867 = vrot.slane %v3866, 4
    %v3869 = vshll.u32 %v3617, 16
    %v3871 = vrot.slane %v3869, 5
    %v3872 = vsel %vm1603, %v3867, %v3871
    %v3873 = vshrl.u32 %v3617, 16
    %v3875 = vrot.slane %v3873, 4
    %v3876 = vor.u32 %v3875, %v3871
    %v3877 = vrot.slane %v3876, 4
    %v3879 = vshll.u32 %v3618, 16
    %v3881 = vrot.slane %v3879, 5
    %v3882 = vsel %vm1603, %v3877, %v3881
    %v3884 = vshrl.u32 %v3619, 16
    %v3886 = vrot.slane %v3884, 4
    %v3887 = vshll.u32 %v3619, 16
    %v3889 = vrot.slane %v3887, 5
    %v3890 = vor.u32 %v3886, %v3889
    %v3891 = vrot.slane %v3890, 4
    %v3893 = vshll.u32 %v3620, 16
    %v3895 = vrot.slane %v3893, 5
    %v3896 = vsel %vm1603, %v3891, %v3895
    %v3897 = vshrl.u32 %v3620, 16
    %v3899 = vrot.slane %v3897, 4
    %v3900 = vor.u32 %v3899, %v3895
    %v3901 = vrot.slane %v3900, 4
    %v3903 = vshll.u32 %v3621, 16
    %v3905 = vrot.slane %v3903, 5
    %v3906 = vsel %vm1603, %v3901, %v3905
    %v3908 = vshrl.u32 %v3622, 16
    %v3910 = vrot.slane %v3908, 4
    %v3911 = vshll.u32 %v3622, 16
    %v3913 = vrot.slane %v3911, 5
    %v3914 = vor.u32 %v3910, %v3913
    %v3915 = vrot.slane %v3914, 4
    %v3917 = vshll.u32 %v3623, 16
    %v3919 = vrot.slane %v3917, 5
    %v3920 = vsel %vm1603, %v3915, %v3919
    %v3921 = vshrl.u32 %v3623, 16
    %v3923 = vrot.slane %v3921, 4
    %v3924 = vor.u32 %v3923, %v3919
    %v3925 = vrot.slane %v3924, 4
    %v3927 = vshll.u32 %v3624, 16
    %v3929 = vrot.slane %v3927, 5
    %v3930 = vsel %vm1603, %v3925, %v3929
    %v3932 = vshrl.u32 %v3625, 16
    %v3934 = vrot.slane %v3932, 4
    %v3935 = vshll.u32 %v3625, 16
    %v3937 = vrot.slane %v3935, 5
    %v3938 = vor.u32 %v3934, %v3937
    %v3939 = vrot.slane %v3938, 4
    %v3941 = vshll.u32 %v3626, 16
    %v3943 = vrot.slane %v3941, 5
    %v3944 = vsel %vm1603, %v3939, %v3943
    %v3945 = vshrl.u32 %v3626, 16
    %v3947 = vrot.slane %v3945, 4
    %v3948 = vor.u32 %v3947, %v3943
    %v3949 = vrot.slane %v3948, 4
    %v3951 = vshll.u32 %v3627, 16
    %v3953 = vrot.slane %v3951, 5
    %v3954 = vsel %vm1603, %v3949, %v3953
    %v3956 = vshrl.u32 %v3628, 16
    %v3958 = vrot.slane %v3956, 4
    %v3959 = vshll.u32 %v3628, 16
    %v3961 = vrot.slane %v3959, 5
    %v3962 = vor.u32 %v3958, %v3961
    %v3963 = vrot.slane %v3962, 4
    %v3965 = vshll.u32 %v3629, 16
    %v3967 = vrot.slane %v3965, 5
    %v3968 = vsel %vm1603, %v3963, %v3967
    %v3969 = vshrl.u32 %v3629, 16
    %v3971 = vrot.slane %v3969, 4
    %v3972 = vor.u32 %v3971, %v3967
    %v3973 = vrot.slane %v3972, 4
    %v3975 = vshll.u32 %v3630, 16
    %v3977 = vrot.slane %v3975, 5
    %v3978 = vsel %vm1603, %v3973, %v3977
    %v3980 = vshrl.u32 %v3631, 16
    %v3982 = vrot.slane %v3980, 4
    %v3983 = vshll.u32 %v3631, 16
    %v3985 = vrot.slane %v3983, 5
    %v3986 = vor.u32 %v3982, %v3985
    %v3987 = vrot.slane %v3986, 4
    %v3989 = vshll.u32 %v3632, 16
    %v3991 = vrot.slane %v3989, 5
    %v3992 = vsel %vm1603, %v3987, %v3991
    %v3993 = vshrl.u32 %v3632, 16
    %v3995 = vrot.slane %v3993, 4
    %v3996 = vor.u32 %v3995, %v3991
    %v3997 = vrot.slane %v3996, 4
    %v3999 = vshll.u32 %v3633, 16
    %v4001 = vrot.slane %v3999, 5
    %v4002 = vsel %vm1603, %v3997, %v4001
    %v4004 = vshrl.u32 %v3634, 16
    %v4006 = vrot.slane %v4004, 4
    %v4007 = vshll.u32 %v3634, 16
    %v4009 = vrot.slane %v4007, 5
    %v4010 = vor.u32 %v4006, %v4009
    %v4011 = vrot.slane %v4010, 4
    %v4013 = vshll.u32 %v3635, 16
    %v4015 = vrot.slane %v4013, 5
    %v4016 = vsel %vm1603, %v4011, %v4015
    %v4017 = vshrl.u32 %v3635, 16
    %v4019 = vrot.slane %v4017, 4
    %v4020 = vor.u32 %v4019, %v4015
    %v4021 = vrot.slane %v4020, 4
    %v4023 = vshll.u32 %v3636, 16
    %v4025 = vrot.slane %v4023, 5
    %v4026 = vsel %vm1603, %v4021, %v4025
    %v4028 = vshrl.u32 %v3637, 16
    %v4030 = vrot.slane %v4028, 4
    %v4031 = vshll.u32 %v3637, 16
    %v4033 = vrot.slane %v4031, 5
    %v4034 = vor.u32 %v4030, %v4033
    %v4035 = vrot.slane %v4034, 4
    %v4037 = vshll.u32 %v3638, 16
    %v4039 = vrot.slane %v4037, 5
    %v4040 = vsel %vm1603, %v4035, %v4039
    %v4041 = vshrl.u32 %v3638, 16
    %v4043 = vrot.slane %v4041, 4
    %v4044 = vor.u32 %v4043, %v4039
    %v4045 = vrot.slane %v4044, 4
    %v4047 = vshll.u32 %v3639, 16
    %v4049 = vrot.slane %v4047, 5
    %v4050 = vsel %vm1603, %v4045, %v4049
    %v4052 = vshrl.u32 %v3640, 16
    %v4054 = vrot.slane %v4052, 4
    %v4055 = vshll.u32 %v3640, 16
    %v4057 = vrot.slane %v4055, 5
    %v4058 = vor.u32 %v4054, %v4057
    %v4059 = vrot.slane %v4058, 4
    %v4061 = vshll.u32 %v3641, 16
    %v4063 = vrot.slane %v4061, 5
    %v4064 = vsel %vm1603, %v4059, %v4063
    %v4065 = vshrl.u32 %v3641, 16
    %v4067 = vrot.slane %v4065, 4
    %v4068 = vor.u32 %v4067, %v4063
    %v4069 = vrot.slane %v4068, 4
    %v4071 = vshll.u32 %v3642, 16
    %v4073 = vrot.slane %v4071, 5
    %v4074 = vsel %vm1603, %v4069, %v4073
    %v4076 = vshrl.u32 %v3643, 16
    %v4078 = vrot.slane %v4076, 4
    %v4079 = vshll.u32 %v3643, 16
    %v4081 = vrot.slane %v4079, 5
    %v4082 = vor.u32 %v4078, %v4081
    %v4083 = vrot.slane %v4082, 4
    %v4085 = vshll.u32 %v3644, 16
    %v4087 = vrot.slane %v4085, 5
    %v4088 = vsel %vm1603, %v4083, %v4087
    %v4089 = vshrl.u32 %v3644, 16
    %v4091 = vrot.slane %v4089, 4
    %v4092 = vor.u32 %v4091, %v4087
    %v4093 = vrot.slane %v4092, 4
    %v4095 = vshll.u32 %v3645, 16
    %v4097 = vrot.slane %v4095, 5
    %v4098 = vsel %vm1603, %v4093, %v4097
    %v4100 = vshrl.u32 %v3646, 16
    %v4102 = vrot.slane %v4100, 4
    %v4103 = vshll.u32 %v3646, 16
    %v4105 = vrot.slane %v4103, 5
    %v4106 = vor.u32 %v4102, %v4105
    %v4107 = vrot.slane %v4106, 4
    %v4109 = vshll.u32 %v3647, 16
    %v4111 = vrot.slane %v4109, 5
    %v4112 = vsel %vm1603, %v4107, %v4111
    %v4113 = vshrl.u32 %v3647, 16
    %v4115 = vrot.slane %v4113, 4
    %v4116 = vor.u32 %v4115, %v4111
    %v4117 = vrot.slane %v4116, 4
    %v4119 = vshll.u32 %v3648, 16
    %v4121 = vrot.slane %v4119, 5
    %v4122 = vsel %vm1603, %v4117, %v4121
    %v4124 = vshrl.u32 %v3649, 16
    %v4126 = vrot.slane %v4124, 4
    %v4127 = vshll.u32 %v3649, 16
    %v4129 = vrot.slane %v4127, 5
    %v4130 = vor.u32 %v4126, %v4129
    %v4131 = vrot.slane %v4130, 4
    %v4133 = vshll.u32 %v3650, 16
    %v4135 = vrot.slane %v4133, 5
    %v4136 = vsel %vm1603, %v4131, %v4135
    %v4137 = vshrl.u32 %v3650, 16
    %v4139 = vrot.slane %v4137, 4
    %v4140 = vor.u32 %v4139, %v4135
    %v4141 = vrot.slane %v4140, 4
    %v4143 = vshll.u32 %v3651, 16
    %v4145 = vrot.slane %v4143, 5
    %v4146 = vsel %vm1603, %v4141, %v4145
    %v4148 = vshrl.u32 %v3652, 16
    %v4150 = vrot.slane %v4148, 4
    %v4151 = vshll.u32 %v3652, 16
    %v4153 = vrot.slane %v4151, 5
    %v4154 = vor.u32 %v4150, %v4153
    %v4155 = vrot.slane %v4154, 4
    %v4157 = vshll.u32 %v3653, 16
    %v4159 = vrot.slane %v4157, 5
    %v4160 = vsel %vm1603, %v4155, %v4159
    %v4161 = vshrl.u32 %v3653, 16
    %v4163 = vrot.slane %v4161, 4
    %v4164 = vor.u32 %v4163, %v4159
    %v4165 = vrot.slane %v4164, 4
    %v4167 = vshll.u32 %v3654, 16
    %v4169 = vrot.slane %v4167, 5
    %v4170 = vsel %vm1603, %v4165, %v4169
    %v4172 = vshrl.u32 %v3655, 16
    %v4174 = vrot.slane %v4172, 4
    %v4175 = vshll.u32 %v3655, 16
    %v4177 = vrot.slane %v4175, 5
    %v4178 = vor.u32 %v4174, %v4177
    %v4179 = vrot.slane %v4178, 4
    %v4181 = vshll.u32 %v3656, 16
    %v4183 = vrot.slane %v4181, 5
    %v4184 = vsel %vm1603, %v4179, %v4183
    %v4185 = vshrl.u32 %v3656, 16
    %v4187 = vrot.slane %v4185, 4
    %v4188 = vor.u32 %v4187, %v4183
    %v4189 = vrot.slane %v4188, 4
    %v4191 = vshll.u32 %v3657, 16
    %v4193 = vrot.slane %v4191, 5
    %v4194 = vsel %vm1603, %v4189, %v4193
    %v4196 = vshrl.u32 %v3658, 16
    %v4198 = vrot.slane %v4196, 4
    %v4199 = vshll.u32 %v3658, 16
    %v4201 = vrot.slane %v4199, 5
    %v4202 = vor.u32 %v4198, %v4201
    %v4203 = vrot.slane %v4202, 4
    %v4205 = vshll.u32 %v3659, 16
    %v4207 = vrot.slane %v4205, 5
    %v4208 = vsel %vm1603, %v4203, %v4207
    %v4209 = vshrl.u32 %v3659, 16
    %v4211 = vrot.slane %v4209, 4
    %v4212 = vor.u32 %v4211, %v4207
    %v4213 = vrot.slane %v4212, 4
    %v4215 = vshll.u32 %v3660, 16
    %v4217 = vrot.slane %v4215, 5
    %v4218 = vsel %vm1603, %v4213, %v4217
    %v4220 = vshrl.u32 %v3661, 16
    %v4222 = vrot.slane %v4220, 4
    %v4223 = vshll.u32 %v3661, 16
    %v4225 = vrot.slane %v4223, 5
    %v4226 = vor.u32 %v4222, %v4225
    %v4227 = vrot.slane %v4226, 4
    %v4229 = vshll.u32 %v3662, 16
    %v4231 = vrot.slane %v4229, 5
    %v4232 = vsel %vm1603, %v4227, %v4231
    %v4233 = vshrl.u32 %v3662, 16
    %v4235 = vrot.slane %v4233, 4
    %v4236 = vor.u32 %v4235, %v4231
    %v4237 = vrot.slane %v4236, 4
    %v4239 = vshll.u32 %v3663, 16
    %v4241 = vrot.slane %v4239, 5
    %v4242 = vsel %vm1603, %v4237, %v4241
    %v4244 = vshrl.u32 %v3664, 16
    %v4246 = vrot.slane %v4244, 4
    %v4247 = vshll.u32 %v3664, 16
    %v4249 = vrot.slane %v4247, 5
    %v4250 = vor.u32 %v4246, %v4249
    %v4251 = vrot.slane %v4250, 4
    %v4253 = vshll.u32 %v3665, 16
    %v4255 = vrot.slane %v4253, 5
    %v4256 = vsel %vm1603, %v4251, %v4255
    %v4257 = vshrl.u32 %v3665, 16
    %v4259 = vrot.slane %v4257, 4
    %v4260 = vor.u32 %v4259, %v4255
    %v4261 = vrot.slane %v4260, 4
    %v4263 = vshll.u32 %v3666, 16
    %v4265 = vrot.slane %v4263, 5
    %v4266 = vsel %vm1603, %v4261, %v4265
    %v4268 = vshrl.u32 %v3667, 16
    %v4270 = vrot.slane %v4268, 4
    %v4271 = vshll.u32 %v3667, 16
    %v4273 = vrot.slane %v4271, 5
    %v4274 = vor.u32 %v4270, %v4273
    %v4275 = vrot.slane %v4274, 4
    %v4277 = vshll.u32 %v3668, 16
    %v4279 = vrot.slane %v4277, 5
    %v4280 = vsel %vm1603, %v4275, %v4279
    %v4281 = vshrl.u32 %v3668, 16
    %v4283 = vrot.slane %v4281, 4
    %v4284 = vor.u32 %v4283, %v4279
    %v4285 = vrot.slane %v4284, 4
    %v4287 = vshll.u32 %v3669, 16
    %v4289 = vrot.slane %v4287, 5
    %v4290 = vsel %vm1603, %v4285, %v4289
    %v4292 = vshrl.u32 %v3670, 16
    %v4294 = vrot.slane %v4292, 4
    %v4295 = vshll.u32 %v3670, 16
    %v4297 = vrot.slane %v4295, 5
    %v4298 = vor.u32 %v4294, %v4297
    %v4299 = vrot.slane %v4298, 4
    %v4301 = vshll.u32 %v3671, 16
    %v4303 = vrot.slane %v4301, 5
    %v4304 = vsel %vm1603, %v4299, %v4303
    %v4305 = vshrl.u32 %v3671, 16
    %v4307 = vrot.slane %v4305, 4
    %v4308 = vor.u32 %v4307, %v4303
    %v4309 = vrot.slane %v4308, 4
    %v4311 = vshll.u32 %v3672, 16
    %v4313 = vrot.slane %v4311, 5
    %v4314 = vsel %vm1603, %v4309, %v4313
    %v4316 = vshrl.u32 %v3673, 16
    %v4318 = vrot.slane %v4316, 4
    %v4319 = vshll.u32 %v3673, 16
    %v4321 = vrot.slane %v4319, 5
    %v4322 = vor.u32 %v4318, %v4321
    %v4323 = vrot.slane %v4322, 4
    %v4325 = vshll.u32 %v3674, 16
    %v4327 = vrot.slane %v4325, 5
    %v4328 = vsel %vm1603, %v4323, %v4327
    %v4329 = vshrl.u32 %v3674, 16
    %v4331 = vrot.slane %v4329, 4
    %v4332 = vor.u32 %v4331, %v4327
    %v4333 = vrot.slane %v4332, 4
    %v4335 = vshll.u32 %v3675, 16
    %v4337 = vrot.slane %v4335, 5
    %v4338 = vsel %vm1603, %v4333, %v4337
    %v4340 = vshrl.u32 %v3676, 16
    %v4342 = vrot.slane %v4340, 4
    %v4343 = vshll.u32 %v3676, 16
    %v4345 = vrot.slane %v4343, 5
    %v4346 = vor.u32 %v4342, %v4345
    %v4347 = vrot.slane %v4346, 4
    %v4349 = vshll.u32 %v3677, 16
    %v4351 = vrot.slane %v4349, 5
    %v4352 = vsel %vm1603, %v4347, %v4351
    %v4353 = vshrl.u32 %v3677, 16
    %v4355 = vrot.slane %v4353, 4
    %v4356 = vor.u32 %v4355, %v4351
    %v4357 = vrot.slane %v4356, 4
    %v4359 = vshll.u32 %v3678, 16
    %v4361 = vrot.slane %v4359, 5
    %v4362 = vsel %vm1603, %v4357, %v4361
    %v4364 = vshrl.u32 %v3679, 16
    %v4366 = vrot.slane %v4364, 4
    %v4367 = vshll.u32 %v3679, 16
    %v4369 = vrot.slane %v4367, 5
    %v4370 = vor.u32 %v4366, %v4369
    %v4371 = vrot.slane %v4370, 4
    %v4373 = vshll.u32 %v3680, 16
    %v4375 = vrot.slane %v4373, 5
    %v4376 = vsel %vm1603, %v4371, %v4375
    %v4377 = vshrl.u32 %v3680, 16
    %v4379 = vrot.slane %v4377, 4
    %v4380 = vor.u32 %v4379, %v4375
    %v4381 = vrot.slane %v4380, 4
    %v4383 = vshll.u32 %v3681, 16
    %v4385 = vrot.slane %v4383, 5
    %v4386 = vsel %vm1603, %v4381, %v4385
    %v4388 = vshrl.u32 %v3682, 16
    %v4390 = vrot.slane %v4388, 4
    %v4391 = vshll.u32 %v3682, 16
    %v4393 = vrot.slane %v4391, 5
    %v4394 = vor.u32 %v4390, %v4393
    %v4395 = vrot.slane %v4394, 4
    %v4397 = vshll.u32 %v3683, 16
    %v4399 = vrot.slane %v4397, 5
    %v4400 = vsel %vm1603, %v4395, %v4399
    %v4401 = vshrl.u32 %v3683, 16
    %v4403 = vrot.slane %v4401, 4
    %v4404 = vor.u32 %v4403, %v4399
    %v4405 = vrot.slane %v4404, 4
    %v4407 = vshll.u32 %v3684, 16
    %v4409 = vrot.slane %v4407, 5
    %v4410 = vsel %vm1603, %v4405, %v4409
    %v4412 = vshrl.u32 %v3685, 16
    %v4414 = vrot.slane %v4412, 4
    %v4415 = vshll.u32 %v3685, 16
    %v4417 = vrot.slane %v4415, 5
    %v4418 = vor.u32 %v4414, %v4417
    %v4419 = vrot.slane %v4418, 4
    %v4421 = vshll.u32 %v3686, 16
    %v4423 = vrot.slane %v4421, 5
    %v4424 = vsel %vm1603, %v4419, %v4423
    %v4425 = vshrl.u32 %v3686, 16
    %v4427 = vrot.slane %v4425, 4
    %v4428 = vor.u32 %v4427, %v4423
    %v4429 = vrot.slane %v4428, 4
    %v4431 = vshll.u32 %v3687, 16
    %v4433 = vrot.slane %v4431, 5
    %v4434 = vsel %vm1603, %v4429, %v4433
    %v4436 = vshrl.u32 %v3688, 16
    %v4438 = vrot.slane %v4436, 4
    %v4439 = vshll.u32 %v3688, 16
    %v4441 = vrot.slane %v4439, 5
    %v4442 = vor.u32 %v4438, %v4441
    %v4443 = vrot.slane %v4442, 4
    %v4445 = vshll.u32 %v3689, 16
    %v4447 = vrot.slane %v4445, 5
    %v4448 = vsel %vm1603, %v4443, %v4447
    %v4449 = vshrl.u32 %v3689, 16
    %v4451 = vrot.slane %v4449, 4
    %v4452 = vor.u32 %v4451, %v4447
    %v4453 = vrot.slane %v4452, 4
    %v4455 = vshll.u32 %v3690, 16
    %v4457 = vrot.slane %v4455, 5
    %v4458 = vsel %vm1603, %v4453, %v4457
    %v4459 = vunpack.c.l.b16 %v3704
    %v4460 = vunpack.c.l.b16 %v3714
    %v4461 = vunpack.c.l.b16 %v3728
    %v4462 = vunpack.c.l.b16 %v3738
    %v4463 = vunpack.c.l.b16 %v3752
    %v4464 = vunpack.c.l.b16 %v3762
    %v4465 = vunpack.c.l.b16 %v3776
    %v4466 = vunpack.c.l.b16 %v3786
    %v4467 = vunpack.c.l.b16 %v3800
    %v4468 = vunpack.c.l.b16 %v3810
    %v4469 = vunpack.c.l.b16 %v3824
    %v4470 = vunpack.c.l.b16 %v3834
    %v4471 = vunpack.c.l.b16 %v3848
    %v4472 = vunpack.c.l.b16 %v3858
    %v4473 = vunpack.c.l.b16 %v3872
    %v4474 = vunpack.c.l.b16 %v3882
    %v4475 = vunpack.c.l.b16 %v3896
    %v4476 = vunpack.c.l.b16 %v3906
    %v4477 = vunpack.c.l.b16 %v3920
    %v4478 = vunpack.c.l.b16 %v3930
    %v4479 = vunpack.c.l.b16 %v3944
    %v4480 = vunpack.c.l.b16 %v3954
    %v4481 = vunpack.c.l.b16 %v3968
    %v4482 = vunpack.c.l.b16 %v3978
    %v4483 = vunpack.c.l.b16 %v3992
    %v4484 = vunpack.c.l.b16 %v4002
    %v4485 = vunpack.c.l.b16 %v4016
    %v4486 = vunpack.c.l.b16 %v4026
    %v4487 = vunpack.c.l.b16 %v4040
    %v4488 = vunpack.c.l.b16 %v4050
    %v4489 = vunpack.c.l.b16 %v4064
    %v4490 = vunpack.c.l.b16 %v4074
    %v4491 = vunpack.c.l.b16 %v4088
    %v4492 = vunpack.c.l.b16 %v4098
    %v4493 = vunpack.c.l.b16 %v4112
    %v4494 = vunpack.c.l.b16 %v4122
    %v4495 = vunpack.c.l.b16 %v4136
    %v4496 = vunpack.c.l.b16 %v4146
    %v4497 = vunpack.c.l.b16 %v4160
    %v4498 = vunpack.c.l.b16 %v4170
    %v4499 = vunpack.c.l.b16 %v4184
    %v4500 = vunpack.c.l.b16 %v4194
    %v4501 = vunpack.c.l.b16 %v4208
    %v4502 = vunpack.c.l.b16 %v4218
    %v4503 = vunpack.c.l.b16 %v4232
    %v4504 = vunpack.c.l.b16 %v4242
    %v4505 = vunpack.c.l.b16 %v4256
    %v4506 = vunpack.c.l.b16 %v4266
    %v4507 = vunpack.c.l.b16 %v4280
    %v4508 = vunpack.c.l.b16 %v4290
    %v4509 = vunpack.c.l.b16 %v4304
    %v4510 = vunpack.c.l.b16 %v4314
    %v4511 = vunpack.c.l.b16 %v4328
    %v4512 = vunpack.c.l.b16 %v4338
    %v4513 = vunpack.c.l.b16 %v4352
    %v4514 = vunpack.c.l.b16 %v4362
    %v4515 = vunpack.c.l.b16 %v4376
    %v4516 = vunpack.c.l.b16 %v4386
    %v4517 = vunpack.c.l.b16 %v4400
    %v4518 = vunpack.c.l.b16 %v4410
    %v4519 = vunpack.c.l.b16 %v4424
    %v4520 = vunpack.c.l.b16 %v4434
    %v4521 = vunpack.c.l.b16 %v4448
    %v4522 = vunpack.c.l.b16 %v4458
    %v4523 = vpack.c.b16 %v4460, %v4459
    %v4524 = vpack.c.b16 %v4462, %v4461
    %v4525 = vpack.c.b16 %v4464, %v4463
    %v4526 = vpack.c.b16 %v4466, %v4465
    %v4527 = vpack.c.b16 %v4468, %v4467
    %v4528 = vpack.c.b16 %v4470, %v4469
    %v4529 = vpack.c.b16 %v4472, %v4471
    %v4530 = vpack.c.b16 %v4474, %v4473
    %v4531 = vpack.c.b16 %v4476, %v4475
    %v4532 = vpack.c.b16 %v4478, %v4477
    %v4533 = vpack.c.b16 %v4480, %v4479
    %v4534 = vpack.c.b16 %v4482, %v4481
    %v4535 = vpack.c.b16 %v4484, %v4483
    %v4536 = vpack.c.b16 %v4486, %v4485
    %v4537 = vpack.c.b16 %v4488, %v4487
    %v4538 = vpack.c.b16 %v4490, %v4489
    %v4539 = vpack.c.b16 %v4492, %v4491
    %v4540 = vpack.c.b16 %v4494, %v4493
    %v4541 = vpack.c.b16 %v4496, %v4495
    %v4542 = vpack.c.b16 %v4498, %v4497
    %v4543 = vpack.c.b16 %v4500, %v4499
    %v4544 = vpack.c.b16 %v4502, %v4501
    %v4545 = vpack.c.b16 %v4504, %v4503
    %v4546 = vpack.c.b16 %v4506, %v4505
    %v4547 = vpack.c.b16 %v4508, %v4507
    %v4548 = vpack.c.b16 %v4510, %v4509
    %v4549 = vpack.c.b16 %v4512, %v4511
    %v4550 = vpack.c.b16 %v4514, %v4513
    %v4551 = vpack.c.b16 %v4516, %v4515
    %v4552 = vpack.c.b16 %v4518, %v4517
    %v4553 = vpack.c.b16 %v4520, %v4519
    %v4554 = vpack.c.b16 %v4522, %v4521
    %4587 = vst.msk [vmem:[#allocation4 + $0x8] sm:$0xff] %vm86, %v4523
    %4588 = vst.msk [vmem:[#allocation4 + $0x20] sm:$0xff] %vm86, %v4524
    %4589 = vst.msk [vmem:[#allocation4 + $0x38] sm:$0xff] %vm86, %v4525
    %4590 = vst.msk [vmem:[#allocation4 + $0x50] sm:$0xff] %vm86, %v4526
    %4591 = vst.msk [vmem:[#allocation4 + $0x68] sm:$0xff] %vm86, %v4527
    %4592 = vst.msk [vmem:[#allocation4 + $0x80] sm:$0xff] %vm86, %v4528
    %4593 = vst.msk [vmem:[#allocation4 + $0x98] sm:$0xff] %vm86, %v4529
    %4594 = vst.msk [vmem:[#allocation4 + $0xb0] sm:$0xff] %vm86, %v4530
    %4595 = vst.msk [vmem:[#allocation4 + $0xc8] sm:$0xff] %vm86, %v4531
    %4596 = vst.msk [vmem:[#allocation4 + $0xe0] sm:$0xff] %vm86, %v4532
    %4597 = vst.msk [vmem:[#allocation4 + $0xf8] sm:$0xff] %vm86, %v4533
    %4598 = vst.msk [vmem:[#allocation4 + $0x110] sm:$0xff] %vm86, %v4534
    %4599 = vst.msk [vmem:[#allocation4 + $0x128] sm:$0xff] %vm86, %v4535
    %4600 = vst.msk [vmem:[#allocation4 + $0x140] sm:$0xff] %vm86, %v4536
    %4601 = vst.msk [vmem:[#allocation4 + $0x158] sm:$0xff] %vm86, %v4537
    %4602 = vst.msk [vmem:[#allocation4 + $0x170] sm:$0xff] %vm86, %v4538
    %4603 = vst.msk [vmem:[#allocation4 + $0x188] sm:$0xff] %vm86, %v4539
    %4604 = vst.msk [vmem:[#allocation4 + $0x1a0] sm:$0xff] %vm86, %v4540
    %4605 = vst.msk [vmem:[#allocation4 + $0x1b8] sm:$0xff] %vm86, %v4541
    %4606 = vst.msk [vmem:[#allocation4 + $0x1d0] sm:$0xff] %vm86, %v4542
    %4607 = vst.msk [vmem:[#allocation4 + $0x1e8] sm:$0xff] %vm86, %v4543
    %4608 = vst.msk [vmem:[#allocation4 + $0x200] sm:$0xff] %vm86, %v4544
    %4609 = vst.msk [vmem:[#allocation4 + $0x218] sm:$0xff] %vm86, %v4545
    %4610 = vst.msk [vmem:[#allocation4 + $0x230] sm:$0xff] %vm86, %v4546
    %4611 = vst.msk [vmem:[#allocation4 + $0x248] sm:$0xff] %vm86, %v4547
    %4612 = vst.msk [vmem:[#allocation4 + $0x260] sm:$0xff] %vm86, %v4548
    %4613 = vst.msk [vmem:[#allocation4 + $0x278] sm:$0xff] %vm86, %v4549
    %4614 = vst.msk [vmem:[#allocation4 + $0x290] sm:$0xff] %vm86, %v4550
    %4615 = vst.msk [vmem:[#allocation4 + $0x2a8] sm:$0xff] %vm86, %v4551
    %4616 = vst.msk [vmem:[#allocation4 + $0x2c0] sm:$0xff] %vm86, %v4552
    %4617 = vst.msk [vmem:[#allocation4 + $0x2d8] sm:$0xff] %vm86, %v4553
    %4618 = vst.msk [vmem:[#allocation4 + $0x2f0] sm:$0xff] %vm86, %v4554
    %v4619 = vld [vmem:[%s3241] sm:$0xe]
    %v4620 = vld [vmem:[%s3241 + $0x4] sm:$0xf]
    %v4621 = vld [vmem:[%s3241 + $0x8] sm:$0x1]
    %v4622 = vld [vmem:[%s3241 + $0xc] sm:$0xe]
    %v4623 = vld [vmem:[%s3241 + $0x10] sm:$0xf]
    %v4624 = vld [vmem:[%s3241 + $0x14] sm:$0x1]
    %v4625 = vld [vmem:[%s3241 + $0x18] sm:$0xe]
    %v4626 = vld [vmem:[%s3241 + $0x1c] sm:$0xf]
    %v4627 = vld [vmem:[%s3241 + $0x20] sm:$0x1]
    %v4628 = vld [vmem:[%s3241 + $0x24] sm:$0xe]
    %v4629 = vld [vmem:[%s3241 + $0x28] sm:$0xf]
    %v4630 = vld [vmem:[%s3241 + $0x2c] sm:$0x1]
    %v4631 = vld [vmem:[%s3241 + $0x30] sm:$0xe]
    %v4632 = vld [vmem:[%s3241 + $0x34] sm:$0xf]
    %v4633 = vld [vmem:[%s3241 + $0x38] sm:$0x1]
    %v4634 = vld [vmem:[%s3241 + $0x3c] sm:$0xe]
    %v4635 = vld [vmem:[%s3241 + $0x40] sm:$0xf]
    %v4636 = vld [vmem:[%s3241 + $0x44] sm:$0x1]
    %v4637 = vld [vmem:[%s3241 + $0x48] sm:$0xe]
    %v4638 = vld [vmem:[%s3241 + $0x4c] sm:$0xf]
    %v4639 = vld [vmem:[%s3241 + $0x50] sm:$0x1]
    %v4640 = vld [vmem:[%s3241 + $0x54] sm:$0xe]
    %v4641 = vld [vmem:[%s3241 + $0x58] sm:$0xf]
    %v4642 = vld [vmem:[%s3241 + $0x5c] sm:$0x1]
    %v4643 = vld [vmem:[%s3241 + $0x60] sm:$0xe]
    %v4644 = vld [vmem:[%s3241 + $0x64] sm:$0xf]
    %v4645 = vld [vmem:[%s3241 + $0x68] sm:$0x1]
    %v4646 = vld [vmem:[%s3241 + $0x6c] sm:$0xe]
    %v4647 = vld [vmem:[%s3241 + $0x70] sm:$0xf]
    %v4648 = vld [vmem:[%s3241 + $0x74] sm:$0x1]
    %v4649 = vld [vmem:[%s3241 + $0x78] sm:$0xe]
    %v4650 = vld [vmem:[%s3241 + $0x7c] sm:$0xf]
    %v4651 = vld [vmem:[%s3241 + $0x80] sm:$0x1]
    %v4652 = vld [vmem:[%s3241 + $0x84] sm:$0xe]
    %v4653 = vld [vmem:[%s3241 + $0x88] sm:$0xf]
    %v4654 = vld [vmem:[%s3241 + $0x8c] sm:$0x1]
    %v4655 = vld [vmem:[%s3241 + $0x90] sm:$0xe]
    %v4656 = vld [vmem:[%s3241 + $0x94] sm:$0xf]
    %v4657 = vld [vmem:[%s3241 + $0x98] sm:$0x1]
    %v4658 = vld [vmem:[%s3241 + $0x9c] sm:$0xe]
    %v4659 = vld [vmem:[%s3241 + $0xa0] sm:$0xf]
    %v4660 = vld [vmem:[%s3241 + $0xa4] sm:$0x1]
    %v4661 = vld [vmem:[%s3241 + $0xa8] sm:$0xe]
    %v4662 = vld [vmem:[%s3241 + $0xac] sm:$0xf]
    %v4663 = vld [vmem:[%s3241 + $0xb0] sm:$0x1]
    %v4664 = vld [vmem:[%s3241 + $0xb4] sm:$0xe]
    %v4665 = vld [vmem:[%s3241 + $0xb8] sm:$0xf]
    %v4666 = vld [vmem:[%s3241 + $0xbc] sm:$0x1]
    %v4667 = vld [vmem:[%s3241 + $0xd8] sm:$0xe]
    %v4668 = vld [vmem:[%s3241 + $0xdc] sm:$0xf]
    %v4669 = vld [vmem:[%s3241 + $0xe0] sm:$0x1]
    %v4670 = vld [vmem:[%s3241 + $0xe4] sm:$0xe]
    %v4671 = vld [vmem:[%s3241 + $0xe8] sm:$0xf]
    %v4672 = vld [vmem:[%s3241 + $0xec] sm:$0x1]
    %v4673 = vld [vmem:[%s3241 + $0xf0] sm:$0xe]
    %v4674 = vld [vmem:[%s3241 + $0xf4] sm:$0xf]
    %v4675 = vld [vmem:[%s3241 + $0xf8] sm:$0x1]
    %v4676 = vld [vmem:[%s3241 + $0xfc] sm:$0xe]
    %v4677 = vld [vmem:[%s3241 + $0x100] sm:$0xf]
    %v4678 = vld [vmem:[%s3241 + $0x104] sm:$0x1]
    %v4679 = vld [vmem:[%s3241 + $0x108] sm:$0xe]
    %v4680 = vld [vmem:[%s3241 + $0x10c] sm:$0xf]
    %v4681 = vld [vmem:[%s3241 + $0x110] sm:$0x1]
    %v4682 = vld [vmem:[%s3241 + $0x114] sm:$0xe]
    %v4683 = vld [vmem:[%s3241 + $0x118] sm:$0xf]
    %v4684 = vld [vmem:[%s3241 + $0x11c] sm:$0x1]
    %v4685 = vld [vmem:[%s3241 + $0x120] sm:$0xe]
    %v4686 = vld [vmem:[%s3241 + $0x124] sm:$0xf]
    %v4687 = vld [vmem:[%s3241 + $0x128] sm:$0x1]
    %v4688 = vld [vmem:[%s3241 + $0x12c] sm:$0xe]
    %v4689 = vld [vmem:[%s3241 + $0x130] sm:$0xf]
    %v4690 = vld [vmem:[%s3241 + $0x134] sm:$0x1]
    %v4691 = vld [vmem:[%s3241 + $0x138] sm:$0xe]
    %v4692 = vld [vmem:[%s3241 + $0x13c] sm:$0xf]
    %v4693 = vld [vmem:[%s3241 + $0x140] sm:$0x1]
    %v4694 = vld [vmem:[%s3241 + $0x144] sm:$0xe]
    %v4695 = vld [vmem:[%s3241 + $0x148] sm:$0xf]
    %v4696 = vld [vmem:[%s3241 + $0x14c] sm:$0x1]
    %v4697 = vld [vmem:[%s3241 + $0x150] sm:$0xe]
    %v4698 = vld [vmem:[%s3241 + $0x154] sm:$0xf]
    %v4699 = vld [vmem:[%s3241 + $0x158] sm:$0x1]
    %v4700 = vld [vmem:[%s3241 + $0x15c] sm:$0xe]
    %v4701 = vld [vmem:[%s3241 + $0x160] sm:$0xf]
    %v4702 = vld [vmem:[%s3241 + $0x164] sm:$0x1]
    %v4703 = vld [vmem:[%s3241 + $0x168] sm:$0xe]
    %v4704 = vld [vmem:[%s3241 + $0x16c] sm:$0xf]
    %v4705 = vld [vmem:[%s3241 + $0x170] sm:$0x1]
    %v4706 = vld [vmem:[%s3241 + $0x174] sm:$0xe]
    %v4707 = vld [vmem:[%s3241 + $0x178] sm:$0xf]
    %v4708 = vld [vmem:[%s3241 + $0x17c] sm:$0x1]
    %v4709 = vld [vmem:[%s3241 + $0x180] sm:$0xe]
    %v4710 = vld [vmem:[%s3241 + $0x184] sm:$0xf]
    %v4711 = vld [vmem:[%s3241 + $0x188] sm:$0x1]
    %v4712 = vld [vmem:[%s3241 + $0x18c] sm:$0xe]
    %v4713 = vld [vmem:[%s3241 + $0x190] sm:$0xf]
    %v4714 = vld [vmem:[%s3241 + $0x194] sm:$0x1]
    %v4811 = vrot.slane %v4619, 5
    %v4812 = vrot.slane %v4811, 4
    %v4813 = vrot.slane %v4620, 5
    %v4814 = vsel %vm2791, %v4812, %v4813
    %v4815 = vrot.slane %v4813, 4
    %v4816 = vrot.slane %v4621, 5
    %v4817 = vsel %vm2791, %v4815, %v4816
    %v4818 = vrot.slane %v4622, 5
    %v4819 = vrot.slane %v4818, 4
    %v4820 = vrot.slane %v4623, 5
    %v4821 = vsel %vm2791, %v4819, %v4820
    %v4822 = vrot.slane %v4820, 4
    %v4823 = vrot.slane %v4624, 5
    %v4824 = vsel %vm2791, %v4822, %v4823
    %v4825 = vrot.slane %v4625, 5
    %v4826 = vrot.slane %v4825, 4
    %v4827 = vrot.slane %v4626, 5
    %v4828 = vsel %vm2791, %v4826, %v4827
    %v4829 = vrot.slane %v4827, 4
    %v4830 = vrot.slane %v4627, 5
    %v4831 = vsel %vm2791, %v4829, %v4830
    %v4832 = vrot.slane %v4628, 5
    %v4833 = vrot.slane %v4832, 4
    %v4834 = vrot.slane %v4629, 5
    %v4835 = vsel %vm2791, %v4833, %v4834
    %v4836 = vrot.slane %v4834, 4
    %v4837 = vrot.slane %v4630, 5
    %v4838 = vsel %vm2791, %v4836, %v4837
    %v4839 = vrot.slane %v4631, 5
    %v4840 = vrot.slane %v4839, 4
    %v4841 = vrot.slane %v4632, 5
    %v4842 = vsel %vm2791, %v4840, %v4841
    %v4843 = vrot.slane %v4841, 4
    %v4844 = vrot.slane %v4633, 5
    %v4845 = vsel %vm2791, %v4843, %v4844
    %v4846 = vrot.slane %v4634, 5
    %v4847 = vrot.slane %v4846, 4
    %v4848 = vrot.slane %v4635, 5
    %v4849 = vsel %vm2791, %v4847, %v4848
    %v4850 = vrot.slane %v4848, 4
    %v4851 = vrot.slane %v4636, 5
    %v4852 = vsel %vm2791, %v4850, %v4851
    %v4853 = vrot.slane %v4637, 5
    %v4854 = vrot.slane %v4853, 4
    %v4855 = vrot.slane %v4638, 5
    %v4856 = vsel %vm2791, %v4854, %v4855
    %v4857 = vrot.slane %v4855, 4
    %v4858 = vrot.slane %v4639, 5
    %v4859 = vsel %vm2791, %v4857, %v4858
    %v4860 = vrot.slane %v4640, 5
    %v4861 = vrot.slane %v4860, 4
    %v4862 = vrot.slane %v4641, 5
    %v4863 = vsel %vm2791, %v4861, %v4862
    %v4864 = vrot.slane %v4862, 4
    %v4865 = vrot.slane %v4642, 5
    %v4866 = vsel %vm2791, %v4864, %v4865
    %v4867 = vrot.slane %v4643, 5
    %v4868 = vrot.slane %v4867, 4
    %v4869 = vrot.slane %v4644, 5
    %v4870 = vsel %vm2791, %v4868, %v4869
    %v4871 = vrot.slane %v4869, 4
    %v4872 = vrot.slane %v4645, 5
    %v4873 = vsel %vm2791, %v4871, %v4872
    %v4874 = vrot.slane %v4646, 5
    %v4875 = vrot.slane %v4874, 4
    %v4876 = vrot.slane %v4647, 5
    %v4877 = vsel %vm2791, %v4875, %v4876
    %v4878 = vrot.slane %v4876, 4
    %v4879 = vrot.slane %v4648, 5
    %v4880 = vsel %vm2791, %v4878, %v4879
    %v4881 = vrot.slane %v4649, 5
    %v4882 = vrot.slane %v4881, 4
    %v4883 = vrot.slane %v4650, 5
    %v4884 = vsel %vm2791, %v4882, %v4883
    %v4885 = vrot.slane %v4883, 4
    %v4886 = vrot.slane %v4651, 5
    %v4887 = vsel %vm2791, %v4885, %v4886
    %v4888 = vrot.slane %v4652, 5
    %v4889 = vrot.slane %v4888, 4
    %v4890 = vrot.slane %v4653, 5
    %v4891 = vsel %vm2791, %v4889, %v4890
    %v4892 = vrot.slane %v4890, 4
    %v4893 = vrot.slane %v4654, 5
    %v4894 = vsel %vm2791, %v4892, %v4893
    %v4895 = vrot.slane %v4655, 5
    %v4896 = vrot.slane %v4895, 4
    %v4897 = vrot.slane %v4656, 5
    %v4898 = vsel %vm2791, %v4896, %v4897
    %v4899 = vrot.slane %v4897, 4
    %v4900 = vrot.slane %v4657, 5
    %v4901 = vsel %vm2791, %v4899, %v4900
    %v4902 = vrot.slane %v4658, 5
    %v4903 = vrot.slane %v4902, 4
    %v4904 = vrot.slane %v4659, 5
    %v4905 = vsel %vm2791, %v4903, %v4904
    %v4906 = vrot.slane %v4904, 4
    %v4907 = vrot.slane %v4660, 5
    %v4908 = vsel %vm2791, %v4906, %v4907
    %v4909 = vrot.slane %v4661, 5
    %v4910 = vrot.slane %v4909, 4
    %v4911 = vrot.slane %v4662, 5
    %v4912 = vsel %vm2791, %v4910, %v4911
    %v4913 = vrot.slane %v4911, 4
    %v4914 = vrot.slane %v4663, 5
    %v4915 = vsel %vm2791, %v4913, %v4914
    %v4916 = vrot.slane %v4664, 5
    %v4917 = vrot.slane %v4916, 4
    %v4918 = vrot.slane %v4665, 5
    %v4919 = vsel %vm2791, %v4917, %v4918
    %v4920 = vrot.slane %v4918, 4
    %v4921 = vrot.slane %v4666, 5
    %v4922 = vsel %vm2791, %v4920, %v4921
    %v4923 = vrot.slane %v4667, 5
    %v4924 = vrot.slane %v4923, 4
    %v4925 = vrot.slane %v4668, 5
    %v4926 = vsel %vm2791, %v4924, %v4925
    %v4927 = vrot.slane %v4925, 4
    %v4928 = vrot.slane %v4669, 5
    %v4929 = vsel %vm2791, %v4927, %v4928
    %v4930 = vrot.slane %v4670, 5
    %v4931 = vrot.slane %v4930, 4
    %v4932 = vrot.slane %v4671, 5
    %v4933 = vsel %vm2791, %v4931, %v4932
    %v4934 = vrot.slane %v4932, 4
    %v4935 = vrot.slane %v4672, 5
    %v4936 = vsel %vm2791, %v4934, %v4935
    %v4937 = vrot.slane %v4673, 5
    %v4938 = vrot.slane %v4937, 4
    %v4939 = vrot.slane %v4674, 5
    %v4940 = vsel %vm2791, %v4938, %v4939
    %v4941 = vrot.slane %v4939, 4
    %v4942 = vrot.slane %v4675, 5
    %v4943 = vsel %vm2791, %v4941, %v4942
    %v4944 = vrot.slane %v4676, 5
    %v4945 = vrot.slane %v4944, 4
    %v4946 = vrot.slane %v4677, 5
    %v4947 = vsel %vm2791, %v4945, %v4946
    %v4948 = vrot.slane %v4946, 4
    %v4949 = vrot.slane %v4678, 5
    %v4950 = vsel %vm2791, %v4948, %v4949
    %v4951 = vrot.slane %v4679, 5
    %v4952 = vrot.slane %v4951, 4
    %v4953 = vrot.slane %v4680, 5
    %v4954 = vsel %vm2791, %v4952, %v4953
    %v4955 = vrot.slane %v4953, 4
    %v4956 = vrot.slane %v4681, 5
    %v4957 = vsel %vm2791, %v4955, %v4956
    %v4958 = vrot.slane %v4682, 5
    %v4959 = vrot.slane %v4958, 4
    %v4960 = vrot.slane %v4683, 5
    %v4961 = vsel %vm2791, %v4959, %v4960
    %v4962 = vrot.slane %v4960, 4
    %v4963 = vrot.slane %v4684, 5
    %v4964 = vsel %vm2791, %v4962, %v4963
    %v4965 = vrot.slane %v4685, 5
    %v4966 = vrot.slane %v4965, 4
    %v4967 = vrot.slane %v4686, 5
    %v4968 = vsel %vm2791, %v4966, %v4967
    %v4969 = vrot.slane %v4967, 4
    %v4970 = vrot.slane %v4687, 5
    %v4971 = vsel %vm2791, %v4969, %v4970
    %v4972 = vrot.slane %v4688, 5
    %v4973 = vrot.slane %v4972, 4
    %v4974 = vrot.slane %v4689, 5
    %v4975 = vsel %vm2791, %v4973, %v4974
    %v4976 = vrot.slane %v4974, 4
    %v4977 = vrot.slane %v4690, 5
    %v4978 = vsel %vm2791, %v4976, %v4977
    %v4979 = vrot.slane %v4691, 5
    %v4980 = vrot.slane %v4979, 4
    %v4981 = vrot.slane %v4692, 5
    %v4982 = vsel %vm2791, %v4980, %v4981
    %v4983 = vrot.slane %v4981, 4
    %v4984 = vrot.slane %v4693, 5
    %v4985 = vsel %vm2791, %v4983, %v4984
    %v4986 = vrot.slane %v4694, 5
    %v4987 = vrot.slane %v4986, 4
    %v4988 = vrot.slane %v4695, 5
    %v4989 = vsel %vm2791, %v4987, %v4988
    %v4990 = vrot.slane %v4988, 4
    %v4991 = vrot.slane %v4696, 5
    %v4992 = vsel %vm2791, %v4990, %v4991
    %v4993 = vrot.slane %v4697, 5
    %v4994 = vrot.slane %v4993, 4
    %v4995 = vrot.slane %v4698, 5
    %v4996 = vsel %vm2791, %v4994, %v4995
    %v4997 = vrot.slane %v4995, 4
    %v4998 = vrot.slane %v4699, 5
    %v4999 = vsel %vm2791, %v4997, %v4998
    %v5000 = vrot.slane %v4700, 5
    %v5001 = vrot.slane %v5000, 4
    %v5002 = vrot.slane %v4701, 5
    %v5003 = vsel %vm2791, %v5001, %v5002
    %v5004 = vrot.slane %v5002, 4
    %v5005 = vrot.slane %v4702, 5
    %v5006 = vsel %vm2791, %v5004, %v5005
    %v5007 = vrot.slane %v4703, 5
    %v5008 = vrot.slane %v5007, 4
    %v5009 = vrot.slane %v4704, 5
    %v5010 = vsel %vm2791, %v5008, %v5009
    %v5011 = vrot.slane %v5009, 4
    %v5012 = vrot.slane %v4705, 5
    %v5013 = vsel %vm2791, %v5011, %v5012
    %v5014 = vrot.slane %v4706, 5
    %v5015 = vrot.slane %v5014, 4
    %v5016 = vrot.slane %v4707, 5
    %v5017 = vsel %vm2791, %v5015, %v5016
    %v5018 = vrot.slane %v5016, 4
    %v5019 = vrot.slane %v4708, 5
    %v5020 = vsel %vm2791, %v5018, %v5019
    %v5021 = vrot.slane %v4709, 5
    %v5022 = vrot.slane %v5021, 4
    %v5023 = vrot.slane %v4710, 5
    %v5024 = vsel %vm2791, %v5022, %v5023
    %v5025 = vrot.slane %v5023, 4
    %v5026 = vrot.slane %v4711, 5
    %v5027 = vsel %vm2791, %v5025, %v5026
    %v5028 = vrot.slane %v4712, 5
    %v5029 = vrot.slane %v5028, 4
    %v5030 = vrot.slane %v4713, 5
    %v5031 = vsel %vm2791, %v5029, %v5030
    %v5032 = vrot.slane %v5030, 4
    %v5033 = vrot.slane %v4714, 5
    %v5034 = vsel %vm2791, %v5032, %v5033
    %v5035 = vunpack.c.l.b16 %v4814
    %v5036 = vunpack.c.l.b16 %v4817
    %v5037 = vunpack.c.l.b16 %v4821
    %v5038 = vunpack.c.l.b16 %v4824
    %v5039 = vunpack.c.l.b16 %v4828
    %v5040 = vunpack.c.l.b16 %v4831
    %v5041 = vunpack.c.l.b16 %v4835
    %v5042 = vunpack.c.l.b16 %v4838
    %v5043 = vunpack.c.l.b16 %v4842
    %v5044 = vunpack.c.l.b16 %v4845
    %v5045 = vunpack.c.l.b16 %v4849
    %v5046 = vunpack.c.l.b16 %v4852
    %v5047 = vunpack.c.l.b16 %v4856
    %v5048 = vunpack.c.l.b16 %v4859
    %v5049 = vunpack.c.l.b16 %v4863
    %v5050 = vunpack.c.l.b16 %v4866
    %v5051 = vunpack.c.l.b16 %v4870
    %v5052 = vunpack.c.l.b16 %v4873
    %v5053 = vunpack.c.l.b16 %v4877
    %v5054 = vunpack.c.l.b16 %v4880
    %v5055 = vunpack.c.l.b16 %v4884
    %v5056 = vunpack.c.l.b16 %v4887
    %v5057 = vunpack.c.l.b16 %v4891
    %v5058 = vunpack.c.l.b16 %v4894
    %v5059 = vunpack.c.l.b16 %v4898
    %v5060 = vunpack.c.l.b16 %v4901
    %v5061 = vunpack.c.l.b16 %v4905
    %v5062 = vunpack.c.l.b16 %v4908
    %v5063 = vunpack.c.l.b16 %v4912
    %v5064 = vunpack.c.l.b16 %v4915
    %v5065 = vunpack.c.l.b16 %v4919
    %v5066 = vunpack.c.l.b16 %v4922
    %v5067 = vunpack.c.l.b16 %v4926
    %v5068 = vunpack.c.l.b16 %v4929
    %v5069 = vunpack.c.l.b16 %v4933
    %v5070 = vunpack.c.l.b16 %v4936
    %v5071 = vunpack.c.l.b16 %v4940
    %v5072 = vunpack.c.l.b16 %v4943
    %v5073 = vunpack.c.l.b16 %v4947
    %v5074 = vunpack.c.l.b16 %v4950
    %v5075 = vunpack.c.l.b16 %v4954
    %v5076 = vunpack.c.l.b16 %v4957
    %v5077 = vunpack.c.l.b16 %v4961
    %v5078 = vunpack.c.l.b16 %v4964
    %v5079 = vunpack.c.l.b16 %v4968
    %v5080 = vunpack.c.l.b16 %v4971
    %v5081 = vunpack.c.l.b16 %v4975
    %v5082 = vunpack.c.l.b16 %v4978
    %v5083 = vunpack.c.l.b16 %v4982
    %v5084 = vunpack.c.l.b16 %v4985
    %v5085 = vunpack.c.l.b16 %v4989
    %v5086 = vunpack.c.l.b16 %v4992
    %v5087 = vunpack.c.l.b16 %v4996
    %v5088 = vunpack.c.l.b16 %v4999
    %v5089 = vunpack.c.l.b16 %v5003
    %v5090 = vunpack.c.l.b16 %v5006
    %v5091 = vunpack.c.l.b16 %v5010
    %v5092 = vunpack.c.l.b16 %v5013
    %v5093 = vunpack.c.l.b16 %v5017
    %v5094 = vunpack.c.l.b16 %v5020
    %v5095 = vunpack.c.l.b16 %v5024
    %v5096 = vunpack.c.l.b16 %v5027
    %v5097 = vunpack.c.l.b16 %v5031
    %v5098 = vunpack.c.l.b16 %v5034
    %v5099 = vpack.c.b16 %v5036, %v5035
    %v5100 = vpack.c.b16 %v5038, %v5037
    %v5101 = vpack.c.b16 %v5040, %v5039
    %v5102 = vpack.c.b16 %v5042, %v5041
    %v5103 = vpack.c.b16 %v5044, %v5043
    %v5104 = vpack.c.b16 %v5046, %v5045
    %v5105 = vpack.c.b16 %v5048, %v5047
    %v5106 = vpack.c.b16 %v5050, %v5049
    %v5107 = vpack.c.b16 %v5052, %v5051
    %v5108 = vpack.c.b16 %v5054, %v5053
    %v5109 = vpack.c.b16 %v5056, %v5055
    %v5110 = vpack.c.b16 %v5058, %v5057
    %v5111 = vpack.c.b16 %v5060, %v5059
    %v5112 = vpack.c.b16 %v5062, %v5061
    %v5113 = vpack.c.b16 %v5064, %v5063
    %v5114 = vpack.c.b16 %v5066, %v5065
    %v5115 = vpack.c.b16 %v5068, %v5067
    %v5116 = vpack.c.b16 %v5070, %v5069
    %v5117 = vpack.c.b16 %v5072, %v5071
    %v5118 = vpack.c.b16 %v5074, %v5073
    %v5119 = vpack.c.b16 %v5076, %v5075
    %v5120 = vpack.c.b16 %v5078, %v5077
    %v5121 = vpack.c.b16 %v5080, %v5079
    %v5122 = vpack.c.b16 %v5082, %v5081
    %v5123 = vpack.c.b16 %v5084, %v5083
    %v5124 = vpack.c.b16 %v5086, %v5085
    %v5125 = vpack.c.b16 %v5088, %v5087
    %v5126 = vpack.c.b16 %v5090, %v5089
    %v5127 = vpack.c.b16 %v5092, %v5091
    %v5128 = vpack.c.b16 %v5094, %v5093
    %v5129 = vpack.c.b16 %v5096, %v5095
    %v5130 = vpack.c.b16 %v5098, %v5097
    %5131 = vrot.lane.b32.xlu0 %v5099, 32
    %v5132 = vpop.permute.xlu0 %5131
    %5133 = vrot.lane.b32.xlu0 %v5100, 32
    %v5134 = vpop.permute.xlu0 %5133
    %5135 = vrot.lane.b32.xlu0 %v5101, 32
    %v5136 = vpop.permute.xlu0 %5135
    %5137 = vrot.lane.b32.xlu0 %v5102, 32
    %v5138 = vpop.permute.xlu0 %5137
    %5139 = vrot.lane.b32.xlu0 %v5103, 32
    %v5140 = vpop.permute.xlu0 %5139
    %5141 = vrot.lane.b32.xlu0 %v5104, 32
    %v5142 = vpop.permute.xlu0 %5141
    %5143 = vrot.lane.b32.xlu0 %v5105, 32
    %v5144 = vpop.permute.xlu0 %5143
    %5145 = vrot.lane.b32.xlu0 %v5106, 32
    %v5146 = vpop.permute.xlu0 %5145
    %5147 = vrot.lane.b32.xlu0 %v5107, 32
    %v5148 = vpop.permute.xlu0 %5147
    %5149 = vrot.lane.b32.xlu0 %v5108, 32
    %v5150 = vpop.permute.xlu0 %5149
    %5151 = vrot.lane.b32.xlu0 %v5109, 32
    %v5152 = vpop.permute.xlu0 %5151
    %5153 = vrot.lane.b32.xlu0 %v5110, 32
    %v5154 = vpop.permute.xlu0 %5153
    %5155 = vrot.lane.b32.xlu0 %v5111, 32
    %v5156 = vpop.permute.xlu0 %5155
    %5157 = vrot.lane.b32.xlu0 %v5112, 32
    %v5158 = vpop.permute.xlu0 %5157
    %5159 = vrot.lane.b32.xlu0 %v5113, 32
    %v5160 = vpop.permute.xlu0 %5159
    %5161 = vrot.lane.b32.xlu0 %v5114, 32
    %v5162 = vpop.permute.xlu0 %5161
    %5163 = vrot.lane.b32.xlu0 %v5115, 32
    %v5164 = vpop.permute.xlu0 %5163
    %5165 = vrot.lane.b32.xlu0 %v5116, 32
    %v5166 = vpop.permute.xlu0 %5165
    %5167 = vrot.lane.b32.xlu0 %v5117, 32
    %v5168 = vpop.permute.xlu0 %5167
    %5169 = vrot.lane.b32.xlu0 %v5118, 32
    %v5170 = vpop.permute.xlu0 %5169
    %5171 = vrot.lane.b32.xlu0 %v5119, 32
    %v5172 = vpop.permute.xlu0 %5171
    %5173 = vrot.lane.b32.xlu0 %v5120, 32
    %v5174 = vpop.permute.xlu0 %5173
    %5175 = vrot.lane.b32.xlu0 %v5121, 32
    %v5176 = vpop.permute.xlu0 %5175
    %5177 = vrot.lane.b32.xlu0 %v5122, 32
    %v5178 = vpop.permute.xlu0 %5177
    %5179 = vrot.lane.b32.xlu0 %v5123, 32
    %v5180 = vpop.permute.xlu0 %5179
    %5181 = vrot.lane.b32.xlu0 %v5124, 32
    %v5182 = vpop.permute.xlu0 %5181
    %5183 = vrot.lane.b32.xlu0 %v5125, 32
    %v5184 = vpop.permute.xlu0 %5183
    %5185 = vrot.lane.b32.xlu0 %v5126, 32
    %v5186 = vpop.permute.xlu0 %5185
    %5187 = vrot.lane.b32.xlu0 %v5127, 32
    %v5188 = vpop.permute.xlu0 %5187
    %5189 = vrot.lane.b32.xlu0 %v5128, 32
    %v5190 = vpop.permute.xlu0 %5189
    %5191 = vrot.lane.b32.xlu0 %v5129, 32
    %v5192 = vpop.permute.xlu0 %5191
    %5193 = vrot.lane.b32.xlu0 %v5130, 32
    %v5194 = vpop.permute.xlu0 %5193
    %5227 = vst.msk [vmem:[#allocation4 + $0x8] sm:$0xff] %vm2564, %v5132
    %5228 = vst.msk [vmem:[#allocation4 + $0x20] sm:$0xff] %vm2564, %v5134
    %5229 = vst.msk [vmem:[#allocation4 + $0x38] sm:$0xff] %vm2564, %v5136
    %5230 = vst.msk [vmem:[#allocation4 + $0x50] sm:$0xff] %vm2564, %v5138
    %5231 = vst.msk [vmem:[#allocation4 + $0x68] sm:$0xff] %vm2564, %v5140
    %5232 = vst.msk [vmem:[#allocation4 + $0x80] sm:$0xff] %vm2564, %v5142
    %5233 = vst.msk [vmem:[#allocation4 + $0x98] sm:$0xff] %vm2564, %v5144
    %5234 = vst.msk [vmem:[#allocation4 + $0xb0] sm:$0xff] %vm2564, %v5146
    %5235 = vst.msk [vmem:[#allocation4 + $0xc8] sm:$0xff] %vm2564, %v5148
    %5236 = vst.msk [vmem:[#allocation4 + $0xe0] sm:$0xff] %vm2564, %v5150
    %5237 = vst.msk [vmem:[#allocation4 + $0xf8] sm:$0xff] %vm2564, %v5152
    %5238 = vst.msk [vmem:[#allocation4 + $0x110] sm:$0xff] %vm2564, %v5154
    %5239 = vst.msk [vmem:[#allocation4 + $0x128] sm:$0xff] %vm2564, %v5156
    %5240 = vst.msk [vmem:[#allocation4 + $0x140] sm:$0xff] %vm2564, %v5158
    %5241 = vst.msk [vmem:[#allocation4 + $0x158] sm:$0xff] %vm2564, %v5160
    %5242 = vst.msk [vmem:[#allocation4 + $0x170] sm:$0xff] %vm2564, %v5162
    %5243 = vst.msk [vmem:[#allocation4 + $0x188] sm:$0xff] %vm2564, %v5164
    %5244 = vst.msk [vmem:[#allocation4 + $0x1a0] sm:$0xff] %vm2564, %v5166
    %5245 = vst.msk [vmem:[#allocation4 + $0x1b8] sm:$0xff] %vm2564, %v5168
    %5246 = vst.msk [vmem:[#allocation4 + $0x1d0] sm:$0xff] %vm2564, %v5170
    %5247 = vst.msk [vmem:[#allocation4 + $0x1e8] sm:$0xff] %vm2564, %v5172
    %5248 = vst.msk [vmem:[#allocation4 + $0x200] sm:$0xff] %vm2564, %v5174
    %5249 = vst.msk [vmem:[#allocation4 + $0x218] sm:$0xff] %vm2564, %v5176
    %5250 = vst.msk [vmem:[#allocation4 + $0x230] sm:$0xff] %vm2564, %v5178
    %5251 = vst.msk [vmem:[#allocation4 + $0x248] sm:$0xff] %vm2564, %v5180
    %5252 = vst.msk [vmem:[#allocation4 + $0x260] sm:$0xff] %vm2564, %v5182
    %5253 = vst.msk [vmem:[#allocation4 + $0x278] sm:$0xff] %vm2564, %v5184
    %5254 = vst.msk [vmem:[#allocation4 + $0x290] sm:$0xff] %vm2564, %v5186
    %5255 = vst.msk [vmem:[#allocation4 + $0x2a8] sm:$0xff] %vm2564, %v5188
    %5256 = vst.msk [vmem:[#allocation4 + $0x2c0] sm:$0xff] %vm2564, %v5190
    %5257 = vst.msk [vmem:[#allocation4 + $0x2d8] sm:$0xff] %vm2564, %v5192
    %5258 = vst.msk [vmem:[#allocation4 + $0x2f0] sm:$0xff] %vm2564, %v5194
    %s5259 = scalar_lea.vmem [#allocation3], 24
    %v5260 = vld [vmem:[%s5259] sm:$0xf]
    %v5261 = vld [vmem:[%s5259 + $0x4] sm:$0xf]
    %v5262 = vld [vmem:[%s5259 + $0xc] sm:$0xf]
    %v5263 = vld [vmem:[%s5259 + $0x10] sm:$0xf]
    %v5264 = vld [vmem:[%s5259 + $0x18] sm:$0xf]
    %v5265 = vld [vmem:[%s5259 + $0x1c] sm:$0xf]
    %v5266 = vld [vmem:[%s5259 + $0x24] sm:$0xf]
    %v5267 = vld [vmem:[%s5259 + $0x28] sm:$0xf]
    %v5268 = vld [vmem:[%s5259 + $0x30] sm:$0xf]
    %v5269 = vld [vmem:[%s5259 + $0x34] sm:$0xf]
    %v5270 = vld [vmem:[%s5259 + $0x3c] sm:$0xf]
    %v5271 = vld [vmem:[%s5259 + $0x40] sm:$0xf]
    %v5272 = vld [vmem:[%s5259 + $0x48] sm:$0xf]
    %v5273 = vld [vmem:[%s5259 + $0x4c] sm:$0xf]
    %v5274 = vld [vmem:[%s5259 + $0x54] sm:$0xf]
    %v5275 = vld [vmem:[%s5259 + $0x58] sm:$0xf]
    %v5276 = vld [vmem:[%s5259 + $0x60] sm:$0xf]
    %v5277 = vld [vmem:[%s5259 + $0x64] sm:$0xf]
    %v5278 = vld [vmem:[%s5259 + $0x6c] sm:$0xf]
    %v5279 = vld [vmem:[%s5259 + $0x70] sm:$0xf]
    %v5280 = vld [vmem:[%s5259 + $0x78] sm:$0xf]
    %v5281 = vld [vmem:[%s5259 + $0x7c] sm:$0xf]
    %v5282 = vld [vmem:[%s5259 + $0x84] sm:$0xf]
    %v5283 = vld [vmem:[%s5259 + $0x88] sm:$0xf]
    %v5284 = vld [vmem:[%s5259 + $0x90] sm:$0xf]
    %v5285 = vld [vmem:[%s5259 + $0x94] sm:$0xf]
    %v5286 = vld [vmem:[%s5259 + $0x9c] sm:$0xf]
    %v5287 = vld [vmem:[%s5259 + $0xa0] sm:$0xf]
    %v5288 = vld [vmem:[%s5259 + $0xa8] sm:$0xf]
    %v5289 = vld [vmem:[%s5259 + $0xac] sm:$0xf]
    %v5290 = vld [vmem:[%s5259 + $0xb4] sm:$0xf]
    %v5291 = vld [vmem:[%s5259 + $0xb8] sm:$0xf]
    %v5292 = vld [vmem:[%s5259 + $0xd8] sm:$0xf]
    %v5293 = vld [vmem:[%s5259 + $0xdc] sm:$0xf]
    %v5294 = vld [vmem:[%s5259 + $0xe4] sm:$0xf]
    %v5295 = vld [vmem:[%s5259 + $0xe8] sm:$0xf]
    %v5296 = vld [vmem:[%s5259 + $0xf0] sm:$0xf]
    %v5297 = vld [vmem:[%s5259 + $0xf4] sm:$0xf]
    %v5298 = vld [vmem:[%s5259 + $0xfc] sm:$0xf]
    %v5299 = vld [vmem:[%s5259 + $0x100] sm:$0xf]
    %v5300 = vld [vmem:[%s5259 + $0x108] sm:$0xf]
    %v5301 = vld [vmem:[%s5259 + $0x10c] sm:$0xf]
    %v5302 = vld [vmem:[%s5259 + $0x114] sm:$0xf]
    %v5303 = vld [vmem:[%s5259 + $0x118] sm:$0xf]
    %v5304 = vld [vmem:[%s5259 + $0x120] sm:$0xf]
    %v5305 = vld [vmem:[%s5259 + $0x124] sm:$0xf]
    %v5306 = vld [vmem:[%s5259 + $0x12c] sm:$0xf]
    %v5307 = vld [vmem:[%s5259 + $0x130] sm:$0xf]
    %v5308 = vld [vmem:[%s5259 + $0x138] sm:$0xf]
    %v5309 = vld [vmem:[%s5259 + $0x13c] sm:$0xf]
    %v5310 = vld [vmem:[%s5259 + $0x144] sm:$0xf]
    %v5311 = vld [vmem:[%s5259 + $0x148] sm:$0xf]
    %v5312 = vld [vmem:[%s5259 + $0x150] sm:$0xf]
    %v5313 = vld [vmem:[%s5259 + $0x154] sm:$0xf]
    %v5314 = vld [vmem:[%s5259 + $0x15c] sm:$0xf]
    %v5315 = vld [vmem:[%s5259 + $0x160] sm:$0xf]
    %v5316 = vld [vmem:[%s5259 + $0x168] sm:$0xf]
    %v5317 = vld [vmem:[%s5259 + $0x16c] sm:$0xf]
    %v5318 = vld [vmem:[%s5259 + $0x174] sm:$0xf]
    %v5319 = vld [vmem:[%s5259 + $0x178] sm:$0xf]
    %v5320 = vld [vmem:[%s5259 + $0x180] sm:$0xf]
    %v5321 = vld [vmem:[%s5259 + $0x184] sm:$0xf]
    %v5322 = vld [vmem:[%s5259 + $0x18c] sm:$0xf]
    %v5323 = vld [vmem:[%s5259 + $0x190] sm:$0xf]
    %v5388 = vunpack.c.l.b16 %v5260
    %v5389 = vunpack.c.l.b16 %v5261
    %v5390 = vunpack.c.l.b16 %v5262
    %v5391 = vunpack.c.l.b16 %v5263
    %v5392 = vunpack.c.l.b16 %v5264
    %v5393 = vunpack.c.l.b16 %v5265
    %v5394 = vunpack.c.l.b16 %v5266
    %v5395 = vunpack.c.l.b16 %v5267
    %v5396 = vunpack.c.l.b16 %v5268
    %v5397 = vunpack.c.l.b16 %v5269
    %v5398 = vunpack.c.l.b16 %v5270
    %v5399 = vunpack.c.l.b16 %v5271
    %v5400 = vunpack.c.l.b16 %v5272
    %v5401 = vunpack.c.l.b16 %v5273
    %v5402 = vunpack.c.l.b16 %v5274
    %v5403 = vunpack.c.l.b16 %v5275
    %v5404 = vunpack.c.l.b16 %v5276
    %v5405 = vunpack.c.l.b16 %v5277
    %v5406 = vunpack.c.l.b16 %v5278
    %v5407 = vunpack.c.l.b16 %v5279
    %v5408 = vunpack.c.l.b16 %v5280
    %v5409 = vunpack.c.l.b16 %v5281
    %v5410 = vunpack.c.l.b16 %v5282
    %v5411 = vunpack.c.l.b16 %v5283
    %v5412 = vunpack.c.l.b16 %v5284
    %v5413 = vunpack.c.l.b16 %v5285
    %v5414 = vunpack.c.l.b16 %v5286
    %v5415 = vunpack.c.l.b16 %v5287
    %v5416 = vunpack.c.l.b16 %v5288
    %v5417 = vunpack.c.l.b16 %v5289
    %v5418 = vunpack.c.l.b16 %v5290
    %v5419 = vunpack.c.l.b16 %v5291
    %v5420 = vunpack.c.l.b16 %v5292
    %v5421 = vunpack.c.l.b16 %v5293
    %v5422 = vunpack.c.l.b16 %v5294
    %v5423 = vunpack.c.l.b16 %v5295
    %v5424 = vunpack.c.l.b16 %v5296
    %v5425 = vunpack.c.l.b16 %v5297
    %v5426 = vunpack.c.l.b16 %v5298
    %v5427 = vunpack.c.l.b16 %v5299
    %v5428 = vunpack.c.l.b16 %v5300
    %v5429 = vunpack.c.l.b16 %v5301
    %v5430 = vunpack.c.l.b16 %v5302
    %v5431 = vunpack.c.l.b16 %v5303
    %v5432 = vunpack.c.l.b16 %v5304
    %v5433 = vunpack.c.l.b16 %v5305
    %v5434 = vunpack.c.l.b16 %v5306
    %v5435 = vunpack.c.l.b16 %v5307
    %v5436 = vunpack.c.l.b16 %v5308
    %v5437 = vunpack.c.l.b16 %v5309
    %v5438 = vunpack.c.l.b16 %v5310
    %v5439 = vunpack.c.l.b16 %v5311
    %v5440 = vunpack.c.l.b16 %v5312
    %v5441 = vunpack.c.l.b16 %v5313
    %v5442 = vunpack.c.l.b16 %v5314
    %v5443 = vunpack.c.l.b16 %v5315
    %v5444 = vunpack.c.l.b16 %v5316
    %v5445 = vunpack.c.l.b16 %v5317
    %v5446 = vunpack.c.l.b16 %v5318
    %v5447 = vunpack.c.l.b16 %v5319
    %v5448 = vunpack.c.l.b16 %v5320
    %v5449 = vunpack.c.l.b16 %v5321
    %v5450 = vunpack.c.l.b16 %v5322
    %v5451 = vunpack.c.l.b16 %v5323
    %v5452 = vpack.c.b16 %v5389, %v5388
    %v5453 = vpack.c.b16 %v5391, %v5390
    %v5454 = vpack.c.b16 %v5393, %v5392
    %v5455 = vpack.c.b16 %v5395, %v5394
    %v5456 = vpack.c.b16 %v5397, %v5396
    %v5457 = vpack.c.b16 %v5399, %v5398
    %v5458 = vpack.c.b16 %v5401, %v5400
    %v5459 = vpack.c.b16 %v5403, %v5402
    %v5460 = vpack.c.b16 %v5405, %v5404
    %v5461 = vpack.c.b16 %v5407, %v5406
    %v5462 = vpack.c.b16 %v5409, %v5408
    %v5463 = vpack.c.b16 %v5411, %v5410
    %v5464 = vpack.c.b16 %v5413, %v5412
    %v5465 = vpack.c.b16 %v5415, %v5414
    %v5466 = vpack.c.b16 %v5417, %v5416
    %v5467 = vpack.c.b16 %v5419, %v5418
    %v5468 = vpack.c.b16 %v5421, %v5420
    %v5469 = vpack.c.b16 %v5423, %v5422
    %v5470 = vpack.c.b16 %v5425, %v5424
    %v5471 = vpack.c.b16 %v5427, %v5426
    %v5472 = vpack.c.b16 %v5429, %v5428
    %v5473 = vpack.c.b16 %v5431, %v5430
    %v5474 = vpack.c.b16 %v5433, %v5432
    %v5475 = vpack.c.b16 %v5435, %v5434
    %v5476 = vpack.c.b16 %v5437, %v5436
    %v5477 = vpack.c.b16 %v5439, %v5438
    %v5478 = vpack.c.b16 %v5441, %v5440
    %v5479 = vpack.c.b16 %v5443, %v5442
    %v5480 = vpack.c.b16 %v5445, %v5444
    %v5481 = vpack.c.b16 %v5447, %v5446
    %v5482 = vpack.c.b16 %v5449, %v5448
    %v5483 = vpack.c.b16 %v5451, %v5450
    %5484 = vrot.lane.b32.xlu0 %v5452, 64
    %v5485 = vpop.permute.xlu0 %5484
    %5486 = vrot.lane.b32.xlu0 %v5453, 64
    %v5487 = vpop.permute.xlu0 %5486
    %5488 = vrot.lane.b32.xlu0 %v5454, 64
    %v5489 = vpop.permute.xlu0 %5488
    %5490 = vrot.lane.b32.xlu0 %v5455, 64
    %v5491 = vpop.permute.xlu0 %5490
    %5492 = vrot.lane.b32.xlu0 %v5456, 64
    %v5493 = vpop.permute.xlu0 %5492
    %5494 = vrot.lane.b32.xlu0 %v5457, 64
    %v5495 = vpop.permute.xlu0 %5494
    %5496 = vrot.lane.b32.xlu0 %v5458, 64
    %v5497 = vpop.permute.xlu0 %5496
    %5498 = vrot.lane.b32.xlu0 %v5459, 64
    %v5499 = vpop.permute.xlu0 %5498
    %5500 = vrot.lane.b32.xlu0 %v5460, 64
    %v5501 = vpop.permute.xlu0 %5500
    %5502 = vrot.lane.b32.xlu0 %v5461, 64
    %v5503 = vpop.permute.xlu0 %5502
    %5504 = vrot.lane.b32.xlu0 %v5462, 64
    %v5505 = vpop.permute.xlu0 %5504
    %5506 = vrot.lane.b32.xlu0 %v5463, 64
    %v5507 = vpop.permute.xlu0 %5506
    %5508 = vrot.lane.b32.xlu0 %v5464, 64
    %v5509 = vpop.permute.xlu0 %5508
    %5510 = vrot.lane.b32.xlu0 %v5465, 64
    %v5511 = vpop.permute.xlu0 %5510
    %5512 = vrot.lane.b32.xlu0 %v5466, 64
    %v5513 = vpop.permute.xlu0 %5512
    %5514 = vrot.lane.b32.xlu0 %v5467, 64
    %v5515 = vpop.permute.xlu0 %5514
    %5516 = vrot.lane.b32.xlu0 %v5468, 64
    %v5517 = vpop.permute.xlu0 %5516
    %5518 = vrot.lane.b32.xlu0 %v5469, 64
    %v5519 = vpop.permute.xlu0 %5518
    %5520 = vrot.lane.b32.xlu0 %v5470, 64
    %v5521 = vpop.permute.xlu0 %5520
    %5522 = vrot.lane.b32.xlu0 %v5471, 64
    %v5523 = vpop.permute.xlu0 %5522
    %5524 = vrot.lane.b32.xlu0 %v5472, 64
    %v5525 = vpop.permute.xlu0 %5524
    %5526 = vrot.lane.b32.xlu0 %v5473, 64
    %v5527 = vpop.permute.xlu0 %5526
    %5528 = vrot.lane.b32.xlu0 %v5474, 64
    %v5529 = vpop.permute.xlu0 %5528
    %5530 = vrot.lane.b32.xlu0 %v5475, 64
    %v5531 = vpop.permute.xlu0 %5530
    %5532 = vrot.lane.b32.xlu0 %v5476, 64
    %v5533 = vpop.permute.xlu0 %5532
    %5534 = vrot.lane.b32.xlu0 %v5477, 64
    %v5535 = vpop.permute.xlu0 %5534
    %5536 = vrot.lane.b32.xlu0 %v5478, 64
    %v5537 = vpop.permute.xlu0 %5536
    %5538 = vrot.lane.b32.xlu0 %v5479, 64
    %v5539 = vpop.permute.xlu0 %5538
    %5540 = vrot.lane.b32.xlu0 %v5480, 64
    %v5541 = vpop.permute.xlu0 %5540
    %5542 = vrot.lane.b32.xlu0 %v5481, 64
    %v5543 = vpop.permute.xlu0 %5542
    %5544 = vrot.lane.b32.xlu0 %v5482, 64
    %v5545 = vpop.permute.xlu0 %5544
    %5546 = vrot.lane.b32.xlu0 %v5483, 64
    %v5547 = vpop.permute.xlu0 %5546
    %5580 = vst.msk [vmem:[#allocation4 + $0x8] sm:$0xff] %vm3208, %v5485
    %5581 = vst.msk [vmem:[#allocation4 + $0x20] sm:$0xff] %vm3208, %v5487
    %5582 = vst.msk [vmem:[#allocation4 + $0x38] sm:$0xff] %vm3208, %v5489
    %5583 = vst.msk [vmem:[#allocation4 + $0x50] sm:$0xff] %vm3208, %v5491
    %5584 = vst.msk [vmem:[#allocation4 + $0x68] sm:$0xff] %vm3208, %v5493
    %5585 = vst.msk [vmem:[#allocation4 + $0x80] sm:$0xff] %vm3208, %v5495
    %5586 = vst.msk [vmem:[#allocation4 + $0x98] sm:$0xff] %vm3208, %v5497
    %5587 = vst.msk [vmem:[#allocation4 + $0xb0] sm:$0xff] %vm3208, %v5499
    %5588 = vst.msk [vmem:[#allocation4 + $0xc8] sm:$0xff] %vm3208, %v5501
    %5589 = vst.msk [vmem:[#allocation4 + $0xe0] sm:$0xff] %vm3208, %v5503
    %5590 = vst.msk [vmem:[#allocation4 + $0xf8] sm:$0xff] %vm3208, %v5505
    %5591 = vst.msk [vmem:[#allocation4 + $0x110] sm:$0xff] %vm3208, %v5507
    %5592 = vst.msk [vmem:[#allocation4 + $0x128] sm:$0xff] %vm3208, %v5509
    %5593 = vst.msk [vmem:[#allocation4 + $0x140] sm:$0xff] %vm3208, %v5511
    %5594 = vst.msk [vmem:[#allocation4 + $0x158] sm:$0xff] %vm3208, %v5513
    %5595 = vst.msk [vmem:[#allocation4 + $0x170] sm:$0xff] %vm3208, %v5515
    %5596 = vst.msk [vmem:[#allocation4 + $0x188] sm:$0xff] %vm3208, %v5517
    %5597 = vst.msk [vmem:[#allocation4 + $0x1a0] sm:$0xff] %vm3208, %v5519
    %5598 = vst.msk [vmem:[#allocation4 + $0x1b8] sm:$0xff] %vm3208, %v5521
    %5599 = vst.msk [vmem:[#allocation4 + $0x1d0] sm:$0xff] %vm3208, %v5523
    %5600 = vst.msk [vmem:[#allocation4 + $0x1e8] sm:$0xff] %vm3208, %v5525
    %5601 = vst.msk [vmem:[#allocation4 + $0x200] sm:$0xff] %vm3208, %v5527
    %5602 = vst.msk [vmem:[#allocation4 + $0x218] sm:$0xff] %vm3208, %v5529
    %5603 = vst.msk [vmem:[#allocation4 + $0x230] sm:$0xff] %vm3208, %v5531
    %5604 = vst.msk [vmem:[#allocation4 + $0x248] sm:$0xff] %vm3208, %v5533
    %5605 = vst.msk [vmem:[#allocation4 + $0x260] sm:$0xff] %vm3208, %v5535
    %5606 = vst.msk [vmem:[#allocation4 + $0x278] sm:$0xff] %vm3208, %v5537
    %5607 = vst.msk [vmem:[#allocation4 + $0x290] sm:$0xff] %vm3208, %v5539
    %5608 = vst.msk [vmem:[#allocation4 + $0x2a8] sm:$0xff] %vm3208, %v5541
    %5609 = vst.msk [vmem:[#allocation4 + $0x2c0] sm:$0xff] %vm3208, %v5543
    %5610 = vst.msk [vmem:[#allocation4 + $0x2d8] sm:$0xff] %vm3208, %v5545
    %5611 = vst.msk [vmem:[#allocation4 + $0x2f0] sm:$0xff] %vm3208, %v5547
    %v5612 = vld [vmem:[%s5259] sm:$0xf]
    %v5613 = vld [vmem:[%s5259 + $0x4] sm:$0xf]
    %v5614 = vld [vmem:[%s5259 + $0x8] sm:$0x1]
    %v5615 = vld [vmem:[%s5259 + $0xc] sm:$0xf]
    %v5616 = vld [vmem:[%s5259 + $0x10] sm:$0xf]
    %v5617 = vld [vmem:[%s5259 + $0x14] sm:$0x1]
    %v5618 = vld [vmem:[%s5259 + $0x18] sm:$0xf]
    %v5619 = vld [vmem:[%s5259 + $0x1c] sm:$0xf]
    %v5620 = vld [vmem:[%s5259 + $0x20] sm:$0x1]
    %v5621 = vld [vmem:[%s5259 + $0x24] sm:$0xf]
    %v5622 = vld [vmem:[%s5259 + $0x28] sm:$0xf]
    %v5623 = vld [vmem:[%s5259 + $0x2c] sm:$0x1]
    %v5624 = vld [vmem:[%s5259 + $0x30] sm:$0xf]
    %v5625 = vld [vmem:[%s5259 + $0x34] sm:$0xf]
    %v5626 = vld [vmem:[%s5259 + $0x38] sm:$0x1]
    %v5627 = vld [vmem:[%s5259 + $0x3c] sm:$0xf]
    %v5628 = vld [vmem:[%s5259 + $0x40] sm:$0xf]
    %v5629 = vld [vmem:[%s5259 + $0x44] sm:$0x1]
    %v5630 = vld [vmem:[%s5259 + $0x48] sm:$0xf]
    %v5631 = vld [vmem:[%s5259 + $0x4c] sm:$0xf]
    %v5632 = vld [vmem:[%s5259 + $0x50] sm:$0x1]
    %v5633 = vld [vmem:[%s5259 + $0x54] sm:$0xf]
    %v5634 = vld [vmem:[%s5259 + $0x58] sm:$0xf]
    %v5635 = vld [vmem:[%s5259 + $0x5c] sm:$0x1]
    %v5636 = vld [vmem:[%s5259 + $0x60] sm:$0xf]
    %v5637 = vld [vmem:[%s5259 + $0x64] sm:$0xf]
    %v5638 = vld [vmem:[%s5259 + $0x68] sm:$0x1]
    %v5639 = vld [vmem:[%s5259 + $0x6c] sm:$0xf]
    %v5640 = vld [vmem:[%s5259 + $0x70] sm:$0xf]
    %v5641 = vld [vmem:[%s5259 + $0x74] sm:$0x1]
    %v5642 = vld [vmem:[%s5259 + $0x78] sm:$0xf]
    %v5643 = vld [vmem:[%s5259 + $0x7c] sm:$0xf]
    %v5644 = vld [vmem:[%s5259 + $0x80] sm:$0x1]
    %v5645 = vld [vmem:[%s5259 + $0x84] sm:$0xf]
    %v5646 = vld [vmem:[%s5259 + $0x88] sm:$0xf]
    %v5647 = vld [vmem:[%s5259 + $0x8c] sm:$0x1]
    %v5648 = vld [vmem:[%s5259 + $0x90] sm:$0xf]
    %v5649 = vld [vmem:[%s5259 + $0x94] sm:$0xf]
    %v5650 = vld [vmem:[%s5259 + $0x98] sm:$0x1]
    %v5651 = vld [vmem:[%s5259 + $0x9c] sm:$0xf]
    %v5652 = vld [vmem:[%s5259 + $0xa0] sm:$0xf]
    %v5653 = vld [vmem:[%s5259 + $0xa4] sm:$0x1]
    %v5654 = vld [vmem:[%s5259 + $0xa8] sm:$0xf]
    %v5655 = vld [vmem:[%s5259 + $0xac] sm:$0xf]
    %v5656 = vld [vmem:[%s5259 + $0xb0] sm:$0x1]
    %v5657 = vld [vmem:[%s5259 + $0xb4] sm:$0xf]
    %v5658 = vld [vmem:[%s5259 + $0xb8] sm:$0xf]
    %v5659 = vld [vmem:[%s5259 + $0xbc] sm:$0x1]
    %v5660 = vld [vmem:[%s5259 + $0xd8] sm:$0xf]
    %v5661 = vld [vmem:[%s5259 + $0xdc] sm:$0xf]
    %v5662 = vld [vmem:[%s5259 + $0xe0] sm:$0x1]
    %v5663 = vld [vmem:[%s5259 + $0xe4] sm:$0xf]
    %v5664 = vld [vmem:[%s5259 + $0xe8] sm:$0xf]
    %v5665 = vld [vmem:[%s5259 + $0xec] sm:$0x1]
    %v5666 = vld [vmem:[%s5259 + $0xf0] sm:$0xf]
    %v5667 = vld [vmem:[%s5259 + $0xf4] sm:$0xf]
    %v5668 = vld [vmem:[%s5259 + $0xf8] sm:$0x1]
    %v5669 = vld [vmem:[%s5259 + $0xfc] sm:$0xf]
    %v5670 = vld [vmem:[%s5259 + $0x100] sm:$0xf]
    %v5671 = vld [vmem:[%s5259 + $0x104] sm:$0x1]
    %v5672 = vld [vmem:[%s5259 + $0x108] sm:$0xf]
    %v5673 = vld [vmem:[%s5259 + $0x10c] sm:$0xf]
    %v5674 = vld [vmem:[%s5259 + $0x110] sm:$0x1]
    %v5675 = vld [vmem:[%s5259 + $0x114] sm:$0xf]
    %v5676 = vld [vmem:[%s5259 + $0x118] sm:$0xf]
    %v5677 = vld [vmem:[%s5259 + $0x11c] sm:$0x1]
    %v5678 = vld [vmem:[%s5259 + $0x120] sm:$0xf]
    %v5679 = vld [vmem:[%s5259 + $0x124] sm:$0xf]
    %v5680 = vld [vmem:[%s5259 + $0x128] sm:$0x1]
    %v5681 = vld [vmem:[%s5259 + $0x12c] sm:$0xf]
    %v5682 = vld [vmem:[%s5259 + $0x130] sm:$0xf]
    %v5683 = vld [vmem:[%s5259 + $0x134] sm:$0x1]
    %v5684 = vld [vmem:[%s5259 + $0x138] sm:$0xf]
    %v5685 = vld [vmem:[%s5259 + $0x13c] sm:$0xf]
    %v5686 = vld [vmem:[%s5259 + $0x140] sm:$0x1]
    %v5687 = vld [vmem:[%s5259 + $0x144] sm:$0xf]
    %v5688 = vld [vmem:[%s5259 + $0x148] sm:$0xf]
    %v5689 = vld [vmem:[%s5259 + $0x14c] sm:$0x1]
    %v5690 = vld [vmem:[%s5259 + $0x150] sm:$0xf]
    %v5691 = vld [vmem:[%s5259 + $0x154] sm:$0xf]
    %v5692 = vld [vmem:[%s5259 + $0x158] sm:$0x1]
    %v5693 = vld [vmem:[%s5259 + $0x15c] sm:$0xf]
    %v5694 = vld [vmem:[%s5259 + $0x160] sm:$0xf]
    %v5695 = vld [vmem:[%s5259 + $0x164] sm:$0x1]
    %v5696 = vld [vmem:[%s5259 + $0x168] sm:$0xf]
    %v5697 = vld [vmem:[%s5259 + $0x16c] sm:$0xf]
    %v5698 = vld [vmem:[%s5259 + $0x170] sm:$0x1]
    %v5699 = vld [vmem:[%s5259 + $0x174] sm:$0xf]
    %v5700 = vld [vmem:[%s5259 + $0x178] sm:$0xf]
    %v5701 = vld [vmem:[%s5259 + $0x17c] sm:$0x1]
    %v5702 = vld [vmem:[%s5259 + $0x180] sm:$0xf]
    %v5703 = vld [vmem:[%s5259 + $0x184] sm:$0xf]
    %v5704 = vld [vmem:[%s5259 + $0x188] sm:$0x1]
    %v5705 = vld [vmem:[%s5259 + $0x18c] sm:$0xf]
    %v5706 = vld [vmem:[%s5259 + $0x190] sm:$0xf]
    %v5707 = vld [vmem:[%s5259 + $0x194] sm:$0x1]
    %v5709 = vshrl.u32 %v5612, 16
    %v5711 = vrot.slane %v5709, 4
    %v5712 = vshll.u32 %v5612, 16
    %v5714 = vrot.slane %v5712, 5
    %v5715 = vor.u32 %v5711, %v5714
    %v5716 = vrot.slane %v5715, 4
    %v5718 = vshll.u32 %v5613, 16
    %v5720 = vrot.slane %v5718, 5
    %v5721 = vsel %vm1603, %v5716, %v5720
    %v5722 = vshrl.u32 %v5613, 16
    %v5724 = vrot.slane %v5722, 4
    %v5725 = vor.u32 %v5724, %v5720
    %v5726 = vrot.slane %v5725, 4
    %v5728 = vshll.u32 %v5614, 16
    %v5730 = vrot.slane %v5728, 5
    %v5731 = vsel %vm1603, %v5726, %v5730
    %v5733 = vshrl.u32 %v5615, 16
    %v5735 = vrot.slane %v5733, 4
    %v5736 = vshll.u32 %v5615, 16
    %v5738 = vrot.slane %v5736, 5
    %v5739 = vor.u32 %v5735, %v5738
    %v5740 = vrot.slane %v5739, 4
    %v5742 = vshll.u32 %v5616, 16
    %v5744 = vrot.slane %v5742, 5
    %v5745 = vsel %vm1603, %v5740, %v5744
    %v5746 = vshrl.u32 %v5616, 16
    %v5748 = vrot.slane %v5746, 4
    %v5749 = vor.u32 %v5748, %v5744
    %v5750 = vrot.slane %v5749, 4
    %v5752 = vshll.u32 %v5617, 16
    %v5754 = vrot.slane %v5752, 5
    %v5755 = vsel %vm1603, %v5750, %v5754
    %v5757 = vshrl.u32 %v5618, 16
    %v5759 = vrot.slane %v5757, 4
    %v5760 = vshll.u32 %v5618, 16
    %v5762 = vrot.slane %v5760, 5
    %v5763 = vor.u32 %v5759, %v5762
    %v5764 = vrot.slane %v5763, 4
    %v5766 = vshll.u32 %v5619, 16
    %v5768 = vrot.slane %v5766, 5
    %v5769 = vsel %vm1603, %v5764, %v5768
    %v5770 = vshrl.u32 %v5619, 16
    %v5772 = vrot.slane %v5770, 4
    %v5773 = vor.u32 %v5772, %v5768
    %v5774 = vrot.slane %v5773, 4
    %v5776 = vshll.u32 %v5620, 16
    %v5778 = vrot.slane %v5776, 5
    %v5779 = vsel %vm1603, %v5774, %v5778
    %v5781 = vshrl.u32 %v5621, 16
    %v5783 = vrot.slane %v5781, 4
    %v5784 = vshll.u32 %v5621, 16
    %v5786 = vrot.slane %v5784, 5
    %v5787 = vor.u32 %v5783, %v5786
    %v5788 = vrot.slane %v5787, 4
    %v5790 = vshll.u32 %v5622, 16
    %v5792 = vrot.slane %v5790, 5
    %v5793 = vsel %vm1603, %v5788, %v5792
    %v5794 = vshrl.u32 %v5622, 16
    %v5796 = vrot.slane %v5794, 4
    %v5797 = vor.u32 %v5796, %v5792
    %v5798 = vrot.slane %v5797, 4
    %v5800 = vshll.u32 %v5623, 16
    %v5802 = vrot.slane %v5800, 5
    %v5803 = vsel %vm1603, %v5798, %v5802
    %v5805 = vshrl.u32 %v5624, 16
    %v5807 = vrot.slane %v5805, 4
    %v5808 = vshll.u32 %v5624, 16
    %v5810 = vrot.slane %v5808, 5
    %v5811 = vor.u32 %v5807, %v5810
    %v5812 = vrot.slane %v5811, 4
    %v5814 = vshll.u32 %v5625, 16
    %v5816 = vrot.slane %v5814, 5
    %v5817 = vsel %vm1603, %v5812, %v5816
    %v5818 = vshrl.u32 %v5625, 16
    %v5820 = vrot.slane %v5818, 4
    %v5821 = vor.u32 %v5820, %v5816
    %v5822 = vrot.slane %v5821, 4
    %v5824 = vshll.u32 %v5626, 16
    %v5826 = vrot.slane %v5824, 5
    %v5827 = vsel %vm1603, %v5822, %v5826
    %v5829 = vshrl.u32 %v5627, 16
    %v5831 = vrot.slane %v5829, 4
    %v5832 = vshll.u32 %v5627, 16
    %v5834 = vrot.slane %v5832, 5
    %v5835 = vor.u32 %v5831, %v5834
    %v5836 = vrot.slane %v5835, 4
    %v5838 = vshll.u32 %v5628, 16
    %v5840 = vrot.slane %v5838, 5
    %v5841 = vsel %vm1603, %v5836, %v5840
    %v5842 = vshrl.u32 %v5628, 16
    %v5844 = vrot.slane %v5842, 4
    %v5845 = vor.u32 %v5844, %v5840
    %v5846 = vrot.slane %v5845, 4
    %v5848 = vshll.u32 %v5629, 16
    %v5850 = vrot.slane %v5848, 5
    %v5851 = vsel %vm1603, %v5846, %v5850
    %v5853 = vshrl.u32 %v5630, 16
    %v5855 = vrot.slane %v5853, 4
    %v5856 = vshll.u32 %v5630, 16
    %v5858 = vrot.slane %v5856, 5
    %v5859 = vor.u32 %v5855, %v5858
    %v5860 = vrot.slane %v5859, 4
    %v5862 = vshll.u32 %v5631, 16
    %v5864 = vrot.slane %v5862, 5
    %v5865 = vsel %vm1603, %v5860, %v5864
    %v5866 = vshrl.u32 %v5631, 16
    %v5868 = vrot.slane %v5866, 4
    %v5869 = vor.u32 %v5868, %v5864
    %v5870 = vrot.slane %v5869, 4
    %v5872 = vshll.u32 %v5632, 16
    %v5874 = vrot.slane %v5872, 5
    %v5875 = vsel %vm1603, %v5870, %v5874
    %v5877 = vshrl.u32 %v5633, 16
    %v5879 = vrot.slane %v5877, 4
    %v5880 = vshll.u32 %v5633, 16
    %v5882 = vrot.slane %v5880, 5
    %v5883 = vor.u32 %v5879, %v5882
    %v5884 = vrot.slane %v5883, 4
    %v5886 = vshll.u32 %v5634, 16
    %v5888 = vrot.slane %v5886, 5
    %v5889 = vsel %vm1603, %v5884, %v5888
    %v5890 = vshrl.u32 %v5634, 16
    %v5892 = vrot.slane %v5890, 4
    %v5893 = vor.u32 %v5892, %v5888
    %v5894 = vrot.slane %v5893, 4
    %v5896 = vshll.u32 %v5635, 16
    %v5898 = vrot.slane %v5896, 5
    %v5899 = vsel %vm1603, %v5894, %v5898
    %v5901 = vshrl.u32 %v5636, 16
    %v5903 = vrot.slane %v5901, 4
    %v5904 = vshll.u32 %v5636, 16
    %v5906 = vrot.slane %v5904, 5
    %v5907 = vor.u32 %v5903, %v5906
    %v5908 = vrot.slane %v5907, 4
    %v5910 = vshll.u32 %v5637, 16
    %v5912 = vrot.slane %v5910, 5
    %v5913 = vsel %vm1603, %v5908, %v5912
    %v5914 = vshrl.u32 %v5637, 16
    %v5916 = vrot.slane %v5914, 4
    %v5917 = vor.u32 %v5916, %v5912
    %v5918 = vrot.slane %v5917, 4
    %v5920 = vshll.u32 %v5638, 16
    %v5922 = vrot.slane %v5920, 5
    %v5923 = vsel %vm1603, %v5918, %v5922
    %v5925 = vshrl.u32 %v5639, 16
    %v5927 = vrot.slane %v5925, 4
    %v5928 = vshll.u32 %v5639, 16
    %v5930 = vrot.slane %v5928, 5
    %v5931 = vor.u32 %v5927, %v5930
    %v5932 = vrot.slane %v5931, 4
    %v5934 = vshll.u32 %v5640, 16
    %v5936 = vrot.slane %v5934, 5
    %v5937 = vsel %vm1603, %v5932, %v5936
    %v5938 = vshrl.u32 %v5640, 16
    %v5940 = vrot.slane %v5938, 4
    %v5941 = vor.u32 %v5940, %v5936
    %v5942 = vrot.slane %v5941, 4
    %v5944 = vshll.u32 %v5641, 16
    %v5946 = vrot.slane %v5944, 5
    %v5947 = vsel %vm1603, %v5942, %v5946
    %v5949 = vshrl.u32 %v5642, 16
    %v5951 = vrot.slane %v5949, 4
    %v5952 = vshll.u32 %v5642, 16
    %v5954 = vrot.slane %v5952, 5
    %v5955 = vor.u32 %v5951, %v5954
    %v5956 = vrot.slane %v5955, 4
    %v5958 = vshll.u32 %v5643, 16
    %v5960 = vrot.slane %v5958, 5
    %v5961 = vsel %vm1603, %v5956, %v5960
    %v5962 = vshrl.u32 %v5643, 16
    %v5964 = vrot.slane %v5962, 4
    %v5965 = vor.u32 %v5964, %v5960
    %v5966 = vrot.slane %v5965, 4
    %v5968 = vshll.u32 %v5644, 16
    %v5970 = vrot.slane %v5968, 5
    %v5971 = vsel %vm1603, %v5966, %v5970
    %v5973 = vshrl.u32 %v5645, 16
    %v5975 = vrot.slane %v5973, 4
    %v5976 = vshll.u32 %v5645, 16
    %v5978 = vrot.slane %v5976, 5
    %v5979 = vor.u32 %v5975, %v5978
    %v5980 = vrot.slane %v5979, 4
    %v5982 = vshll.u32 %v5646, 16
    %v5984 = vrot.slane %v5982, 5
    %v5985 = vsel %vm1603, %v5980, %v5984
    %v5986 = vshrl.u32 %v5646, 16
    %v5988 = vrot.slane %v5986, 4
    %v5989 = vor.u32 %v5988, %v5984
    %v5990 = vrot.slane %v5989, 4
    %v5992 = vshll.u32 %v5647, 16
    %v5994 = vrot.slane %v5992, 5
    %v5995 = vsel %vm1603, %v5990, %v5994
    %v5997 = vshrl.u32 %v5648, 16
    %v5999 = vrot.slane %v5997, 4
    %v6000 = vshll.u32 %v5648, 16
    %v6002 = vrot.slane %v6000, 5
    %v6003 = vor.u32 %v5999, %v6002
    %v6004 = vrot.slane %v6003, 4
    %v6006 = vshll.u32 %v5649, 16
    %v6008 = vrot.slane %v6006, 5
    %v6009 = vsel %vm1603, %v6004, %v6008
    %v6010 = vshrl.u32 %v5649, 16
    %v6012 = vrot.slane %v6010, 4
    %v6013 = vor.u32 %v6012, %v6008
    %v6014 = vrot.slane %v6013, 4
    %v6016 = vshll.u32 %v5650, 16
    %v6018 = vrot.slane %v6016, 5
    %v6019 = vsel %vm1603, %v6014, %v6018
    %v6021 = vshrl.u32 %v5651, 16
    %v6023 = vrot.slane %v6021, 4
    %v6024 = vshll.u32 %v5651, 16
    %v6026 = vrot.slane %v6024, 5
    %v6027 = vor.u32 %v6023, %v6026
    %v6028 = vrot.slane %v6027, 4
    %v6030 = vshll.u32 %v5652, 16
    %v6032 = vrot.slane %v6030, 5
    %v6033 = vsel %vm1603, %v6028, %v6032
    %v6034 = vshrl.u32 %v5652, 16
    %v6036 = vrot.slane %v6034, 4
    %v6037 = vor.u32 %v6036, %v6032
    %v6038 = vrot.slane %v6037, 4
    %v6040 = vshll.u32 %v5653, 16
    %v6042 = vrot.slane %v6040, 5
    %v6043 = vsel %vm1603, %v6038, %v6042
    %v6045 = vshrl.u32 %v5654, 16
    %v6047 = vrot.slane %v6045, 4
    %v6048 = vshll.u32 %v5654, 16
    %v6050 = vrot.slane %v6048, 5
    %v6051 = vor.u32 %v6047, %v6050
    %v6052 = vrot.slane %v6051, 4
    %v6054 = vshll.u32 %v5655, 16
    %v6056 = vrot.slane %v6054, 5
    %v6057 = vsel %vm1603, %v6052, %v6056
    %v6058 = vshrl.u32 %v5655, 16
    %v6060 = vrot.slane %v6058, 4
    %v6061 = vor.u32 %v6060, %v6056
    %v6062 = vrot.slane %v6061, 4
    %v6064 = vshll.u32 %v5656, 16
    %v6066 = vrot.slane %v6064, 5
    %v6067 = vsel %vm1603, %v6062, %v6066
    %v6069 = vshrl.u32 %v5657, 16
    %v6071 = vrot.slane %v6069, 4
    %v6072 = vshll.u32 %v5657, 16
    %v6074 = vrot.slane %v6072, 5
    %v6075 = vor.u32 %v6071, %v6074
    %v6076 = vrot.slane %v6075, 4
    %v6078 = vshll.u32 %v5658, 16
    %v6080 = vrot.slane %v6078, 5
    %v6081 = vsel %vm1603, %v6076, %v6080
    %v6082 = vshrl.u32 %v5658, 16
    %v6084 = vrot.slane %v6082, 4
    %v6085 = vor.u32 %v6084, %v6080
    %v6086 = vrot.slane %v6085, 4
    %v6088 = vshll.u32 %v5659, 16
    %v6090 = vrot.slane %v6088, 5
    %v6091 = vsel %vm1603, %v6086, %v6090
    %v6093 = vshrl.u32 %v5660, 16
    %v6095 = vrot.slane %v6093, 4
    %v6096 = vshll.u32 %v5660, 16
    %v6098 = vrot.slane %v6096, 5
    %v6099 = vor.u32 %v6095, %v6098
    %v6100 = vrot.slane %v6099, 4
    %v6102 = vshll.u32 %v5661, 16
    %v6104 = vrot.slane %v6102, 5
    %v6105 = vsel %vm1603, %v6100, %v6104
    %v6106 = vshrl.u32 %v5661, 16
    %v6108 = vrot.slane %v6106, 4
    %v6109 = vor.u32 %v6108, %v6104
    %v6110 = vrot.slane %v6109, 4
    %v6112 = vshll.u32 %v5662, 16
    %v6114 = vrot.slane %v6112, 5
    %v6115 = vsel %vm1603, %v6110, %v6114
    %v6117 = vshrl.u32 %v5663, 16
    %v6119 = vrot.slane %v6117, 4
    %v6120 = vshll.u32 %v5663, 16
    %v6122 = vrot.slane %v6120, 5
    %v6123 = vor.u32 %v6119, %v6122
    %v6124 = vrot.slane %v6123, 4
    %v6126 = vshll.u32 %v5664, 16
    %v6128 = vrot.slane %v6126, 5
    %v6129 = vsel %vm1603, %v6124, %v6128
    %v6130 = vshrl.u32 %v5664, 16
    %v6132 = vrot.slane %v6130, 4
    %v6133 = vor.u32 %v6132, %v6128
    %v6134 = vrot.slane %v6133, 4
    %v6136 = vshll.u32 %v5665, 16
    %v6138 = vrot.slane %v6136, 5
    %v6139 = vsel %vm1603, %v6134, %v6138
    %v6141 = vshrl.u32 %v5666, 16
    %v6143 = vrot.slane %v6141, 4
    %v6144 = vshll.u32 %v5666, 16
    %v6146 = vrot.slane %v6144, 5
    %v6147 = vor.u32 %v6143, %v6146
    %v6148 = vrot.slane %v6147, 4
    %v6150 = vshll.u32 %v5667, 16
    %v6152 = vrot.slane %v6150, 5
    %v6153 = vsel %vm1603, %v6148, %v6152
    %v6154 = vshrl.u32 %v5667, 16
    %v6156 = vrot.slane %v6154, 4
    %v6157 = vor.u32 %v6156, %v6152
    %v6158 = vrot.slane %v6157, 4
    %v6160 = vshll.u32 %v5668, 16
    %v6162 = vrot.slane %v6160, 5
    %v6163 = vsel %vm1603, %v6158, %v6162
    %v6165 = vshrl.u32 %v5669, 16
    %v6167 = vrot.slane %v6165, 4
    %v6168 = vshll.u32 %v5669, 16
    %v6170 = vrot.slane %v6168, 5
    %v6171 = vor.u32 %v6167, %v6170
    %v6172 = vrot.slane %v6171, 4
    %v6174 = vshll.u32 %v5670, 16
    %v6176 = vrot.slane %v6174, 5
    %v6177 = vsel %vm1603, %v6172, %v6176
    %v6178 = vshrl.u32 %v5670, 16
    %v6180 = vrot.slane %v6178, 4
    %v6181 = vor.u32 %v6180, %v6176
    %v6182 = vrot.slane %v6181, 4
    %v6184 = vshll.u32 %v5671, 16
    %v6186 = vrot.slane %v6184, 5
    %v6187 = vsel %vm1603, %v6182, %v6186
    %v6189 = vshrl.u32 %v5672, 16
    %v6191 = vrot.slane %v6189, 4
    %v6192 = vshll.u32 %v5672, 16
    %v6194 = vrot.slane %v6192, 5
    %v6195 = vor.u32 %v6191, %v6194
    %v6196 = vrot.slane %v6195, 4
    %v6198 = vshll.u32 %v5673, 16
    %v6200 = vrot.slane %v6198, 5
    %v6201 = vsel %vm1603, %v6196, %v6200
    %v6202 = vshrl.u32 %v5673, 16
    %v6204 = vrot.slane %v6202, 4
    %v6205 = vor.u32 %v6204, %v6200
    %v6206 = vrot.slane %v6205, 4
    %v6208 = vshll.u32 %v5674, 16
    %v6210 = vrot.slane %v6208, 5
    %v6211 = vsel %vm1603, %v6206, %v6210
    %v6213 = vshrl.u32 %v5675, 16
    %v6215 = vrot.slane %v6213, 4
    %v6216 = vshll.u32 %v5675, 16
    %v6218 = vrot.slane %v6216, 5
    %v6219 = vor.u32 %v6215, %v6218
    %v6220 = vrot.slane %v6219, 4
    %v6222 = vshll.u32 %v5676, 16
    %v6224 = vrot.slane %v6222, 5
    %v6225 = vsel %vm1603, %v6220, %v6224
    %v6226 = vshrl.u32 %v5676, 16
    %v6228 = vrot.slane %v6226, 4
    %v6229 = vor.u32 %v6228, %v6224
    %v6230 = vrot.slane %v6229, 4
    %v6232 = vshll.u32 %v5677, 16
    %v6234 = vrot.slane %v6232, 5
    %v6235 = vsel %vm1603, %v6230, %v6234
    %v6237 = vshrl.u32 %v5678, 16
    %v6239 = vrot.slane %v6237, 4
    %v6240 = vshll.u32 %v5678, 16
    %v6242 = vrot.slane %v6240, 5
    %v6243 = vor.u32 %v6239, %v6242
    %v6244 = vrot.slane %v6243, 4
    %v6246 = vshll.u32 %v5679, 16
    %v6248 = vrot.slane %v6246, 5
    %v6249 = vsel %vm1603, %v6244, %v6248
    %v6250 = vshrl.u32 %v5679, 16
    %v6252 = vrot.slane %v6250, 4
    %v6253 = vor.u32 %v6252, %v6248
    %v6254 = vrot.slane %v6253, 4
    %v6256 = vshll.u32 %v5680, 16
    %v6258 = vrot.slane %v6256, 5
    %v6259 = vsel %vm1603, %v6254, %v6258
    %v6261 = vshrl.u32 %v5681, 16
    %v6263 = vrot.slane %v6261, 4
    %v6264 = vshll.u32 %v5681, 16
    %v6266 = vrot.slane %v6264, 5
    %v6267 = vor.u32 %v6263, %v6266
    %v6268 = vrot.slane %v6267, 4
    %v6270 = vshll.u32 %v5682, 16
    %v6272 = vrot.slane %v6270, 5
    %v6273 = vsel %vm1603, %v6268, %v6272
    %v6274 = vshrl.u32 %v5682, 16
    %v6276 = vrot.slane %v6274, 4
    %v6277 = vor.u32 %v6276, %v6272
    %v6278 = vrot.slane %v6277, 4
    %v6280 = vshll.u32 %v5683, 16
    %v6282 = vrot.slane %v6280, 5
    %v6283 = vsel %vm1603, %v6278, %v6282
    %v6285 = vshrl.u32 %v5684, 16
    %v6287 = vrot.slane %v6285, 4
    %v6288 = vshll.u32 %v5684, 16
    %v6290 = vrot.slane %v6288, 5
    %v6291 = vor.u32 %v6287, %v6290
    %v6292 = vrot.slane %v6291, 4
    %v6294 = vshll.u32 %v5685, 16
    %v6296 = vrot.slane %v6294, 5
    %v6297 = vsel %vm1603, %v6292, %v6296
    %v6298 = vshrl.u32 %v5685, 16
    %v6300 = vrot.slane %v6298, 4
    %v6301 = vor.u32 %v6300, %v6296
    %v6302 = vrot.slane %v6301, 4
    %v6304 = vshll.u32 %v5686, 16
    %v6306 = vrot.slane %v6304, 5
    %v6307 = vsel %vm1603, %v6302, %v6306
    %v6309 = vshrl.u32 %v5687, 16
    %v6311 = vrot.slane %v6309, 4
    %v6312 = vshll.u32 %v5687, 16
    %v6314 = vrot.slane %v6312, 5
    %v6315 = vor.u32 %v6311, %v6314
    %v6316 = vrot.slane %v6315, 4
    %v6318 = vshll.u32 %v5688, 16
    %v6320 = vrot.slane %v6318, 5
    %v6321 = vsel %vm1603, %v6316, %v6320
    %v6322 = vshrl.u32 %v5688, 16
    %v6324 = vrot.slane %v6322, 4
    %v6325 = vor.u32 %v6324, %v6320
    %v6326 = vrot.slane %v6325, 4
    %v6328 = vshll.u32 %v5689, 16
    %v6330 = vrot.slane %v6328, 5
    %v6331 = vsel %vm1603, %v6326, %v6330
    %v6333 = vshrl.u32 %v5690, 16
    %v6335 = vrot.slane %v6333, 4
    %v6336 = vshll.u32 %v5690, 16
    %v6338 = vrot.slane %v6336, 5
    %v6339 = vor.u32 %v6335, %v6338
    %v6340 = vrot.slane %v6339, 4
    %v6342 = vshll.u32 %v5691, 16
    %v6344 = vrot.slane %v6342, 5
    %v6345 = vsel %vm1603, %v6340, %v6344
    %v6346 = vshrl.u32 %v5691, 16
    %v6348 = vrot.slane %v6346, 4
    %v6349 = vor.u32 %v6348, %v6344
    %v6350 = vrot.slane %v6349, 4
    %v6352 = vshll.u32 %v5692, 16
    %v6354 = vrot.slane %v6352, 5
    %v6355 = vsel %vm1603, %v6350, %v6354
    %v6357 = vshrl.u32 %v5693, 16
    %v6359 = vrot.slane %v6357, 4
    %v6360 = vshll.u32 %v5693, 16
    %v6362 = vrot.slane %v6360, 5
    %v6363 = vor.u32 %v6359, %v6362
    %v6364 = vrot.slane %v6363, 4
    %v6366 = vshll.u32 %v5694, 16
    %v6368 = vrot.slane %v6366, 5
    %v6369 = vsel %vm1603, %v6364, %v6368
    %v6370 = vshrl.u32 %v5694, 16
    %v6372 = vrot.slane %v6370, 4
    %v6373 = vor.u32 %v6372, %v6368
    %v6374 = vrot.slane %v6373, 4
    %v6376 = vshll.u32 %v5695, 16
    %v6378 = vrot.slane %v6376, 5
    %v6379 = vsel %vm1603, %v6374, %v6378
    %v6381 = vshrl.u32 %v5696, 16
    %v6383 = vrot.slane %v6381, 4
    %v6384 = vshll.u32 %v5696, 16
    %v6386 = vrot.slane %v6384, 5
    %v6387 = vor.u32 %v6383, %v6386
    %v6388 = vrot.slane %v6387, 4
    %v6390 = vshll.u32 %v5697, 16
    %v6392 = vrot.slane %v6390, 5
    %v6393 = vsel %vm1603, %v6388, %v6392
    %v6394 = vshrl.u32 %v5697, 16
    %v6396 = vrot.slane %v6394, 4
    %v6397 = vor.u32 %v6396, %v6392
    %v6398 = vrot.slane %v6397, 4
    %v6400 = vshll.u32 %v5698, 16
    %v6402 = vrot.slane %v6400, 5
    %v6403 = vsel %vm1603, %v6398, %v6402
    %v6405 = vshrl.u32 %v5699, 16
    %v6407 = vrot.slane %v6405, 4
    %v6408 = vshll.u32 %v5699, 16
    %v6410 = vrot.slane %v6408, 5
    %v6411 = vor.u32 %v6407, %v6410
    %v6412 = vrot.slane %v6411, 4
    %v6414 = vshll.u32 %v5700, 16
    %v6416 = vrot.slane %v6414, 5
    %v6417 = vsel %vm1603, %v6412, %v6416
    %v6418 = vshrl.u32 %v5700, 16
    %v6420 = vrot.slane %v6418, 4
    %v6421 = vor.u32 %v6420, %v6416
    %v6422 = vrot.slane %v6421, 4
    %v6424 = vshll.u32 %v5701, 16
    %v6426 = vrot.slane %v6424, 5
    %v6427 = vsel %vm1603, %v6422, %v6426
    %v6429 = vshrl.u32 %v5702, 16
    %v6431 = vrot.slane %v6429, 4
    %v6432 = vshll.u32 %v5702, 16
    %v6434 = vrot.slane %v6432, 5
    %v6435 = vor.u32 %v6431, %v6434
    %v6436 = vrot.slane %v6435, 4
    %v6438 = vshll.u32 %v5703, 16
    %v6440 = vrot.slane %v6438, 5
    %v6441 = vsel %vm1603, %v6436, %v6440
    %v6442 = vshrl.u32 %v5703, 16
    %v6444 = vrot.slane %v6442, 4
    %v6445 = vor.u32 %v6444, %v6440
    %v6446 = vrot.slane %v6445, 4
    %v6448 = vshll.u32 %v5704, 16
    %v6450 = vrot.slane %v6448, 5
    %v6451 = vsel %vm1603, %v6446, %v6450
    %v6453 = vshrl.u32 %v5705, 16
    %v6455 = vrot.slane %v6453, 4
    %v6456 = vshll.u32 %v5705, 16
    %v6458 = vrot.slane %v6456, 5
    %v6459 = vor.u32 %v6455, %v6458
    %v6460 = vrot.slane %v6459, 4
    %v6462 = vshll.u32 %v5706, 16
    %v6464 = vrot.slane %v6462, 5
    %v6465 = vsel %vm1603, %v6460, %v6464
    %v6466 = vshrl.u32 %v5706, 16
    %v6468 = vrot.slane %v6466, 4
    %v6469 = vor.u32 %v6468, %v6464
    %v6470 = vrot.slane %v6469, 4
    %v6472 = vshll.u32 %v5707, 16
    %v6474 = vrot.slane %v6472, 5
    %v6475 = vsel %vm1603, %v6470, %v6474
    %v6476 = vunpack.c.l.b16 %v5721
    %v6477 = vunpack.c.l.b16 %v5731
    %v6478 = vunpack.c.l.b16 %v5745
    %v6479 = vunpack.c.l.b16 %v5755
    %v6480 = vunpack.c.l.b16 %v5769
    %v6481 = vunpack.c.l.b16 %v5779
    %v6482 = vunpack.c.l.b16 %v5793
    %v6483 = vunpack.c.l.b16 %v5803
    %v6484 = vunpack.c.l.b16 %v5817
    %v6485 = vunpack.c.l.b16 %v5827
    %v6486 = vunpack.c.l.b16 %v5841
    %v6487 = vunpack.c.l.b16 %v5851
    %v6488 = vunpack.c.l.b16 %v5865
    %v6489 = vunpack.c.l.b16 %v5875
    %v6490 = vunpack.c.l.b16 %v5889
    %v6491 = vunpack.c.l.b16 %v5899
    %v6492 = vunpack.c.l.b16 %v5913
    %v6493 = vunpack.c.l.b16 %v5923
    %v6494 = vunpack.c.l.b16 %v5937
    %v6495 = vunpack.c.l.b16 %v5947
    %v6496 = vunpack.c.l.b16 %v5961
    %v6497 = vunpack.c.l.b16 %v5971
    %v6498 = vunpack.c.l.b16 %v5985
    %v6499 = vunpack.c.l.b16 %v5995
    %v6500 = vunpack.c.l.b16 %v6009
    %v6501 = vunpack.c.l.b16 %v6019
    %v6502 = vunpack.c.l.b16 %v6033
    %v6503 = vunpack.c.l.b16 %v6043
    %v6504 = vunpack.c.l.b16 %v6057
    %v6505 = vunpack.c.l.b16 %v6067
    %v6506 = vunpack.c.l.b16 %v6081
    %v6507 = vunpack.c.l.b16 %v6091
    %v6508 = vunpack.c.l.b16 %v6105
    %v6509 = vunpack.c.l.b16 %v6115
    %v6510 = vunpack.c.l.b16 %v6129
    %v6511 = vunpack.c.l.b16 %v6139
    %v6512 = vunpack.c.l.b16 %v6153
    %v6513 = vunpack.c.l.b16 %v6163
    %v6514 = vunpack.c.l.b16 %v6177
    %v6515 = vunpack.c.l.b16 %v6187
    %v6516 = vunpack.c.l.b16 %v6201
    %v6517 = vunpack.c.l.b16 %v6211
    %v6518 = vunpack.c.l.b16 %v6225
    %v6519 = vunpack.c.l.b16 %v6235
    %v6520 = vunpack.c.l.b16 %v6249
    %v6521 = vunpack.c.l.b16 %v6259
    %v6522 = vunpack.c.l.b16 %v6273
    %v6523 = vunpack.c.l.b16 %v6283
    %v6524 = vunpack.c.l.b16 %v6297
    %v6525 = vunpack.c.l.b16 %v6307
    %v6526 = vunpack.c.l.b16 %v6321
    %v6527 = vunpack.c.l.b16 %v6331
    %v6528 = vunpack.c.l.b16 %v6345
    %v6529 = vunpack.c.l.b16 %v6355
    %v6530 = vunpack.c.l.b16 %v6369
    %v6531 = vunpack.c.l.b16 %v6379
    %v6532 = vunpack.c.l.b16 %v6393
    %v6533 = vunpack.c.l.b16 %v6403
    %v6534 = vunpack.c.l.b16 %v6417
    %v6535 = vunpack.c.l.b16 %v6427
    %v6536 = vunpack.c.l.b16 %v6441
    %v6537 = vunpack.c.l.b16 %v6451
    %v6538 = vunpack.c.l.b16 %v6465
    %v6539 = vunpack.c.l.b16 %v6475
    %v6540 = vpack.c.b16 %v6477, %v6476
    %v6541 = vpack.c.b16 %v6479, %v6478
    %v6542 = vpack.c.b16 %v6481, %v6480
    %v6543 = vpack.c.b16 %v6483, %v6482
    %v6544 = vpack.c.b16 %v6485, %v6484
    %v6545 = vpack.c.b16 %v6487, %v6486
    %v6546 = vpack.c.b16 %v6489, %v6488
    %v6547 = vpack.c.b16 %v6491, %v6490
    %v6548 = vpack.c.b16 %v6493, %v6492
    %v6549 = vpack.c.b16 %v6495, %v6494
    %v6550 = vpack.c.b16 %v6497, %v6496
    %v6551 = vpack.c.b16 %v6499, %v6498
    %v6552 = vpack.c.b16 %v6501, %v6500
    %v6553 = vpack.c.b16 %v6503, %v6502
    %v6554 = vpack.c.b16 %v6505, %v6504
    %v6555 = vpack.c.b16 %v6507, %v6506
    %v6556 = vpack.c.b16 %v6509, %v6508
    %v6557 = vpack.c.b16 %v6511, %v6510
    %v6558 = vpack.c.b16 %v6513, %v6512
    %v6559 = vpack.c.b16 %v6515, %v6514
    %v6560 = vpack.c.b16 %v6517, %v6516
    %v6561 = vpack.c.b16 %v6519, %v6518
    %v6562 = vpack.c.b16 %v6521, %v6520
    %v6563 = vpack.c.b16 %v6523, %v6522
    %v6564 = vpack.c.b16 %v6525, %v6524
    %v6565 = vpack.c.b16 %v6527, %v6526
    %v6566 = vpack.c.b16 %v6529, %v6528
    %v6567 = vpack.c.b16 %v6531, %v6530
    %v6568 = vpack.c.b16 %v6533, %v6532
    %v6569 = vpack.c.b16 %v6535, %v6534
    %v6570 = vpack.c.b16 %v6537, %v6536
    %v6571 = vpack.c.b16 %v6539, %v6538
    %6572 = vrot.lane.b32.xlu0 %v6540, 96
    %v6573 = vpop.permute.xlu0 %6572
    %6574 = vrot.lane.b32.xlu0 %v6541, 96
    %v6575 = vpop.permute.xlu0 %6574
    %6576 = vrot.lane.b32.xlu0 %v6542, 96
    %v6577 = vpop.permute.xlu0 %6576
    %6578 = vrot.lane.b32.xlu0 %v6543, 96
    %v6579 = vpop.permute.xlu0 %6578
    %6580 = vrot.lane.b32.xlu0 %v6544, 96
    %v6581 = vpop.permute.xlu0 %6580
    %6582 = vrot.lane.b32.xlu0 %v6545, 96
    %v6583 = vpop.permute.xlu0 %6582
    %6584 = vrot.lane.b32.xlu0 %v6546, 96
    %v6585 = vpop.permute.xlu0 %6584
    %6586 = vrot.lane.b32.xlu0 %v6547, 96
    %v6587 = vpop.permute.xlu0 %6586
    %6588 = vrot.lane.b32.xlu0 %v6548, 96
    %v6589 = vpop.permute.xlu0 %6588
    %6590 = vrot.lane.b32.xlu0 %v6549, 96
    %v6591 = vpop.permute.xlu0 %6590
    %6592 = vrot.lane.b32.xlu0 %v6550, 96
    %v6593 = vpop.permute.xlu0 %6592
    %6594 = vrot.lane.b32.xlu0 %v6551, 96
    %v6595 = vpop.permute.xlu0 %6594
    %6596 = vrot.lane.b32.xlu0 %v6552, 96
    %v6597 = vpop.permute.xlu0 %6596
    %6598 = vrot.lane.b32.xlu0 %v6553, 96
    %v6599 = vpop.permute.xlu0 %6598
    %6600 = vrot.lane.b32.xlu0 %v6554, 96
    %v6601 = vpop.permute.xlu0 %6600
    %6602 = vrot.lane.b32.xlu0 %v6555, 96
    %v6603 = vpop.permute.xlu0 %6602
    %6604 = vrot.lane.b32.xlu0 %v6556, 96
    %v6605 = vpop.permute.xlu0 %6604
    %6606 = vrot.lane.b32.xlu0 %v6557, 96
    %v6607 = vpop.permute.xlu0 %6606
    %6608 = vrot.lane.b32.xlu0 %v6558, 96
    %v6609 = vpop.permute.xlu0 %6608
    %6610 = vrot.lane.b32.xlu0 %v6559, 96
    %v6611 = vpop.permute.xlu0 %6610
    %6612 = vrot.lane.b32.xlu0 %v6560, 96
    %v6613 = vpop.permute.xlu0 %6612
    %6614 = vrot.lane.b32.xlu0 %v6561, 96
    %v6615 = vpop.permute.xlu0 %6614
    %6616 = vrot.lane.b32.xlu0 %v6562, 96
    %v6617 = vpop.permute.xlu0 %6616
    %6618 = vrot.lane.b32.xlu0 %v6563, 96
    %v6619 = vpop.permute.xlu0 %6618
    %6620 = vrot.lane.b32.xlu0 %v6564, 96
    %v6621 = vpop.permute.xlu0 %6620
    %6622 = vrot.lane.b32.xlu0 %v6565, 96
    %v6623 = vpop.permute.xlu0 %6622
    %6624 = vrot.lane.b32.xlu0 %v6566, 96
    %v6625 = vpop.permute.xlu0 %6624
    %6626 = vrot.lane.b32.xlu0 %v6567, 96
    %v6627 = vpop.permute.xlu0 %6626
    %6628 = vrot.lane.b32.xlu0 %v6568, 96
    %v6629 = vpop.permute.xlu0 %6628
    %6630 = vrot.lane.b32.xlu0 %v6569, 96
    %v6631 = vpop.permute.xlu0 %6630
    %6632 = vrot.lane.b32.xlu0 %v6570, 96
    %v6633 = vpop.permute.xlu0 %6632
    %6634 = vrot.lane.b32.xlu0 %v6571, 96
    %v6635 = vpop.permute.xlu0 %6634
    %6668 = vst.msk [vmem:[#allocation4 + $0x8] sm:$0xff] %vm3562, %v6573
    %6669 = vst.msk [vmem:[#allocation4 + $0x20] sm:$0xff] %vm3562, %v6575
    %6670 = vst.msk [vmem:[#allocation4 + $0x38] sm:$0xff] %vm3562, %v6577
    %6671 = vst.msk [vmem:[#allocation4 + $0x50] sm:$0xff] %vm3562, %v6579
    %6672 = vst.msk [vmem:[#allocation4 + $0x68] sm:$0xff] %vm3562, %v6581
    %6673 = vst.msk [vmem:[#allocation4 + $0x80] sm:$0xff] %vm3562, %v6583
    %6674 = vst.msk [vmem:[#allocation4 + $0x98] sm:$0xff] %vm3562, %v6585
    %6675 = vst.msk [vmem:[#allocation4 + $0xb0] sm:$0xff] %vm3562, %v6587
    %6676 = vst.msk [vmem:[#allocation4 + $0xc8] sm:$0xff] %vm3562, %v6589
    %6677 = vst.msk [vmem:[#allocation4 + $0xe0] sm:$0xff] %vm3562, %v6591
    %6678 = vst.msk [vmem:[#allocation4 + $0xf8] sm:$0xff] %vm3562, %v6593
    %6679 = vst.msk [vmem:[#allocation4 + $0x110] sm:$0xff] %vm3562, %v6595
    %6680 = vst.msk [vmem:[#allocation4 + $0x128] sm:$0xff] %vm3562, %v6597
    %6681 = vst.msk [vmem:[#allocation4 + $0x140] sm:$0xff] %vm3562, %v6599
    %6682 = vst.msk [vmem:[#allocation4 + $0x158] sm:$0xff] %vm3562, %v6601
    %6683 = vst.msk [vmem:[#allocation4 + $0x170] sm:$0xff] %vm3562, %v6603
    %6684 = vst.msk [vmem:[#allocation4 + $0x188] sm:$0xff] %vm3562, %v6605
    %6685 = vst.msk [vmem:[#allocation4 + $0x1a0] sm:$0xff] %vm3562, %v6607
    %6686 = vst.msk [vmem:[#allocation4 + $0x1b8] sm:$0xff] %vm3562, %v6609
    %6687 = vst.msk [vmem:[#allocation4 + $0x1d0] sm:$0xff] %vm3562, %v6611
    %6688 = vst.msk [vmem:[#allocation4 + $0x1e8] sm:$0xff] %vm3562, %v6613
    %6689 = vst.msk [vmem:[#allocation4 + $0x200] sm:$0xff] %vm3562, %v6615
    %6690 = vst.msk [vmem:[#allocation4 + $0x218] sm:$0xff] %vm3562, %v6617
    %6691 = vst.msk [vmem:[#allocation4 + $0x230] sm:$0xff] %vm3562, %v6619
    %6692 = vst.msk [vmem:[#allocation4 + $0x248] sm:$0xff] %vm3562, %v6621
    %6693 = vst.msk [vmem:[#allocation4 + $0x260] sm:$0xff] %vm3562, %v6623
    %6694 = vst.msk [vmem:[#allocation4 + $0x278] sm:$0xff] %vm3562, %v6625
    %6695 = vst.msk [vmem:[#allocation4 + $0x290] sm:$0xff] %vm3562, %v6627
    %6696 = vst.msk [vmem:[#allocation4 + $0x2a8] sm:$0xff] %vm3562, %v6629
    %6697 = vst.msk [vmem:[#allocation4 + $0x2c0] sm:$0xff] %vm3562, %v6631
    %6698 = vst.msk [vmem:[#allocation4 + $0x2d8] sm:$0xff] %vm3562, %v6633
    %6699 = vst.msk [vmem:[#allocation4 + $0x2f0] sm:$0xff] %vm3562, %v6635
    %v6700 = vld [vmem:[%s5259] sm:$0xe]
    %v6701 = vld [vmem:[%s5259 + $0x4] sm:$0xf]
    %v6702 = vld [vmem:[%s5259 + $0x8] sm:$0x1]
    %v6703 = vld [vmem:[%s5259 + $0xc] sm:$0xe]
    %v6704 = vld [vmem:[%s5259 + $0x10] sm:$0xf]
    %v6705 = vld [vmem:[%s5259 + $0x14] sm:$0x1]
    %v6706 = vld [vmem:[%s5259 + $0x18] sm:$0xe]
    %v6707 = vld [vmem:[%s5259 + $0x1c] sm:$0xf]
    %v6708 = vld [vmem:[%s5259 + $0x20] sm:$0x1]
    %v6709 = vld [vmem:[%s5259 + $0x24] sm:$0xe]
    %v6710 = vld [vmem:[%s5259 + $0x28] sm:$0xf]
    %v6711 = vld [vmem:[%s5259 + $0x2c] sm:$0x1]
    %v6712 = vld [vmem:[%s5259 + $0x30] sm:$0xe]
    %v6713 = vld [vmem:[%s5259 + $0x34] sm:$0xf]
    %v6714 = vld [vmem:[%s5259 + $0x38] sm:$0x1]
    %v6715 = vld [vmem:[%s5259 + $0x3c] sm:$0xe]
    %v6716 = vld [vmem:[%s5259 + $0x40] sm:$0xf]
    %v6717 = vld [vmem:[%s5259 + $0x44] sm:$0x1]
    %v6718 = vld [vmem:[%s5259 + $0x48] sm:$0xe]
    %v6719 = vld [vmem:[%s5259 + $0x4c] sm:$0xf]
    %v6720 = vld [vmem:[%s5259 + $0x50] sm:$0x1]
    %v6721 = vld [vmem:[%s5259 + $0x54] sm:$0xe]
    %v6722 = vld [vmem:[%s5259 + $0x58] sm:$0xf]
    %v6723 = vld [vmem:[%s5259 + $0x5c] sm:$0x1]
    %v6724 = vld [vmem:[%s5259 + $0x60] sm:$0xe]
    %v6725 = vld [vmem:[%s5259 + $0x64] sm:$0xf]
    %v6726 = vld [vmem:[%s5259 + $0x68] sm:$0x1]
    %v6727 = vld [vmem:[%s5259 + $0x6c] sm:$0xe]
    %v6728 = vld [vmem:[%s5259 + $0x70] sm:$0xf]
    %v6729 = vld [vmem:[%s5259 + $0x74] sm:$0x1]
    %v6730 = vld [vmem:[%s5259 + $0x78] sm:$0xe]
    %v6731 = vld [vmem:[%s5259 + $0x7c] sm:$0xf]
    %v6732 = vld [vmem:[%s5259 + $0x80] sm:$0x1]
    %v6733 = vld [vmem:[%s5259 + $0x84] sm:$0xe]
    %v6734 = vld [vmem:[%s5259 + $0x88] sm:$0xf]
    %v6735 = vld [vmem:[%s5259 + $0x8c] sm:$0x1]
    %v6736 = vld [vmem:[%s5259 + $0x90] sm:$0xe]
    %v6737 = vld [vmem:[%s5259 + $0x94] sm:$0xf]
    %v6738 = vld [vmem:[%s5259 + $0x98] sm:$0x1]
    %v6739 = vld [vmem:[%s5259 + $0x9c] sm:$0xe]
    %v6740 = vld [vmem:[%s5259 + $0xa0] sm:$0xf]
    %v6741 = vld [vmem:[%s5259 + $0xa4] sm:$0x1]
    %v6742 = vld [vmem:[%s5259 + $0xa8] sm:$0xe]
    %v6743 = vld [vmem:[%s5259 + $0xac] sm:$0xf]
    %v6744 = vld [vmem:[%s5259 + $0xb0] sm:$0x1]
    %v6745 = vld [vmem:[%s5259 + $0xb4] sm:$0xe]
    %v6746 = vld [vmem:[%s5259 + $0xb8] sm:$0xf]
    %v6747 = vld [vmem:[%s5259 + $0xbc] sm:$0x1]
    %v6748 = vld [vmem:[%s5259 + $0xd8] sm:$0xe]
    %v6749 = vld [vmem:[%s5259 + $0xdc] sm:$0xf]
    %v6750 = vld [vmem:[%s5259 + $0xe0] sm:$0x1]
    %v6751 = vld [vmem:[%s5259 + $0xe4] sm:$0xe]
    %v6752 = vld [vmem:[%s5259 + $0xe8] sm:$0xf]
    %v6753 = vld [vmem:[%s5259 + $0xec] sm:$0x1]
    %v6754 = vld [vmem:[%s5259 + $0xf0] sm:$0xe]
    %v6755 = vld [vmem:[%s5259 + $0xf4] sm:$0xf]
    %v6756 = vld [vmem:[%s5259 + $0xf8] sm:$0x1]
    %v6757 = vld [vmem:[%s5259 + $0xfc] sm:$0xe]
    %v6758 = vld [vmem:[%s5259 + $0x100] sm:$0xf]
    %v6759 = vld [vmem:[%s5259 + $0x104] sm:$0x1]
    %v6760 = vld [vmem:[%s5259 + $0x108] sm:$0xe]
    %v6761 = vld [vmem:[%s5259 + $0x10c] sm:$0xf]
    %v6762 = vld [vmem:[%s5259 + $0x110] sm:$0x1]
    %v6763 = vld [vmem:[%s5259 + $0x114] sm:$0xe]
    %v6764 = vld [vmem:[%s5259 + $0x118] sm:$0xf]
    %v6765 = vld [vmem:[%s5259 + $0x11c] sm:$0x1]
    %v6766 = vld [vmem:[%s5259 + $0x120] sm:$0xe]
    %v6767 = vld [vmem:[%s5259 + $0x124] sm:$0xf]
    %v6768 = vld [vmem:[%s5259 + $0x128] sm:$0x1]
    %v6769 = vld [vmem:[%s5259 + $0x12c] sm:$0xe]
    %v6770 = vld [vmem:[%s5259 + $0x130] sm:$0xf]
    %v6771 = vld [vmem:[%s5259 + $0x134] sm:$0x1]
    %v6772 = vld [vmem:[%s5259 + $0x138] sm:$0xe]
    %v6773 = vld [vmem:[%s5259 + $0x13c] sm:$0xf]
    %v6774 = vld [vmem:[%s5259 + $0x140] sm:$0x1]
    %v6775 = vld [vmem:[%s5259 + $0x144] sm:$0xe]
    %v6776 = vld [vmem:[%s5259 + $0x148] sm:$0xf]
    %v6777 = vld [vmem:[%s5259 + $0x14c] sm:$0x1]
    %v6778 = vld [vmem:[%s5259 + $0x150] sm:$0xe]
    %v6779 = vld [vmem:[%s5259 + $0x154] sm:$0xf]
    %v6780 = vld [vmem:[%s5259 + $0x158] sm:$0x1]
    %v6781 = vld [vmem:[%s5259 + $0x15c] sm:$0xe]
    %v6782 = vld [vmem:[%s5259 + $0x160] sm:$0xf]
    %v6783 = vld [vmem:[%s5259 + $0x164] sm:$0x1]
    %v6784 = vld [vmem:[%s5259 + $0x168] sm:$0xe]
    %v6785 = vld [vmem:[%s5259 + $0x16c] sm:$0xf]
    %v6786 = vld [vmem:[%s5259 + $0x170] sm:$0x1]
    %v6787 = vld [vmem:[%s5259 + $0x174] sm:$0xe]
    %v6788 = vld [vmem:[%s5259 + $0x178] sm:$0xf]
    %v6789 = vld [vmem:[%s5259 + $0x17c] sm:$0x1]
    %v6790 = vld [vmem:[%s5259 + $0x180] sm:$0xe]
    %v6791 = vld [vmem:[%s5259 + $0x184] sm:$0xf]
    %v6792 = vld [vmem:[%s5259 + $0x188] sm:$0x1]
    %v6793 = vld [vmem:[%s5259 + $0x18c] sm:$0xe]
    %v6794 = vld [vmem:[%s5259 + $0x190] sm:$0xf]
    %v6795 = vld [vmem:[%s5259 + $0x194] sm:$0x1]
    %v6892 = vrot.slane %v6700, 5
    %v6893 = vrot.slane %v6892, 4
    %v6894 = vrot.slane %v6701, 5
    %v6895 = vsel %vm2791, %v6893, %v6894
    %v6896 = vrot.slane %v6894, 4
    %v6897 = vrot.slane %v6702, 5
    %v6898 = vsel %vm2791, %v6896, %v6897
    %v6899 = vrot.slane %v6703, 5
    %v6900 = vrot.slane %v6899, 4
    %v6901 = vrot.slane %v6704, 5
    %v6902 = vsel %vm2791, %v6900, %v6901
    %v6903 = vrot.slane %v6901, 4
    %v6904 = vrot.slane %v6705, 5
    %v6905 = vsel %vm2791, %v6903, %v6904
    %v6906 = vrot.slane %v6706, 5
    %v6907 = vrot.slane %v6906, 4
    %v6908 = vrot.slane %v6707, 5
    %v6909 = vsel %vm2791, %v6907, %v6908
    %v6910 = vrot.slane %v6908, 4
    %v6911 = vrot.slane %v6708, 5
    %v6912 = vsel %vm2791, %v6910, %v6911
    %v6913 = vrot.slane %v6709, 5
    %v6914 = vrot.slane %v6913, 4
    %v6915 = vrot.slane %v6710, 5
    %v6916 = vsel %vm2791, %v6914, %v6915
    %v6917 = vrot.slane %v6915, 4
    %v6918 = vrot.slane %v6711, 5
    %v6919 = vsel %vm2791, %v6917, %v6918
    %v6920 = vrot.slane %v6712, 5
    %v6921 = vrot.slane %v6920, 4
    %v6922 = vrot.slane %v6713, 5
    %v6923 = vsel %vm2791, %v6921, %v6922
    %v6924 = vrot.slane %v6922, 4
    %v6925 = vrot.slane %v6714, 5
    %v6926 = vsel %vm2791, %v6924, %v6925
    %v6927 = vrot.slane %v6715, 5
    %v6928 = vrot.slane %v6927, 4
    %v6929 = vrot.slane %v6716, 5
    %v6930 = vsel %vm2791, %v6928, %v6929
    %v6931 = vrot.slane %v6929, 4
    %v6932 = vrot.slane %v6717, 5
    %v6933 = vsel %vm2791, %v6931, %v6932
    %v6934 = vrot.slane %v6718, 5
    %v6935 = vrot.slane %v6934, 4
    %v6936 = vrot.slane %v6719, 5
    %v6937 = vsel %vm2791, %v6935, %v6936
    %v6938 = vrot.slane %v6936, 4
    %v6939 = vrot.slane %v6720, 5
    %v6940 = vsel %vm2791, %v6938, %v6939
    %v6941 = vrot.slane %v6721, 5
    %v6942 = vrot.slane %v6941, 4
    %v6943 = vrot.slane %v6722, 5
    %v6944 = vsel %vm2791, %v6942, %v6943
    %v6945 = vrot.slane %v6943, 4
    %v6946 = vrot.slane %v6723, 5
    %v6947 = vsel %vm2791, %v6945, %v6946
    %v6948 = vrot.slane %v6724, 5
    %v6949 = vrot.slane %v6948, 4
    %v6950 = vrot.slane %v6725, 5
    %v6951 = vsel %vm2791, %v6949, %v6950
    %v6952 = vrot.slane %v6950, 4
    %v6953 = vrot.slane %v6726, 5
    %v6954 = vsel %vm2791, %v6952, %v6953
    %v6955 = vrot.slane %v6727, 5
    %v6956 = vrot.slane %v6955, 4
    %v6957 = vrot.slane %v6728, 5
    %v6958 = vsel %vm2791, %v6956, %v6957
    %v6959 = vrot.slane %v6957, 4
    %v6960 = vrot.slane %v6729, 5
    %v6961 = vsel %vm2791, %v6959, %v6960
    %v6962 = vrot.slane %v6730, 5
    %v6963 = vrot.slane %v6962, 4
    %v6964 = vrot.slane %v6731, 5
    %v6965 = vsel %vm2791, %v6963, %v6964
    %v6966 = vrot.slane %v6964, 4
    %v6967 = vrot.slane %v6732, 5
    %v6968 = vsel %vm2791, %v6966, %v6967
    %v6969 = vrot.slane %v6733, 5
    %v6970 = vrot.slane %v6969, 4
    %v6971 = vrot.slane %v6734, 5
    %v6972 = vsel %vm2791, %v6970, %v6971
    %v6973 = vrot.slane %v6971, 4
    %v6974 = vrot.slane %v6735, 5
    %v6975 = vsel %vm2791, %v6973, %v6974
    %v6976 = vrot.slane %v6736, 5
    %v6977 = vrot.slane %v6976, 4
    %v6978 = vrot.slane %v6737, 5
    %v6979 = vsel %vm2791, %v6977, %v6978
    %v6980 = vrot.slane %v6978, 4
    %v6981 = vrot.slane %v6738, 5
    %v6982 = vsel %vm2791, %v6980, %v6981
    %v6983 = vrot.slane %v6739, 5
    %v6984 = vrot.slane %v6983, 4
    %v6985 = vrot.slane %v6740, 5
    %v6986 = vsel %vm2791, %v6984, %v6985
    %v6987 = vrot.slane %v6985, 4
    %v6988 = vrot.slane %v6741, 5
    %v6989 = vsel %vm2791, %v6987, %v6988
    %v6990 = vrot.slane %v6742, 5
    %v6991 = vrot.slane %v6990, 4
    %v6992 = vrot.slane %v6743, 5
    %v6993 = vsel %vm2791, %v6991, %v6992
    %v6994 = vrot.slane %v6992, 4
    %v6995 = vrot.slane %v6744, 5
    %v6996 = vsel %vm2791, %v6994, %v6995
    %v6997 = vrot.slane %v6745, 5
    %v6998 = vrot.slane %v6997, 4
    %v6999 = vrot.slane %v6746, 5
    %v7000 = vsel %vm2791, %v6998, %v6999
    %v7001 = vrot.slane %v6999, 4
    %v7002 = vrot.slane %v6747, 5
    %v7003 = vsel %vm2791, %v7001, %v7002
    %v7004 = vrot.slane %v6748, 5
    %v7005 = vrot.slane %v7004, 4
    %v7006 = vrot.slane %v6749, 5
    %v7007 = vsel %vm2791, %v7005, %v7006
    %v7008 = vrot.slane %v7006, 4
    %v7009 = vrot.slane %v6750, 5
    %v7010 = vsel %vm2791, %v7008, %v7009
    %v7011 = vrot.slane %v6751, 5
    %v7012 = vrot.slane %v7011, 4
    %v7013 = vrot.slane %v6752, 5
    %v7014 = vsel %vm2791, %v7012, %v7013
    %v7015 = vrot.slane %v7013, 4
    %v7016 = vrot.slane %v6753, 5
    %v7017 = vsel %vm2791, %v7015, %v7016
    %v7018 = vrot.slane %v6754, 5
    %v7019 = vrot.slane %v7018, 4
    %v7020 = vrot.slane %v6755, 5
    %v7021 = vsel %vm2791, %v7019, %v7020
    %v7022 = vrot.slane %v7020, 4
    %v7023 = vrot.slane %v6756, 5
    %v7024 = vsel %vm2791, %v7022, %v7023
    %v7025 = vrot.slane %v6757, 5
    %v7026 = vrot.slane %v7025, 4
    %v7027 = vrot.slane %v6758, 5
    %v7028 = vsel %vm2791, %v7026, %v7027
    %v7029 = vrot.slane %v7027, 4
    %v7030 = vrot.slane %v6759, 5
    %v7031 = vsel %vm2791, %v7029, %v7030
    %v7032 = vrot.slane %v6760, 5
    %v7033 = vrot.slane %v7032, 4
    %v7034 = vrot.slane %v6761, 5
    %v7035 = vsel %vm2791, %v7033, %v7034
    %v7036 = vrot.slane %v7034, 4
    %v7037 = vrot.slane %v6762, 5
    %v7038 = vsel %vm2791, %v7036, %v7037
    %v7039 = vrot.slane %v6763, 5
    %v7040 = vrot.slane %v7039, 4
    %v7041 = vrot.slane %v6764, 5
    %v7042 = vsel %vm2791, %v7040, %v7041
    %v7043 = vrot.slane %v7041, 4
    %v7044 = vrot.slane %v6765, 5
    %v7045 = vsel %vm2791, %v7043, %v7044
    %v7046 = vrot.slane %v6766, 5
    %v7047 = vrot.slane %v7046, 4
    %v7048 = vrot.slane %v6767, 5
    %v7049 = vsel %vm2791, %v7047, %v7048
    %v7050 = vrot.slane %v7048, 4
    %v7051 = vrot.slane %v6768, 5
    %v7052 = vsel %vm2791, %v7050, %v7051
    %v7053 = vrot.slane %v6769, 5
    %v7054 = vrot.slane %v7053, 4
    %v7055 = vrot.slane %v6770, 5
    %v7056 = vsel %vm2791, %v7054, %v7055
    %v7057 = vrot.slane %v7055, 4
    %v7058 = vrot.slane %v6771, 5
    %v7059 = vsel %vm2791, %v7057, %v7058
    %v7060 = vrot.slane %v6772, 5
    %v7061 = vrot.slane %v7060, 4
    %v7062 = vrot.slane %v6773, 5
    %v7063 = vsel %vm2791, %v7061, %v7062
    %v7064 = vrot.slane %v7062, 4
    %v7065 = vrot.slane %v6774, 5
    %v7066 = vsel %vm2791, %v7064, %v7065
    %v7067 = vrot.slane %v6775, 5
    %v7068 = vrot.slane %v7067, 4
    %v7069 = vrot.slane %v6776, 5
    %v7070 = vsel %vm2791, %v7068, %v7069
    %v7071 = vrot.slane %v7069, 4
    %v7072 = vrot.slane %v6777, 5
    %v7073 = vsel %vm2791, %v7071, %v7072
    %v7074 = vrot.slane %v6778, 5
    %v7075 = vrot.slane %v7074, 4
    %v7076 = vrot.slane %v6779, 5
    %v7077 = vsel %vm2791, %v7075, %v7076
    %v7078 = vrot.slane %v7076, 4
    %v7079 = vrot.slane %v6780, 5
    %v7080 = vsel %vm2791, %v7078, %v7079
    %v7081 = vrot.slane %v6781, 5
    %v7082 = vrot.slane %v7081, 4
    %v7083 = vrot.slane %v6782, 5
    %v7084 = vsel %vm2791, %v7082, %v7083
    %v7085 = vrot.slane %v7083, 4
    %v7086 = vrot.slane %v6783, 5
    %v7087 = vsel %vm2791, %v7085, %v7086
    %v7088 = vrot.slane %v6784, 5
    %v7089 = vrot.slane %v7088, 4
    %v7090 = vrot.slane %v6785, 5
    %v7091 = vsel %vm2791, %v7089, %v7090
    %v7092 = vrot.slane %v7090, 4
    %v7093 = vrot.slane %v6786, 5
    %v7094 = vsel %vm2791, %v7092, %v7093
    %v7095 = vrot.slane %v6787, 5
    %v7096 = vrot.slane %v7095, 4
    %v7097 = vrot.slane %v6788, 5
    %v7098 = vsel %vm2791, %v7096, %v7097
    %v7099 = vrot.slane %v7097, 4
    %v7100 = vrot.slane %v6789, 5
    %v7101 = vsel %vm2791, %v7099, %v7100
    %v7102 = vrot.slane %v6790, 5
    %v7103 = vrot.slane %v7102, 4
    %v7104 = vrot.slane %v6791, 5
    %v7105 = vsel %vm2791, %v7103, %v7104
    %v7106 = vrot.slane %v7104, 4
    %v7107 = vrot.slane %v6792, 5
    %v7108 = vsel %vm2791, %v7106, %v7107
    %v7109 = vrot.slane %v6793, 5
    %v7110 = vrot.slane %v7109, 4
    %v7111 = vrot.slane %v6794, 5
    %v7112 = vsel %vm2791, %v7110, %v7111
    %v7113 = vrot.slane %v7111, 4
    %v7114 = vrot.slane %v6795, 5
    %v7115 = vsel %vm2791, %v7113, %v7114
    %v7116 = vunpack.c.l.b16 %v6895
    %v7117 = vunpack.c.l.b16 %v6898
    %v7118 = vunpack.c.l.b16 %v6902
    %v7119 = vunpack.c.l.b16 %v6905
    %v7120 = vunpack.c.l.b16 %v6909
    %v7121 = vunpack.c.l.b16 %v6912
    %v7122 = vunpack.c.l.b16 %v6916
    %v7123 = vunpack.c.l.b16 %v6919
    %v7124 = vunpack.c.l.b16 %v6923
    %v7125 = vunpack.c.l.b16 %v6926
    %v7126 = vunpack.c.l.b16 %v6930
    %v7127 = vunpack.c.l.b16 %v6933
    %v7128 = vunpack.c.l.b16 %v6937
    %v7129 = vunpack.c.l.b16 %v6940
    %v7130 = vunpack.c.l.b16 %v6944
    %v7131 = vunpack.c.l.b16 %v6947
    %v7132 = vunpack.c.l.b16 %v6951
    %v7133 = vunpack.c.l.b16 %v6954
    %v7134 = vunpack.c.l.b16 %v6958
    %v7135 = vunpack.c.l.b16 %v6961
    %v7136 = vunpack.c.l.b16 %v6965
    %v7137 = vunpack.c.l.b16 %v6968
    %v7138 = vunpack.c.l.b16 %v6972
    %v7139 = vunpack.c.l.b16 %v6975
    %v7140 = vunpack.c.l.b16 %v6979
    %v7141 = vunpack.c.l.b16 %v6982
    %v7142 = vunpack.c.l.b16 %v6986
    %v7143 = vunpack.c.l.b16 %v6989
    %v7144 = vunpack.c.l.b16 %v6993
    %v7145 = vunpack.c.l.b16 %v6996
    %v7146 = vunpack.c.l.b16 %v7000
    %v7147 = vunpack.c.l.b16 %v7003
    %v7148 = vunpack.c.l.b16 %v7007
    %v7149 = vunpack.c.l.b16 %v7010
    %v7150 = vunpack.c.l.b16 %v7014
    %v7151 = vunpack.c.l.b16 %v7017
    %v7152 = vunpack.c.l.b16 %v7021
    %v7153 = vunpack.c.l.b16 %v7024
    %v7154 = vunpack.c.l.b16 %v7028
    %v7155 = vunpack.c.l.b16 %v7031
    %v7156 = vunpack.c.l.b16 %v7035
    %v7157 = vunpack.c.l.b16 %v7038
    %v7158 = vunpack.c.l.b16 %v7042
    %v7159 = vunpack.c.l.b16 %v7045
    %v7160 = vunpack.c.l.b16 %v7049
    %v7161 = vunpack.c.l.b16 %v7052
    %v7162 = vunpack.c.l.b16 %v7056
    %v7163 = vunpack.c.l.b16 %v7059
    %v7164 = vunpack.c.l.b16 %v7063
    %v7165 = vunpack.c.l.b16 %v7066
    %v7166 = vunpack.c.l.b16 %v7070
    %v7167 = vunpack.c.l.b16 %v7073
    %v7168 = vunpack.c.l.b16 %v7077
    %v7169 = vunpack.c.l.b16 %v7080
    %v7170 = vunpack.c.l.b16 %v7084
    %v7171 = vunpack.c.l.b16 %v7087
    %v7172 = vunpack.c.l.b16 %v7091
    %v7173 = vunpack.c.l.b16 %v7094
    %v7174 = vunpack.c.l.b16 %v7098
    %v7175 = vunpack.c.l.b16 %v7101
    %v7176 = vunpack.c.l.b16 %v7105
    %v7177 = vunpack.c.l.b16 %v7108
    %v7178 = vunpack.c.l.b16 %v7112
    %v7179 = vunpack.c.l.b16 %v7115
    %v7180 = vpack.c.b16 %v7117, %v7116
    %v7181 = vpack.c.b16 %v7119, %v7118
    %v7182 = vpack.c.b16 %v7121, %v7120
    %v7183 = vpack.c.b16 %v7123, %v7122
    %v7184 = vpack.c.b16 %v7125, %v7124
    %v7185 = vpack.c.b16 %v7127, %v7126
    %v7186 = vpack.c.b16 %v7129, %v7128
    %v7187 = vpack.c.b16 %v7131, %v7130
    %v7188 = vpack.c.b16 %v7133, %v7132
    %v7189 = vpack.c.b16 %v7135, %v7134
    %v7190 = vpack.c.b16 %v7137, %v7136
    %v7191 = vpack.c.b16 %v7139, %v7138
    %v7192 = vpack.c.b16 %v7141, %v7140
    %v7193 = vpack.c.b16 %v7143, %v7142
    %v7194 = vpack.c.b16 %v7145, %v7144
    %v7195 = vpack.c.b16 %v7147, %v7146
    %v7196 = vpack.c.b16 %v7149, %v7148
    %v7197 = vpack.c.b16 %v7151, %v7150
    %v7198 = vpack.c.b16 %v7153, %v7152
    %v7199 = vpack.c.b16 %v7155, %v7154
    %v7200 = vpack.c.b16 %v7157, %v7156
    %v7201 = vpack.c.b16 %v7159, %v7158
    %v7202 = vpack.c.b16 %v7161, %v7160
    %v7203 = vpack.c.b16 %v7163, %v7162
    %v7204 = vpack.c.b16 %v7165, %v7164
    %v7205 = vpack.c.b16 %v7167, %v7166
    %v7206 = vpack.c.b16 %v7169, %v7168
    %v7207 = vpack.c.b16 %v7171, %v7170
    %v7208 = vpack.c.b16 %v7173, %v7172
    %v7209 = vpack.c.b16 %v7175, %v7174
    %v7210 = vpack.c.b16 %v7177, %v7176
    %v7211 = vpack.c.b16 %v7179, %v7178
    %7244 = vst.msk [vmem:[#allocation4 + $0x10] sm:$0xff] %vm86, %v7180
    %7245 = vst.msk [vmem:[#allocation4 + $0x28] sm:$0xff] %vm86, %v7181
    %7246 = vst.msk [vmem:[#allocation4 + $0x40] sm:$0xff] %vm86, %v7182
    %7247 = vst.msk [vmem:[#allocation4 + $0x58] sm:$0xff] %vm86, %v7183
    %7248 = vst.msk [vmem:[#allocation4 + $0x70] sm:$0xff] %vm86, %v7184
    %7249 = vst.msk [vmem:[#allocation4 + $0x88] sm:$0xff] %vm86, %v7185
    %7250 = vst.msk [vmem:[#allocation4 + $0xa0] sm:$0xff] %vm86, %v7186
    %7251 = vst.msk [vmem:[#allocation4 + $0xb8] sm:$0xff] %vm86, %v7187
    %7252 = vst.msk [vmem:[#allocation4 + $0xd0] sm:$0xff] %vm86, %v7188
    %7253 = vst.msk [vmem:[#allocation4 + $0xe8] sm:$0xff] %vm86, %v7189
    %7254 = vst.msk [vmem:[#allocation4 + $0x100] sm:$0xff] %vm86, %v7190
    %7255 = vst.msk [vmem:[#allocation4 + $0x118] sm:$0xff] %vm86, %v7191
    %7256 = vst.msk [vmem:[#allocation4 + $0x130] sm:$0xff] %vm86, %v7192
    %7257 = vst.msk [vmem:[#allocation4 + $0x148] sm:$0xff] %vm86, %v7193
    %7258 = vst.msk [vmem:[#allocation4 + $0x160] sm:$0xff] %vm86, %v7194
    %7259 = vst.msk [vmem:[#allocation4 + $0x178] sm:$0xff] %vm86, %v7195
    %7260 = vst.msk [vmem:[#allocation4 + $0x190] sm:$0xff] %vm86, %v7196
    %7261 = vst.msk [vmem:[#allocation4 + $0x1a8] sm:$0xff] %vm86, %v7197
    %7262 = vst.msk [vmem:[#allocation4 + $0x1c0] sm:$0xff] %vm86, %v7198
    %7263 = vst.msk [vmem:[#allocation4 + $0x1d8] sm:$0xff] %vm86, %v7199
    %7264 = vst.msk [vmem:[#allocation4 + $0x1f0] sm:$0xff] %vm86, %v7200
    %7265 = vst.msk [vmem:[#allocation4 + $0x208] sm:$0xff] %vm86, %v7201
    %7266 = vst.msk [vmem:[#allocation4 + $0x220] sm:$0xff] %vm86, %v7202
    %7267 = vst.msk [vmem:[#allocation4 + $0x238] sm:$0xff] %vm86, %v7203
    %7268 = vst.msk [vmem:[#allocation4 + $0x250] sm:$0xff] %vm86, %v7204
    %7269 = vst.msk [vmem:[#allocation4 + $0x268] sm:$0xff] %vm86, %v7205
    %7270 = vst.msk [vmem:[#allocation4 + $0x280] sm:$0xff] %vm86, %v7206
    %7271 = vst.msk [vmem:[#allocation4 + $0x298] sm:$0xff] %vm86, %v7207
    %7272 = vst.msk [vmem:[#allocation4 + $0x2b0] sm:$0xff] %vm86, %v7208
    %7273 = vst.msk [vmem:[#allocation4 + $0x2c8] sm:$0xff] %vm86, %v7209
    %7274 = vst.msk [vmem:[#allocation4 + $0x2e0] sm:$0xff] %vm86, %v7210
    %7275 = vst.msk [vmem:[#allocation4 + $0x2f8] sm:$0xff] %vm86, %v7211
    %v7276 = vld [vmem:[#allocation4] sm:$0xff]
    %v7277 = vld [vmem:[#allocation4 + $0x8] sm:$0xff]
    %v7278 = vld [vmem:[#allocation4 + $0x10] sm:$0xff]
    %v7279 = vld [vmem:[#allocation4 + $0x18] sm:$0xff]
    %v7280 = vld [vmem:[#allocation4 + $0x20] sm:$0xff]
    %v7281 = vld [vmem:[#allocation4 + $0x28] sm:$0xff]
    %v7282 = vld [vmem:[#allocation4 + $0x30] sm:$0xff]
    %v7283 = vld [vmem:[#allocation4 + $0x38] sm:$0xff]
    %v7284 = vld [vmem:[#allocation4 + $0x40] sm:$0xff]
    %v7285 = vld [vmem:[#allocation4 + $0x48] sm:$0xff]
    %v7286 = vld [vmem:[#allocation4 + $0x50] sm:$0xff]
    %v7287 = vld [vmem:[#allocation4 + $0x58] sm:$0xff]
    %v7288 = vld [vmem:[#allocation4 + $0x60] sm:$0xff]
    %v7289 = vld [vmem:[#allocation4 + $0x68] sm:$0xff]
    %v7290 = vld [vmem:[#allocation4 + $0x70] sm:$0xff]
    %v7291 = vld [vmem:[#allocation4 + $0x78] sm:$0xff]
    %v7292 = vld [vmem:[#allocation4 + $0x80] sm:$0xff]
    %v7293 = vld [vmem:[#allocation4 + $0x88] sm:$0xff]
    %v7294 = vld [vmem:[#allocation4 + $0x90] sm:$0xff]
    %v7295 = vld [vmem:[#allocation4 + $0x98] sm:$0xff]
    %v7296 = vld [vmem:[#allocation4 + $0xa0] sm:$0xff]
    %v7297 = vld [vmem:[#allocation4 + $0xa8] sm:$0xff]
    %v7298 = vld [vmem:[#allocation4 + $0xb0] sm:$0xff]
    %v7299 = vld [vmem:[#allocation4 + $0xb8] sm:$0xff]
    %v7300 = vld [vmem:[#allocation4 + $0xc0] sm:$0xff]
    %v7301 = vld [vmem:[#allocation4 + $0xc8] sm:$0xff]
    %v7302 = vld [vmem:[#allocation4 + $0xd0] sm:$0xff]
    %v7303 = vld [vmem:[#allocation4 + $0xd8] sm:$0xff]
    %v7304 = vld [vmem:[#allocation4 + $0xe0] sm:$0xff]
    %v7305 = vld [vmem:[#allocation4 + $0xe8] sm:$0xff]
    %v7306 = vld [vmem:[#allocation4 + $0xf0] sm:$0xff]
    %v7307 = vld [vmem:[#allocation4 + $0xf8] sm:$0xff]
    %v7308 = vld [vmem:[#allocation4 + $0x100] sm:$0xff]
    %v7309 = vld [vmem:[#allocation4 + $0x108] sm:$0xff]
    %v7310 = vld [vmem:[#allocation4 + $0x110] sm:$0xff]
    %v7311 = vld [vmem:[#allocation4 + $0x118] sm:$0xff]
    %v7312 = vld [vmem:[#allocation4 + $0x120] sm:$0xff]
    %v7313 = vld [vmem:[#allocation4 + $0x128] sm:$0xff]
    %v7314 = vld [vmem:[#allocation4 + $0x130] sm:$0xff]
    %v7315 = vld [vmem:[#allocation4 + $0x138] sm:$0xff]
    %v7316 = vld [vmem:[#allocation4 + $0x140] sm:$0xff]
    %v7317 = vld [vmem:[#allocation4 + $0x148] sm:$0xff]
    %v7318 = vld [vmem:[#allocation4 + $0x150] sm:$0xff]
    %v7319 = vld [vmem:[#allocation4 + $0x158] sm:$0xff]
    %v7320 = vld [vmem:[#allocation4 + $0x160] sm:$0xff]
    %v7321 = vld [vmem:[#allocation4 + $0x168] sm:$0xff]
    %v7322 = vld [vmem:[#allocation4 + $0x170] sm:$0xff]
    %v7323 = vld [vmem:[#allocation4 + $0x178] sm:$0xff]
    %v7324 = vld [vmem:[#allocation4 + $0x180] sm:$0xff]
    %v7325 = vld [vmem:[#allocation4 + $0x188] sm:$0xff]
    %v7326 = vld [vmem:[#allocation4 + $0x190] sm:$0xff]
    %v7327 = vld [vmem:[#allocation4 + $0x198] sm:$0xff]
    %v7328 = vld [vmem:[#allocation4 + $0x1a0] sm:$0xff]
    %v7329 = vld [vmem:[#allocation4 + $0x1a8] sm:$0xff]
    %v7330 = vld [vmem:[#allocation4 + $0x1b0] sm:$0xff]
    %v7331 = vld [vmem:[#allocation4 + $0x1b8] sm:$0xff]
    %v7332 = vld [vmem:[#allocation4 + $0x1c0] sm:$0xff]
    %v7333 = vld [vmem:[#allocation4 + $0x1c8] sm:$0xff]
    %v7334 = vld [vmem:[#allocation4 + $0x1d0] sm:$0xff]
    %v7335 = vld [vmem:[#allocation4 + $0x1d8] sm:$0xff]
    %v7336 = vld [vmem:[#allocation4 + $0x1e0] sm:$0xff]
    %v7337 = vld [vmem:[#allocation4 + $0x1e8] sm:$0xff]
    %v7338 = vld [vmem:[#allocation4 + $0x1f0] sm:$0xff]
    %v7339 = vld [vmem:[#allocation4 + $0x1f8] sm:$0xff]
    %v7340 = vld [vmem:[#allocation4 + $0x200] sm:$0xff]
    %v7341 = vld [vmem:[#allocation4 + $0x208] sm:$0xff]
    %v7342 = vld [vmem:[#allocation4 + $0x210] sm:$0xff]
    %v7343 = vld [vmem:[#allocation4 + $0x218] sm:$0xff]
    %v7344 = vld [vmem:[#allocation4 + $0x220] sm:$0xff]
    %v7345 = vld [vmem:[#allocation4 + $0x228] sm:$0xff]
    %v7346 = vld [vmem:[#allocation4 + $0x230] sm:$0xff]
    %v7347 = vld [vmem:[#allocation4 + $0x238] sm:$0xff]
    %v7348 = vld [vmem:[#allocation4 + $0x240] sm:$0xff]
    %v7349 = vld [vmem:[#allocation4 + $0x248] sm:$0xff]
    %v7350 = vld [vmem:[#allocation4 + $0x250] sm:$0xff]
    %v7351 = vld [vmem:[#allocation4 + $0x258] sm:$0xff]
    %v7352 = vld [vmem:[#allocation4 + $0x260] sm:$0xff]
    %v7353 = vld [vmem:[#allocation4 + $0x268] sm:$0xff]
    %v7354 = vld [vmem:[#allocation4 + $0x270] sm:$0xff]
    %v7355 = vld [vmem:[#allocation4 + $0x278] sm:$0xff]
    %v7356 = vld [vmem:[#allocation4 + $0x280] sm:$0xff]
    %v7357 = vld [vmem:[#allocation4 + $0x288] sm:$0xff]
    %v7358 = vld [vmem:[#allocation4 + $0x290] sm:$0xff]
    %v7359 = vld [vmem:[#allocation4 + $0x298] sm:$0xff]
    %v7360 = vld [vmem:[#allocation4 + $0x2a0] sm:$0xff]
    %v7361 = vld [vmem:[#allocation4 + $0x2a8] sm:$0xff]
    %v7362 = vld [vmem:[#allocation4 + $0x2b0] sm:$0xff]
    %v7363 = vld [vmem:[#allocation4 + $0x2b8] sm:$0xff]
    %v7364 = vld [vmem:[#allocation4 + $0x2c0] sm:$0xff]
    %v7365 = vld [vmem:[#allocation4 + $0x2c8] sm:$0xff]
    %v7366 = vld [vmem:[#allocation4 + $0x2d0] sm:$0xff]
    %v7367 = vld [vmem:[#allocation4 + $0x2d8] sm:$0xff]
    %v7368 = vld [vmem:[#allocation4 + $0x2e0] sm:$0xff]
    %v7369 = vld [vmem:[#allocation4 + $0x2e8] sm:$0xff]
    %v7370 = vld [vmem:[#allocation4 + $0x2f0] sm:$0xff]
    %v7371 = vld [vmem:[#allocation4 + $0x2f8] sm:$0xff]
    %v7372 = vld [vmem:[#allocation11] sm:$0xf]
    %v7373 = vld [vmem:[#allocation11 + $0x4] sm:$0xf]
    %v7374 = vld [vmem:[#allocation11 + $0x8] sm:$0xf]
    %v7375 = vld [vmem:[#allocation11 + $0xc] sm:$0xf]
    %v7376 = vld [vmem:[#allocation11 + $0x10] sm:$0xf]
    %v7377 = vld [vmem:[#allocation11 + $0x14] sm:$0xf]
    %v7378 = vld [vmem:[#allocation11 + $0x18] sm:$0xf]
    %v7379 = vld [vmem:[#allocation11 + $0x1c] sm:$0xf]
    %v7380 = vld [vmem:[#allocation11 + $0x20] sm:$0xf]
    %v7381 = vld [vmem:[#allocation11 + $0x24] sm:$0xf]
    %v7382 = vld [vmem:[#allocation11 + $0x28] sm:$0xf]
    %v7383 = vld [vmem:[#allocation11 + $0x2c] sm:$0xf]
    %v7384 = vld [vmem:[#allocation11 + $0x30] sm:$0xf]
    %v7385 = vld [vmem:[#allocation11 + $0x34] sm:$0xf]
    %v7386 = vld [vmem:[#allocation11 + $0x38] sm:$0xf]
    %v7387 = vld [vmem:[#allocation11 + $0x3c] sm:$0xf]
    %v7388 = vld [vmem:[#allocation11 + $0x40] sm:$0xf]
    %v7389 = vld [vmem:[#allocation11 + $0x44] sm:$0xf]
    %v7390 = vld [vmem:[#allocation11 + $0x48] sm:$0xf]
    %v7391 = vld [vmem:[#allocation11 + $0x4c] sm:$0xf]
    %v7392 = vld [vmem:[#allocation11 + $0x50] sm:$0xf]
    %v7393 = vld [vmem:[#allocation11 + $0x54] sm:$0xf]
    %v7394 = vld [vmem:[#allocation11 + $0x58] sm:$0xf]
    %v7395 = vld [vmem:[#allocation11 + $0x5c] sm:$0xf]
    %v7396 = vld [vmem:[#allocation11 + $0x60] sm:$0xf]
    %v7397 = vld [vmem:[#allocation11 + $0x64] sm:$0xf]
    %v7398 = vld [vmem:[#allocation11 + $0x68] sm:$0xf]
    %v7399 = vld [vmem:[#allocation11 + $0x6c] sm:$0xf]
    %v7400 = vld [vmem:[#allocation11 + $0x70] sm:$0xf]
    %v7401 = vld [vmem:[#allocation11 + $0x74] sm:$0xf]
    %v7402 = vld [vmem:[#allocation11 + $0x78] sm:$0xf]
    %v7403 = vld [vmem:[#allocation11 + $0x7c] sm:$0xf]
    %v7404 = vld [vmem:[#allocation11 + $0x80] sm:$0xf]
    %v7405 = vld [vmem:[#allocation11 + $0x84] sm:$0xf]
    %v7406 = vld [vmem:[#allocation11 + $0x88] sm:$0xf]
    %v7407 = vld [vmem:[#allocation11 + $0x8c] sm:$0xf]
    %v7408 = vld [vmem:[#allocation13] sm:$0x1]
    %v7410 = vlaneseq
    %v7411 = vshrl.u32 %v7410, 7
    %v7412 = vsub.s32 0, %v7411
    %v7413 = vrot.slane %v7408, %v7412
    %v7451 = vunpack.c.l.b16 %v7372
    %v7452 = vunpack.c.l.b16 %v7373
    %v7453 = vunpack.c.l.b16 %v7374
    %v7454 = vunpack.c.l.b16 %v7375
    %v7455 = vunpack.c.l.b16 %v7376
    %v7456 = vunpack.c.l.b16 %v7377
    %v7457 = vunpack.c.l.b16 %v7378
    %v7458 = vunpack.c.l.b16 %v7379
    %v7459 = vunpack.c.l.b16 %v7380
    %v7460 = vunpack.c.l.b16 %v7381
    %v7461 = vunpack.c.l.b16 %v7382
    %v7462 = vunpack.c.l.b16 %v7383
    %v7463 = vunpack.c.l.b16 %v7384
    %v7464 = vunpack.c.l.b16 %v7385
    %v7465 = vunpack.c.l.b16 %v7386
    %v7466 = vunpack.c.l.b16 %v7387
    %v7467 = vunpack.c.l.b16 %v7388
    %v7468 = vunpack.c.l.b16 %v7389
    %v7469 = vunpack.c.l.b16 %v7390
    %v7470 = vunpack.c.l.b16 %v7391
    %v7471 = vunpack.c.l.b16 %v7392
    %v7472 = vunpack.c.l.b16 %v7393
    %v7473 = vunpack.c.l.b16 %v7394
    %v7474 = vunpack.c.l.b16 %v7395
    %v7475 = vunpack.c.l.b16 %v7396
    %v7476 = vunpack.c.l.b16 %v7397
    %v7477 = vunpack.c.l.b16 %v7398
    %v7478 = vunpack.c.l.b16 %v7399
    %v7479 = vunpack.c.l.b16 %v7400
    %v7480 = vunpack.c.l.b16 %v7401
    %v7481 = vunpack.c.l.b16 %v7402
    %v7482 = vunpack.c.l.b16 %v7403
    %v7483 = vunpack.c.l.b16 %v7404
    %v7484 = vunpack.c.l.b16 %v7405
    %v7485 = vunpack.c.l.b16 %v7406
    %v7486 = vunpack.c.l.b16 %v7407
    %v7487 = vpack.c.b16 %v7452, %v7451
    %v7488 = vpack.c.b16 %v7454, %v7453
    %v7489 = vpack.c.b16 %v7456, %v7455
    %v7490 = vpack.c.b16 %v7458, %v7457
    %v7491 = vpack.c.b16 %v7460, %v7459
    %v7492 = vpack.c.b16 %v7462, %v7461
    %v7493 = vpack.c.b16 %v7464, %v7463
    %v7494 = vpack.c.b16 %v7466, %v7465
    %v7495 = vpack.c.b16 %v7468, %v7467
    %v7496 = vpack.c.b16 %v7470, %v7469
    %v7497 = vpack.c.b16 %v7472, %v7471
    %v7498 = vpack.c.b16 %v7474, %v7473
    %v7499 = vpack.c.b16 %v7476, %v7475
    %v7500 = vpack.c.b16 %v7478, %v7477
    %v7501 = vpack.c.b16 %v7480, %v7479
    %v7502 = vpack.c.b16 %v7482, %v7481
    %v7503 = vpack.c.b16 %v7484, %v7483
    %v7504 = vpack.c.b16 %v7486, %v7485
    %v7524 = vsel %vm86, %v7278, 0
    %v7527 = vsel %vm86, %v7281, 0
    %v7530 = vsel %vm86, %v7284, 0
    %v7533 = vsel %vm86, %v7287, 0
    %v7536 = vsel %vm86, %v7290, 0
    %v7539 = vsel %vm86, %v7293, 0
    %v7542 = vsel %vm86, %v7296, 0
    %v7545 = vsel %vm86, %v7299, 0
    %v7548 = vsel %vm86, %v7302, 0
    %v7551 = vsel %vm86, %v7305, 0
    %v7554 = vsel %vm86, %v7308, 0
    %v7557 = vsel %vm86, %v7311, 0
    %v7560 = vsel %vm86, %v7314, 0
    %v7563 = vsel %vm86, %v7317, 0
    %v7566 = vsel %vm86, %v7320, 0
    %v7569 = vsel %vm86, %v7323, 0
    %v7572 = vsel %vm86, %v7326, 0
    %v7575 = vsel %vm86, %v7329, 0
    %v7578 = vsel %vm86, %v7332, 0
    %v7581 = vsel %vm86, %v7335, 0
    %v7584 = vsel %vm86, %v7338, 0
    %v7587 = vsel %vm86, %v7341, 0
    %v7590 = vsel %vm86, %v7344, 0
    %v7593 = vsel %vm86, %v7347, 0
    %v7596 = vsel %vm86, %v7350, 0
    %v7599 = vsel %vm86, %v7353, 0
    %v7602 = vsel %vm86, %v7356, 0
    %v7605 = vsel %vm86, %v7359, 0
    %v7608 = vsel %vm86, %v7362, 0
    %v7611 = vsel %vm86, %v7365, 0
    %v7614 = vsel %vm86, %v7368, 0
    %v7617 = vsel %vm86, %v7371, 0
    %7619 = vmatprep.subr.bf16.mxu0 0
    %7620 = vmatpush1.bf16.msra.mxu0 %v7487
    %7621 = vmatprep.subr.bf16.mxu0 0
    %7622 = vmatpush1.bf16.msra.mxu0 %v7488
    %7623 = vmatprep.subr.bf16.mxu0 0
    %7624 = vmatpush1.bf16.msra.mxu0 %v7489
    %7625 = vmatprep.subr.bf16.mxu0 0
    %7626 = vmatpush1.bf16.msra.mxu0 %v7490
    %7627 = vmatprep.subr.bf16.mxu0 0
    %7628 = vmatpush1.bf16.msra.mxu0 %v7491
    %7629 = vmatprep.subr.bf16.mxu0 0
    %7630 = vmatpush1.bf16.msra.mxu0 %v7492
    %7631 = vmatprep.subr.bf16.mxu0 0
    %7632 = vmatpush1.bf16.msra.mxu0 %v7493
    %7633 = vmatprep.subr.bf16.mxu0 0
    %7634 = vmatpush1.bf16.msra.mxu0 %v7494
    %7635 = vmatprep.subr.bf16.mxu0 0
    %7636 = vmatpush1.bf16.msra.mxu0 %v7495
    %7637 = vmatprep.subr.bf16.mxu0 0
    %7638 = vmatpush1.bf16.msra.mxu0 %v7496
    %7639 = vmatprep.subr.bf16.mxu0 0
    %7640 = vmatpush1.bf16.msra.mxu0 %v7497
    %7641 = vmatprep.subr.bf16.mxu0 0
    %7642 = vmatpush1.bf16.msra.mxu0 %v7498
    %7643 = vmatprep.subr.bf16.mxu0 0
    %7644 = vmatpush1.bf16.msra.mxu0 %v7499
    %7645 = vmatprep.subr.bf16.mxu0 0
    %7646 = vmatpush1.bf16.msra.mxu0 %v7500
    %7647 = vmatprep.subr.bf16.mxu0 0
    %7648 = vmatpush1.bf16.msra.mxu0 %v7501
    %7649 = vmatprep.subr.bf16.mxu0 0
    %7650 = vmatpush1.bf16.msra.mxu0 %v7502
    %7651 = vmatprep.mubr.bf16.mxu0 %v7277
    %7652 = vmatmul.mubr.bf16.gmra.mrb[0].mxu0 %v7276
    %v7653 = vpop.f32.mrb[0].mxu0
    %v7654 = vadd.f32 %v7413, %v7653
    %v7655 = vpop.f32.mrb[0].mxu0
    %v7656 = vpop.f32.mrb[0].mxu0
    %v7657 = vadd.f32 %v7413, %v7656
    %v7658 = vpop.f32.mrb[0].mxu0
    %7659 = vmatprep.mubr.bf16.mxu0 %v7280
    %7660 = vmatmul.mubr.bf16.gmra.mrb[0].mxu0 %v7279
    %v7661 = vpop.f32.mrb[0].mxu0
    %v7662 = vadd.f32 %v7413, %v7661
    %v7663 = vpop.f32.mrb[0].mxu0
    %v7664 = vpop.f32.mrb[0].mxu0
    %v7665 = vadd.f32 %v7413, %v7664
    %v7666 = vpop.f32.mrb[0].mxu0
    %7667 = vmatprep.mubr.bf16.mxu0 %v7283
    %7668 = vmatmul.mubr.bf16.gmra.mrb[0].mxu0 %v7282
    %v7669 = vpop.f32.mrb[0].mxu0
    %v7670 = vadd.f32 %v7413, %v7669
    %v7671 = vpop.f32.mrb[0].mxu0
    %v7672 = vpop.f32.mrb[0].mxu0
    %v7673 = vadd.f32 %v7413, %v7672
    %v7674 = vpop.f32.mrb[0].mxu0
    %7675 = vmatprep.mubr.bf16.mxu0 %v7286
    %7676 = vmatmul.mubr.bf16.gmra.mrb[0].mxu0 %v7285
    %v7677 = vpop.f32.mrb[0].mxu0
    %v7678 = vadd.f32 %v7413, %v7677
    %v7679 = vpop.f32.mrb[0].mxu0
    %v7680 = vpop.f32.mrb[0].mxu0
    %v7681 = vadd.f32 %v7413, %v7680
    %v7682 = vpop.f32.mrb[0].mxu0
    %7683 = vmatprep.mubr.bf16.mxu0 %v7289
    %7684 = vmatmul.mubr.bf16.gmra.mrb[0].mxu0 %v7288
    %v7685 = vpop.f32.mrb[0].mxu0
    %v7686 = vadd.f32 %v7413, %v7685
    %v7687 = vpop.f32.mrb[0].mxu0
    %v7688 = vpop.f32.mrb[0].mxu0
    %v7689 = vadd.f32 %v7413, %v7688
    %v7690 = vpop.f32.mrb[0].mxu0
    %7691 = vmatprep.mubr.bf16.mxu0 %v7292
    %7692 = vmatmul.mubr.bf16.gmra.mrb[0].mxu0 %v7291
    %v7693 = vpop.f32.mrb[0].mxu0
    %v7694 = vadd.f32 %v7413, %v7693
    %v7695 = vpop.f32.mrb[0].mxu0
    %v7696 = vpop.f32.mrb[0].mxu0
    %v7697 = vadd.f32 %v7413, %v7696
    %v7698 = vpop.f32.mrb[0].mxu0
    %7699 = vmatprep.mubr.bf16.mxu0 %v7295
    %7700 = vmatmul.mubr.bf16.gmra.mrb[0].mxu0 %v7294
    %v7701 = vpop.f32.mrb[0].mxu0
    %v7702 = vadd.f32 %v7413, %v7701
    %v7703 = vpop.f32.mrb[0].mxu0
    %v7704 = vpop.f32.mrb[0].mxu0
    %v7705 = vadd.f32 %v7413, %v7704
    %v7706 = vpop.f32.mrb[0].mxu0
    %7707 = vmatprep.mubr.bf16.mxu0 %v7298
    %7708 = vmatmul.mubr.bf16.gmra.mrb[0].mxu0 %v7297
    %v7709 = vpop.f32.mrb[0].mxu0
    %v7710 = vadd.f32 %v7413, %v7709
    %v7711 = vpop.f32.mrb[0].mxu0
    %v7712 = vpop.f32.mrb[0].mxu0
    %v7713 = vadd.f32 %v7413, %v7712
    %v7714 = vpop.f32.mrb[0].mxu0
    %7715 = vmatprep.mubr.bf16.mxu0 %v7301
    %7716 = vmatmul.mubr.bf16.gmra.mrb[0].mxu0 %v7300
    %v7717 = vpop.f32.mrb[0].mxu0
    %v7718 = vadd.f32 %v7413, %v7717
    %v7719 = vpop.f32.mrb[0].mxu0
    %v7720 = vpop.f32.mrb[0].mxu0
    %v7721 = vadd.f32 %v7413, %v7720
    %v7722 = vpop.f32.mrb[0].mxu0
    %7723 = vmatprep.mubr.bf16.mxu0 %v7304
    %7724 = vmatmul.mubr.bf16.gmra.mrb[0].mxu0 %v7303
    %v7725 = vpop.f32.mrb[0].mxu0
    %v7726 = vadd.f32 %v7413, %v7725
    %v7727 = vpop.f32.mrb[0].mxu0
    %v7728 = vpop.f32.mrb[0].mxu0
    %v7729 = vadd.f32 %v7413, %v7728
    %v7730 = vpop.f32.mrb[0].mxu0
    %7731 = vmatprep.mubr.bf16.mxu0 %v7307
    %7732 = vmatmul.mubr.bf16.gmra.mrb[0].mxu0 %v7306
    %v7733 = vpop.f32.mrb[0].mxu0
    %v7734 = vadd.f32 %v7413, %v7733
    %v7735 = vpop.f32.mrb[0].mxu0
    %v7736 = vpop.f32.mrb[0].mxu0
    %v7737 = vadd.f32 %v7413, %v7736
    %v7738 = vpop.f32.mrb[0].mxu0
    %7739 = vmatprep.mubr.bf16.mxu0 %v7310
    %7740 = vmatmul.mubr.bf16.gmra.mrb[0].mxu0 %v7309
    %v7741 = vpop.f32.mrb[0].mxu0
    %v7742 = vadd.f32 %v7413, %v7741
    %v7743 = vpop.f32.mrb[0].mxu0
    %v7744 = vpop.f32.mrb[0].mxu0
    %v7745 = vadd.f32 %v7413, %v7744
    %v7746 = vpop.f32.mrb[0].mxu0
    %7747 = vmatprep.mubr.bf16.mxu0 %v7313
    %7748 = vmatmul.mubr.bf16.gmra.mrb[0].mxu0 %v7312
    %v7749 = vpop.f32.mrb[0].mxu0
    %v7750 = vadd.f32 %v7413, %v7749
    %v7751 = vpop.f32.mrb[0].mxu0
    %v7752 = vpop.f32.mrb[0].mxu0
    %v7753 = vadd.f32 %v7413, %v7752
    %v7754 = vpop.f32.mrb[0].mxu0
    %7755 = vmatprep.mubr.bf16.mxu0 %v7316
    %7756 = vmatmul.mubr.bf16.gmra.mrb[0].mxu0 %v7315
    %v7757 = vpop.f32.mrb[0].mxu0
    %v7758 = vadd.f32 %v7413, %v7757
    %v7759 = vpop.f32.mrb[0].mxu0
    %v7760 = vpop.f32.mrb[0].mxu0
    %v7761 = vadd.f32 %v7413, %v7760
    %v7762 = vpop.f32.mrb[0].mxu0
    %7763 = vmatprep.mubr.bf16.mxu0 %v7319
    %7764 = vmatmul.mubr.bf16.gmra.mrb[0].mxu0 %v7318
    %v7765 = vpop.f32.mrb[0].mxu0
    %v7766 = vadd.f32 %v7413, %v7765
    %v7767 = vpop.f32.mrb[0].mxu0
    %v7768 = vpop.f32.mrb[0].mxu0
    %v7769 = vadd.f32 %v7413, %v7768
    %v7770 = vpop.f32.mrb[0].mxu0
    %7771 = vmatprep.mubr.bf16.mxu0 %v7322
    %7772 = vmatmul.mubr.bf16.gmra.mrb[0].mxu0 %v7321
    %v7773 = vpop.f32.mrb[0].mxu0
    %v7774 = vadd.f32 %v7413, %v7773
    %v7775 = vpop.f32.mrb[0].mxu0
    %v7776 = vpop.f32.mrb[0].mxu0
    %v7777 = vadd.f32 %v7413, %v7776
    %v7778 = vpop.f32.mrb[0].mxu0
    %7779 = vmatprep.mubr.bf16.mxu0 %v7325
    %7780 = vmatmul.mubr.bf16.gmra.mrb[0].mxu0 %v7324
    %v7781 = vpop.f32.mrb[0].mxu0
    %v7782 = vadd.f32 %v7413, %v7781
    %v7783 = vpop.f32.mrb[0].mxu0
    %v7784 = vpop.f32.mrb[0].mxu0
    %v7785 = vadd.f32 %v7413, %v7784
    %v7786 = vpop.f32.mrb[0].mxu0
    %7787 = vmatprep.mubr.bf16.mxu0 %v7328
    %7788 = vmatmul.mubr.bf16.gmra.mrb[0].mxu0 %v7327
    %v7789 = vpop.f32.mrb[0].mxu0
    %v7790 = vadd.f32 %v7413, %v7789
    %v7791 = vpop.f32.mrb[0].mxu0
    %v7792 = vpop.f32.mrb[0].mxu0
    %v7793 = vadd.f32 %v7413, %v7792
    %v7794 = vpop.f32.mrb[0].mxu0
    %7795 = vmatprep.mubr.bf16.mxu0 %v7331
    %7796 = vmatmul.mubr.bf16.gmra.mrb[0].mxu0 %v7330
    %v7797 = vpop.f32.mrb[0].mxu0
    %v7798 = vadd.f32 %v7413, %v7797
    %v7799 = vpop.f32.mrb[0].mxu0
    %v7800 = vpop.f32.mrb[0].mxu0
    %v7801 = vadd.f32 %v7413, %v7800
    %v7802 = vpop.f32.mrb[0].mxu0
    %7803 = vmatprep.mubr.bf16.mxu0 %v7334
    %7804 = vmatmul.mubr.bf16.gmra.mrb[0].mxu0 %v7333
    %v7805 = vpop.f32.mrb[0].mxu0
    %v7806 = vadd.f32 %v7413, %v7805
    %v7807 = vpop.f32.mrb[0].mxu0
    %v7808 = vpop.f32.mrb[0].mxu0
    %v7809 = vadd.f32 %v7413, %v7808
    %v7810 = vpop.f32.mrb[0].mxu0
    %7811 = vmatprep.mubr.bf16.mxu0 %v7337
    %7812 = vmatmul.mubr.bf16.gmra.mrb[0].mxu0 %v7336
    %v7813 = vpop.f32.mrb[0].mxu0
    %v7814 = vadd.f32 %v7413, %v7813
    %v7815 = vpop.f32.mrb[0].mxu0
    %v7816 = vpop.f32.mrb[0].mxu0
    %v7817 = vadd.f32 %v7413, %v7816
    %v7818 = vpop.f32.mrb[0].mxu0
    %7819 = vmatprep.mubr.bf16.mxu0 %v7340
    %7820 = vmatmul.mubr.bf16.gmra.mrb[0].mxu0 %v7339
    %v7821 = vpop.f32.mrb[0].mxu0
    %v7822 = vadd.f32 %v7413, %v7821
    %v7823 = vpop.f32.mrb[0].mxu0
    %v7824 = vpop.f32.mrb[0].mxu0
    %v7825 = vadd.f32 %v7413, %v7824
    %v7826 = vpop.f32.mrb[0].mxu0
    %7827 = vmatprep.mubr.bf16.mxu0 %v7343
    %7828 = vmatmul.mubr.bf16.gmra.mrb[0].mxu0 %v7342
    %v7829 = vpop.f32.mrb[0].mxu0
    %v7830 = vadd.f32 %v7413, %v7829
    %v7831 = vpop.f32.mrb[0].mxu0
    %v7832 = vpop.f32.mrb[0].mxu0
    %v7833 = vadd.f32 %v7413, %v7832
    %v7834 = vpop.f32.mrb[0].mxu0
    %7835 = vmatprep.mubr.bf16.mxu0 %v7346
    %7836 = vmatmul.mubr.bf16.gmra.mrb[0].mxu0 %v7345
    %v7837 = vpop.f32.mrb[0].mxu0
    %v7838 = vadd.f32 %v7413, %v7837
    %v7839 = vpop.f32.mrb[0].mxu0
    %v7840 = vpop.f32.mrb[0].mxu0
    %v7841 = vadd.f32 %v7413, %v7840
    %v7842 = vpop.f32.mrb[0].mxu0
    %7843 = vmatprep.mubr.bf16.mxu0 %v7349
    %7844 = vmatmul.mubr.bf16.gmra.mrb[0].mxu0 %v7348
    %v7845 = vpop.f32.mrb[0].mxu0
    %v7846 = vadd.f32 %v7413, %v7845
    %v7847 = vpop.f32.mrb[0].mxu0
    %v7848 = vpop.f32.mrb[0].mxu0
    %v7849 = vadd.f32 %v7413, %v7848
    %v7850 = vpop.f32.mrb[0].mxu0
    %7851 = vmatprep.mubr.bf16.mxu0 %v7352
    %7852 = vmatmul.mubr.bf16.gmra.mrb[0].mxu0 %v7351
    %v7853 = vpop.f32.mrb[0].mxu0
    %v7854 = vadd.f32 %v7413, %v7853
    %v7855 = vpop.f32.mrb[0].mxu0
    %v7856 = vpop.f32.mrb[0].mxu0
    %v7857 = vadd.f32 %v7413, %v7856
    %v7858 = vpop.f32.mrb[0].mxu0
    %7859 = vmatprep.mubr.bf16.mxu0 %v7355
    %7860 = vmatmul.mubr.bf16.gmra.mrb[0].mxu0 %v7354
    %v7861 = vpop.f32.mrb[0].mxu0
    %v7862 = vadd.f32 %v7413, %v7861
    %v7863 = vpop.f32.mrb[0].mxu0
    %v7864 = vpop.f32.mrb[0].mxu0
    %v7865 = vadd.f32 %v7413, %v7864
    %v7866 = vpop.f32.mrb[0].mxu0
    %7867 = vmatprep.mubr.bf16.mxu0 %v7358
    %7868 = vmatmul.mubr.bf16.gmra.mrb[0].mxu0 %v7357
    %v7869 = vpop.f32.mrb[0].mxu0
    %v7870 = vadd.f32 %v7413, %v7869
    %v7871 = vpop.f32.mrb[0].mxu0
    %v7872 = vpop.f32.mrb[0].mxu0
    %v7873 = vadd.f32 %v7413, %v7872
    %v7874 = vpop.f32.mrb[0].mxu0
    %7875 = vmatprep.mubr.bf16.mxu0 %v7361
    %7876 = vmatmul.mubr.bf16.gmra.mrb[0].mxu0 %v7360
    %v7877 = vpop.f32.mrb[0].mxu0
    %v7878 = vadd.f32 %v7413, %v7877
    %v7879 = vpop.f32.mrb[0].mxu0
    %v7880 = vpop.f32.mrb[0].mxu0
    %v7881 = vadd.f32 %v7413, %v7880
    %v7882 = vpop.f32.mrb[0].mxu0
    %7883 = vmatprep.mubr.bf16.mxu0 %v7364
    %7884 = vmatmul.mubr.bf16.gmra.mrb[0].mxu0 %v7363
    %v7885 = vpop.f32.mrb[0].mxu0
    %v7886 = vadd.f32 %v7413, %v7885
    %v7887 = vpop.f32.mrb[0].mxu0
    %v7888 = vpop.f32.mrb[0].mxu0
    %v7889 = vadd.f32 %v7413, %v7888
    %v7890 = vpop.f32.mrb[0].mxu0
    %7891 = vmatprep.mubr.bf16.mxu0 %v7367
    %7892 = vmatmul.mubr.bf16.gmra.mrb[0].mxu0 %v7366
    %v7893 = vpop.f32.mrb[0].mxu0
    %v7894 = vadd.f32 %v7413, %v7893
    %v7895 = vpop.f32.mrb[0].mxu0
    %v7896 = vpop.f32.mrb[0].mxu0
    %v7897 = vadd.f32 %v7413, %v7896
    %v7898 = vpop.f32.mrb[0].mxu0
    %7899 = vmatprep.mubr.bf16.mxu0 %v7370
    %7900 = vmatmul.mubr.bf16.gmra.mrb[0].mxu0 %v7369
    %v7901 = vpop.f32.mrb[0].mxu0
    %v7902 = vadd.f32 %v7413, %v7901
    %v7903 = vpop.f32.mrb[0].mxu0
    %v7904 = vpop.f32.mrb[0].mxu0
    %v7905 = vadd.f32 %v7413, %v7904
    %v7906 = vpop.f32.mrb[0].mxu0
    %7907 = vdwg.mxu0
    %7908 = vmatprep.subr.bf16.mxu0 0
    %7909 = vmatpush1.bf16.msra.mxu0 %v7503
    %7910 = vmatprep.subr.bf16.mxu0 0
    %7911 = vmatpush1.bf16.msra.mxu0 %v7504
    %7912 = vmatprep.subr.bf16.mxu0 0
    %7913 = vmatpush1.bf16.msra.mxu0 0
    %7914 = vmatprep.subr.bf16.mxu0 0
    %7915 = vmatpush1.bf16.msra.mxu0 0
    %7916 = vmatprep.subr.bf16.mxu0 0
    %7917 = vmatpush1.bf16.msra.mxu0 0
    %7918 = vmatprep.subr.bf16.mxu0 0
    %7919 = vmatpush1.bf16.msra.mxu0 0
    %7920 = vmatprep.subr.bf16.mxu0 0
    %7921 = vmatpush1.bf16.msra.mxu0 0
    %7922 = vmatprep.subr.bf16.mxu0 0
    %7923 = vmatpush1.bf16.msra.mxu0 0
    %7924 = vmatprep.subr.bf16.mxu0 0
    %7925 = vmatpush1.bf16.msra.mxu0 0
    %7926 = vmatprep.subr.bf16.mxu0 0
    %7927 = vmatpush1.bf16.msra.mxu0 0
    %7928 = vmatprep.subr.bf16.mxu0 0
    %7929 = vmatpush1.bf16.msra.mxu0 0
    %7930 = vmatprep.subr.bf16.mxu0 0
    %7931 = vmatpush1.bf16.msra.mxu0 0
    %7932 = vmatprep.subr.bf16.mxu0 0
    %7933 = vmatpush1.bf16.msra.mxu0 0
    %7934 = vmatprep.subr.bf16.mxu0 0
    %7935 = vmatpush1.bf16.msra.mxu0 0
    %7936 = vmatprep.subr.bf16.mxu0 0
    %7937 = vmatpush1.bf16.msra.mxu0 0
    %7938 = vmatprep.subr.bf16.mxu0 0
    %7939 = vmatpush1.bf16.msra.mxu0 0
    %7940 = vmatprep.mubr.bf16.mxu0 0
    %7941 = vmatmul.mubr.bf16.gmra.mrb[0].mxu0 %v7524
    %v7942 = vpop.f32.mrb[0].mxu0
    %v7943 = vadd.f32 %v7654, %v7942
    %v7944 = vpop.f32.mrb[0].mxu0
    %v7945 = vpop.f32.mrb[0].mxu0
    %v7946 = vadd.f32 %v7657, %v7945
    %v7947 = vpop.f32.mrb[0].mxu0
    %7948 = vmatprep.mubr.bf16.mxu0 0
    %7949 = vmatmul.mubr.bf16.gmra.mrb[0].mxu0 %v7527
    %v7950 = vpop.f32.mrb[0].mxu0
    %v7951 = vadd.f32 %v7662, %v7950
    %v7952 = vpop.f32.mrb[0].mxu0
    %v7953 = vpop.f32.mrb[0].mxu0
    %v7954 = vadd.f32 %v7665, %v7953
    %v7955 = vpop.f32.mrb[0].mxu0
    %7956 = vmatprep.mubr.bf16.mxu0 0
    %7957 = vmatmul.mubr.bf16.gmra.mrb[0].mxu0 %v7530
    %v7958 = vpop.f32.mrb[0].mxu0
    %v7959 = vadd.f32 %v7670, %v7958
    %v7960 = vpop.f32.mrb[0].mxu0
    %v7961 = vpop.f32.mrb[0].mxu0
    %v7962 = vadd.f32 %v7673, %v7961
    %v7963 = vpop.f32.mrb[0].mxu0
    %7964 = vmatprep.mubr.bf16.mxu0 0
    %7965 = vmatmul.mubr.bf16.gmra.mrb[0].mxu0 %v7533
    %v7966 = vpop.f32.mrb[0].mxu0
    %v7967 = vadd.f32 %v7678, %v7966
    %v7968 = vpop.f32.mrb[0].mxu0
    %v7969 = vpop.f32.mrb[0].mxu0
    %v7970 = vadd.f32 %v7681, %v7969
    %v7971 = vpop.f32.mrb[0].mxu0
    %7972 = vmatprep.mubr.bf16.mxu0 0
    %7973 = vmatmul.mubr.bf16.gmra.mrb[0].mxu0 %v7536
    %v7974 = vpop.f32.mrb[0].mxu0
    %v7975 = vadd.f32 %v7686, %v7974
    %v7976 = vpop.f32.mrb[0].mxu0
    %v7977 = vpop.f32.mrb[0].mxu0
    %v7978 = vadd.f32 %v7689, %v7977
    %v7979 = vpop.f32.mrb[0].mxu0
    %7980 = vmatprep.mubr.bf16.mxu0 0
    %7981 = vmatmul.mubr.bf16.gmra.mrb[0].mxu0 %v7539
    %v7982 = vpop.f32.mrb[0].mxu0
    %v7983 = vadd.f32 %v7694, %v7982
    %v7984 = vpop.f32.mrb[0].mxu0
    %v7985 = vpop.f32.mrb[0].mxu0
    %v7986 = vadd.f32 %v7697, %v7985
    %v7987 = vpop.f32.mrb[0].mxu0
    %7988 = vmatprep.mubr.bf16.mxu0 0
    %7989 = vmatmul.mubr.bf16.gmra.mrb[0].mxu0 %v7542
    %v7990 = vpop.f32.mrb[0].mxu0
    %v7991 = vadd.f32 %v7702, %v7990
    %v7992 = vpop.f32.mrb[0].mxu0
    %v7993 = vpop.f32.mrb[0].mxu0
    %v7994 = vadd.f32 %v7705, %v7993
    %v7995 = vpop.f32.mrb[0].mxu0
    %7996 = vmatprep.mubr.bf16.mxu0 0
    %7997 = vmatmul.mubr.bf16.gmra.mrb[0].mxu0 %v7545
    %v7998 = vpop.f32.mrb[0].mxu0
    %v7999 = vadd.f32 %v7710, %v7998
    %v8000 = vpop.f32.mrb[0].mxu0
    %v8001 = vpop.f32.mrb[0].mxu0
    %v8002 = vadd.f32 %v7713, %v8001
    %v8003 = vpop.f32.mrb[0].mxu0
    %8004 = vmatprep.mubr.bf16.mxu0 0
    %8005 = vmatmul.mubr.bf16.gmra.mrb[0].mxu0 %v7548
    %v8006 = vpop.f32.mrb[0].mxu0
    %v8007 = vadd.f32 %v7718, %v8006
    %v8008 = vpop.f32.mrb[0].mxu0
    %v8009 = vpop.f32.mrb[0].mxu0
    %v8010 = vadd.f32 %v7721, %v8009
    %v8011 = vpop.f32.mrb[0].mxu0
    %8012 = vmatprep.mubr.bf16.mxu0 0
    %8013 = vmatmul.mubr.bf16.gmra.mrb[0].mxu0 %v7551
    %v8014 = vpop.f32.mrb[0].mxu0
    %v8015 = vadd.f32 %v7726, %v8014
    %v8016 = vpop.f32.mrb[0].mxu0
    %v8017 = vpop.f32.mrb[0].mxu0
    %v8018 = vadd.f32 %v7729, %v8017
    %v8019 = vpop.f32.mrb[0].mxu0
    %8020 = vmatprep.mubr.bf16.mxu0 0
    %8021 = vmatmul.mubr.bf16.gmra.mrb[0].mxu0 %v7554
    %v8022 = vpop.f32.mrb[0].mxu0
    %v8023 = vadd.f32 %v7734, %v8022
    %v8024 = vpop.f32.mrb[0].mxu0
    %v8025 = vpop.f32.mrb[0].mxu0
    %v8026 = vadd.f32 %v7737, %v8025
    %v8027 = vpop.f32.mrb[0].mxu0
    %8028 = vmatprep.mubr.bf16.mxu0 0
    %8029 = vmatmul.mubr.bf16.gmra.mrb[0].mxu0 %v7557
    %v8030 = vpop.f32.mrb[0].mxu0
    %v8031 = vadd.f32 %v7742, %v8030
    %v8032 = vpop.f32.mrb[0].mxu0
    %v8033 = vpop.f32.mrb[0].mxu0
    %v8034 = vadd.f32 %v7745, %v8033
    %v8035 = vpop.f32.mrb[0].mxu0
    %8036 = vmatprep.mubr.bf16.mxu0 0
    %8037 = vmatmul.mubr.bf16.gmra.mrb[0].mxu0 %v7560
    %v8038 = vpop.f32.mrb[0].mxu0
    %v8039 = vadd.f32 %v7750, %v8038
    %v8040 = vpop.f32.mrb[0].mxu0
    %v8041 = vpop.f32.mrb[0].mxu0
    %v8042 = vadd.f32 %v7753, %v8041
    %v8043 = vpop.f32.mrb[0].mxu0
    %8044 = vmatprep.mubr.bf16.mxu0 0
    %8045 = vmatmul.mubr.bf16.gmra.mrb[0].mxu0 %v7563
    %v8046 = vpop.f32.mrb[0].mxu0
    %v8047 = vadd.f32 %v7758, %v8046
    %v8048 = vpop.f32.mrb[0].mxu0
    %v8049 = vpop.f32.mrb[0].mxu0
    %v8050 = vadd.f32 %v7761, %v8049
    %v8051 = vpop.f32.mrb[0].mxu0
    %8052 = vmatprep.mubr.bf16.mxu0 0
    %8053 = vmatmul.mubr.bf16.gmra.mrb[0].mxu0 %v7566
    %v8054 = vpop.f32.mrb[0].mxu0
    %v8055 = vadd.f32 %v7766, %v8054
    %v8056 = vpop.f32.mrb[0].mxu0
    %v8057 = vpop.f32.mrb[0].mxu0
    %v8058 = vadd.f32 %v7769, %v8057
    %v8059 = vpop.f32.mrb[0].mxu0
    %8060 = vmatprep.mubr.bf16.mxu0 0
    %8061 = vmatmul.mubr.bf16.gmra.mrb[0].mxu0 %v7569
    %v8062 = vpop.f32.mrb[0].mxu0
    %v8063 = vadd.f32 %v7774, %v8062
    %v8064 = vpop.f32.mrb[0].mxu0
    %v8065 = vpop.f32.mrb[0].mxu0
    %v8066 = vadd.f32 %v7777, %v8065
    %v8067 = vpop.f32.mrb[0].mxu0
    %8068 = vmatprep.mubr.bf16.mxu0 0
    %8069 = vmatmul.mubr.bf16.gmra.mrb[0].mxu0 %v7572
    %v8070 = vpop.f32.mrb[0].mxu0
    %v8071 = vadd.f32 %v7782, %v8070
    %v8072 = vpop.f32.mrb[0].mxu0
    %v8073 = vpop.f32.mrb[0].mxu0
    %v8074 = vadd.f32 %v7785, %v8073
    %v8075 = vpop.f32.mrb[0].mxu0
    %8076 = vmatprep.mubr.bf16.mxu0 0
    %8077 = vmatmul.mubr.bf16.gmra.mrb[0].mxu0 %v7575
    %v8078 = vpop.f32.mrb[0].mxu0
    %v8079 = vadd.f32 %v7790, %v8078
    %v8080 = vpop.f32.mrb[0].mxu0
    %v8081 = vpop.f32.mrb[0].mxu0
    %v8082 = vadd.f32 %v7793, %v8081
    %v8083 = vpop.f32.mrb[0].mxu0
    %8084 = vmatprep.mubr.bf16.mxu0 0
    %8085 = vmatmul.mubr.bf16.gmra.mrb[0].mxu0 %v7578
    %v8086 = vpop.f32.mrb[0].mxu0
    %v8087 = vadd.f32 %v7798, %v8086
    %v8088 = vpop.f32.mrb[0].mxu0
    %v8089 = vpop.f32.mrb[0].mxu0
    %v8090 = vadd.f32 %v7801, %v8089
    %v8091 = vpop.f32.mrb[0].mxu0
    %8092 = vmatprep.mubr.bf16.mxu0 0
    %8093 = vmatmul.mubr.bf16.gmra.mrb[0].mxu0 %v7581
    %v8094 = vpop.f32.mrb[0].mxu0
    %v8095 = vadd.f32 %v7806, %v8094
    %v8096 = vpop.f32.mrb[0].mxu0
    %v8097 = vpop.f32.mrb[0].mxu0
    %v8098 = vadd.f32 %v7809, %v8097
    %v8099 = vpop.f32.mrb[0].mxu0
    %8100 = vmatprep.mubr.bf16.mxu0 0
    %8101 = vmatmul.mubr.bf16.gmra.mrb[0].mxu0 %v7584
    %v8102 = vpop.f32.mrb[0].mxu0
    %v8103 = vadd.f32 %v7814, %v8102
    %v8104 = vpop.f32.mrb[0].mxu0
    %v8105 = vpop.f32.mrb[0].mxu0
    %v8106 = vadd.f32 %v7817, %v8105
    %v8107 = vpop.f32.mrb[0].mxu0
    %8108 = vmatprep.mubr.bf16.mxu0 0
    %8109 = vmatmul.mubr.bf16.gmra.mrb[0].mxu0 %v7587
    %v8110 = vpop.f32.mrb[0].mxu0
    %v8111 = vadd.f32 %v7822, %v8110
    %v8112 = vpop.f32.mrb[0].mxu0
    %v8113 = vpop.f32.mrb[0].mxu0
    %v8114 = vadd.f32 %v7825, %v8113
    %v8115 = vpop.f32.mrb[0].mxu0
    %8116 = vmatprep.mubr.bf16.mxu0 0
    %8117 = vmatmul.mubr.bf16.gmra.mrb[0].mxu0 %v7590
    %v8118 = vpop.f32.mrb[0].mxu0
    %v8119 = vadd.f32 %v7830, %v8118
    %v8120 = vpop.f32.mrb[0].mxu0
    %v8121 = vpop.f32.mrb[0].mxu0
    %v8122 = vadd.f32 %v7833, %v8121
    %v8123 = vpop.f32.mrb[0].mxu0
    %8124 = vmatprep.mubr.bf16.mxu0 0
    %8125 = vmatmul.mubr.bf16.gmra.mrb[0].mxu0 %v7593
    %v8126 = vpop.f32.mrb[0].mxu0
    %v8127 = vadd.f32 %v7838, %v8126
    %v8128 = vpop.f32.mrb[0].mxu0
    %v8129 = vpop.f32.mrb[0].mxu0
    %v8130 = vadd.f32 %v7841, %v8129
    %v8131 = vpop.f32.mrb[0].mxu0
    %8132 = vmatprep.mubr.bf16.mxu0 0
    %8133 = vmatmul.mubr.bf16.gmra.mrb[0].mxu0 %v7596
    %v8134 = vpop.f32.mrb[0].mxu0
    %v8135 = vadd.f32 %v7846, %v8134
    %v8136 = vpop.f32.mrb[0].mxu0
    %v8137 = vpop.f32.mrb[0].mxu0
    %v8138 = vadd.f32 %v7849, %v8137
    %v8139 = vpop.f32.mrb[0].mxu0
    %8140 = vmatprep.mubr.bf16.mxu0 0
    %8141 = vmatmul.mubr.bf16.gmra.mrb[0].mxu0 %v7599
    %v8142 = vpop.f32.mrb[0].mxu0
    %v8143 = vadd.f32 %v7854, %v8142
    %v8144 = vpop.f32.mrb[0].mxu0
    %v8145 = vpop.f32.mrb[0].mxu0
    %v8146 = vadd.f32 %v7857, %v8145
    %v8147 = vpop.f32.mrb[0].mxu0
    %8148 = vmatprep.mubr.bf16.mxu0 0
    %8149 = vmatmul.mubr.bf16.gmra.mrb[0].mxu0 %v7602
    %v8150 = vpop.f32.mrb[0].mxu0
    %v8151 = vadd.f32 %v7862, %v8150
    %v8152 = vpop.f32.mrb[0].mxu0
    %v8153 = vpop.f32.mrb[0].mxu0
    %v8154 = vadd.f32 %v7865, %v8153
    %v8155 = vpop.f32.mrb[0].mxu0
    %8156 = vmatprep.mubr.bf16.mxu0 0
    %8157 = vmatmul.mubr.bf16.gmra.mrb[0].mxu0 %v7605
    %v8158 = vpop.f32.mrb[0].mxu0
    %v8159 = vadd.f32 %v7870, %v8158
    %v8160 = vpop.f32.mrb[0].mxu0
    %v8161 = vpop.f32.mrb[0].mxu0
    %v8162 = vadd.f32 %v7873, %v8161
    %v8163 = vpop.f32.mrb[0].mxu0
    %8164 = vmatprep.mubr.bf16.mxu0 0
    %8165 = vmatmul.mubr.bf16.gmra.mrb[0].mxu0 %v7608
    %v8166 = vpop.f32.mrb[0].mxu0
    %v8167 = vadd.f32 %v7878, %v8166
    %v8168 = vpop.f32.mrb[0].mxu0
    %v8169 = vpop.f32.mrb[0].mxu0
    %v8170 = vadd.f32 %v7881, %v8169
    %v8171 = vpop.f32.mrb[0].mxu0
    %8172 = vmatprep.mubr.bf16.mxu0 0
    %8173 = vmatmul.mubr.bf16.gmra.mrb[0].mxu0 %v7611
    %v8174 = vpop.f32.mrb[0].mxu0
    %v8175 = vadd.f32 %v7886, %v8174
    %v8176 = vpop.f32.mrb[0].mxu0
    %v8177 = vpop.f32.mrb[0].mxu0
    %v8178 = vadd.f32 %v7889, %v8177
    %v8179 = vpop.f32.mrb[0].mxu0
    %8180 = vmatprep.mubr.bf16.mxu0 0
    %8181 = vmatmul.mubr.bf16.gmra.mrb[0].mxu0 %v7614
    %v8182 = vpop.f32.mrb[0].mxu0
    %v8183 = vadd.f32 %v7894, %v8182
    %v8184 = vpop.f32.mrb[0].mxu0
    %v8185 = vpop.f32.mrb[0].mxu0
    %v8186 = vadd.f32 %v7897, %v8185
    %v8187 = vpop.f32.mrb[0].mxu0
    %8188 = vmatprep.mubr.bf16.mxu0 0
    %8189 = vmatmul.mubr.bf16.gmra.mrb[0].mxu0 %v7617
    %v8190 = vpop.f32.mrb[0].mxu0
    %v8191 = vadd.f32 %v7902, %v8190
    %v8192 = vpop.f32.mrb[0].mxu0
    %v8193 = vpop.f32.mrb[0].mxu0
    %v8194 = vadd.f32 %v7905, %v8193
    %v8195 = vpop.f32.mrb[0].mxu0
    %8196 = vdwg.mxu0
    %v8197 = vmax.f32 %v7943, 0.0
    %v8198 = vmax.f32 %v7946, 0.0
    %v8199 = vmax.f32 %v7951, 0.0
    %v8200 = vmax.f32 %v7954, 0.0
    %v8201 = vmax.f32 %v7959, 0.0
    %v8202 = vmax.f32 %v7962, 0.0
    %v8203 = vmax.f32 %v7967, 0.0
    %v8204 = vmax.f32 %v7970, 0.0
    %v8205 = vmax.f32 %v7975, 0.0
    %v8206 = vmax.f32 %v7978, 0.0
    %v8207 = vmax.f32 %v7983, 0.0
    %v8208 = vmax.f32 %v7986, 0.0
    %v8209 = vmax.f32 %v7991, 0.0
    %v8210 = vmax.f32 %v7994, 0.0
    %v8211 = vmax.f32 %v7999, 0.0
    %v8212 = vmax.f32 %v8002, 0.0
    %v8213 = vmax.f32 %v8007, 0.0
    %v8214 = vmax.f32 %v8010, 0.0
    %v8215 = vmax.f32 %v8015, 0.0
    %v8216 = vmax.f32 %v8018, 0.0
    %v8217 = vmax.f32 %v8023, 0.0
    %v8218 = vmax.f32 %v8026, 0.0
    %v8219 = vmax.f32 %v8031, 0.0
    %v8220 = vmax.f32 %v8034, 0.0
    %v8221 = vmax.f32 %v8039, 0.0
    %v8222 = vmax.f32 %v8042, 0.0
    %v8223 = vmax.f32 %v8047, 0.0
    %v8224 = vmax.f32 %v8050, 0.0
    %v8225 = vmax.f32 %v8055, 0.0
    %v8226 = vmax.f32 %v8058, 0.0
    %v8227 = vmax.f32 %v8063, 0.0
    %v8228 = vmax.f32 %v8066, 0.0
    %v8229 = vmax.f32 %v8071, 0.0
    %v8230 = vmax.f32 %v8074, 0.0
    %v8231 = vmax.f32 %v8079, 0.0
    %v8232 = vmax.f32 %v8082, 0.0
    %v8233 = vmax.f32 %v8087, 0.0
    %v8234 = vmax.f32 %v8090, 0.0
    %v8235 = vmax.f32 %v8095, 0.0
    %v8236 = vmax.f32 %v8098, 0.0
    %v8237 = vmax.f32 %v8103, 0.0
    %v8238 = vmax.f32 %v8106, 0.0
    %v8239 = vmax.f32 %v8111, 0.0
    %v8240 = vmax.f32 %v8114, 0.0
    %v8241 = vmax.f32 %v8119, 0.0
    %v8242 = vmax.f32 %v8122, 0.0
    %v8243 = vmax.f32 %v8127, 0.0
    %v8244 = vmax.f32 %v8130, 0.0
    %v8245 = vmax.f32 %v8135, 0.0
    %v8246 = vmax.f32 %v8138, 0.0
    %v8247 = vmax.f32 %v8143, 0.0
    %v8248 = vmax.f32 %v8146, 0.0
    %v8249 = vmax.f32 %v8151, 0.0
    %v8250 = vmax.f32 %v8154, 0.0
    %v8251 = vmax.f32 %v8159, 0.0
    %v8252 = vmax.f32 %v8162, 0.0
    %v8253 = vmax.f32 %v8167, 0.0
    %v8254 = vmax.f32 %v8170, 0.0
    %v8255 = vmax.f32 %v8175, 0.0
    %v8256 = vmax.f32 %v8178, 0.0
    %v8257 = vmax.f32 %v8183, 0.0
    %v8258 = vmax.f32 %v8186, 0.0
    %v8259 = vmax.f32 %v8191, 0.0
    %v8260 = vmax.f32 %v8194, 0.0
    %v8261 = vsel %vm86, %v8197, -inf
    %v8262 = vsel %vm86, %v8199, -inf
    %v8263 = vmax.f32 %v8261, %v8262
    %v8264 = vsel %vm86, %v8198, -inf
    %v8265 = vsel %vm86, %v8200, -inf
    %v8266 = vmax.f32 %v8264, %v8265
    %v8267 = vsel %vm86, %v8201, -inf
    %v8268 = vsel %vm86, %v8203, -inf
    %v8269 = vmax.f32 %v8267, %v8268
    %v8270 = vsel %vm86, %v8202, -inf
    %v8271 = vsel %vm86, %v8204, -inf
    %v8272 = vmax.f32 %v8270, %v8271
    %v8273 = vsel %vm86, %v8205, -inf
    %v8274 = vsel %vm86, %v8207, -inf
    %v8275 = vmax.f32 %v8273, %v8274
    %v8276 = vsel %vm86, %v8206, -inf
    %v8277 = vsel %vm86, %v8208, -inf
    %v8278 = vmax.f32 %v8276, %v8277
    %v8279 = vsel %vm86, %v8209, -inf
    %v8280 = vsel %vm86, %v8211, -inf
    %v8281 = vmax.f32 %v8279, %v8280
    %v8282 = vsel %vm86, %v8210, -inf
    %v8283 = vsel %vm86, %v8212, -inf
    %v8284 = vmax.f32 %v8282, %v8283
    %v8285 = vsel %vm86, %v8213, -inf
    %v8286 = vsel %vm86, %v8215, -inf
    %v8287 = vmax.f32 %v8285, %v8286
    %v8288 = vsel %vm86, %v8214, -inf
    %v8289 = vsel %vm86, %v8216, -inf
    %v8290 = vmax.f32 %v8288, %v8289
    %v8291 = vsel %vm86, %v8217, -inf
    %v8292 = vsel %vm86, %v8219, -inf
    %v8293 = vmax.f32 %v8291, %v8292
    %v8294 = vsel %vm86, %v8218, -inf
    %v8295 = vsel %vm86, %v8220, -inf
    %v8296 = vmax.f32 %v8294, %v8295
    %v8297 = vsel %vm86, %v8221, -inf
    %v8298 = vsel %vm86, %v8223, -inf
    %v8299 = vmax.f32 %v8297, %v8298
    %v8300 = vsel %vm86, %v8222, -inf
    %v8301 = vsel %vm86, %v8224, -inf
    %v8302 = vmax.f32 %v8300, %v8301
    %v8303 = vsel %vm86, %v8225, -inf
    %v8304 = vsel %vm86, %v8227, -inf
    %v8305 = vmax.f32 %v8303, %v8304
    %v8306 = vsel %vm86, %v8226, -inf
    %v8307 = vsel %vm86, %v8228, -inf
    %v8308 = vmax.f32 %v8306, %v8307
    %v8309 = vsel %vm86, %v8229, -inf
    %v8310 = vsel %vm86, %v8231, -inf
    %v8311 = vmax.f32 %v8309, %v8310
    %v8312 = vsel %vm86, %v8230, -inf
    %v8313 = vsel %vm86, %v8232, -inf
    %v8314 = vmax.f32 %v8312, %v8313
    %v8315 = vsel %vm86, %v8233, -inf
    %v8316 = vsel %vm86, %v8235, -inf
    %v8317 = vmax.f32 %v8315, %v8316
    %v8318 = vsel %vm86, %v8234, -inf
    %v8319 = vsel %vm86, %v8236, -inf
    %v8320 = vmax.f32 %v8318, %v8319
    %v8321 = vsel %vm86, %v8237, -inf
    %v8322 = vsel %vm86, %v8239, -inf
    %v8323 = vmax.f32 %v8321, %v8322
    %v8324 = vsel %vm86, %v8238, -inf
    %v8325 = vsel %vm86, %v8240, -inf
    %v8326 = vmax.f32 %v8324, %v8325
    %v8327 = vsel %vm86, %v8241, -inf
    %v8328 = vsel %vm86, %v8243, -inf
    %v8329 = vmax.f32 %v8327, %v8328
    %v8330 = vsel %vm86, %v8242, -inf
    %v8331 = vsel %vm86, %v8244, -inf
    %v8332 = vmax.f32 %v8330, %v8331
    %v8333 = vsel %vm86, %v8245, -inf
    %v8334 = vsel %vm86, %v8247, -inf
    %v8335 = vmax.f32 %v8333, %v8334
    %v8336 = vsel %vm86, %v8246, -inf
    %v8337 = vsel %vm86, %v8248, -inf
    %v8338 = vmax.f32 %v8336, %v8337
    %v8339 = vsel %vm86, %v8249, -inf
    %v8340 = vsel %vm86, %v8251, -inf
    %v8341 = vmax.f32 %v8339, %v8340
    %v8342 = vsel %vm86, %v8250, -inf
    %v8343 = vsel %vm86, %v8252, -inf
    %v8344 = vmax.f32 %v8342, %v8343
    %v8345 = vsel %vm86, %v8253, -inf
    %v8346 = vsel %vm86, %v8255, -inf
    %v8347 = vmax.f32 %v8345, %v8346
    %v8348 = vsel %vm86, %v8254, -inf
    %v8349 = vsel %vm86, %v8256, -inf
    %v8350 = vmax.f32 %v8348, %v8349
    %v8351 = vsel %vm86, %v8257, -inf
    %v8352 = vsel %vm86, %v8259, -inf
    %v8353 = vmax.f32 %v8351, %v8352
    %v8354 = vsel %vm86, %v8258, -inf
    %v8355 = vsel %vm86, %v8260, -inf
    %v8356 = vmax.f32 %v8354, %v8355
    %v8389 = vcombine.high %v8263, %v8263
    %v8391 = vunpack.c.l.s4 1983009808
    %v8392 = vunpack.c.0.s8 %v8391
    %v8393 = vlaneseq
    %v8394 = vshrl.u32 %v8393, 7
    %v8395 = vsub.s32 %v8392, %v8394
    %v8396 = vrot.slane %v8263, %v8395
    %v8398 = vunpack.c.l.s4 1983009808
    %v8399 = vunpack.c.0.s8 %v8398
    %v8400 = vlaneseq
    %v8401 = vshrl.u32 %v8400, 7
    %v8402 = vsub.s32 %v8399, %v8401
    %v8403 = vrot.slane %v8389, %v8402
    %v8404 = vcombine.high %v8396, %v8396
    %v8405 = vcombine.high %v8403, %v8403
    %v8406 = vcombine.high %v8266, %v8266
    %v8408 = vunpack.c.l.s4 1983009808
    %v8409 = vunpack.c.0.s8 %v8408
    %v8410 = vlaneseq
    %v8411 = vshrl.u32 %v8410, 7
    %v8412 = vsub.s32 %v8409, %v8411
    %v8413 = vrot.slane %v8266, %v8412
    %v8415 = vunpack.c.l.s4 1983009808
    %v8416 = vunpack.c.0.s8 %v8415
    %v8417 = vlaneseq
    %v8418 = vshrl.u32 %v8417, 7
    %v8419 = vsub.s32 %v8416, %v8418
    %v8420 = vrot.slane %v8406, %v8419
    %v8421 = vcombine.high %v8413, %v8413
    %v8422 = vcombine.high %v8420, %v8420
    %v8423 = vcombine.high %v8269, %v8269
    %v8425 = vunpack.c.l.s4 1983009808
    %v8426 = vunpack.c.0.s8 %v8425
    %v8427 = vlaneseq
    %v8428 = vshrl.u32 %v8427, 7
    %v8429 = vsub.s32 %v8426, %v8428
    %v8430 = vrot.slane %v8269, %v8429
    %v8432 = vunpack.c.l.s4 1983009808
    %v8433 = vunpack.c.0.s8 %v8432
    %v8434 = vlaneseq
    %v8435 = vshrl.u32 %v8434, 7
    %v8436 = vsub.s32 %v8433, %v8435
    %v8437 = vrot.slane %v8423, %v8436
    %v8438 = vcombine.high %v8430, %v8430
    %v8439 = vcombine.high %v8437, %v8437
    %v8440 = vcombine.high %v8272, %v8272
    %v8442 = vunpack.c.l.s4 1983009808
    %v8443 = vunpack.c.0.s8 %v8442
    %v8444 = vlaneseq
    %v8445 = vshrl.u32 %v8444, 7
    %v8446 = vsub.s32 %v8443, %v8445
    %v8447 = vrot.slane %v8272, %v8446
    %v8449 = vunpack.c.l.s4 1983009808
    %v8450 = vunpack.c.0.s8 %v8449
    %v8451 = vlaneseq
    %v8452 = vshrl.u32 %v8451, 7
    %v8453 = vsub.s32 %v8450, %v8452
    %v8454 = vrot.slane %v8440, %v8453
    %v8455 = vcombine.high %v8447, %v8447
    %v8456 = vcombine.high %v8454, %v8454
    %v8457 = vcombine.high %v8275, %v8275
    %v8459 = vunpack.c.l.s4 1983009808
    %v8460 = vunpack.c.0.s8 %v8459
    %v8461 = vlaneseq
    %v8462 = vshrl.u32 %v8461, 7
    %v8463 = vsub.s32 %v8460, %v8462
    %v8464 = vrot.slane %v8275, %v8463
    %v8466 = vunpack.c.l.s4 1983009808
    %v8467 = vunpack.c.0.s8 %v8466
    %v8468 = vlaneseq
    %v8469 = vshrl.u32 %v8468, 7
    %v8470 = vsub.s32 %v8467, %v8469
    %v8471 = vrot.slane %v8457, %v8470
    %v8472 = vcombine.high %v8464, %v8464
    %v8473 = vcombine.high %v8471, %v8471
    %v8474 = vcombine.high %v8278, %v8278
    %v8476 = vunpack.c.l.s4 1983009808
    %v8477 = vunpack.c.0.s8 %v8476
    %v8478 = vlaneseq
    %v8479 = vshrl.u32 %v8478, 7
    %v8480 = vsub.s32 %v8477, %v8479
    %v8481 = vrot.slane %v8278, %v8480
    %v8483 = vunpack.c.l.s4 1983009808
    %v8484 = vunpack.c.0.s8 %v8483
    %v8485 = vlaneseq
    %v8486 = vshrl.u32 %v8485, 7
    %v8487 = vsub.s32 %v8484, %v8486
    %v8488 = vrot.slane %v8474, %v8487
    %v8489 = vcombine.high %v8481, %v8481
    %v8490 = vcombine.high %v8488, %v8488
    %v8491 = vcombine.high %v8281, %v8281
    %v8493 = vunpack.c.l.s4 1983009808
    %v8494 = vunpack.c.0.s8 %v8493
    %v8495 = vlaneseq
    %v8496 = vshrl.u32 %v8495, 7
    %v8497 = vsub.s32 %v8494, %v8496
    %v8498 = vrot.slane %v8281, %v8497
    %v8500 = vunpack.c.l.s4 1983009808
    %v8501 = vunpack.c.0.s8 %v8500
    %v8502 = vlaneseq
    %v8503 = vshrl.u32 %v8502, 7
    %v8504 = vsub.s32 %v8501, %v8503
    %v8505 = vrot.slane %v8491, %v8504
    %v8506 = vcombine.high %v8498, %v8498
    %v8507 = vcombine.high %v8505, %v8505
    %v8508 = vcombine.high %v8284, %v8284
    %v8510 = vunpack.c.l.s4 1983009808
    %v8511 = vunpack.c.0.s8 %v8510
    %v8512 = vlaneseq
    %v8513 = vshrl.u32 %v8512, 7
    %v8514 = vsub.s32 %v8511, %v8513
    %v8515 = vrot.slane %v8284, %v8514
    %v8517 = vunpack.c.l.s4 1983009808
    %v8518 = vunpack.c.0.s8 %v8517
    %v8519 = vlaneseq
    %v8520 = vshrl.u32 %v8519, 7
    %v8521 = vsub.s32 %v8518, %v8520
    %v8522 = vrot.slane %v8508, %v8521
    %v8523 = vcombine.high %v8515, %v8515
    %v8524 = vcombine.high %v8522, %v8522
    %v8525 = vcombine.high %v8287, %v8287
    %v8527 = vunpack.c.l.s4 1983009808
    %v8528 = vunpack.c.0.s8 %v8527
    %v8529 = vlaneseq
    %v8530 = vshrl.u32 %v8529, 7
    %v8531 = vsub.s32 %v8528, %v8530
    %v8532 = vrot.slane %v8287, %v8531
    %v8534 = vunpack.c.l.s4 1983009808
    %v8535 = vunpack.c.0.s8 %v8534
    %v8536 = vlaneseq
    %v8537 = vshrl.u32 %v8536, 7
    %v8538 = vsub.s32 %v8535, %v8537
    %v8539 = vrot.slane %v8525, %v8538
    %v8540 = vcombine.high %v8532, %v8532
    %v8541 = vcombine.high %v8539, %v8539
    %v8542 = vcombine.high %v8290, %v8290
    %v8544 = vunpack.c.l.s4 1983009808
    %v8545 = vunpack.c.0.s8 %v8544
    %v8546 = vlaneseq
    %v8547 = vshrl.u32 %v8546, 7
    %v8548 = vsub.s32 %v8545, %v8547
    %v8549 = vrot.slane %v8290, %v8548
    %v8551 = vunpack.c.l.s4 1983009808
    %v8552 = vunpack.c.0.s8 %v8551
    %v8553 = vlaneseq
    %v8554 = vshrl.u32 %v8553, 7
    %v8555 = vsub.s32 %v8552, %v8554
    %v8556 = vrot.slane %v8542, %v8555
    %v8557 = vcombine.high %v8549, %v8549
    %v8558 = vcombine.high %v8556, %v8556
    %v8559 = vcombine.high %v8293, %v8293
    %v8561 = vunpack.c.l.s4 1983009808
    %v8562 = vunpack.c.0.s8 %v8561
    %v8563 = vlaneseq
    %v8564 = vshrl.u32 %v8563, 7
    %v8565 = vsub.s32 %v8562, %v8564
    %v8566 = vrot.slane %v8293, %v8565
    %v8568 = vunpack.c.l.s4 1983009808
    %v8569 = vunpack.c.0.s8 %v8568
    %v8570 = vlaneseq
    %v8571 = vshrl.u32 %v8570, 7
    %v8572 = vsub.s32 %v8569, %v8571
    %v8573 = vrot.slane %v8559, %v8572
    %v8574 = vcombine.high %v8566, %v8566
    %v8575 = vcombine.high %v8573, %v8573
    %v8576 = vcombine.high %v8296, %v8296
    %v8578 = vunpack.c.l.s4 1983009808
    %v8579 = vunpack.c.0.s8 %v8578
    %v8580 = vlaneseq
    %v8581 = vshrl.u32 %v8580, 7
    %v8582 = vsub.s32 %v8579, %v8581
    %v8583 = vrot.slane %v8296, %v8582
    %v8585 = vunpack.c.l.s4 1983009808
    %v8586 = vunpack.c.0.s8 %v8585
    %v8587 = vlaneseq
    %v8588 = vshrl.u32 %v8587, 7
    %v8589 = vsub.s32 %v8586, %v8588
    %v8590 = vrot.slane %v8576, %v8589
    %v8591 = vcombine.high %v8583, %v8583
    %v8592 = vcombine.high %v8590, %v8590
    %v8593 = vcombine.high %v8299, %v8299
    %v8595 = vunpack.c.l.s4 1983009808
    %v8596 = vunpack.c.0.s8 %v8595
    %v8597 = vlaneseq
    %v8598 = vshrl.u32 %v8597, 7
    %v8599 = vsub.s32 %v8596, %v8598
    %v8600 = vrot.slane %v8299, %v8599
    %v8602 = vunpack.c.l.s4 1983009808
    %v8603 = vunpack.c.0.s8 %v8602
    %v8604 = vlaneseq
    %v8605 = vshrl.u32 %v8604, 7
    %v8606 = vsub.s32 %v8603, %v8605
    %v8607 = vrot.slane %v8593, %v8606
    %v8608 = vcombine.high %v8600, %v8600
    %v8609 = vcombine.high %v8607, %v8607
    %v8610 = vcombine.high %v8302, %v8302
    %v8612 = vunpack.c.l.s4 1983009808
    %v8613 = vunpack.c.0.s8 %v8612
    %v8614 = vlaneseq
    %v8615 = vshrl.u32 %v8614, 7
    %v8616 = vsub.s32 %v8613, %v8615
    %v8617 = vrot.slane %v8302, %v8616
    %v8619 = vunpack.c.l.s4 1983009808
    %v8620 = vunpack.c.0.s8 %v8619
    %v8621 = vlaneseq
    %v8622 = vshrl.u32 %v8621, 7
    %v8623 = vsub.s32 %v8620, %v8622
    %v8624 = vrot.slane %v8610, %v8623
    %v8625 = vcombine.high %v8617, %v8617
    %v8626 = vcombine.high %v8624, %v8624
    %v8627 = vcombine.high %v8305, %v8305
    %v8629 = vunpack.c.l.s4 1983009808
    %v8630 = vunpack.c.0.s8 %v8629
    %v8631 = vlaneseq
    %v8632 = vshrl.u32 %v8631, 7
    %v8633 = vsub.s32 %v8630, %v8632
    %v8634 = vrot.slane %v8305, %v8633
    %v8636 = vunpack.c.l.s4 1983009808
    %v8637 = vunpack.c.0.s8 %v8636
    %v8638 = vlaneseq
    %v8639 = vshrl.u32 %v8638, 7
    %v8640 = vsub.s32 %v8637, %v8639
    %v8641 = vrot.slane %v8627, %v8640
    %v8642 = vcombine.high %v8634, %v8634
    %v8643 = vcombine.high %v8641, %v8641
    %v8644 = vcombine.high %v8308, %v8308
    %v8646 = vunpack.c.l.s4 1983009808
    %v8647 = vunpack.c.0.s8 %v8646
    %v8648 = vlaneseq
    %v8649 = vshrl.u32 %v8648, 7
    %v8650 = vsub.s32 %v8647, %v8649
    %v8651 = vrot.slane %v8308, %v8650
    %v8653 = vunpack.c.l.s4 1983009808
    %v8654 = vunpack.c.0.s8 %v8653
    %v8655 = vlaneseq
    %v8656 = vshrl.u32 %v8655, 7
    %v8657 = vsub.s32 %v8654, %v8656
    %v8658 = vrot.slane %v8644, %v8657
    %v8659 = vcombine.high %v8651, %v8651
    %v8660 = vcombine.high %v8658, %v8658
    %v8661 = vcombine.high %v8311, %v8311
    %v8663 = vunpack.c.l.s4 1983009808
    %v8664 = vunpack.c.0.s8 %v8663
    %v8665 = vlaneseq
    %v8666 = vshrl.u32 %v8665, 7
    %v8667 = vsub.s32 %v8664, %v8666
    %v8668 = vrot.slane %v8311, %v8667
    %v8670 = vunpack.c.l.s4 1983009808
    %v8671 = vunpack.c.0.s8 %v8670
    %v8672 = vlaneseq
    %v8673 = vshrl.u32 %v8672, 7
    %v8674 = vsub.s32 %v8671, %v8673
    %v8675 = vrot.slane %v8661, %v8674
    %v8676 = vcombine.high %v8668, %v8668
    %v8677 = vcombine.high %v8675, %v8675
    %v8678 = vcombine.high %v8314, %v8314
    %v8680 = vunpack.c.l.s4 1983009808
    %v8681 = vunpack.c.0.s8 %v8680
    %v8682 = vlaneseq
    %v8683 = vshrl.u32 %v8682, 7
    %v8684 = vsub.s32 %v8681, %v8683
    %v8685 = vrot.slane %v8314, %v8684
    %v8687 = vunpack.c.l.s4 1983009808
    %v8688 = vunpack.c.0.s8 %v8687
    %v8689 = vlaneseq
    %v8690 = vshrl.u32 %v8689, 7
    %v8691 = vsub.s32 %v8688, %v8690
    %v8692 = vrot.slane %v8678, %v8691
    %v8693 = vcombine.high %v8685, %v8685
    %v8694 = vcombine.high %v8692, %v8692
    %v8695 = vcombine.high %v8317, %v8317
    %v8697 = vunpack.c.l.s4 1983009808
    %v8698 = vunpack.c.0.s8 %v8697
    %v8699 = vlaneseq
    %v8700 = vshrl.u32 %v8699, 7
    %v8701 = vsub.s32 %v8698, %v8700
    %v8702 = vrot.slane %v8317, %v8701
    %v8704 = vunpack.c.l.s4 1983009808
    %v8705 = vunpack.c.0.s8 %v8704
    %v8706 = vlaneseq
    %v8707 = vshrl.u32 %v8706, 7
    %v8708 = vsub.s32 %v8705, %v8707
    %v8709 = vrot.slane %v8695, %v8708
    %v8710 = vcombine.high %v8702, %v8702
    %v8711 = vcombine.high %v8709, %v8709
    %v8712 = vcombine.high %v8320, %v8320
    %v8714 = vunpack.c.l.s4 1983009808
    %v8715 = vunpack.c.0.s8 %v8714
    %v8716 = vlaneseq
    %v8717 = vshrl.u32 %v8716, 7
    %v8718 = vsub.s32 %v8715, %v8717
    %v8719 = vrot.slane %v8320, %v8718
    %v8721 = vunpack.c.l.s4 1983009808
    %v8722 = vunpack.c.0.s8 %v8721
    %v8723 = vlaneseq
    %v8724 = vshrl.u32 %v8723, 7
    %v8725 = vsub.s32 %v8722, %v8724
    %v8726 = vrot.slane %v8712, %v8725
    %v8727 = vcombine.high %v8719, %v8719
    %v8728 = vcombine.high %v8726, %v8726
    %v8729 = vcombine.high %v8323, %v8323
    %v8731 = vunpack.c.l.s4 1983009808
    %v8732 = vunpack.c.0.s8 %v8731
    %v8733 = vlaneseq
    %v8734 = vshrl.u32 %v8733, 7
    %v8735 = vsub.s32 %v8732, %v8734
    %v8736 = vrot.slane %v8323, %v8735
    %v8738 = vunpack.c.l.s4 1983009808
    %v8739 = vunpack.c.0.s8 %v8738
    %v8740 = vlaneseq
    %v8741 = vshrl.u32 %v8740, 7
    %v8742 = vsub.s32 %v8739, %v8741
    %v8743 = vrot.slane %v8729, %v8742
    %v8744 = vcombine.high %v8736, %v8736
    %v8745 = vcombine.high %v8743, %v8743
    %v8746 = vcombine.high %v8326, %v8326
    %v8748 = vunpack.c.l.s4 1983009808
    %v8749 = vunpack.c.0.s8 %v8748
    %v8750 = vlaneseq
    %v8751 = vshrl.u32 %v8750, 7
    %v8752 = vsub.s32 %v8749, %v8751
    %v8753 = vrot.slane %v8326, %v8752
    %v8755 = vunpack.c.l.s4 1983009808
    %v8756 = vunpack.c.0.s8 %v8755
    %v8757 = vlaneseq
    %v8758 = vshrl.u32 %v8757, 7
    %v8759 = vsub.s32 %v8756, %v8758
    %v8760 = vrot.slane %v8746, %v8759
    %v8761 = vcombine.high %v8753, %v8753
    %v8762 = vcombine.high %v8760, %v8760
    %v8763 = vcombine.high %v8329, %v8329
    %v8765 = vunpack.c.l.s4 1983009808
    %v8766 = vunpack.c.0.s8 %v8765
    %v8767 = vlaneseq
    %v8768 = vshrl.u32 %v8767, 7
    %v8769 = vsub.s32 %v8766, %v8768
    %v8770 = vrot.slane %v8329, %v8769
    %v8772 = vunpack.c.l.s4 1983009808
    %v8773 = vunpack.c.0.s8 %v8772
    %v8774 = vlaneseq
    %v8775 = vshrl.u32 %v8774, 7
    %v8776 = vsub.s32 %v8773, %v8775
    %v8777 = vrot.slane %v8763, %v8776
    %v8778 = vcombine.high %v8770, %v8770
    %v8779 = vcombine.high %v8777, %v8777
    %v8780 = vcombine.high %v8332, %v8332
    %v8782 = vunpack.c.l.s4 1983009808
    %v8783 = vunpack.c.0.s8 %v8782
    %v8784 = vlaneseq
    %v8785 = vshrl.u32 %v8784, 7
    %v8786 = vsub.s32 %v8783, %v8785
    %v8787 = vrot.slane %v8332, %v8786
    %v8789 = vunpack.c.l.s4 1983009808
    %v8790 = vunpack.c.0.s8 %v8789
    %v8791 = vlaneseq
    %v8792 = vshrl.u32 %v8791, 7
    %v8793 = vsub.s32 %v8790, %v8792
    %v8794 = vrot.slane %v8780, %v8793
    %v8795 = vcombine.high %v8787, %v8787
    %v8796 = vcombine.high %v8794, %v8794
    %v8797 = vcombine.high %v8335, %v8335
    %v8799 = vunpack.c.l.s4 1983009808
    %v8800 = vunpack.c.0.s8 %v8799
    %v8801 = vlaneseq
    %v8802 = vshrl.u32 %v8801, 7
    %v8803 = vsub.s32 %v8800, %v8802
    %v8804 = vrot.slane %v8335, %v8803
    %v8806 = vunpack.c.l.s4 1983009808
    %v8807 = vunpack.c.0.s8 %v8806
    %v8808 = vlaneseq
    %v8809 = vshrl.u32 %v8808, 7
    %v8810 = vsub.s32 %v8807, %v8809
    %v8811 = vrot.slane %v8797, %v8810
    %v8812 = vcombine.high %v8804, %v8804
    %v8813 = vcombine.high %v8811, %v8811
    %v8814 = vcombine.high %v8338, %v8338
    %v8816 = vunpack.c.l.s4 1983009808
    %v8817 = vunpack.c.0.s8 %v8816
    %v8818 = vlaneseq
    %v8819 = vshrl.u32 %v8818, 7
    %v8820 = vsub.s32 %v8817, %v8819
    %v8821 = vrot.slane %v8338, %v8820
    %v8823 = vunpack.c.l.s4 1983009808
    %v8824 = vunpack.c.0.s8 %v8823
    %v8825 = vlaneseq
    %v8826 = vshrl.u32 %v8825, 7
    %v8827 = vsub.s32 %v8824, %v8826
    %v8828 = vrot.slane %v8814, %v8827
    %v8829 = vcombine.high %v8821, %v8821
    %v8830 = vcombine.high %v8828, %v8828
    %v8831 = vcombine.high %v8341, %v8341
    %v8833 = vunpack.c.l.s4 1983009808
    %v8834 = vunpack.c.0.s8 %v8833
    %v8835 = vlaneseq
    %v8836 = vshrl.u32 %v8835, 7
    %v8837 = vsub.s32 %v8834, %v8836
    %v8838 = vrot.slane %v8341, %v8837
    %v8840 = vunpack.c.l.s4 1983009808
    %v8841 = vunpack.c.0.s8 %v8840
    %v8842 = vlaneseq
    %v8843 = vshrl.u32 %v8842, 7
    %v8844 = vsub.s32 %v8841, %v8843
    %v8845 = vrot.slane %v8831, %v8844
    %v8846 = vcombine.high %v8838, %v8838
    %v8847 = vcombine.high %v8845, %v8845
    %v8848 = vcombine.high %v8344, %v8344
    %v8850 = vunpack.c.l.s4 1983009808
    %v8851 = vunpack.c.0.s8 %v8850
    %v8852 = vlaneseq
    %v8853 = vshrl.u32 %v8852, 7
    %v8854 = vsub.s32 %v8851, %v8853
    %v8855 = vrot.slane %v8344, %v8854
    %v8857 = vunpack.c.l.s4 1983009808
    %v8858 = vunpack.c.0.s8 %v8857
    %v8859 = vlaneseq
    %v8860 = vshrl.u32 %v8859, 7
    %v8861 = vsub.s32 %v8858, %v8860
    %v8862 = vrot.slane %v8848, %v8861
    %v8863 = vcombine.high %v8855, %v8855
    %v8864 = vcombine.high %v8862, %v8862
    %v8865 = vcombine.high %v8347, %v8347
    %v8867 = vunpack.c.l.s4 1983009808
    %v8868 = vunpack.c.0.s8 %v8867
    %v8869 = vlaneseq
    %v8870 = vshrl.u32 %v8869, 7
    %v8871 = vsub.s32 %v8868, %v8870
    %v8872 = vrot.slane %v8347, %v8871
    %v8874 = vunpack.c.l.s4 1983009808
    %v8875 = vunpack.c.0.s8 %v8874
    %v8876 = vlaneseq
    %v8877 = vshrl.u32 %v8876, 7
    %v8878 = vsub.s32 %v8875, %v8877
    %v8879 = vrot.slane %v8865, %v8878
    %v8880 = vcombine.high %v8872, %v8872
    %v8881 = vcombine.high %v8879, %v8879
    %v8882 = vcombine.high %v8350, %v8350
    %v8884 = vunpack.c.l.s4 1983009808
    %v8885 = vunpack.c.0.s8 %v8884
    %v8886 = vlaneseq
    %v8887 = vshrl.u32 %v8886, 7
    %v8888 = vsub.s32 %v8885, %v8887
    %v8889 = vrot.slane %v8350, %v8888
    %v8891 = vunpack.c.l.s4 1983009808
    %v8892 = vunpack.c.0.s8 %v8891
    %v8893 = vlaneseq
    %v8894 = vshrl.u32 %v8893, 7
    %v8895 = vsub.s32 %v8892, %v8894
    %v8896 = vrot.slane %v8882, %v8895
    %v8897 = vcombine.high %v8889, %v8889
    %v8898 = vcombine.high %v8896, %v8896
    %v8899 = vcombine.high %v8353, %v8353
    %v8901 = vunpack.c.l.s4 1983009808
    %v8902 = vunpack.c.0.s8 %v8901
    %v8903 = vlaneseq
    %v8904 = vshrl.u32 %v8903, 7
    %v8905 = vsub.s32 %v8902, %v8904
    %v8906 = vrot.slane %v8353, %v8905
    %v8908 = vunpack.c.l.s4 1983009808
    %v8909 = vunpack.c.0.s8 %v8908
    %v8910 = vlaneseq
    %v8911 = vshrl.u32 %v8910, 7
    %v8912 = vsub.s32 %v8909, %v8911
    %v8913 = vrot.slane %v8899, %v8912
    %v8914 = vcombine.high %v8906, %v8906
    %v8915 = vcombine.high %v8913, %v8913
    %v8916 = vcombine.high %v8356, %v8356
    %v8918 = vunpack.c.l.s4 1983009808
    %v8919 = vunpack.c.0.s8 %v8918
    %v8920 = vlaneseq
    %v8921 = vshrl.u32 %v8920, 7
    %v8922 = vsub.s32 %v8919, %v8921
    %v8923 = vrot.slane %v8356, %v8922
    %v8925 = vunpack.c.l.s4 1983009808
    %v8926 = vunpack.c.0.s8 %v8925
    %v8927 = vlaneseq
    %v8928 = vshrl.u32 %v8927, 7
    %v8929 = vsub.s32 %v8926, %v8928
    %v8930 = vrot.slane %v8916, %v8929
    %v8931 = vcombine.high %v8923, %v8923
    %v8932 = vcombine.high %v8930, %v8930
    %v9061 = vsel %vm89, %v8396, -inf
    %v9062 = vrot.slane %v9061, 4
    %v9063 = vmax.f32 %v9061, %v9062
    %v9064 = vrot.slane %v9063, 2
    %v9065 = vmax.f32 %v9063, %v9064
    %v9066 = vrot.slane %v9065, 1
    %v9067 = vmax.f32 %v9065, %v9066
    %v9068 = vsel %vm89, %v8404, -inf
    %v9069 = vrot.slane %v9068, 4
    %v9070 = vmax.f32 %v9068, %v9069
    %v9071 = vrot.slane %v9070, 2
    %v9072 = vmax.f32 %v9070, %v9071
    %v9073 = vrot.slane %v9072, 1
    %v9074 = vmax.f32 %v9072, %v9073
    %v9075 = vsel %vm89, %v8403, -inf
    %v9076 = vrot.slane %v9075, 4
    %v9077 = vmax.f32 %v9075, %v9076
    %v9078 = vrot.slane %v9077, 2
    %v9079 = vmax.f32 %v9077, %v9078
    %v9080 = vrot.slane %v9079, 1
    %v9081 = vmax.f32 %v9079, %v9080
    %v9082 = vsel %vm89, %v8405, -inf
    %v9083 = vrot.slane %v9082, 4
    %v9084 = vmax.f32 %v9082, %v9083
    %v9085 = vrot.slane %v9084, 2
    %v9086 = vmax.f32 %v9084, %v9085
    %v9087 = vrot.slane %v9086, 1
    %v9088 = vmax.f32 %v9086, %v9087
    %v9089 = vsel %vm89, %v8413, -inf
    %v9090 = vrot.slane %v9089, 4
    %v9091 = vmax.f32 %v9089, %v9090
    %v9092 = vrot.slane %v9091, 2
    %v9093 = vmax.f32 %v9091, %v9092
    %v9094 = vrot.slane %v9093, 1
    %v9095 = vmax.f32 %v9093, %v9094
    %v9096 = vsel %vm89, %v8421, -inf
    %v9097 = vrot.slane %v9096, 4
    %v9098 = vmax.f32 %v9096, %v9097
    %v9099 = vrot.slane %v9098, 2
    %v9100 = vmax.f32 %v9098, %v9099
    %v9101 = vrot.slane %v9100, 1
    %v9102 = vmax.f32 %v9100, %v9101
    %v9103 = vsel %vm89, %v8420, -inf
    %v9104 = vrot.slane %v9103, 4
    %v9105 = vmax.f32 %v9103, %v9104
    %v9106 = vrot.slane %v9105, 2
    %v9107 = vmax.f32 %v9105, %v9106
    %v9108 = vrot.slane %v9107, 1
    %v9109 = vmax.f32 %v9107, %v9108
    %v9110 = vsel %vm89, %v8422, -inf
    %v9111 = vrot.slane %v9110, 4
    %v9112 = vmax.f32 %v9110, %v9111
    %v9113 = vrot.slane %v9112, 2
    %v9114 = vmax.f32 %v9112, %v9113
    %v9115 = vrot.slane %v9114, 1
    %v9116 = vmax.f32 %v9114, %v9115
    %v9117 = vsel %vm89, %v8430, -inf
    %v9118 = vrot.slane %v9117, 4
    %v9119 = vmax.f32 %v9117, %v9118
    %v9120 = vrot.slane %v9119, 2
    %v9121 = vmax.f32 %v9119, %v9120
    %v9122 = vrot.slane %v9121, 1
    %v9123 = vmax.f32 %v9121, %v9122
    %v9124 = vsel %vm89, %v8438, -inf
    %v9125 = vrot.slane %v9124, 4
    %v9126 = vmax.f32 %v9124, %v9125
    %v9127 = vrot.slane %v9126, 2
    %v9128 = vmax.f32 %v9126, %v9127
    %v9129 = vrot.slane %v9128, 1
    %v9130 = vmax.f32 %v9128, %v9129
    %v9131 = vsel %vm89, %v8437, -inf
    %v9132 = vrot.slane %v9131, 4
    %v9133 = vmax.f32 %v9131, %v9132
    %v9134 = vrot.slane %v9133, 2
    %v9135 = vmax.f32 %v9133, %v9134
    %v9136 = vrot.slane %v9135, 1
    %v9137 = vmax.f32 %v9135, %v9136
    %v9138 = vsel %vm89, %v8439, -inf
    %v9139 = vrot.slane %v9138, 4
    %v9140 = vmax.f32 %v9138, %v9139
    %v9141 = vrot.slane %v9140, 2
    %v9142 = vmax.f32 %v9140, %v9141
    %v9143 = vrot.slane %v9142, 1
    %v9144 = vmax.f32 %v9142, %v9143
    %v9145 = vsel %vm89, %v8447, -inf
    %v9146 = vrot.slane %v9145, 4
    %v9147 = vmax.f32 %v9145, %v9146
    %v9148 = vrot.slane %v9147, 2
    %v9149 = vmax.f32 %v9147, %v9148
    %v9150 = vrot.slane %v9149, 1
    %v9151 = vmax.f32 %v9149, %v9150
    %v9152 = vsel %vm89, %v8455, -inf
    %v9153 = vrot.slane %v9152, 4
    %v9154 = vmax.f32 %v9152, %v9153
    %v9155 = vrot.slane %v9154, 2
    %v9156 = vmax.f32 %v9154, %v9155
    %v9157 = vrot.slane %v9156, 1
    %v9158 = vmax.f32 %v9156, %v9157
    %v9159 = vsel %vm89, %v8454, -inf
    %v9160 = vrot.slane %v9159, 4
    %v9161 = vmax.f32 %v9159, %v9160
    %v9162 = vrot.slane %v9161, 2
    %v9163 = vmax.f32 %v9161, %v9162
    %v9164 = vrot.slane %v9163, 1
    %v9165 = vmax.f32 %v9163, %v9164
    %v9166 = vsel %vm89, %v8456, -inf
    %v9167 = vrot.slane %v9166, 4
    %v9168 = vmax.f32 %v9166, %v9167
    %v9169 = vrot.slane %v9168, 2
    %v9170 = vmax.f32 %v9168, %v9169
    %v9171 = vrot.slane %v9170, 1
    %v9172 = vmax.f32 %v9170, %v9171
    %v9173 = vsel %vm89, %v8464, -inf
    %v9174 = vrot.slane %v9173, 4
    %v9175 = vmax.f32 %v9173, %v9174
    %v9176 = vrot.slane %v9175, 2
    %v9177 = vmax.f32 %v9175, %v9176
    %v9178 = vrot.slane %v9177, 1
    %v9179 = vmax.f32 %v9177, %v9178
    %v9180 = vsel %vm89, %v8472, -inf
    %v9181 = vrot.slane %v9180, 4
    %v9182 = vmax.f32 %v9180, %v9181
    %v9183 = vrot.slane %v9182, 2
    %v9184 = vmax.f32 %v9182, %v9183
    %v9185 = vrot.slane %v9184, 1
    %v9186 = vmax.f32 %v9184, %v9185
    %v9187 = vsel %vm89, %v8471, -inf
    %v9188 = vrot.slane %v9187, 4
    %v9189 = vmax.f32 %v9187, %v9188
    %v9190 = vrot.slane %v9189, 2
    %v9191 = vmax.f32 %v9189, %v9190
    %v9192 = vrot.slane %v9191, 1
    %v9193 = vmax.f32 %v9191, %v9192
    %v9194 = vsel %vm89, %v8473, -inf
    %v9195 = vrot.slane %v9194, 4
    %v9196 = vmax.f32 %v9194, %v9195
    %v9197 = vrot.slane %v9196, 2
    %v9198 = vmax.f32 %v9196, %v9197
    %v9199 = vrot.slane %v9198, 1
    %v9200 = vmax.f32 %v9198, %v9199
    %v9201 = vsel %vm89, %v8481, -inf
    %v9202 = vrot.slane %v9201, 4
    %v9203 = vmax.f32 %v9201, %v9202
    %v9204 = vrot.slane %v9203, 2
    %v9205 = vmax.f32 %v9203, %v9204
    %v9206 = vrot.slane %v9205, 1
    %v9207 = vmax.f32 %v9205, %v9206
    %v9208 = vsel %vm89, %v8489, -inf
    %v9209 = vrot.slane %v9208, 4
    %v9210 = vmax.f32 %v9208, %v9209
    %v9211 = vrot.slane %v9210, 2
    %v9212 = vmax.f32 %v9210, %v9211
    %v9213 = vrot.slane %v9212, 1
    %v9214 = vmax.f32 %v9212, %v9213
    %v9215 = vsel %vm89, %v8488, -inf
    %v9216 = vrot.slane %v9215, 4
    %v9217 = vmax.f32 %v9215, %v9216
    %v9218 = vrot.slane %v9217, 2
    %v9219 = vmax.f32 %v9217, %v9218
    %v9220 = vrot.slane %v9219, 1
    %v9221 = vmax.f32 %v9219, %v9220
    %v9222 = vsel %vm89, %v8490, -inf
    %v9223 = vrot.slane %v9222, 4
    %v9224 = vmax.f32 %v9222, %v9223
    %v9225 = vrot.slane %v9224, 2
    %v9226 = vmax.f32 %v9224, %v9225
    %v9227 = vrot.slane %v9226, 1
    %v9228 = vmax.f32 %v9226, %v9227
    %v9229 = vsel %vm89, %v8498, -inf
    %v9230 = vrot.slane %v9229, 4
    %v9231 = vmax.f32 %v9229, %v9230
    %v9232 = vrot.slane %v9231, 2
    %v9233 = vmax.f32 %v9231, %v9232
    %v9234 = vrot.slane %v9233, 1
    %v9235 = vmax.f32 %v9233, %v9234
    %v9236 = vsel %vm89, %v8506, -inf
    %v9237 = vrot.slane %v9236, 4
    %v9238 = vmax.f32 %v9236, %v9237
    %v9239 = vrot.slane %v9238, 2
    %v9240 = vmax.f32 %v9238, %v9239
    %v9241 = vrot.slane %v9240, 1
    %v9242 = vmax.f32 %v9240, %v9241
    %v9243 = vsel %vm89, %v8505, -inf
    %v9244 = vrot.slane %v9243, 4
    %v9245 = vmax.f32 %v9243, %v9244
    %v9246 = vrot.slane %v9245, 2
    %v9247 = vmax.f32 %v9245, %v9246
    %v9248 = vrot.slane %v9247, 1
    %v9249 = vmax.f32 %v9247, %v9248
    %v9250 = vsel %vm89, %v8507, -inf
    %v9251 = vrot.slane %v9250, 4
    %v9252 = vmax.f32 %v9250, %v9251
    %v9253 = vrot.slane %v9252, 2
    %v9254 = vmax.f32 %v9252, %v9253
    %v9255 = vrot.slane %v9254, 1
    %v9256 = vmax.f32 %v9254, %v9255
    %v9257 = vsel %vm89, %v8515, -inf
    %v9258 = vrot.slane %v9257, 4
    %v9259 = vmax.f32 %v9257, %v9258
    %v9260 = vrot.slane %v9259, 2
    %v9261 = vmax.f32 %v9259, %v9260
    %v9262 = vrot.slane %v9261, 1
    %v9263 = vmax.f32 %v9261, %v9262
    %v9264 = vsel %vm89, %v8523, -inf
    %v9265 = vrot.slane %v9264, 4
    %v9266 = vmax.f32 %v9264, %v9265
    %v9267 = vrot.slane %v9266, 2
    %v9268 = vmax.f32 %v9266, %v9267
    %v9269 = vrot.slane %v9268, 1
    %v9270 = vmax.f32 %v9268, %v9269
    %v9271 = vsel %vm89, %v8522, -inf
    %v9272 = vrot.slane %v9271, 4
    %v9273 = vmax.f32 %v9271, %v9272
    %v9274 = vrot.slane %v9273, 2
    %v9275 = vmax.f32 %v9273, %v9274
    %v9276 = vrot.slane %v9275, 1
    %v9277 = vmax.f32 %v9275, %v9276
    %v9278 = vsel %vm89, %v8524, -inf
    %v9279 = vrot.slane %v9278, 4
    %v9280 = vmax.f32 %v9278, %v9279
    %v9281 = vrot.slane %v9280, 2
    %v9282 = vmax.f32 %v9280, %v9281
    %v9283 = vrot.slane %v9282, 1
    %v9284 = vmax.f32 %v9282, %v9283
    %v9285 = vsel %vm89, %v8532, -inf
    %v9286 = vrot.slane %v9285, 4
    %v9287 = vmax.f32 %v9285, %v9286
    %v9288 = vrot.slane %v9287, 2
    %v9289 = vmax.f32 %v9287, %v9288
    %v9290 = vrot.slane %v9289, 1
    %v9291 = vmax.f32 %v9289, %v9290
    %v9292 = vsel %vm89, %v8540, -inf
    %v9293 = vrot.slane %v9292, 4
    %v9294 = vmax.f32 %v9292, %v9293
    %v9295 = vrot.slane %v9294, 2
    %v9296 = vmax.f32 %v9294, %v9295
    %v9297 = vrot.slane %v9296, 1
    %v9298 = vmax.f32 %v9296, %v9297
    %v9299 = vsel %vm89, %v8539, -inf
    %v9300 = vrot.slane %v9299, 4
    %v9301 = vmax.f32 %v9299, %v9300
    %v9302 = vrot.slane %v9301, 2
    %v9303 = vmax.f32 %v9301, %v9302
    %v9304 = vrot.slane %v9303, 1
    %v9305 = vmax.f32 %v9303, %v9304
    %v9306 = vsel %vm89, %v8541, -inf
    %v9307 = vrot.slane %v9306, 4
    %v9308 = vmax.f32 %v9306, %v9307
    %v9309 = vrot.slane %v9308, 2
    %v9310 = vmax.f32 %v9308, %v9309
    %v9311 = vrot.slane %v9310, 1
    %v9312 = vmax.f32 %v9310, %v9311
    %v9313 = vsel %vm89, %v8549, -inf
    %v9314 = vrot.slane %v9313, 4
    %v9315 = vmax.f32 %v9313, %v9314
    %v9316 = vrot.slane %v9315, 2
    %v9317 = vmax.f32 %v9315, %v9316
    %v9318 = vrot.slane %v9317, 1
    %v9319 = vmax.f32 %v9317, %v9318
    %v9320 = vsel %vm89, %v8557, -inf
    %v9321 = vrot.slane %v9320, 4
    %v9322 = vmax.f32 %v9320, %v9321
    %v9323 = vrot.slane %v9322, 2
    %v9324 = vmax.f32 %v9322, %v9323
    %v9325 = vrot.slane %v9324, 1
    %v9326 = vmax.f32 %v9324, %v9325
    %v9327 = vsel %vm89, %v8556, -inf
    %v9328 = vrot.slane %v9327, 4
    %v9329 = vmax.f32 %v9327, %v9328
    %v9330 = vrot.slane %v9329, 2
    %v9331 = vmax.f32 %v9329, %v9330
    %v9332 = vrot.slane %v9331, 1
    %v9333 = vmax.f32 %v9331, %v9332
    %v9334 = vsel %vm89, %v8558, -inf
    %v9335 = vrot.slane %v9334, 4
    %v9336 = vmax.f32 %v9334, %v9335
    %v9337 = vrot.slane %v9336, 2
    %v9338 = vmax.f32 %v9336, %v9337
    %v9339 = vrot.slane %v9338, 1
    %v9340 = vmax.f32 %v9338, %v9339
    %v9341 = vsel %vm89, %v8566, -inf
    %v9342 = vrot.slane %v9341, 4
    %v9343 = vmax.f32 %v9341, %v9342
    %v9344 = vrot.slane %v9343, 2
    %v9345 = vmax.f32 %v9343, %v9344
    %v9346 = vrot.slane %v9345, 1
    %v9347 = vmax.f32 %v9345, %v9346
    %v9348 = vsel %vm89, %v8574, -inf
    %v9349 = vrot.slane %v9348, 4
    %v9350 = vmax.f32 %v9348, %v9349
    %v9351 = vrot.slane %v9350, 2
    %v9352 = vmax.f32 %v9350, %v9351
    %v9353 = vrot.slane %v9352, 1
    %v9354 = vmax.f32 %v9352, %v9353
    %v9355 = vsel %vm89, %v8573, -inf
    %v9356 = vrot.slane %v9355, 4
    %v9357 = vmax.f32 %v9355, %v9356
    %v9358 = vrot.slane %v9357, 2
    %v9359 = vmax.f32 %v9357, %v9358
    %v9360 = vrot.slane %v9359, 1
    %v9361 = vmax.f32 %v9359, %v9360
    %v9362 = vsel %vm89, %v8575, -inf
    %v9363 = vrot.slane %v9362, 4
    %v9364 = vmax.f32 %v9362, %v9363
    %v9365 = vrot.slane %v9364, 2
    %v9366 = vmax.f32 %v9364, %v9365
    %v9367 = vrot.slane %v9366, 1
    %v9368 = vmax.f32 %v9366, %v9367
    %v9369 = vsel %vm89, %v8583, -inf
    %v9370 = vrot.slane %v9369, 4
    %v9371 = vmax.f32 %v9369, %v9370
    %v9372 = vrot.slane %v9371, 2
    %v9373 = vmax.f32 %v9371, %v9372
    %v9374 = vrot.slane %v9373, 1
    %v9375 = vmax.f32 %v9373, %v9374
    %v9376 = vsel %vm89, %v8591, -inf
    %v9377 = vrot.slane %v9376, 4
    %v9378 = vmax.f32 %v9376, %v9377
    %v9379 = vrot.slane %v9378, 2
    %v9380 = vmax.f32 %v9378, %v9379
    %v9381 = vrot.slane %v9380, 1
    %v9382 = vmax.f32 %v9380, %v9381
    %v9383 = vsel %vm89, %v8590, -inf
    %v9384 = vrot.slane %v9383, 4
    %v9385 = vmax.f32 %v9383, %v9384
    %v9386 = vrot.slane %v9385, 2
    %v9387 = vmax.f32 %v9385, %v9386
    %v9388 = vrot.slane %v9387, 1
    %v9389 = vmax.f32 %v9387, %v9388
    %v9390 = vsel %vm89, %v8592, -inf
    %v9391 = vrot.slane %v9390, 4
    %v9392 = vmax.f32 %v9390, %v9391
    %v9393 = vrot.slane %v9392, 2
    %v9394 = vmax.f32 %v9392, %v9393
    %v9395 = vrot.slane %v9394, 1
    %v9396 = vmax.f32 %v9394, %v9395
    %v9397 = vsel %vm89, %v8600, -inf
    %v9398 = vrot.slane %v9397, 4
    %v9399 = vmax.f32 %v9397, %v9398
    %v9400 = vrot.slane %v9399, 2
    %v9401 = vmax.f32 %v9399, %v9400
    %v9402 = vrot.slane %v9401, 1
    %v9403 = vmax.f32 %v9401, %v9402
    %v9404 = vsel %vm89, %v8608, -inf
    %v9405 = vrot.slane %v9404, 4
    %v9406 = vmax.f32 %v9404, %v9405
    %v9407 = vrot.slane %v9406, 2
    %v9408 = vmax.f32 %v9406, %v9407
    %v9409 = vrot.slane %v9408, 1
    %v9410 = vmax.f32 %v9408, %v9409
    %v9411 = vsel %vm89, %v8607, -inf
    %v9412 = vrot.slane %v9411, 4
    %v9413 = vmax.f32 %v9411, %v9412
    %v9414 = vrot.slane %v9413, 2
    %v9415 = vmax.f32 %v9413, %v9414
    %v9416 = vrot.slane %v9415, 1
    %v9417 = vmax.f32 %v9415, %v9416
    %v9418 = vsel %vm89, %v8609, -inf
    %v9419 = vrot.slane %v9418, 4
    %v9420 = vmax.f32 %v9418, %v9419
    %v9421 = vrot.slane %v9420, 2
    %v9422 = vmax.f32 %v9420, %v9421
    %v9423 = vrot.slane %v9422, 1
    %v9424 = vmax.f32 %v9422, %v9423
    %v9425 = vsel %vm89, %v8617, -inf
    %v9426 = vrot.slane %v9425, 4
    %v9427 = vmax.f32 %v9425, %v9426
    %v9428 = vrot.slane %v9427, 2
    %v9429 = vmax.f32 %v9427, %v9428
    %v9430 = vrot.slane %v9429, 1
    %v9431 = vmax.f32 %v9429, %v9430
    %v9432 = vsel %vm89, %v8625, -inf
    %v9433 = vrot.slane %v9432, 4
    %v9434 = vmax.f32 %v9432, %v9433
    %v9435 = vrot.slane %v9434, 2
    %v9436 = vmax.f32 %v9434, %v9435
    %v9437 = vrot.slane %v9436, 1
    %v9438 = vmax.f32 %v9436, %v9437
    %v9439 = vsel %vm89, %v8624, -inf
    %v9440 = vrot.slane %v9439, 4
    %v9441 = vmax.f32 %v9439, %v9440
    %v9442 = vrot.slane %v9441, 2
    %v9443 = vmax.f32 %v9441, %v9442
    %v9444 = vrot.slane %v9443, 1
    %v9445 = vmax.f32 %v9443, %v9444
    %v9446 = vsel %vm89, %v8626, -inf
    %v9447 = vrot.slane %v9446, 4
    %v9448 = vmax.f32 %v9446, %v9447
    %v9449 = vrot.slane %v9448, 2
    %v9450 = vmax.f32 %v9448, %v9449
    %v9451 = vrot.slane %v9450, 1
    %v9452 = vmax.f32 %v9450, %v9451
    %v9453 = vsel %vm89, %v8634, -inf
    %v9454 = vrot.slane %v9453, 4
    %v9455 = vmax.f32 %v9453, %v9454
    %v9456 = vrot.slane %v9455, 2
    %v9457 = vmax.f32 %v9455, %v9456
    %v9458 = vrot.slane %v9457, 1
    %v9459 = vmax.f32 %v9457, %v9458
    %v9460 = vsel %vm89, %v8642, -inf
    %v9461 = vrot.slane %v9460, 4
    %v9462 = vmax.f32 %v9460, %v9461
    %v9463 = vrot.slane %v9462, 2
    %v9464 = vmax.f32 %v9462, %v9463
    %v9465 = vrot.slane %v9464, 1
    %v9466 = vmax.f32 %v9464, %v9465
    %v9467 = vsel %vm89, %v8641, -inf
    %v9468 = vrot.slane %v9467, 4
    %v9469 = vmax.f32 %v9467, %v9468
    %v9470 = vrot.slane %v9469, 2
    %v9471 = vmax.f32 %v9469, %v9470
    %v9472 = vrot.slane %v9471, 1
    %v9473 = vmax.f32 %v9471, %v9472
    %v9474 = vsel %vm89, %v8643, -inf
    %v9475 = vrot.slane %v9474, 4
    %v9476 = vmax.f32 %v9474, %v9475
    %v9477 = vrot.slane %v9476, 2
    %v9478 = vmax.f32 %v9476, %v9477
    %v9479 = vrot.slane %v9478, 1
    %v9480 = vmax.f32 %v9478, %v9479
    %v9481 = vsel %vm89, %v8651, -inf
    %v9482 = vrot.slane %v9481, 4
    %v9483 = vmax.f32 %v9481, %v9482
    %v9484 = vrot.slane %v9483, 2
    %v9485 = vmax.f32 %v9483, %v9484
    %v9486 = vrot.slane %v9485, 1
    %v9487 = vmax.f32 %v9485, %v9486
    %v9488 = vsel %vm89, %v8659, -inf
    %v9489 = vrot.slane %v9488, 4
    %v9490 = vmax.f32 %v9488, %v9489
    %v9491 = vrot.slane %v9490, 2
    %v9492 = vmax.f32 %v9490, %v9491
    %v9493 = vrot.slane %v9492, 1
    %v9494 = vmax.f32 %v9492, %v9493
    %v9495 = vsel %vm89, %v8658, -inf
    %v9496 = vrot.slane %v9495, 4
    %v9497 = vmax.f32 %v9495, %v9496
    %v9498 = vrot.slane %v9497, 2
    %v9499 = vmax.f32 %v9497, %v9498
    %v9500 = vrot.slane %v9499, 1
    %v9501 = vmax.f32 %v9499, %v9500
    %v9502 = vsel %vm89, %v8660, -inf
    %v9503 = vrot.slane %v9502, 4
    %v9504 = vmax.f32 %v9502, %v9503
    %v9505 = vrot.slane %v9504, 2
    %v9506 = vmax.f32 %v9504, %v9505
    %v9507 = vrot.slane %v9506, 1
    %v9508 = vmax.f32 %v9506, %v9507
    %v9509 = vsel %vm89, %v8668, -inf
    %v9510 = vrot.slane %v9509, 4
    %v9511 = vmax.f32 %v9509, %v9510
    %v9512 = vrot.slane %v9511, 2
    %v9513 = vmax.f32 %v9511, %v9512
    %v9514 = vrot.slane %v9513, 1
    %v9515 = vmax.f32 %v9513, %v9514
    %v9516 = vsel %vm89, %v8676, -inf
    %v9517 = vrot.slane %v9516, 4
    %v9518 = vmax.f32 %v9516, %v9517
    %v9519 = vrot.slane %v9518, 2
    %v9520 = vmax.f32 %v9518, %v9519
    %v9521 = vrot.slane %v9520, 1
    %v9522 = vmax.f32 %v9520, %v9521
    %v9523 = vsel %vm89, %v8675, -inf
    %v9524 = vrot.slane %v9523, 4
    %v9525 = vmax.f32 %v9523, %v9524
    %v9526 = vrot.slane %v9525, 2
    %v9527 = vmax.f32 %v9525, %v9526
    %v9528 = vrot.slane %v9527, 1
    %v9529 = vmax.f32 %v9527, %v9528
    %v9530 = vsel %vm89, %v8677, -inf
    %v9531 = vrot.slane %v9530, 4
    %v9532 = vmax.f32 %v9530, %v9531
    %v9533 = vrot.slane %v9532, 2
    %v9534 = vmax.f32 %v9532, %v9533
    %v9535 = vrot.slane %v9534, 1
    %v9536 = vmax.f32 %v9534, %v9535
    %v9537 = vsel %vm89, %v8685, -inf
    %v9538 = vrot.slane %v9537, 4
    %v9539 = vmax.f32 %v9537, %v9538
    %v9540 = vrot.slane %v9539, 2
    %v9541 = vmax.f32 %v9539, %v9540
    %v9542 = vrot.slane %v9541, 1
    %v9543 = vmax.f32 %v9541, %v9542
    %v9544 = vsel %vm89, %v8693, -inf
    %v9545 = vrot.slane %v9544, 4
    %v9546 = vmax.f32 %v9544, %v9545
    %v9547 = vrot.slane %v9546, 2
    %v9548 = vmax.f32 %v9546, %v9547
    %v9549 = vrot.slane %v9548, 1
    %v9550 = vmax.f32 %v9548, %v9549
    %v9551 = vsel %vm89, %v8692, -inf
    %v9552 = vrot.slane %v9551, 4
    %v9553 = vmax.f32 %v9551, %v9552
    %v9554 = vrot.slane %v9553, 2
    %v9555 = vmax.f32 %v9553, %v9554
    %v9556 = vrot.slane %v9555, 1
    %v9557 = vmax.f32 %v9555, %v9556
    %v9558 = vsel %vm89, %v8694, -inf
    %v9559 = vrot.slane %v9558, 4
    %v9560 = vmax.f32 %v9558, %v9559
    %v9561 = vrot.slane %v9560, 2
    %v9562 = vmax.f32 %v9560, %v9561
    %v9563 = vrot.slane %v9562, 1
    %v9564 = vmax.f32 %v9562, %v9563
    %v9565 = vsel %vm89, %v8702, -inf
    %v9566 = vrot.slane %v9565, 4
    %v9567 = vmax.f32 %v9565, %v9566
    %v9568 = vrot.slane %v9567, 2
    %v9569 = vmax.f32 %v9567, %v9568
    %v9570 = vrot.slane %v9569, 1
    %v9571 = vmax.f32 %v9569, %v9570
    %v9572 = vsel %vm89, %v8710, -inf
    %v9573 = vrot.slane %v9572, 4
    %v9574 = vmax.f32 %v9572, %v9573
    %v9575 = vrot.slane %v9574, 2
    %v9576 = vmax.f32 %v9574, %v9575
    %v9577 = vrot.slane %v9576, 1
    %v9578 = vmax.f32 %v9576, %v9577
    %v9579 = vsel %vm89, %v8709, -inf
    %v9580 = vrot.slane %v9579, 4
    %v9581 = vmax.f32 %v9579, %v9580
    %v9582 = vrot.slane %v9581, 2
    %v9583 = vmax.f32 %v9581, %v9582
    %v9584 = vrot.slane %v9583, 1
    %v9585 = vmax.f32 %v9583, %v9584
    %v9586 = vsel %vm89, %v8711, -inf
    %v9587 = vrot.slane %v9586, 4
    %v9588 = vmax.f32 %v9586, %v9587
    %v9589 = vrot.slane %v9588, 2
    %v9590 = vmax.f32 %v9588, %v9589
    %v9591 = vrot.slane %v9590, 1
    %v9592 = vmax.f32 %v9590, %v9591
    %v9593 = vsel %vm89, %v8719, -inf
    %v9594 = vrot.slane %v9593, 4
    %v9595 = vmax.f32 %v9593, %v9594
    %v9596 = vrot.slane %v9595, 2
    %v9597 = vmax.f32 %v9595, %v9596
    %v9598 = vrot.slane %v9597, 1
    %v9599 = vmax.f32 %v9597, %v9598
    %v9600 = vsel %vm89, %v8727, -inf
    %v9601 = vrot.slane %v9600, 4
    %v9602 = vmax.f32 %v9600, %v9601
    %v9603 = vrot.slane %v9602, 2
    %v9604 = vmax.f32 %v9602, %v9603
    %v9605 = vrot.slane %v9604, 1
    %v9606 = vmax.f32 %v9604, %v9605
    %v9607 = vsel %vm89, %v8726, -inf
    %v9608 = vrot.slane %v9607, 4
    %v9609 = vmax.f32 %v9607, %v9608
    %v9610 = vrot.slane %v9609, 2
    %v9611 = vmax.f32 %v9609, %v9610
    %v9612 = vrot.slane %v9611, 1
    %v9613 = vmax.f32 %v9611, %v9612
    %v9614 = vsel %vm89, %v8728, -inf
    %v9615 = vrot.slane %v9614, 4
    %v9616 = vmax.f32 %v9614, %v9615
    %v9617 = vrot.slane %v9616, 2
    %v9618 = vmax.f32 %v9616, %v9617
    %v9619 = vrot.slane %v9618, 1
    %v9620 = vmax.f32 %v9618, %v9619
    %v9621 = vsel %vm89, %v8736, -inf
    %v9622 = vrot.slane %v9621, 4
    %v9623 = vmax.f32 %v9621, %v9622
    %v9624 = vrot.slane %v9623, 2
    %v9625 = vmax.f32 %v9623, %v9624
    %v9626 = vrot.slane %v9625, 1
    %v9627 = vmax.f32 %v9625, %v9626
    %v9628 = vsel %vm89, %v8744, -inf
    %v9629 = vrot.slane %v9628, 4
    %v9630 = vmax.f32 %v9628, %v9629
    %v9631 = vrot.slane %v9630, 2
    %v9632 = vmax.f32 %v9630, %v9631
    %v9633 = vrot.slane %v9632, 1
    %v9634 = vmax.f32 %v9632, %v9633
    %v9635 = vsel %vm89, %v8743, -inf
    %v9636 = vrot.slane %v9635, 4
    %v9637 = vmax.f32 %v9635, %v9636
    %v9638 = vrot.slane %v9637, 2
    %v9639 = vmax.f32 %v9637, %v9638
    %v9640 = vrot.slane %v9639, 1
    %v9641 = vmax.f32 %v9639, %v9640
    %v9642 = vsel %vm89, %v8745, -inf
    %v9643 = vrot.slane %v9642, 4
    %v9644 = vmax.f32 %v9642, %v9643
    %v9645 = vrot.slane %v9644, 2
    %v9646 = vmax.f32 %v9644, %v9645
    %v9647 = vrot.slane %v9646, 1
    %v9648 = vmax.f32 %v9646, %v9647
    %v9649 = vsel %vm89, %v8753, -inf
    %v9650 = vrot.slane %v9649, 4
    %v9651 = vmax.f32 %v9649, %v9650
    %v9652 = vrot.slane %v9651, 2
    %v9653 = vmax.f32 %v9651, %v9652
    %v9654 = vrot.slane %v9653, 1
    %v9655 = vmax.f32 %v9653, %v9654
    %v9656 = vsel %vm89, %v8761, -inf
    %v9657 = vrot.slane %v9656, 4
    %v9658 = vmax.f32 %v9656, %v9657
    %v9659 = vrot.slane %v9658, 2
    %v9660 = vmax.f32 %v9658, %v9659
    %v9661 = vrot.slane %v9660, 1
    %v9662 = vmax.f32 %v9660, %v9661
    %v9663 = vsel %vm89, %v8760, -inf
    %v9664 = vrot.slane %v9663, 4
    %v9665 = vmax.f32 %v9663, %v9664
    %v9666 = vrot.slane %v9665, 2
    %v9667 = vmax.f32 %v9665, %v9666
    %v9668 = vrot.slane %v9667, 1
    %v9669 = vmax.f32 %v9667, %v9668
    %v9670 = vsel %vm89, %v8762, -inf
    %v9671 = vrot.slane %v9670, 4
    %v9672 = vmax.f32 %v9670, %v9671
    %v9673 = vrot.slane %v9672, 2
    %v9674 = vmax.f32 %v9672, %v9673
    %v9675 = vrot.slane %v9674, 1
    %v9676 = vmax.f32 %v9674, %v9675
    %v9677 = vsel %vm89, %v8770, -inf
    %v9678 = vrot.slane %v9677, 4
    %v9679 = vmax.f32 %v9677, %v9678
    %v9680 = vrot.slane %v9679, 2
    %v9681 = vmax.f32 %v9679, %v9680
    %v9682 = vrot.slane %v9681, 1
    %v9683 = vmax.f32 %v9681, %v9682
    %v9684 = vsel %vm89, %v8778, -inf
    %v9685 = vrot.slane %v9684, 4
    %v9686 = vmax.f32 %v9684, %v9685
    %v9687 = vrot.slane %v9686, 2
    %v9688 = vmax.f32 %v9686, %v9687
    %v9689 = vrot.slane %v9688, 1
    %v9690 = vmax.f32 %v9688, %v9689
    %v9691 = vsel %vm89, %v8777, -inf
    %v9692 = vrot.slane %v9691, 4
    %v9693 = vmax.f32 %v9691, %v9692
    %v9694 = vrot.slane %v9693, 2
    %v9695 = vmax.f32 %v9693, %v9694
    %v9696 = vrot.slane %v9695, 1
    %v9697 = vmax.f32 %v9695, %v9696
    %v9698 = vsel %vm89, %v8779, -inf
    %v9699 = vrot.slane %v9698, 4
    %v9700 = vmax.f32 %v9698, %v9699
    %v9701 = vrot.slane %v9700, 2
    %v9702 = vmax.f32 %v9700, %v9701
    %v9703 = vrot.slane %v9702, 1
    %v9704 = vmax.f32 %v9702, %v9703
    %v9705 = vsel %vm89, %v8787, -inf
    %v9706 = vrot.slane %v9705, 4
    %v9707 = vmax.f32 %v9705, %v9706
    %v9708 = vrot.slane %v9707, 2
    %v9709 = vmax.f32 %v9707, %v9708
    %v9710 = vrot.slane %v9709, 1
    %v9711 = vmax.f32 %v9709, %v9710
    %v9712 = vsel %vm89, %v8795, -inf
    %v9713 = vrot.slane %v9712, 4
    %v9714 = vmax.f32 %v9712, %v9713
    %v9715 = vrot.slane %v9714, 2
    %v9716 = vmax.f32 %v9714, %v9715
    %v9717 = vrot.slane %v9716, 1
    %v9718 = vmax.f32 %v9716, %v9717
    %v9719 = vsel %vm89, %v8794, -inf
    %v9720 = vrot.slane %v9719, 4
    %v9721 = vmax.f32 %v9719, %v9720
    %v9722 = vrot.slane %v9721, 2
    %v9723 = vmax.f32 %v9721, %v9722
    %v9724 = vrot.slane %v9723, 1
    %v9725 = vmax.f32 %v9723, %v9724
    %v9726 = vsel %vm89, %v8796, -inf
    %v9727 = vrot.slane %v9726, 4
    %v9728 = vmax.f32 %v9726, %v9727
    %v9729 = vrot.slane %v9728, 2
    %v9730 = vmax.f32 %v9728, %v9729
    %v9731 = vrot.slane %v9730, 1
    %v9732 = vmax.f32 %v9730, %v9731
    %v9733 = vsel %vm89, %v8804, -inf
    %v9734 = vrot.slane %v9733, 4
    %v9735 = vmax.f32 %v9733, %v9734
    %v9736 = vrot.slane %v9735, 2
    %v9737 = vmax.f32 %v9735, %v9736
    %v9738 = vrot.slane %v9737, 1
    %v9739 = vmax.f32 %v9737, %v9738
    %v9740 = vsel %vm89, %v8812, -inf
    %v9741 = vrot.slane %v9740, 4
    %v9742 = vmax.f32 %v9740, %v9741
    %v9743 = vrot.slane %v9742, 2
    %v9744 = vmax.f32 %v9742, %v9743
    %v9745 = vrot.slane %v9744, 1
    %v9746 = vmax.f32 %v9744, %v9745
    %v9747 = vsel %vm89, %v8811, -inf
    %v9748 = vrot.slane %v9747, 4
    %v9749 = vmax.f32 %v9747, %v9748
    %v9750 = vrot.slane %v9749, 2
    %v9751 = vmax.f32 %v9749, %v9750
    %v9752 = vrot.slane %v9751, 1
    %v9753 = vmax.f32 %v9751, %v9752
    %v9754 = vsel %vm89, %v8813, -inf
    %v9755 = vrot.slane %v9754, 4
    %v9756 = vmax.f32 %v9754, %v9755
    %v9757 = vrot.slane %v9756, 2
    %v9758 = vmax.f32 %v9756, %v9757
    %v9759 = vrot.slane %v9758, 1
    %v9760 = vmax.f32 %v9758, %v9759
    %v9761 = vsel %vm89, %v8821, -inf
    %v9762 = vrot.slane %v9761, 4
    %v9763 = vmax.f32 %v9761, %v9762
    %v9764 = vrot.slane %v9763, 2
    %v9765 = vmax.f32 %v9763, %v9764
    %v9766 = vrot.slane %v9765, 1
    %v9767 = vmax.f32 %v9765, %v9766
    %v9768 = vsel %vm89, %v8829, -inf
    %v9769 = vrot.slane %v9768, 4
    %v9770 = vmax.f32 %v9768, %v9769
    %v9771 = vrot.slane %v9770, 2
    %v9772 = vmax.f32 %v9770, %v9771
    %v9773 = vrot.slane %v9772, 1
    %v9774 = vmax.f32 %v9772, %v9773
    %v9775 = vsel %vm89, %v8828, -inf
    %v9776 = vrot.slane %v9775, 4
    %v9777 = vmax.f32 %v9775, %v9776
    %v9778 = vrot.slane %v9777, 2
    %v9779 = vmax.f32 %v9777, %v9778
    %v9780 = vrot.slane %v9779, 1
    %v9781 = vmax.f32 %v9779, %v9780
    %v9782 = vsel %vm89, %v8830, -inf
    %v9783 = vrot.slane %v9782, 4
    %v9784 = vmax.f32 %v9782, %v9783
    %v9785 = vrot.slane %v9784, 2
    %v9786 = vmax.f32 %v9784, %v9785
    %v9787 = vrot.slane %v9786, 1
    %v9788 = vmax.f32 %v9786, %v9787
    %v9789 = vsel %vm89, %v8838, -inf
    %v9790 = vrot.slane %v9789, 4
    %v9791 = vmax.f32 %v9789, %v9790
    %v9792 = vrot.slane %v9791, 2
    %v9793 = vmax.f32 %v9791, %v9792
    %v9794 = vrot.slane %v9793, 1
    %v9795 = vmax.f32 %v9793, %v9794
    %v9796 = vsel %vm89, %v8846, -inf
    %v9797 = vrot.slane %v9796, 4
    %v9798 = vmax.f32 %v9796, %v9797
    %v9799 = vrot.slane %v9798, 2
    %v9800 = vmax.f32 %v9798, %v9799
    %v9801 = vrot.slane %v9800, 1
    %v9802 = vmax.f32 %v9800, %v9801
    %v9803 = vsel %vm89, %v8845, -inf
    %v9804 = vrot.slane %v9803, 4
    %v9805 = vmax.f32 %v9803, %v9804
    %v9806 = vrot.slane %v9805, 2
    %v9807 = vmax.f32 %v9805, %v9806
    %v9808 = vrot.slane %v9807, 1
    %v9809 = vmax.f32 %v9807, %v9808
    %v9810 = vsel %vm89, %v8847, -inf
    %v9811 = vrot.slane %v9810, 4
    %v9812 = vmax.f32 %v9810, %v9811
    %v9813 = vrot.slane %v9812, 2
    %v9814 = vmax.f32 %v9812, %v9813
    %v9815 = vrot.slane %v9814, 1
    %v9816 = vmax.f32 %v9814, %v9815
    %v9817 = vsel %vm89, %v8855, -inf
    %v9818 = vrot.slane %v9817, 4
    %v9819 = vmax.f32 %v9817, %v9818
    %v9820 = vrot.slane %v9819, 2
    %v9821 = vmax.f32 %v9819, %v9820
    %v9822 = vrot.slane %v9821, 1
    %v9823 = vmax.f32 %v9821, %v9822
    %v9824 = vsel %vm89, %v8863, -inf
    %v9825 = vrot.slane %v9824, 4
    %v9826 = vmax.f32 %v9824, %v9825
    %v9827 = vrot.slane %v9826, 2
    %v9828 = vmax.f32 %v9826, %v9827
    %v9829 = vrot.slane %v9828, 1
    %v9830 = vmax.f32 %v9828, %v9829
    %v9831 = vsel %vm89, %v8862, -inf
    %v9832 = vrot.slane %v9831, 4
    %v9833 = vmax.f32 %v9831, %v9832
    %v9834 = vrot.slane %v9833, 2
    %v9835 = vmax.f32 %v9833, %v9834
    %v9836 = vrot.slane %v9835, 1
    %v9837 = vmax.f32 %v9835, %v9836
    %v9838 = vsel %vm89, %v8864, -inf
    %v9839 = vrot.slane %v9838, 4
    %v9840 = vmax.f32 %v9838, %v9839
    %v9841 = vrot.slane %v9840, 2
    %v9842 = vmax.f32 %v9840, %v9841
    %v9843 = vrot.slane %v9842, 1
    %v9844 = vmax.f32 %v9842, %v9843
    %v9845 = vsel %vm89, %v8872, -inf
    %v9846 = vrot.slane %v9845, 4
    %v9847 = vmax.f32 %v9845, %v9846
    %v9848 = vrot.slane %v9847, 2
    %v9849 = vmax.f32 %v9847, %v9848
    %v9850 = vrot.slane %v9849, 1
    %v9851 = vmax.f32 %v9849, %v9850
    %v9852 = vsel %vm89, %v8880, -inf
    %v9853 = vrot.slane %v9852, 4
    %v9854 = vmax.f32 %v9852, %v9853
    %v9855 = vrot.slane %v9854, 2
    %v9856 = vmax.f32 %v9854, %v9855
    %v9857 = vrot.slane %v9856, 1
    %v9858 = vmax.f32 %v9856, %v9857
    %v9859 = vsel %vm89, %v8879, -inf
    %v9860 = vrot.slane %v9859, 4
    %v9861 = vmax.f32 %v9859, %v9860
    %v9862 = vrot.slane %v9861, 2
    %v9863 = vmax.f32 %v9861, %v9862
    %v9864 = vrot.slane %v9863, 1
    %v9865 = vmax.f32 %v9863, %v9864
    %v9866 = vsel %vm89, %v8881, -inf
    %v9867 = vrot.slane %v9866, 4
    %v9868 = vmax.f32 %v9866, %v9867
    %v9869 = vrot.slane %v9868, 2
    %v9870 = vmax.f32 %v9868, %v9869
    %v9871 = vrot.slane %v9870, 1
    %v9872 = vmax.f32 %v9870, %v9871
    %v9873 = vsel %vm89, %v8889, -inf
    %v9874 = vrot.slane %v9873, 4
    %v9875 = vmax.f32 %v9873, %v9874
    %v9876 = vrot.slane %v9875, 2
    %v9877 = vmax.f32 %v9875, %v9876
    %v9878 = vrot.slane %v9877, 1
    %v9879 = vmax.f32 %v9877, %v9878
    %v9880 = vsel %vm89, %v8897, -inf
    %v9881 = vrot.slane %v9880, 4
    %v9882 = vmax.f32 %v9880, %v9881
    %v9883 = vrot.slane %v9882, 2
    %v9884 = vmax.f32 %v9882, %v9883
    %v9885 = vrot.slane %v9884, 1
    %v9886 = vmax.f32 %v9884, %v9885
    %v9887 = vsel %vm89, %v8896, -inf
    %v9888 = vrot.slane %v9887, 4
    %v9889 = vmax.f32 %v9887, %v9888
    %v9890 = vrot.slane %v9889, 2
    %v9891 = vmax.f32 %v9889, %v9890
    %v9892 = vrot.slane %v9891, 1
    %v9893 = vmax.f32 %v9891, %v9892
    %v9894 = vsel %vm89, %v8898, -inf
    %v9895 = vrot.slane %v9894, 4
    %v9896 = vmax.f32 %v9894, %v9895
    %v9897 = vrot.slane %v9896, 2
    %v9898 = vmax.f32 %v9896, %v9897
    %v9899 = vrot.slane %v9898, 1
    %v9900 = vmax.f32 %v9898, %v9899
    %v9901 = vsel %vm89, %v8906, -inf
    %v9902 = vrot.slane %v9901, 4
    %v9903 = vmax.f32 %v9901, %v9902
    %v9904 = vrot.slane %v9903, 2
    %v9905 = vmax.f32 %v9903, %v9904
    %v9906 = vrot.slane %v9905, 1
    %v9907 = vmax.f32 %v9905, %v9906
    %v9908 = vsel %vm89, %v8914, -inf
    %v9909 = vrot.slane %v9908, 4
    %v9910 = vmax.f32 %v9908, %v9909
    %v9911 = vrot.slane %v9910, 2
    %v9912 = vmax.f32 %v9910, %v9911
    %v9913 = vrot.slane %v9912, 1
    %v9914 = vmax.f32 %v9912, %v9913
    %v9915 = vsel %vm89, %v8913, -inf
    %v9916 = vrot.slane %v9915, 4
    %v9917 = vmax.f32 %v9915, %v9916
    %v9918 = vrot.slane %v9917, 2
    %v9919 = vmax.f32 %v9917, %v9918
    %v9920 = vrot.slane %v9919, 1
    %v9921 = vmax.f32 %v9919, %v9920
    %v9922 = vsel %vm89, %v8915, -inf
    %v9923 = vrot.slane %v9922, 4
    %v9924 = vmax.f32 %v9922, %v9923
    %v9925 = vrot.slane %v9924, 2
    %v9926 = vmax.f32 %v9924, %v9925
    %v9927 = vrot.slane %v9926, 1
    %v9928 = vmax.f32 %v9926, %v9927
    %v9929 = vsel %vm89, %v8923, -inf
    %v9930 = vrot.slane %v9929, 4
    %v9931 = vmax.f32 %v9929, %v9930
    %v9932 = vrot.slane %v9931, 2
    %v9933 = vmax.f32 %v9931, %v9932
    %v9934 = vrot.slane %v9933, 1
    %v9935 = vmax.f32 %v9933, %v9934
    %v9936 = vsel %vm89, %v8931, -inf
    %v9937 = vrot.slane %v9936, 4
    %v9938 = vmax.f32 %v9936, %v9937
    %v9939 = vrot.slane %v9938, 2
    %v9940 = vmax.f32 %v9938, %v9939
    %v9941 = vrot.slane %v9940, 1
    %v9942 = vmax.f32 %v9940, %v9941
    %v9943 = vsel %vm89, %v8930, -inf
    %v9944 = vrot.slane %v9943, 4
    %v9945 = vmax.f32 %v9943, %v9944
    %v9946 = vrot.slane %v9945, 2
    %v9947 = vmax.f32 %v9945, %v9946
    %v9948 = vrot.slane %v9947, 1
    %v9949 = vmax.f32 %v9947, %v9948
    %v9950 = vsel %vm89, %v8932, -inf
    %v9951 = vrot.slane %v9950, 4
    %v9952 = vmax.f32 %v9950, %v9951
    %v9953 = vrot.slane %v9952, 2
    %v9954 = vmax.f32 %v9952, %v9953
    %v9955 = vrot.slane %v9954, 1
    %v9956 = vmax.f32 %v9954, %v9955
    %vm10085 = vcmask 1041409
    %v10086 = vsel %vm10085, %v9074, %v9067
    %vm10087 = vcmask 1042434
    %v10088 = vsel %vm10087, %v9081, %v10086
    %vm10089 = vcmask 1043459
    %v10090 = vsel %vm10089, %v9088, %v10088
    %vm10091 = vcmask 1044484
    %v10092 = vsel %vm10091, %v9095, %v10090
    %vm10093 = vcmask 1045509
    %v10094 = vsel %vm10093, %v9102, %v10092
    %vm10095 = vcmask 1046534
    %v10096 = vsel %vm10095, %v9109, %v10094
    %vm10097 = vcmask 1047559
    %v10098 = vsel %vm10097, %v9116, %v10096
    %v10099 = vsel %vm10085, %v9130, %v9123
    %v10100 = vsel %vm10087, %v9137, %v10099
    %v10101 = vsel %vm10089, %v9144, %v10100
    %v10102 = vsel %vm10091, %v9151, %v10101
    %v10103 = vsel %vm10093, %v9158, %v10102
    %v10104 = vsel %vm10095, %v9165, %v10103
    %v10105 = vsel %vm10097, %v9172, %v10104
    %v10106 = vsel %vm10085, %v9186, %v9179
    %v10107 = vsel %vm10087, %v9193, %v10106
    %v10108 = vsel %vm10089, %v9200, %v10107
    %v10109 = vsel %vm10091, %v9207, %v10108
    %v10110 = vsel %vm10093, %v9214, %v10109
    %v10111 = vsel %vm10095, %v9221, %v10110
    %v10112 = vsel %vm10097, %v9228, %v10111
    %v10113 = vsel %vm10085, %v9242, %v9235
    %v10114 = vsel %vm10087, %v9249, %v10113
    %v10115 = vsel %vm10089, %v9256, %v10114
    %v10116 = vsel %vm10091, %v9263, %v10115
    %v10117 = vsel %vm10093, %v9270, %v10116
    %v10118 = vsel %vm10095, %v9277, %v10117
    %v10119 = vsel %vm10097, %v9284, %v10118
    %v10120 = vsel %vm10085, %v9298, %v9291
    %v10121 = vsel %vm10087, %v9305, %v10120
    %v10122 = vsel %vm10089, %v9312, %v10121
    %v10123 = vsel %vm10091, %v9319, %v10122
    %v10124 = vsel %vm10093, %v9326, %v10123
    %v10125 = vsel %vm10095, %v9333, %v10124
    %v10126 = vsel %vm10097, %v9340, %v10125
    %v10127 = vsel %vm10085, %v9354, %v9347
    %v10128 = vsel %vm10087, %v9361, %v10127
    %v10129 = vsel %vm10089, %v9368, %v10128
    %v10130 = vsel %vm10091, %v9375, %v10129
    %v10131 = vsel %vm10093, %v9382, %v10130
    %v10132 = vsel %vm10095, %v9389, %v10131
    %v10133 = vsel %vm10097, %v9396, %v10132
    %v10134 = vsel %vm10085, %v9410, %v9403
    %v10135 = vsel %vm10087, %v9417, %v10134
    %v10136 = vsel %vm10089, %v9424, %v10135
    %v10137 = vsel %vm10091, %v9431, %v10136
    %v10138 = vsel %vm10093, %v9438, %v10137
    %v10139 = vsel %vm10095, %v9445, %v10138
    %v10140 = vsel %vm10097, %v9452, %v10139
    %v10141 = vsel %vm10085, %v9466, %v9459
    %v10142 = vsel %vm10087, %v9473, %v10141
    %v10143 = vsel %vm10089, %v9480, %v10142
    %v10144 = vsel %vm10091, %v9487, %v10143
    %v10145 = vsel %vm10093, %v9494, %v10144
    %v10146 = vsel %vm10095, %v9501, %v10145
    %v10147 = vsel %vm10097, %v9508, %v10146
    %v10148 = vsel %vm10085, %v9522, %v9515
    %v10149 = vsel %vm10087, %v9529, %v10148
    %v10150 = vsel %vm10089, %v9536, %v10149
    %v10151 = vsel %vm10091, %v9543, %v10150
    %v10152 = vsel %vm10093, %v9550, %v10151
    %v10153 = vsel %vm10095, %v9557, %v10152
    %v10154 = vsel %vm10097, %v9564, %v10153
    %v10155 = vsel %vm10085, %v9578, %v9571
    %v10156 = vsel %vm10087, %v9585, %v10155
    %v10157 = vsel %vm10089, %v9592, %v10156
    %v10158 = vsel %vm10091, %v9599, %v10157
    %v10159 = vsel %vm10093, %v9606, %v10158
    %v10160 = vsel %vm10095, %v9613, %v10159
    %v10161 = vsel %vm10097, %v9620, %v10160
    %v10162 = vsel %vm10085, %v9634, %v9627
    %v10163 = vsel %vm10087, %v9641, %v10162
    %v10164 = vsel %vm10089, %v9648, %v10163
    %v10165 = vsel %vm10091, %v9655, %v10164
    %v10166 = vsel %vm10093, %v9662, %v10165
    %v10167 = vsel %vm10095, %v9669, %v10166
    %v10168 = vsel %vm10097, %v9676, %v10167
    %v10169 = vsel %vm10085, %v9690, %v9683
    %v10170 = vsel %vm10087, %v9697, %v10169
    %v10171 = vsel %vm10089, %v9704, %v10170
    %v10172 = vsel %vm10091, %v9711, %v10171
    %v10173 = vsel %vm10093, %v9718, %v10172
    %v10174 = vsel %vm10095, %v9725, %v10173
    %v10175 = vsel %vm10097, %v9732, %v10174
    %v10176 = vsel %vm10085, %v9746, %v9739
    %v10177 = vsel %vm10087, %v9753, %v10176
    %v10178 = vsel %vm10089, %v9760, %v10177
    %v10179 = vsel %vm10091, %v9767, %v10178
    %v10180 = vsel %vm10093, %v9774, %v10179
    %v10181 = vsel %vm10095, %v9781, %v10180
    %v10182 = vsel %vm10097, %v9788, %v10181
    %v10183 = vsel %vm10085, %v9802, %v9795
    %v10184 = vsel %vm10087, %v9809, %v10183
    %v10185 = vsel %vm10089, %v9816, %v10184
    %v10186 = vsel %vm10091, %v9823, %v10185
    %v10187 = vsel %vm10093, %v9830, %v10186
    %v10188 = vsel %vm10095, %v9837, %v10187
    %v10189 = vsel %vm10097, %v9844, %v10188
    %v10190 = vsel %vm10085, %v9858, %v9851
    %v10191 = vsel %vm10087, %v9865, %v10190
    %v10192 = vsel %vm10089, %v9872, %v10191
    %v10193 = vsel %vm10091, %v9879, %v10192
    %v10194 = vsel %vm10093, %v9886, %v10193
    %v10195 = vsel %vm10095, %v9893, %v10194
    %v10196 = vsel %vm10097, %v9900, %v10195
    %v10197 = vsel %vm10085, %v9914, %v9907
    %v10198 = vsel %vm10087, %v9921, %v10197
    %v10199 = vsel %vm10089, %v9928, %v10198
    %v10200 = vsel %vm10091, %v9935, %v10199
    %v10201 = vsel %vm10093, %v9942, %v10200
    %v10202 = vsel %vm10095, %v9949, %v10201
    %v10203 = vsel %vm10097, %v9956, %v10202
    %v10220 = vcombine.low %v10098, %v10112
    %v10221 = vcombine.high %v10098, %v10112
    %v10223 = vunpack.c.l.s4 1983009808
    %v10224 = vunpack.c.0.s8 %v10223
    %v10225 = vlaneseq
    %v10226 = vshrl.u32 %v10225, 7
    %v10227 = vsub.s32 %v10224, %v10226
    %v10228 = vrot.slane %v10220, %v10227
    %v10230 = vunpack.c.l.s4 1983009808
    %v10231 = vunpack.c.0.s8 %v10230
    %v10232 = vlaneseq
    %v10233 = vshrl.u32 %v10232, 7
    %v10234 = vsub.s32 %v10231, %v10233
    %v10235 = vrot.slane %v10221, %v10234
    %v10236 = vcombine.low %v10105, %v10119
    %v10237 = vcombine.high %v10105, %v10119
    %v10239 = vunpack.c.l.s4 1983009808
    %v10240 = vunpack.c.0.s8 %v10239
    %v10241 = vlaneseq
    %v10242 = vshrl.u32 %v10241, 7
    %v10243 = vsub.s32 %v10240, %v10242
    %v10244 = vrot.slane %v10236, %v10243
    %v10246 = vunpack.c.l.s4 1983009808
    %v10247 = vunpack.c.0.s8 %v10246
    %v10248 = vlaneseq
    %v10249 = vshrl.u32 %v10248, 7
    %v10250 = vsub.s32 %v10247, %v10249
    %v10251 = vrot.slane %v10237, %v10250
    %v10252 = vcombine.low %v10126, %v10140
    %v10253 = vcombine.high %v10126, %v10140
    %v10255 = vunpack.c.l.s4 1983009808
    %v10256 = vunpack.c.0.s8 %v10255
    %v10257 = vlaneseq
    %v10258 = vshrl.u32 %v10257, 7
    %v10259 = vsub.s32 %v10256, %v10258
    %v10260 = vrot.slane %v10252, %v10259
    %v10262 = vunpack.c.l.s4 1983009808
    %v10263 = vunpack.c.0.s8 %v10262
    %v10264 = vlaneseq
    %v10265 = vshrl.u32 %v10264, 7
    %v10266 = vsub.s32 %v10263, %v10265
    %v10267 = vrot.slane %v10253, %v10266
    %v10268 = vcombine.low %v10133, %v10147
    %v10269 = vcombine.high %v10133, %v10147
    %v10271 = vunpack.c.l.s4 1983009808
    %v10272 = vunpack.c.0.s8 %v10271
    %v10273 = vlaneseq
    %v10274 = vshrl.u32 %v10273, 7
    %v10275 = vsub.s32 %v10272, %v10274
    %v10276 = vrot.slane %v10268, %v10275
    %v10278 = vunpack.c.l.s4 1983009808
    %v10279 = vunpack.c.0.s8 %v10278
    %v10280 = vlaneseq
    %v10281 = vshrl.u32 %v10280, 7
    %v10282 = vsub.s32 %v10279, %v10281
    %v10283 = vrot.slane %v10269, %v10282
    %v10284 = vcombine.low %v10228, %v10244
    %v10285 = vcombine.high %v10228, %v10244
    %v10287 = vunpack.c.l.s4 1934713408
    %v10288 = vunpack.c.0.s8 %v10287
    %v10289 = vlaneseq
    %v10290 = vshrl.u32 %v10289, 7
    %v10291 = vsub.s32 %v10288, %v10290
    %v10292 = vrot.slane %v10284, %v10291
    %v10294 = vunpack.c.l.s4 1934713408
    %v10295 = vunpack.c.0.s8 %v10294
    %v10296 = vlaneseq
    %v10297 = vshrl.u32 %v10296, 7
    %v10298 = vsub.s32 %v10295, %v10297
    %v10299 = vrot.slane %v10285, %v10298
    %v10300 = vcombine.low %v10235, %v10251
    %v10301 = vcombine.high %v10235, %v10251
    %v10303 = vunpack.c.l.s4 1934713408
    %v10304 = vunpack.c.0.s8 %v10303
    %v10305 = vlaneseq
    %v10306 = vshrl.u32 %v10305, 7
    %v10307 = vsub.s32 %v10304, %v10306
    %v10308 = vrot.slane %v10300, %v10307
    %v10310 = vunpack.c.l.s4 1934713408
    %v10311 = vunpack.c.0.s8 %v10310
    %v10312 = vlaneseq
    %v10313 = vshrl.u32 %v10312, 7
    %v10314 = vsub.s32 %v10311, %v10313
    %v10315 = vrot.slane %v10301, %v10314
    %v10316 = vcombine.low %v10260, %v10276
    %v10317 = vcombine.high %v10260, %v10276
    %v10319 = vunpack.c.l.s4 1934713408
    %v10320 = vunpack.c.0.s8 %v10319
    %v10321 = vlaneseq
    %v10322 = vshrl.u32 %v10321, 7
    %v10323 = vsub.s32 %v10320, %v10322
    %v10324 = vrot.slane %v10316, %v10323
    %v10326 = vunpack.c.l.s4 1934713408
    %v10327 = vunpack.c.0.s8 %v10326
    %v10328 = vlaneseq
    %v10329 = vshrl.u32 %v10328, 7
    %v10330 = vsub.s32 %v10327, %v10329
    %v10331 = vrot.slane %v10317, %v10330
    %v10332 = vcombine.low %v10267, %v10283
    %v10333 = vcombine.high %v10267, %v10283
    %v10335 = vunpack.c.l.s4 1934713408
    %v10336 = vunpack.c.0.s8 %v10335
    %v10337 = vlaneseq
    %v10338 = vshrl.u32 %v10337, 7
    %v10339 = vsub.s32 %v10336, %v10338
    %v10340 = vrot.slane %v10332, %v10339
    %v10342 = vunpack.c.l.s4 1934713408
    %v10343 = vunpack.c.0.s8 %v10342
    %v10344 = vlaneseq
    %v10345 = vshrl.u32 %v10344, 7
    %v10346 = vsub.s32 %v10343, %v10345
    %v10347 = vrot.slane %v10333, %v10346
    %v10348 = vcombine.low %v10292, %v10324
    %v10349 = vcombine.high %v10292, %v10324
    %v10350 = vcombine.low %v10299, %v10331
    %v10351 = vcombine.high %v10299, %v10331
    %v10352 = vcombine.low %v10308, %v10340
    %v10353 = vcombine.high %v10308, %v10340
    %v10354 = vcombine.low %v10315, %v10347
    %v10355 = vcombine.high %v10315, %v10347
    %v10356 = vcombine.low %v10154, %v10168
    %v10357 = vcombine.high %v10154, %v10168
    %v10359 = vunpack.c.l.s4 1983009808
    %v10360 = vunpack.c.0.s8 %v10359
    %v10361 = vlaneseq
    %v10362 = vshrl.u32 %v10361, 7
    %v10363 = vsub.s32 %v10360, %v10362
    %v10364 = vrot.slane %v10356, %v10363
    %v10366 = vunpack.c.l.s4 1983009808
    %v10367 = vunpack.c.0.s8 %v10366
    %v10368 = vlaneseq
    %v10369 = vshrl.u32 %v10368, 7
    %v10370 = vsub.s32 %v10367, %v10369
    %v10371 = vrot.slane %v10357, %v10370
    %v10372 = vcombine.low %v10161, %v10175
    %v10373 = vcombine.high %v10161, %v10175
    %v10375 = vunpack.c.l.s4 1983009808
    %v10376 = vunpack.c.0.s8 %v10375
    %v10377 = vlaneseq
    %v10378 = vshrl.u32 %v10377, 7
    %v10379 = vsub.s32 %v10376, %v10378
    %v10380 = vrot.slane %v10372, %v10379
    %v10382 = vunpack.c.l.s4 1983009808
    %v10383 = vunpack.c.0.s8 %v10382
    %v10384 = vlaneseq
    %v10385 = vshrl.u32 %v10384, 7
    %v10386 = vsub.s32 %v10383, %v10385
    %v10387 = vrot.slane %v10373, %v10386
    %v10388 = vcombine.low %v10182, %v10196
    %v10389 = vcombine.high %v10182, %v10196
    %v10391 = vunpack.c.l.s4 1983009808
    %v10392 = vunpack.c.0.s8 %v10391
    %v10393 = vlaneseq
    %v10394 = vshrl.u32 %v10393, 7
    %v10395 = vsub.s32 %v10392, %v10394
    %v10396 = vrot.slane %v10388, %v10395
    %v10398 = vunpack.c.l.s4 1983009808
    %v10399 = vunpack.c.0.s8 %v10398
    %v10400 = vlaneseq
    %v10401 = vshrl.u32 %v10400, 7
    %v10402 = vsub.s32 %v10399, %v10401
    %v10403 = vrot.slane %v10389, %v10402
    %v10404 = vcombine.low %v10189, %v10203
    %v10405 = vcombine.high %v10189, %v10203
    %v10407 = vunpack.c.l.s4 1983009808
    %v10408 = vunpack.c.0.s8 %v10407
    %v10409 = vlaneseq
    %v10410 = vshrl.u32 %v10409, 7
    %v10411 = vsub.s32 %v10408, %v10410
    %v10412 = vrot.slane %v10404, %v10411
    %v10414 = vunpack.c.l.s4 1983009808
    %v10415 = vunpack.c.0.s8 %v10414
    %v10416 = vlaneseq
    %v10417 = vshrl.u32 %v10416, 7
    %v10418 = vsub.s32 %v10415, %v10417
    %v10419 = vrot.slane %v10405, %v10418
    %v10420 = vcombine.low %v10364, %v10380
    %v10421 = vcombine.high %v10364, %v10380
    %v10423 = vunpack.c.l.s4 1934713408
    %v10424 = vunpack.c.0.s8 %v10423
    %v10425 = vlaneseq
    %v10426 = vshrl.u32 %v10425, 7
    %v10427 = vsub.s32 %v10424, %v10426
    %v10428 = vrot.slane %v10420, %v10427
    %v10430 = vunpack.c.l.s4 1934713408
    %v10431 = vunpack.c.0.s8 %v10430
    %v10432 = vlaneseq
    %v10433 = vshrl.u32 %v10432, 7
    %v10434 = vsub.s32 %v10431, %v10433
    %v10435 = vrot.slane %v10421, %v10434
    %v10436 = vcombine.low %v10371, %v10387
    %v10437 = vcombine.high %v10371, %v10387
    %v10439 = vunpack.c.l.s4 1934713408
    %v10440 = vunpack.c.0.s8 %v10439
    %v10441 = vlaneseq
    %v10442 = vshrl.u32 %v10441, 7
    %v10443 = vsub.s32 %v10440, %v10442
    %v10444 = vrot.slane %v10436, %v10443
    %v10446 = vunpack.c.l.s4 1934713408
    %v10447 = vunpack.c.0.s8 %v10446
    %v10448 = vlaneseq
    %v10449 = vshrl.u32 %v10448, 7
    %v10450 = vsub.s32 %v10447, %v10449
    %v10451 = vrot.slane %v10437, %v10450
    %v10452 = vcombine.low %v10396, %v10412
    %v10453 = vcombine.high %v10396, %v10412
    %v10455 = vunpack.c.l.s4 1934713408
    %v10456 = vunpack.c.0.s8 %v10455
    %v10457 = vlaneseq
    %v10458 = vshrl.u32 %v10457, 7
    %v10459 = vsub.s32 %v10456, %v10458
    %v10460 = vrot.slane %v10452, %v10459
    %v10462 = vunpack.c.l.s4 1934713408
    %v10463 = vunpack.c.0.s8 %v10462
    %v10464 = vlaneseq
    %v10465 = vshrl.u32 %v10464, 7
    %v10466 = vsub.s32 %v10463, %v10465
    %v10467 = vrot.slane %v10453, %v10466
    %v10468 = vcombine.low %v10403, %v10419
    %v10469 = vcombine.high %v10403, %v10419
    %v10471 = vunpack.c.l.s4 1934713408
    %v10472 = vunpack.c.0.s8 %v10471
    %v10473 = vlaneseq
    %v10474 = vshrl.u32 %v10473, 7
    %v10475 = vsub.s32 %v10472, %v10474
    %v10476 = vrot.slane %v10468, %v10475
    %v10478 = vunpack.c.l.s4 1934713408
    %v10479 = vunpack.c.0.s8 %v10478
    %v10480 = vlaneseq
    %v10481 = vshrl.u32 %v10480, 7
    %v10482 = vsub.s32 %v10479, %v10481
    %v10483 = vrot.slane %v10469, %v10482
    %v10484 = vcombine.low %v10428, %v10460
    %v10485 = vcombine.high %v10428, %v10460
    %v10486 = vcombine.low %v10435, %v10467
    %v10487 = vcombine.high %v10435, %v10467
    %v10488 = vcombine.low %v10444, %v10476
    %v10489 = vcombine.high %v10444, %v10476
    %v10490 = vcombine.low %v10451, %v10483
    %v10491 = vcombine.high %v10451, %v10483
    %10494 = vrot.lane.b32.xlu0 %v10349, 32
    %v10495 = vpop.permute.xlu0 %10494
    %10496 = vrot.lane.b32.xlu0 %v10485, 32
    %v10497 = vpop.permute.xlu0 %10496
    %10502 = vrot.lane.b32.xlu0 %v10350, 64
    %v10503 = vpop.permute.xlu0 %10502
    %10504 = vrot.lane.b32.xlu0 %v10486, 64
    %v10505 = vpop.permute.xlu0 %10504
    %10510 = vrot.lane.b32.xlu0 %v10351, 96
    %v10511 = vpop.permute.xlu0 %10510
    %10512 = vrot.lane.b32.xlu0 %v10487, 96
    %v10513 = vpop.permute.xlu0 %10512
    %10518 = vrot.lane.b32.xlu0 %v10353, 32
    %v10519 = vpop.permute.xlu0 %10518
    %10520 = vrot.lane.b32.xlu0 %v10489, 32
    %v10521 = vpop.permute.xlu0 %10520
    %10526 = vrot.lane.b32.xlu0 %v10354, 64
    %v10527 = vpop.permute.xlu0 %10526
    %10528 = vrot.lane.b32.xlu0 %v10490, 64
    %v10529 = vpop.permute.xlu0 %10528
    %10534 = vrot.lane.b32.xlu0 %v10355, 96
    %v10535 = vpop.permute.xlu0 %10534
    %10536 = vrot.lane.b32.xlu0 %v10491, 96
    %v10537 = vpop.permute.xlu0 %10536
    %v10540 = vsel %vm86, %v10348, %v10495
    %v10541 = vsel %vm86, %v10484, %v10497
    %vm10542 = vcmask 523264
    %v10543 = vsel %vm10542, %v10540, %v10503
    %v10544 = vsel %vm10542, %v10541, %v10505
    %vm10545 = vcmask 785408
    %v10546 = vsel %vm10545, %v10543, %v10511
    %v10547 = vsel %vm10545, %v10544, %v10513
    %v10548 = vsel %vm86, %v10352, %v10519
    %v10549 = vsel %vm86, %v10488, %v10521
    %v10550 = vsel %vm10542, %v10548, %v10527
    %v10551 = vsel %vm10542, %v10549, %v10529
    %v10552 = vsel %vm10545, %v10550, %v10535
    %v10553 = vsel %vm10545, %v10551, %v10537
    %10554 = vst [vmem:[#allocation14] sm:$0xff] %v10546
    %10555 = vst [vmem:[#allocation14 + $0x8] sm:$0xff] %v10552
    %10556 = vst [vmem:[#allocation14 + $0x10] sm:$0xff] %v10547
    %10557 = vst [vmem:[#allocation14 + $0x18] sm:$0xff] %v10553
    // Predicated region
    $region49: #{down_conv.1} parent=1 // pred_check
      _
    $region50: #{down_conv.1} parent=1 // pred_check_branch
      %10559 = sbr.rel (0) target = $region52
    $region51: #{down_conv.1} parent=1 // pred_region
      %s10561 = ssub.s32 512, 512
      %10562 = vsyncadd [#allocation7], %s10561
      %s10563 = sshll.u32 [#allocation14], 4
      %s10564 = int_to_ptr.vmem [resolvable:$true] %s10563
      %10569 = dma.vmem_to_hbm [thread:$0]  %s10564, 512, %s5, [#allocation7], 256, 256, 16
    $region52: #{down_conv.1} parent=1 // pred_fallthru
      _
    // Predicated region
    $region53: #{down_conv.1} parent=1 // pred_check
      _
    $region54: #{down_conv.1} parent=1 // pred_check_branch
      %10571 = sbr.rel (0) target = $region56
    $region55: #{down_conv.1} parent=1 // pred_region
      %10572 = dma.done [#allocation7], 512
    $region56: #{down_conv.1} parent=1 // pred_fallthru
      _
    %10573 = vsyncpa [#allocation6], 1
    %10574 = vsyncpa [#allocation9], 1
    %10575 = vsyncpa [#allocation12], 1
    %10576 = vsyncpa [#allocation7], 1

</llo_original>
